<compile_context>
chip_gen: v5e
topology: v5e:2x2
jax: 0.10.0
libtpu: 0.0.40
codegen_flags: <defaults>
</compile_context>

<pallas_src>
import math

import numpy as np

import jax
import jax.numpy as jnp
from jax.experimental import pallas as pl
from jax.experimental.pallas import tpu as pltpu

# ----------------------------------------------------------------------------
# Constants from the PyTorch module
# ----------------------------------------------------------------------------
N_CURVE = 18
DECAY = 0.1
VREF = 0.15
VCO_INIT = 0.15
VCO_CHANGE_PER_VOLT = 1.0
ENERGY_PER_SPIKE = 5e-08
SPIKE_WIDTH = 5e-08
SPIKE_AMPLITUDE = ENERGY_PER_SPIKE / SPIKE_WIDTH  # == 1.0
PI = math.pi

X_CURVE = [0.0525, 0.07, 0.0875, 0.105, 0.1225, 0.14, 0.1575, 0.175, 0.1925,
           0.21, 0.2275, 0.245, 0.2625, 0.28, 0.2975, 0.315, 0.3325, 0.35]
Y_CURVE = [644404.0862, 761653.8961, 939789.2253, 1178813.607, 1498410.95,
           1937406.885, 2546507.201, 3374555.172, 4487038.625, 5974375.188,
           7940600.158, 10476316.7, 13607669.83, 17208745.11, 20945786.46,
           24370070.17, 27157403.26, 29234740.57]

# X_CURVE is a uniform grid: x0 = 0.0525, dx = 0.0175
X0 = 0.0525
DX = 0.0175
INV_DX = 1.0 / DX

# If True, the per-element 1/freq divide is replaced by an EUP approximate
# reciprocal (pl.reciprocal(approx=True)). Off by default: it changes rounding
# relative to the PyTorch reference near the hard phase >= pi threshold.
USE_APPROX_RECIP = False

# ----------------------------------------------------------------------------
# Trace-time constant folding (np.float32, same op order as the torch
# linear_interpolator so the folded values are bit-exact vs. the reference).
# ----------------------------------------------------------------------------
_X32 = np.asarray(X_CURVE, dtype=np.float32)
_Y32 = np.asarray(Y_CURVE, dtype=np.float32)

# Constant VREF lookup (local_freq, 1/local_freq).
_vref32 = np.float32(VREF)
_li = int(np.argmin(np.abs(_X32 - _vref32)))        # == 6, no wraparound
_lslope = (_Y32[_li] - _Y32[_li - 1]) / (_X32[_li] - _X32[_li - 1])
LOCAL_FREQ = np.float32(_lslope * (_vref32 - _X32[_li - 1]) + _Y32[_li - 1])
INV_LOCAL = np.float32(np.float32(1.0) / LOCAL_FREQ)

# Per-segment interpolation constants: slope_k, x_{k-1}, y_{k-1}
# (k == 0 wraps to index 17, reproducing torch's negative indexing).
_SEG_SLOPE = np.empty(N_CURVE, dtype=np.float32)
_SEG_XM = np.empty(N_CURVE, dtype=np.float32)
_SEG_YM = np.empty(N_CURVE, dtype=np.float32)
for _k in range(N_CURVE):
    _km1 = (_k - 1) % N_CURVE
    _SEG_SLOPE[_k] = (_Y32[_k] - _Y32[_km1]) / (_X32[_k] - _X32[_km1])
    _SEG_XM[_k] = _X32[_km1]
    _SEG_YM[_k] = _Y32[_km1]


# ----------------------------------------------------------------------------
# In-kernel helpers (pure jnp, traced inside the Pallas kernel)
# ----------------------------------------------------------------------------
def _lin_interp(v):
    """linear_interpolator() via uniform-grid index arithmetic + ONE select chain.

    v : (TR, 128) query plane. Nearest index = round((v-x0)/dx) with
    torch.argmin first-index tie-breaking reproduced via ceil(t - 0.5),
    clamped to [0, 17]. A single unrolled 17-step compare/select chain picks
    the trace-time-folded (slope, x_{k-1}, y_{k-1}) per segment; the final
    expression stays slope*(v - x_m) + y_m (bit-exact vs. the reference).
    """
    t = (v - X0) * INV_DX
    idx = jnp.clip(jnp.ceil(t - 0.5), 0.0, float(N_CURVE - 1)).astype(jnp.int32)
    slope = jnp.full(v.shape, jnp.float32(_SEG_SLOPE[0]), jnp.float32)
    x_m = jnp.full(v.shape, jnp.float32(_SEG_XM[0]), jnp.float32)
    y_m = jnp.full(v.shape, jnp.float32(_SEG_YM[0]), jnp.float32)
    for k in range(1, N_CURVE):
        m = idx == k
        slope = jnp.where(m, jnp.float32(_SEG_SLOPE[k]), slope)
        x_m = jnp.where(m, jnp.float32(_SEG_XM[k]), x_m)
        y_m = jnp.where(m, jnp.float32(_SEG_YM[k]), y_m)
    return slope * (v - x_m) + y_m


def _pdn_layer(x):
    """PDNNeuron_Layer.forward (single stateless step), x : (TR, 128) plane."""
    vco = jnp.maximum(VCO_INIT + x * VCO_CHANGE_PER_VOLT - VCO_INIT * DECAY, 0.0)
    freq = _lin_interp(vco)
    if USE_APPROX_RECIP:
        inv_freq = pl.reciprocal(freq, approx=True)   # EUP slot, not bit-exact
    else:
        inv_freq = 1.0 / freq                         # exact, matches reference
    # local_freq (VREF lookup) and 1/local_freq are compile-time constants.
    phase = (freq - LOCAL_FREQ) * 2.0 * PI * (INV_LOCAL + inv_freq)
    return jnp.where(phase >= PI, jnp.float32(SPIKE_AMPLITUDE), jnp.float32(0.0))


def _linear_row(w_ref, row, h0, h1, h2):
    """One output row of nn.Linear(bias=False): scalar*plane FMAs on the VPU.

    w_ref : (21,) f32 SMEM ref holding [w_in; w_h1; w_h2] row-major.
    h0/h1/h2 : (TR, 128) input channel planes. `row` is a static int.
    """
    b = 3 * row
    return w_ref[b] * h0 + w_ref[b + 1] * h1 + w_ref[b + 2] * h2


# ----------------------------------------------------------------------------
# Fused, batched Chip.forward kernel (channel-plane layout)
# ----------------------------------------------------------------------------
def chip_kernel(w_ref, x_ref, out_ref):
    # x_ref : (3, TR, 128) input channel planes; w_ref : (21,) SMEM scalars.
    a0 = _pdn_layer(x_ref[0])                       # input_layer
    a1 = _pdn_layer(x_ref[1])
    a2 = _pdn_layer(x_ref[2])
    b0 = _pdn_layer(_linear_row(w_ref, 0, a0, a1, a2))   # input_weights + hidden_layer1
    b1 = _pdn_layer(_linear_row(w_ref, 1, a0, a1, a2))
    b2 = _pdn_layer(_linear_row(w_ref, 2, a0, a1, a2))
    c0 = _pdn_layer(_linear_row(w_ref, 3, b0, b1, b2))   # hidden_weights1 + hidden_layer2
    c1 = _pdn_layer(_linear_row(w_ref, 4, b0, b1, b2))
    c2 = _pdn_layer(_linear_row(w_ref, 5, b0, b1, b2))
    # hidden_weights2 + output_layer -> (TR, 128), lane-dense unmasked store.
    out_ref[...] = _pdn_layer(_linear_row(w_ref, 6, c0, c1, c2))


def chip_forward(x_batch, w_in, w_h1, w_h2, *, block_b=4096):
    """Batched chip forward.

    x_batch : (B, 3) input voltage vectors -> (B,) spike outputs, each matching
    a single stateless PyTorch Chip.forward call. The batch fills both the
    sublane and lane axes (channel-plane layout); B must be a multiple of
    block_b, and block_b a multiple of 1024 (so the sublane tile is a
    multiple of 8).
    """
    B = x_batch.shape[0]
    assert x_batch.shape == (B, 3)
    assert block_b % 1024 == 0 and B % block_b == 0
    R = B // 128
    TR = block_b // 128

    # Channel-plane layout: x_planes[c, r, l] = x_batch[r*128 + l, c].
    # TODO(synk): callers that already hold channel-major data should pass it
    # directly to skip this wrapper-side transpose (pure HBM overhead).
    x_planes = jnp.transpose(
        jnp.asarray(x_batch, jnp.float32).reshape(R, 128, 3), (2, 0, 1))

    # Packed weights, flattened row-major: [w_in(3x3); w_h1(3x3); w_h2(1x3)].
    w_flat = jnp.concatenate(
        [jnp.asarray(w_in, jnp.float32).reshape(-1),
         jnp.asarray(w_h1, jnp.float32).reshape(-1),
         jnp.asarray(w_h2, jnp.float32).reshape(-1)], axis=0)   # (21,)

    out = pl.pallas_call(
        chip_kernel,
        out_shape=jax.ShapeDtypeStruct((R, 128), jnp.float32),
        grid_spec=pltpu.PrefetchScalarGridSpec(
            num_scalar_prefetch=0,
            grid=(B // block_b,),
            in_specs=[
                # Weights live whole in SMEM; read as scalars in the kernel.
                pl.BlockSpec(memory_space=pltpu.MemorySpace.SMEM),
                # (3, TR, 128) input channel planes per grid step.
                pl.BlockSpec((3, TR, 128), lambda b: (0, b, 0)),
            ],
            out_specs=pl.BlockSpec((TR, 128), lambda b: (b, 0)),
        ),
        compiler_params=pltpu.CompilerParams(
            dimension_semantics=("parallel",)),
    )(w_flat, x_planes)
    return out.reshape(B)


# ----------------------------------------------------------------------------
# Pure-JAX reference (mirrors the PyTorch code) for verification
# ----------------------------------------------------------------------------
def _ref_lin_interp(x, xv, yv):
    a = jnp.abs(xv[None, :] - x[:, None])
    idx = jnp.argmin(a, axis=1)
    idx_m1 = (idx - 1) % xv.shape[0]
    slope = (yv[idx] - yv[idx_m1]) / (xv[idx] - xv[idx_m1])
    return slope * (x - xv[idx_m1]) + yv[idx_m1]


def _ref_neuron(x, xv, yv):
    vco = jnp.maximum(VCO_INIT + x * VCO_CHANGE_PER_VOLT - VCO_INIT * DECAY, 0.0)
    freq = _ref_lin_interp(vco, xv, yv)
    local = _ref_lin_interp(jnp.full_like(x, VREF), xv, yv)
    phase = (freq - local) * 2.0 * PI * (1.0 / local + 1.0 / freq)
    return jnp.where(phase >= PI, 1.0, 0.0).astype(jnp.float32)


def _ref_chip_one(x, xv, yv, w_in, w_h1, w_h2):
    h = _ref_neuron(x, xv, yv)
    h = w_in @ h
    h = _ref_neuron(h, xv, yv)
    h = w_h1 @ h
    h = _ref_neuron(h, xv, yv)
    h = w_h2 @ h
    return _ref_neuron(h, xv, yv)


# ----------------------------------------------------------------------------
if __name__ == "__main__":
    xv = jnp.asarray(X_CURVE, dtype=jnp.float32)
    yv = jnp.asarray(Y_CURVE, dtype=jnp.float32)

    key = jax.random.PRNGKey(0)
    k_in, k_h1, k_h2, k_x = jax.random.split(key, 4)

    # nn.Linear(in=3, out=*) weights, bias=False; deterministic uniform init
    bound = 1.0 / math.sqrt(3.0)
    w_in = jax.random.uniform(k_in, (3, 3), jnp.float32, -bound, bound)   # Linear(3,3)
    w_h1 = jax.random.uniform(k_h1, (3, 3), jnp.float32, -bound, bound)   # Linear(3,3)
    w_h2 = jax.random.uniform(k_h2, (1, 3), jnp.float32, -bound, bound)   # Linear(3,1)

    # Batch of independent (3,) input voltage vectors. Two grid steps so
    # dimension_semantics=("parallel",) can shard across v7x's 2 TensorCores.
    B = 8192
    block_b = 4096
    x_batch = jax.random.uniform(k_x, (B, 3), jnp.float32, 0.0, 0.25)

    out = chip_forward(x_batch, w_in, w_h1, w_h2, block_b=block_b)
    out = jax.block_until_ready(out)

    ref = jax.vmap(lambda x: _ref_chip_one(x, xv, yv, w_in, w_h1, w_h2))(x_batch)
    ref = ref.reshape(B)

    assert out.shape == (B,), out.shape
    assert jnp.allclose(out, ref, atol=1e-5), (out, ref)

    print("KERNEL_OK")
</pallas_src>

<mosaic_0001>
module attributes {stable_mosaic.version = 11 : i64} {
  func.func @chip_kernel(%arg0: i32, %arg1: memref<21xf32, #tpu.memory_space<smem>>, %arg2: memref<3x32x128xf32, #tpu.memory_space<vmem>>, %arg3: memref<32x128xf32, #tpu.memory_space<vmem>>) attributes {dimension_semantics = [#tpu.dimension_semantics<parallel>], iteration_bounds = array<i64: 2>, scalar_prefetch = 0 : i64, scratch_operands = 0 : i64, tpu.core_type = #tpu.core_type<tc>, window_params = [{transform_indices = @transform_0, window_bounds = array<i64: 21>}, {transform_indices = @transform_1, window_bounds = array<i64: 3, 32, 128>}, {transform_indices = @transform_2, window_bounds = array<i64: 32, 128>}]} {
    %c0 = arith.constant 0 : index
    %c0_0 = arith.constant 0 : index
    %c0_1 = arith.constant 0 : index
    %0 = vector.load %arg2[%c0, %c0_0, %c0_1] : memref<3x32x128xf32, #tpu.memory_space<vmem>>, vector<1x32x128xf32>
    %1 = vector.shape_cast %0 : vector<1x32x128xf32> to vector<32x128xf32>
    %cst = arith.constant 1.000000e+00 : f32
    %2 = vector.broadcast %cst : f32 to vector<32x128xf32>
    %3 = arith.mulf %1, %2 : vector<32x128xf32>
    %cst_2 = arith.constant 1.500000e-01 : f32
    %4 = vector.broadcast %cst_2 : f32 to vector<32x128xf32>
    %5 = arith.addf %4, %3 : vector<32x128xf32>
    %cst_3 = arith.constant 1.500000e-02 : f32
    %6 = vector.broadcast %cst_3 : f32 to vector<32x128xf32>
    %7 = arith.subf %5, %6 : vector<32x128xf32>
    %cst_4 = arith.constant 0.000000e+00 : f32
    %8 = vector.broadcast %cst_4 : f32 to vector<32x128xf32>
    %9 = arith.maximumf %7, %8 : vector<32x128xf32>
    %cst_5 = arith.constant 5.250000e-02 : f32
    %10 = vector.broadcast %cst_5 : f32 to vector<32x128xf32>
    %11 = arith.subf %9, %10 : vector<32x128xf32>
    %cst_6 = arith.constant 57.1428566 : f32
    %12 = vector.broadcast %cst_6 : f32 to vector<32x128xf32>
    %13 = arith.mulf %11, %12 : vector<32x128xf32>
    %cst_7 = arith.constant 5.000000e-01 : f32
    %14 = vector.broadcast %cst_7 : f32 to vector<32x128xf32>
    %15 = arith.subf %13, %14 : vector<32x128xf32>
    %16 = math.ceil %15 : vector<32x128xf32>
    %cst_8 = arith.constant 0.000000e+00 : f32
    %cst_9 = arith.constant 1.700000e+01 : f32
    %17 = vector.broadcast %cst_8 : f32 to vector<32x128xf32>
    %18 = arith.maximumf %17, %16 : vector<32x128xf32>
    %19 = vector.broadcast %cst_9 : f32 to vector<32x128xf32>
    %20 = arith.minimumf %19, %18 : vector<32x128xf32>
    %21 = arith.fptosi %20 : vector<32x128xf32> to vector<32x128xi32>
    %cst_10 = arith.constant 0x4CB74CCB : f32
    %22 = vector.broadcast %cst_10 : f32 to vector<32x128xf32>
    %cst_11 = arith.constant 3.500000e-01 : f32
    %23 = vector.broadcast %cst_11 : f32 to vector<32x128xf32>
    %cst_12 = arith.constant 0x4BDF0B1A : f32
    %24 = vector.broadcast %cst_12 : f32 to vector<32x128xf32>
    %c1_i32 = arith.constant 1 : i32
    %25 = vector.broadcast %c1_i32 : i32 to vector<32x128xi32>
    %26 = arith.cmpi eq, %21, %25 : vector<32x128xi32>
    %cst_13 = arith.constant 6699988.5 : f32
    %27 = vector.broadcast %cst_13 : f32 to vector<32x128xf32>
    %28 = arith.select %26, %27, %22 : vector<32x128xi1>, vector<32x128xf32>
    %cst_14 = arith.constant 5.250000e-02 : f32
    %29 = vector.broadcast %cst_14 : f32 to vector<32x128xf32>
    %30 = arith.select %26, %29, %23 : vector<32x128xi1>, vector<32x128xf32>
    %cst_15 = arith.constant 644404.063 : f32
    %31 = vector.broadcast %cst_15 : f32 to vector<32x128xf32>
    %32 = arith.select %26, %31, %24 : vector<32x128xi1>, vector<32x128xf32>
    %c2_i32 = arith.constant 2 : i32
    %33 = vector.broadcast %c2_i32 : i32 to vector<32x128xi32>
    %34 = arith.cmpi eq, %21, %33 : vector<32x128xi32>
    %cst_16 = arith.constant 0x4B1B525D : f32
    %35 = vector.broadcast %cst_16 : f32 to vector<32x128xf32>
    %36 = arith.select %34, %35, %28 : vector<32x128xi1>, vector<32x128xf32>
    %cst_17 = arith.constant 7.000000e-02 : f32
    %37 = vector.broadcast %cst_17 : f32 to vector<32x128xf32>
    %38 = arith.select %34, %37, %30 : vector<32x128xi1>, vector<32x128xf32>
    %cst_18 = arith.constant 761653.875 : f32
    %39 = vector.broadcast %cst_18 : f32 to vector<32x128xf32>
    %40 = arith.select %34, %39, %32 : vector<32x128xi1>, vector<32x128xf32>
    %c3_i32 = arith.constant 3 : i32
    %41 = vector.broadcast %c3_i32 : i32 to vector<32x128xi32>
    %42 = arith.cmpi eq, %21, %41 : vector<32x128xi32>
    %cst_19 = arith.constant 0x4B5069A9 : f32
    %43 = vector.broadcast %cst_19 : f32 to vector<32x128xf32>
    %44 = arith.select %42, %43, %36 : vector<32x128xi1>, vector<32x128xf32>
    %cst_20 = arith.constant 0.0874999985 : f32
    %45 = vector.broadcast %cst_20 : f32 to vector<32x128xf32>
    %46 = arith.select %42, %45, %38 : vector<32x128xi1>, vector<32x128xf32>
    %cst_21 = arith.constant 939789.25 : f32
    %47 = vector.broadcast %cst_21 : f32 to vector<32x128xf32>
    %48 = arith.select %42, %47, %40 : vector<32x128xi1>, vector<32x128xf32>
    %c4_i32 = arith.constant 4 : i32
    %49 = vector.broadcast %c4_i32 : i32 to vector<32x128xi32>
    %50 = arith.cmpi eq, %21, %49 : vector<32x128xi32>
    %cst_22 = arith.constant 0x4B8B5557 : f32
    %51 = vector.broadcast %cst_22 : f32 to vector<32x128xf32>
    %52 = arith.select %50, %51, %44 : vector<32x128xi1>, vector<32x128xf32>
    %cst_23 = arith.constant 1.050000e-01 : f32
    %53 = vector.broadcast %cst_23 : f32 to vector<32x128xf32>
    %54 = arith.select %50, %53, %46 : vector<32x128xi1>, vector<32x128xf32>
    %cst_24 = arith.constant 1178813.63 : f32
    %55 = vector.broadcast %cst_24 : f32 to vector<32x128xf32>
    %56 = arith.select %50, %55, %48 : vector<32x128xi1>, vector<32x128xf32>
    %c5_i32 = arith.constant 5 : i32
    %57 = vector.broadcast %c5_i32 : i32 to vector<32x128xi32>
    %58 = arith.cmpi eq, %21, %57 : vector<32x128xi32>
    %cst_25 = arith.constant 0x4BBF6315 : f32
    %59 = vector.broadcast %cst_25 : f32 to vector<32x128xf32>
    %60 = arith.select %58, %59, %52 : vector<32x128xi1>, vector<32x128xf32>
    %cst_26 = arith.constant 1.225000e-01 : f32
    %61 = vector.broadcast %cst_26 : f32 to vector<32x128xf32>
    %62 = arith.select %58, %61, %54 : vector<32x128xi1>, vector<32x128xf32>
    %cst_27 = arith.constant 0x49B6E958 : f32
    %63 = vector.broadcast %cst_27 : f32 to vector<32x128xf32>
    %64 = arith.select %58, %63, %56 : vector<32x128xi1>, vector<32x128xf32>
    %c6_i32 = arith.constant 6 : i32
    %65 = vector.broadcast %c6_i32 : i32 to vector<32x128xi32>
    %66 = arith.cmpi eq, %21, %65 : vector<32x128xi32>
    %cst_28 = arith.constant 0x4C04C5FB : f32
    %67 = vector.broadcast %cst_28 : f32 to vector<32x128xf32>
    %68 = arith.select %66, %67, %60 : vector<32x128xi1>, vector<32x128xf32>
    %cst_29 = arith.constant 1.400000e-01 : f32
    %69 = vector.broadcast %cst_29 : f32 to vector<32x128xf32>
    %70 = arith.select %66, %69, %62 : vector<32x128xi1>, vector<32x128xf32>
    %cst_30 = arith.constant 1937406.88 : f32
    %71 = vector.broadcast %cst_30 : f32 to vector<32x128xf32>
    %72 = arith.select %66, %71, %64 : vector<32x128xi1>, vector<32x128xf32>
    %c7_i32 = arith.constant 7 : i32
    %73 = vector.broadcast %c7_i32 : i32 to vector<32x128xi32>
    %74 = arith.cmpi eq, %21, %73 : vector<32x128xi32>
    %cst_31 = arith.constant 0x4C34800A : f32
    %75 = vector.broadcast %cst_31 : f32 to vector<32x128xf32>
    %76 = arith.select %74, %75, %68 : vector<32x128xi1>, vector<32x128xf32>
    %cst_32 = arith.constant 1.575000e-01 : f32
    %77 = vector.broadcast %cst_32 : f32 to vector<32x128xf32>
    %78 = arith.select %74, %77, %70 : vector<32x128xi1>, vector<32x128xf32>
    %cst_33 = arith.constant 2546507.25 : f32
    %79 = vector.broadcast %cst_33 : f32 to vector<32x128xf32>
    %80 = arith.select %74, %79, %72 : vector<32x128xi1>, vector<32x128xf32>
    %c8_i32 = arith.constant 8 : i32
    %81 = vector.broadcast %c8_i32 : i32 to vector<32x128xi32>
    %82 = arith.cmpi eq, %21, %81 : vector<32x128xi32>
    %cst_34 = arith.constant 0x4C72808B : f32
    %83 = vector.broadcast %cst_34 : f32 to vector<32x128xf32>
    %84 = arith.select %82, %83, %76 : vector<32x128xi1>, vector<32x128xf32>
    %cst_35 = arith.constant 1.750000e-01 : f32
    %85 = vector.broadcast %cst_35 : f32 to vector<32x128xf32>
    %86 = arith.select %82, %85, %78 : vector<32x128xi1>, vector<32x128xf32>
    %cst_36 = arith.constant 3374555.25 : f32
    %87 = vector.broadcast %cst_36 : f32 to vector<32x128xf32>
    %88 = arith.select %82, %87, %80 : vector<32x128xi1>, vector<32x128xf32>
    %c9_i32 = arith.constant 9 : i32
    %89 = vector.broadcast %c9_i32 : i32 to vector<32x128xi32>
    %90 = arith.cmpi eq, %21, %89 : vector<32x128xi32>
    %cst_37 = arith.constant 0x4CA21B59 : f32
    %91 = vector.broadcast %cst_37 : f32 to vector<32x128xf32>
    %92 = arith.select %90, %91, %84 : vector<32x128xi1>, vector<32x128xf32>
    %cst_38 = arith.constant 1.925000e-01 : f32
    %93 = vector.broadcast %cst_38 : f32 to vector<32x128xf32>
    %94 = arith.select %90, %93, %86 : vector<32x128xi1>, vector<32x128xf32>
    %cst_39 = arith.constant 4487038.5 : f32
    %95 = vector.broadcast %cst_39 : f32 to vector<32x128xf32>
    %96 = arith.select %90, %95, %88 : vector<32x128xi1>, vector<32x128xf32>
    %c10_i32 = arith.constant 10 : i32
    %97 = vector.broadcast %c10_i32 : i32 to vector<32x128xi32>
    %98 = arith.cmpi eq, %21, %97 : vector<32x128xi32>
    %cst_40 = arith.constant 0x4CD64D26 : f32
    %99 = vector.broadcast %cst_40 : f32 to vector<32x128xf32>
    %100 = arith.select %98, %99, %92 : vector<32x128xi1>, vector<32x128xf32>
    %cst_41 = arith.constant 2.100000e-01 : f32
    %101 = vector.broadcast %cst_41 : f32 to vector<32x128xf32>
    %102 = arith.select %98, %101, %94 : vector<32x128xi1>, vector<32x128xf32>
    %cst_42 = arith.constant 0x4AB652CE : f32
    %103 = vector.broadcast %cst_42 : f32 to vector<32x128xf32>
    %104 = arith.select %98, %103, %96 : vector<32x128xi1>, vector<32x128xf32>
    %c11_i32 = arith.constant 11 : i32
    %105 = vector.broadcast %c11_i32 : i32 to vector<32x128xi32>
    %106 = arith.cmpi eq, %21, %105 : vector<32x128xi32>
    %cst_43 = arith.constant 0x4D0A2F85 : f32
    %107 = vector.broadcast %cst_43 : f32 to vector<32x128xf32>
    %108 = arith.select %106, %107, %100 : vector<32x128xi1>, vector<32x128xf32>
    %cst_44 = arith.constant 2.275000e-01 : f32
    %109 = vector.broadcast %cst_44 : f32 to vector<32x128xf32>
    %110 = arith.select %106, %109, %102 : vector<32x128xi1>, vector<32x128xf32>
    %cst_45 = arith.constant 7.940600e+06 : f32
    %111 = vector.broadcast %cst_45 : f32 to vector<32x128xf32>
    %112 = arith.select %106, %111, %104 : vector<32x128xi1>, vector<32x128xf32>
    %c12_i32 = arith.constant 12 : i32
    %113 = vector.broadcast %c12_i32 : i32 to vector<32x128xi32>
    %114 = arith.cmpi eq, %21, %113 : vector<32x128xi32>
    %cst_46 = arith.constant 0x4D2AA536 : f32
    %115 = vector.broadcast %cst_46 : f32 to vector<32x128xf32>
    %116 = arith.select %114, %115, %108 : vector<32x128xi1>, vector<32x128xf32>
    %cst_47 = arith.constant 2.450000e-01 : f32
    %117 = vector.broadcast %cst_47 : f32 to vector<32x128xf32>
    %118 = arith.select %114, %117, %110 : vector<32x128xi1>, vector<32x128xf32>
    %cst_48 = arith.constant 0x4B1FDB1D : f32
    %119 = vector.broadcast %cst_48 : f32 to vector<32x128xf32>
    %120 = arith.select %114, %119, %112 : vector<32x128xi1>, vector<32x128xf32>
    %c13_i32 = arith.constant 13 : i32
    %121 = vector.broadcast %c13_i32 : i32 to vector<32x128xi32>
    %122 = arith.cmpi eq, %21, %121 : vector<32x128xi32>
    %cst_49 = arith.constant 0x4D443E30 : f32
    %123 = vector.broadcast %cst_49 : f32 to vector<32x128xf32>
    %124 = arith.select %122, %123, %116 : vector<32x128xi1>, vector<32x128xf32>
    %cst_50 = arith.constant 2.625000e-01 : f32
    %125 = vector.broadcast %cst_50 : f32 to vector<32x128xf32>
    %126 = arith.select %122, %125, %118 : vector<32x128xi1>, vector<32x128xf32>
    %cst_51 = arith.constant 0x4B4FA2F6 : f32
    %127 = vector.broadcast %cst_51 : f32 to vector<32x128xf32>
    %128 = arith.select %122, %127, %120 : vector<32x128xi1>, vector<32x128xf32>
    %c14_i32 = arith.constant 14 : i32
    %129 = vector.broadcast %c14_i32 : i32 to vector<32x128xi32>
    %130 = arith.cmpi eq, %21, %129 : vector<32x128xi32>
    %cst_52 = arith.constant 0x4D4BA701 : f32
    %131 = vector.broadcast %cst_52 : f32 to vector<32x128xf32>
    %132 = arith.select %130, %131, %124 : vector<32x128xi1>, vector<32x128xf32>
    %cst_53 = arith.constant 2.800000e-01 : f32
    %133 = vector.broadcast %cst_53 : f32 to vector<32x128xf32>
    %134 = arith.select %130, %133, %126 : vector<32x128xi1>, vector<32x128xf32>
    %cst_54 = arith.constant 0x4B834AD5 : f32
    %135 = vector.broadcast %cst_54 : f32 to vector<32x128xf32>
    %136 = arith.select %130, %135, %128 : vector<32x128xi1>, vector<32x128xf32>
    %c15_i32 = arith.constant 15 : i32
    %137 = vector.broadcast %c15_i32 : i32 to vector<32x128xi32>
    %138 = arith.cmpi eq, %21, %137 : vector<32x128xi32>
    %cst_55 = arith.constant 0x4D3A9BDD : f32
    %139 = vector.broadcast %cst_55 : f32 to vector<32x128xf32>
    %140 = arith.select %138, %139, %132 : vector<32x128xi1>, vector<32x128xf32>
    %cst_56 = arith.constant 2.975000e-01 : f32
    %141 = vector.broadcast %cst_56 : f32 to vector<32x128xf32>
    %142 = arith.select %138, %141, %134 : vector<32x128xi1>, vector<32x128xf32>
    %cst_57 = arith.constant 0x4B9FCDBD : f32
    %143 = vector.broadcast %cst_57 : f32 to vector<32x128xf32>
    %144 = arith.select %138, %143, %136 : vector<32x128xi1>, vector<32x128xf32>
    %c16_i32 = arith.constant 16 : i32
    %145 = vector.broadcast %c16_i32 : i32 to vector<32x128xi32>
    %146 = arith.cmpi eq, %21, %145 : vector<32x128xi32>
    %cst_58 = arith.constant 0x4D17E5C5 : f32
    %147 = vector.broadcast %cst_58 : f32 to vector<32x128xf32>
    %148 = arith.select %146, %147, %140 : vector<32x128xi1>, vector<32x128xf32>
    %cst_59 = arith.constant 3.150000e-01 : f32
    %149 = vector.broadcast %cst_59 : f32 to vector<32x128xf32>
    %150 = arith.select %146, %149, %142 : vector<32x128xi1>, vector<32x128xf32>
    %cst_60 = arith.constant 0x4BB9EDCB : f32
    %151 = vector.broadcast %cst_60 : f32 to vector<32x128xf32>
    %152 = arith.select %146, %151, %144 : vector<32x128xi1>, vector<32x128xf32>
    %c17_i32 = arith.constant 17 : i32
    %153 = vector.broadcast %c17_i32 : i32 to vector<32x128xi32>
    %154 = arith.cmpi eq, %21, %153 : vector<32x128xi32>
    %cst_61 = arith.constant 0x4CE26970 : f32
    %155 = vector.broadcast %cst_61 : f32 to vector<32x128xf32>
    %156 = arith.select %154, %155, %148 : vector<32x128xi1>, vector<32x128xf32>
    %cst_62 = arith.constant 3.325000e-01 : f32
    %157 = vector.broadcast %cst_62 : f32 to vector<32x128xf32>
    %158 = arith.select %154, %157, %150 : vector<32x128xi1>, vector<32x128xf32>
    %cst_63 = arith.constant 0x4BCF31CE : f32
    %159 = vector.broadcast %cst_63 : f32 to vector<32x128xf32>
    %160 = arith.select %154, %159, %152 : vector<32x128xi1>, vector<32x128xf32>
    %161 = arith.subf %9, %158 : vector<32x128xf32>
    %162 = arith.mulf %156, %161 : vector<32x128xf32>
    %163 = arith.addf %162, %160 : vector<32x128xf32>
    %cst_64 = arith.constant 1.000000e+00 : f32
    %164 = vector.broadcast %cst_64 : f32 to vector<32x128xf32>
    %165 = arith.divf %164, %163 : vector<32x128xf32>
    %cst_65 = arith.constant 2285464.5 : f32
    %166 = vector.broadcast %cst_65 : f32 to vector<32x128xf32>
    %167 = arith.subf %163, %166 : vector<32x128xf32>
    %cst_66 = arith.constant 2.000000e+00 : f32
    %168 = vector.broadcast %cst_66 : f32 to vector<32x128xf32>
    %169 = arith.mulf %167, %168 : vector<32x128xf32>
    %cst_67 = arith.constant 3.14159274 : f32
    %170 = vector.broadcast %cst_67 : f32 to vector<32x128xf32>
    %171 = arith.mulf %169, %170 : vector<32x128xf32>
    %cst_68 = arith.constant 4.37547811E-7 : f32
    %172 = vector.broadcast %cst_68 : f32 to vector<32x128xf32>
    %173 = arith.addf %172, %165 : vector<32x128xf32>
    %174 = arith.mulf %171, %173 : vector<32x128xf32>
    %cst_69 = arith.constant 3.14159274 : f32
    %175 = vector.broadcast %cst_69 : f32 to vector<32x128xf32>
    %176 = arith.cmpf oge, %174, %175 : vector<32x128xf32>
    %cst_70 = arith.constant 1.000000e+00 : f32
    %cst_71 = arith.constant 0.000000e+00 : f32
    %177 = vector.broadcast %cst_70 : f32 to vector<32x128xf32>
    %178 = vector.broadcast %cst_71 : f32 to vector<32x128xf32>
    %179 = arith.select %176, %177, %178 : vector<32x128xi1>, vector<32x128xf32>
    %c1 = arith.constant 1 : index
    %c0_72 = arith.constant 0 : index
    %c0_73 = arith.constant 0 : index
    %180 = vector.load %arg2[%c1, %c0_72, %c0_73] : memref<3x32x128xf32, #tpu.memory_space<vmem>>, vector<1x32x128xf32>
    %181 = vector.shape_cast %180 : vector<1x32x128xf32> to vector<32x128xf32>
    %cst_74 = arith.constant 1.000000e+00 : f32
    %182 = vector.broadcast %cst_74 : f32 to vector<32x128xf32>
    %183 = arith.mulf %181, %182 : vector<32x128xf32>
    %cst_75 = arith.constant 1.500000e-01 : f32
    %184 = vector.broadcast %cst_75 : f32 to vector<32x128xf32>
    %185 = arith.addf %184, %183 : vector<32x128xf32>
    %cst_76 = arith.constant 1.500000e-02 : f32
    %186 = vector.broadcast %cst_76 : f32 to vector<32x128xf32>
    %187 = arith.subf %185, %186 : vector<32x128xf32>
    %cst_77 = arith.constant 0.000000e+00 : f32
    %188 = vector.broadcast %cst_77 : f32 to vector<32x128xf32>
    %189 = arith.maximumf %187, %188 : vector<32x128xf32>
    %cst_78 = arith.constant 5.250000e-02 : f32
    %190 = vector.broadcast %cst_78 : f32 to vector<32x128xf32>
    %191 = arith.subf %189, %190 : vector<32x128xf32>
    %cst_79 = arith.constant 57.1428566 : f32
    %192 = vector.broadcast %cst_79 : f32 to vector<32x128xf32>
    %193 = arith.mulf %191, %192 : vector<32x128xf32>
    %cst_80 = arith.constant 5.000000e-01 : f32
    %194 = vector.broadcast %cst_80 : f32 to vector<32x128xf32>
    %195 = arith.subf %193, %194 : vector<32x128xf32>
    %196 = math.ceil %195 : vector<32x128xf32>
    %cst_81 = arith.constant 0.000000e+00 : f32
    %cst_82 = arith.constant 1.700000e+01 : f32
    %197 = vector.broadcast %cst_81 : f32 to vector<32x128xf32>
    %198 = arith.maximumf %197, %196 : vector<32x128xf32>
    %199 = vector.broadcast %cst_82 : f32 to vector<32x128xf32>
    %200 = arith.minimumf %199, %198 : vector<32x128xf32>
    %201 = arith.fptosi %200 : vector<32x128xf32> to vector<32x128xi32>
    %cst_83 = arith.constant 0x4CB74CCB : f32
    %202 = vector.broadcast %cst_83 : f32 to vector<32x128xf32>
    %cst_84 = arith.constant 3.500000e-01 : f32
    %203 = vector.broadcast %cst_84 : f32 to vector<32x128xf32>
    %cst_85 = arith.constant 0x4BDF0B1A : f32
    %204 = vector.broadcast %cst_85 : f32 to vector<32x128xf32>
    %c1_i32_86 = arith.constant 1 : i32
    %205 = vector.broadcast %c1_i32_86 : i32 to vector<32x128xi32>
    %206 = arith.cmpi eq, %201, %205 : vector<32x128xi32>
    %cst_87 = arith.constant 6699988.5 : f32
    %207 = vector.broadcast %cst_87 : f32 to vector<32x128xf32>
    %208 = arith.select %206, %207, %202 : vector<32x128xi1>, vector<32x128xf32>
    %cst_88 = arith.constant 5.250000e-02 : f32
    %209 = vector.broadcast %cst_88 : f32 to vector<32x128xf32>
    %210 = arith.select %206, %209, %203 : vector<32x128xi1>, vector<32x128xf32>
    %cst_89 = arith.constant 644404.063 : f32
    %211 = vector.broadcast %cst_89 : f32 to vector<32x128xf32>
    %212 = arith.select %206, %211, %204 : vector<32x128xi1>, vector<32x128xf32>
    %c2_i32_90 = arith.constant 2 : i32
    %213 = vector.broadcast %c2_i32_90 : i32 to vector<32x128xi32>
    %214 = arith.cmpi eq, %201, %213 : vector<32x128xi32>
    %cst_91 = arith.constant 0x4B1B525D : f32
    %215 = vector.broadcast %cst_91 : f32 to vector<32x128xf32>
    %216 = arith.select %214, %215, %208 : vector<32x128xi1>, vector<32x128xf32>
    %cst_92 = arith.constant 7.000000e-02 : f32
    %217 = vector.broadcast %cst_92 : f32 to vector<32x128xf32>
    %218 = arith.select %214, %217, %210 : vector<32x128xi1>, vector<32x128xf32>
    %cst_93 = arith.constant 761653.875 : f32
    %219 = vector.broadcast %cst_93 : f32 to vector<32x128xf32>
    %220 = arith.select %214, %219, %212 : vector<32x128xi1>, vector<32x128xf32>
    %c3_i32_94 = arith.constant 3 : i32
    %221 = vector.broadcast %c3_i32_94 : i32 to vector<32x128xi32>
    %222 = arith.cmpi eq, %201, %221 : vector<32x128xi32>
    %cst_95 = arith.constant 0x4B5069A9 : f32
    %223 = vector.broadcast %cst_95 : f32 to vector<32x128xf32>
    %224 = arith.select %222, %223, %216 : vector<32x128xi1>, vector<32x128xf32>
    %cst_96 = arith.constant 0.0874999985 : f32
    %225 = vector.broadcast %cst_96 : f32 to vector<32x128xf32>
    %226 = arith.select %222, %225, %218 : vector<32x128xi1>, vector<32x128xf32>
    %cst_97 = arith.constant 939789.25 : f32
    %227 = vector.broadcast %cst_97 : f32 to vector<32x128xf32>
    %228 = arith.select %222, %227, %220 : vector<32x128xi1>, vector<32x128xf32>
    %c4_i32_98 = arith.constant 4 : i32
    %229 = vector.broadcast %c4_i32_98 : i32 to vector<32x128xi32>
    %230 = arith.cmpi eq, %201, %229 : vector<32x128xi32>
    %cst_99 = arith.constant 0x4B8B5557 : f32
    %231 = vector.broadcast %cst_99 : f32 to vector<32x128xf32>
    %232 = arith.select %230, %231, %224 : vector<32x128xi1>, vector<32x128xf32>
    %cst_100 = arith.constant 1.050000e-01 : f32
    %233 = vector.broadcast %cst_100 : f32 to vector<32x128xf32>
    %234 = arith.select %230, %233, %226 : vector<32x128xi1>, vector<32x128xf32>
    %cst_101 = arith.constant 1178813.63 : f32
    %235 = vector.broadcast %cst_101 : f32 to vector<32x128xf32>
    %236 = arith.select %230, %235, %228 : vector<32x128xi1>, vector<32x128xf32>
    %c5_i32_102 = arith.constant 5 : i32
    %237 = vector.broadcast %c5_i32_102 : i32 to vector<32x128xi32>
    %238 = arith.cmpi eq, %201, %237 : vector<32x128xi32>
    %cst_103 = arith.constant 0x4BBF6315 : f32
    %239 = vector.broadcast %cst_103 : f32 to vector<32x128xf32>
    %240 = arith.select %238, %239, %232 : vector<32x128xi1>, vector<32x128xf32>
    %cst_104 = arith.constant 1.225000e-01 : f32
    %241 = vector.broadcast %cst_104 : f32 to vector<32x128xf32>
    %242 = arith.select %238, %241, %234 : vector<32x128xi1>, vector<32x128xf32>
    %cst_105 = arith.constant 0x49B6E958 : f32
    %243 = vector.broadcast %cst_105 : f32 to vector<32x128xf32>
    %244 = arith.select %238, %243, %236 : vector<32x128xi1>, vector<32x128xf32>
    %c6_i32_106 = arith.constant 6 : i32
    %245 = vector.broadcast %c6_i32_106 : i32 to vector<32x128xi32>
    %246 = arith.cmpi eq, %201, %245 : vector<32x128xi32>
    %cst_107 = arith.constant 0x4C04C5FB : f32
    %247 = vector.broadcast %cst_107 : f32 to vector<32x128xf32>
    %248 = arith.select %246, %247, %240 : vector<32x128xi1>, vector<32x128xf32>
    %cst_108 = arith.constant 1.400000e-01 : f32
    %249 = vector.broadcast %cst_108 : f32 to vector<32x128xf32>
    %250 = arith.select %246, %249, %242 : vector<32x128xi1>, vector<32x128xf32>
    %cst_109 = arith.constant 1937406.88 : f32
    %251 = vector.broadcast %cst_109 : f32 to vector<32x128xf32>
    %252 = arith.select %246, %251, %244 : vector<32x128xi1>, vector<32x128xf32>
    %c7_i32_110 = arith.constant 7 : i32
    %253 = vector.broadcast %c7_i32_110 : i32 to vector<32x128xi32>
    %254 = arith.cmpi eq, %201, %253 : vector<32x128xi32>
    %cst_111 = arith.constant 0x4C34800A : f32
    %255 = vector.broadcast %cst_111 : f32 to vector<32x128xf32>
    %256 = arith.select %254, %255, %248 : vector<32x128xi1>, vector<32x128xf32>
    %cst_112 = arith.constant 1.575000e-01 : f32
    %257 = vector.broadcast %cst_112 : f32 to vector<32x128xf32>
    %258 = arith.select %254, %257, %250 : vector<32x128xi1>, vector<32x128xf32>
    %cst_113 = arith.constant 2546507.25 : f32
    %259 = vector.broadcast %cst_113 : f32 to vector<32x128xf32>
    %260 = arith.select %254, %259, %252 : vector<32x128xi1>, vector<32x128xf32>
    %c8_i32_114 = arith.constant 8 : i32
    %261 = vector.broadcast %c8_i32_114 : i32 to vector<32x128xi32>
    %262 = arith.cmpi eq, %201, %261 : vector<32x128xi32>
    %cst_115 = arith.constant 0x4C72808B : f32
    %263 = vector.broadcast %cst_115 : f32 to vector<32x128xf32>
    %264 = arith.select %262, %263, %256 : vector<32x128xi1>, vector<32x128xf32>
    %cst_116 = arith.constant 1.750000e-01 : f32
    %265 = vector.broadcast %cst_116 : f32 to vector<32x128xf32>
    %266 = arith.select %262, %265, %258 : vector<32x128xi1>, vector<32x128xf32>
    %cst_117 = arith.constant 3374555.25 : f32
    %267 = vector.broadcast %cst_117 : f32 to vector<32x128xf32>
    %268 = arith.select %262, %267, %260 : vector<32x128xi1>, vector<32x128xf32>
    %c9_i32_118 = arith.constant 9 : i32
    %269 = vector.broadcast %c9_i32_118 : i32 to vector<32x128xi32>
    %270 = arith.cmpi eq, %201, %269 : vector<32x128xi32>
    %cst_119 = arith.constant 0x4CA21B59 : f32
    %271 = vector.broadcast %cst_119 : f32 to vector<32x128xf32>
    %272 = arith.select %270, %271, %264 : vector<32x128xi1>, vector<32x128xf32>
    %cst_120 = arith.constant 1.925000e-01 : f32
    %273 = vector.broadcast %cst_120 : f32 to vector<32x128xf32>
    %274 = arith.select %270, %273, %266 : vector<32x128xi1>, vector<32x128xf32>
    %cst_121 = arith.constant 4487038.5 : f32
    %275 = vector.broadcast %cst_121 : f32 to vector<32x128xf32>
    %276 = arith.select %270, %275, %268 : vector<32x128xi1>, vector<32x128xf32>
    %c10_i32_122 = arith.constant 10 : i32
    %277 = vector.broadcast %c10_i32_122 : i32 to vector<32x128xi32>
    %278 = arith.cmpi eq, %201, %277 : vector<32x128xi32>
    %cst_123 = arith.constant 0x4CD64D26 : f32
    %279 = vector.broadcast %cst_123 : f32 to vector<32x128xf32>
    %280 = arith.select %278, %279, %272 : vector<32x128xi1>, vector<32x128xf32>
    %cst_124 = arith.constant 2.100000e-01 : f32
    %281 = vector.broadcast %cst_124 : f32 to vector<32x128xf32>
    %282 = arith.select %278, %281, %274 : vector<32x128xi1>, vector<32x128xf32>
    %cst_125 = arith.constant 0x4AB652CE : f32
    %283 = vector.broadcast %cst_125 : f32 to vector<32x128xf32>
    %284 = arith.select %278, %283, %276 : vector<32x128xi1>, vector<32x128xf32>
    %c11_i32_126 = arith.constant 11 : i32
    %285 = vector.broadcast %c11_i32_126 : i32 to vector<32x128xi32>
    %286 = arith.cmpi eq, %201, %285 : vector<32x128xi32>
    %cst_127 = arith.constant 0x4D0A2F85 : f32
    %287 = vector.broadcast %cst_127 : f32 to vector<32x128xf32>
    %288 = arith.select %286, %287, %280 : vector<32x128xi1>, vector<32x128xf32>
    %cst_128 = arith.constant 2.275000e-01 : f32
    %289 = vector.broadcast %cst_128 : f32 to vector<32x128xf32>
    %290 = arith.select %286, %289, %282 : vector<32x128xi1>, vector<32x128xf32>
    %cst_129 = arith.constant 7.940600e+06 : f32
    %291 = vector.broadcast %cst_129 : f32 to vector<32x128xf32>
    %292 = arith.select %286, %291, %284 : vector<32x128xi1>, vector<32x128xf32>
    %c12_i32_130 = arith.constant 12 : i32
    %293 = vector.broadcast %c12_i32_130 : i32 to vector<32x128xi32>
    %294 = arith.cmpi eq, %201, %293 : vector<32x128xi32>
    %cst_131 = arith.constant 0x4D2AA536 : f32
    %295 = vector.broadcast %cst_131 : f32 to vector<32x128xf32>
    %296 = arith.select %294, %295, %288 : vector<32x128xi1>, vector<32x128xf32>
    %cst_132 = arith.constant 2.450000e-01 : f32
    %297 = vector.broadcast %cst_132 : f32 to vector<32x128xf32>
    %298 = arith.select %294, %297, %290 : vector<32x128xi1>, vector<32x128xf32>
    %cst_133 = arith.constant 0x4B1FDB1D : f32
    %299 = vector.broadcast %cst_133 : f32 to vector<32x128xf32>
    %300 = arith.select %294, %299, %292 : vector<32x128xi1>, vector<32x128xf32>
    %c13_i32_134 = arith.constant 13 : i32
    %301 = vector.broadcast %c13_i32_134 : i32 to vector<32x128xi32>
    %302 = arith.cmpi eq, %201, %301 : vector<32x128xi32>
    %cst_135 = arith.constant 0x4D443E30 : f32
    %303 = vector.broadcast %cst_135 : f32 to vector<32x128xf32>
    %304 = arith.select %302, %303, %296 : vector<32x128xi1>, vector<32x128xf32>
    %cst_136 = arith.constant 2.625000e-01 : f32
    %305 = vector.broadcast %cst_136 : f32 to vector<32x128xf32>
    %306 = arith.select %302, %305, %298 : vector<32x128xi1>, vector<32x128xf32>
    %cst_137 = arith.constant 0x4B4FA2F6 : f32
    %307 = vector.broadcast %cst_137 : f32 to vector<32x128xf32>
    %308 = arith.select %302, %307, %300 : vector<32x128xi1>, vector<32x128xf32>
    %c14_i32_138 = arith.constant 14 : i32
    %309 = vector.broadcast %c14_i32_138 : i32 to vector<32x128xi32>
    %310 = arith.cmpi eq, %201, %309 : vector<32x128xi32>
    %cst_139 = arith.constant 0x4D4BA701 : f32
    %311 = vector.broadcast %cst_139 : f32 to vector<32x128xf32>
    %312 = arith.select %310, %311, %304 : vector<32x128xi1>, vector<32x128xf32>
    %cst_140 = arith.constant 2.800000e-01 : f32
    %313 = vector.broadcast %cst_140 : f32 to vector<32x128xf32>
    %314 = arith.select %310, %313, %306 : vector<32x128xi1>, vector<32x128xf32>
    %cst_141 = arith.constant 0x4B834AD5 : f32
    %315 = vector.broadcast %cst_141 : f32 to vector<32x128xf32>
    %316 = arith.select %310, %315, %308 : vector<32x128xi1>, vector<32x128xf32>
    %c15_i32_142 = arith.constant 15 : i32
    %317 = vector.broadcast %c15_i32_142 : i32 to vector<32x128xi32>
    %318 = arith.cmpi eq, %201, %317 : vector<32x128xi32>
    %cst_143 = arith.constant 0x4D3A9BDD : f32
    %319 = vector.broadcast %cst_143 : f32 to vector<32x128xf32>
    %320 = arith.select %318, %319, %312 : vector<32x128xi1>, vector<32x128xf32>
    %cst_144 = arith.constant 2.975000e-01 : f32
    %321 = vector.broadcast %cst_144 : f32 to vector<32x128xf32>
    %322 = arith.select %318, %321, %314 : vector<32x128xi1>, vector<32x128xf32>
    %cst_145 = arith.constant 0x4B9FCDBD : f32
    %323 = vector.broadcast %cst_145 : f32 to vector<32x128xf32>
    %324 = arith.select %318, %323, %316 : vector<32x128xi1>, vector<32x128xf32>
    %c16_i32_146 = arith.constant 16 : i32
    %325 = vector.broadcast %c16_i32_146 : i32 to vector<32x128xi32>
    %326 = arith.cmpi eq, %201, %325 : vector<32x128xi32>
    %cst_147 = arith.constant 0x4D17E5C5 : f32
    %327 = vector.broadcast %cst_147 : f32 to vector<32x128xf32>
    %328 = arith.select %326, %327, %320 : vector<32x128xi1>, vector<32x128xf32>
    %cst_148 = arith.constant 3.150000e-01 : f32
    %329 = vector.broadcast %cst_148 : f32 to vector<32x128xf32>
    %330 = arith.select %326, %329, %322 : vector<32x128xi1>, vector<32x128xf32>
    %cst_149 = arith.constant 0x4BB9EDCB : f32
    %331 = vector.broadcast %cst_149 : f32 to vector<32x128xf32>
    %332 = arith.select %326, %331, %324 : vector<32x128xi1>, vector<32x128xf32>
    %c17_i32_150 = arith.constant 17 : i32
    %333 = vector.broadcast %c17_i32_150 : i32 to vector<32x128xi32>
    %334 = arith.cmpi eq, %201, %333 : vector<32x128xi32>
    %cst_151 = arith.constant 0x4CE26970 : f32
    %335 = vector.broadcast %cst_151 : f32 to vector<32x128xf32>
    %336 = arith.select %334, %335, %328 : vector<32x128xi1>, vector<32x128xf32>
    %cst_152 = arith.constant 3.325000e-01 : f32
    %337 = vector.broadcast %cst_152 : f32 to vector<32x128xf32>
    %338 = arith.select %334, %337, %330 : vector<32x128xi1>, vector<32x128xf32>
    %cst_153 = arith.constant 0x4BCF31CE : f32
    %339 = vector.broadcast %cst_153 : f32 to vector<32x128xf32>
    %340 = arith.select %334, %339, %332 : vector<32x128xi1>, vector<32x128xf32>
    %341 = arith.subf %189, %338 : vector<32x128xf32>
    %342 = arith.mulf %336, %341 : vector<32x128xf32>
    %343 = arith.addf %342, %340 : vector<32x128xf32>
    %cst_154 = arith.constant 1.000000e+00 : f32
    %344 = vector.broadcast %cst_154 : f32 to vector<32x128xf32>
    %345 = arith.divf %344, %343 : vector<32x128xf32>
    %cst_155 = arith.constant 2285464.5 : f32
    %346 = vector.broadcast %cst_155 : f32 to vector<32x128xf32>
    %347 = arith.subf %343, %346 : vector<32x128xf32>
    %cst_156 = arith.constant 2.000000e+00 : f32
    %348 = vector.broadcast %cst_156 : f32 to vector<32x128xf32>
    %349 = arith.mulf %347, %348 : vector<32x128xf32>
    %cst_157 = arith.constant 3.14159274 : f32
    %350 = vector.broadcast %cst_157 : f32 to vector<32x128xf32>
    %351 = arith.mulf %349, %350 : vector<32x128xf32>
    %cst_158 = arith.constant 4.37547811E-7 : f32
    %352 = vector.broadcast %cst_158 : f32 to vector<32x128xf32>
    %353 = arith.addf %352, %345 : vector<32x128xf32>
    %354 = arith.mulf %351, %353 : vector<32x128xf32>
    %cst_159 = arith.constant 3.14159274 : f32
    %355 = vector.broadcast %cst_159 : f32 to vector<32x128xf32>
    %356 = arith.cmpf oge, %354, %355 : vector<32x128xf32>
    %cst_160 = arith.constant 1.000000e+00 : f32
    %cst_161 = arith.constant 0.000000e+00 : f32
    %357 = vector.broadcast %cst_160 : f32 to vector<32x128xf32>
    %358 = vector.broadcast %cst_161 : f32 to vector<32x128xf32>
    %359 = arith.select %356, %357, %358 : vector<32x128xi1>, vector<32x128xf32>
    %c2 = arith.constant 2 : index
    %c0_162 = arith.constant 0 : index
    %c0_163 = arith.constant 0 : index
    %360 = vector.load %arg2[%c2, %c0_162, %c0_163] : memref<3x32x128xf32, #tpu.memory_space<vmem>>, vector<1x32x128xf32>
    %361 = vector.shape_cast %360 : vector<1x32x128xf32> to vector<32x128xf32>
    %cst_164 = arith.constant 1.000000e+00 : f32
    %362 = vector.broadcast %cst_164 : f32 to vector<32x128xf32>
    %363 = arith.mulf %361, %362 : vector<32x128xf32>
    %cst_165 = arith.constant 1.500000e-01 : f32
    %364 = vector.broadcast %cst_165 : f32 to vector<32x128xf32>
    %365 = arith.addf %364, %363 : vector<32x128xf32>
    %cst_166 = arith.constant 1.500000e-02 : f32
    %366 = vector.broadcast %cst_166 : f32 to vector<32x128xf32>
    %367 = arith.subf %365, %366 : vector<32x128xf32>
    %cst_167 = arith.constant 0.000000e+00 : f32
    %368 = vector.broadcast %cst_167 : f32 to vector<32x128xf32>
    %369 = arith.maximumf %367, %368 : vector<32x128xf32>
    %cst_168 = arith.constant 5.250000e-02 : f32
    %370 = vector.broadcast %cst_168 : f32 to vector<32x128xf32>
    %371 = arith.subf %369, %370 : vector<32x128xf32>
    %cst_169 = arith.constant 57.1428566 : f32
    %372 = vector.broadcast %cst_169 : f32 to vector<32x128xf32>
    %373 = arith.mulf %371, %372 : vector<32x128xf32>
    %cst_170 = arith.constant 5.000000e-01 : f32
    %374 = vector.broadcast %cst_170 : f32 to vector<32x128xf32>
    %375 = arith.subf %373, %374 : vector<32x128xf32>
    %376 = math.ceil %375 : vector<32x128xf32>
    %cst_171 = arith.constant 0.000000e+00 : f32
    %cst_172 = arith.constant 1.700000e+01 : f32
    %377 = vector.broadcast %cst_171 : f32 to vector<32x128xf32>
    %378 = arith.maximumf %377, %376 : vector<32x128xf32>
    %379 = vector.broadcast %cst_172 : f32 to vector<32x128xf32>
    %380 = arith.minimumf %379, %378 : vector<32x128xf32>
    %381 = arith.fptosi %380 : vector<32x128xf32> to vector<32x128xi32>
    %cst_173 = arith.constant 0x4CB74CCB : f32
    %382 = vector.broadcast %cst_173 : f32 to vector<32x128xf32>
    %cst_174 = arith.constant 3.500000e-01 : f32
    %383 = vector.broadcast %cst_174 : f32 to vector<32x128xf32>
    %cst_175 = arith.constant 0x4BDF0B1A : f32
    %384 = vector.broadcast %cst_175 : f32 to vector<32x128xf32>
    %c1_i32_176 = arith.constant 1 : i32
    %385 = vector.broadcast %c1_i32_176 : i32 to vector<32x128xi32>
    %386 = arith.cmpi eq, %381, %385 : vector<32x128xi32>
    %cst_177 = arith.constant 6699988.5 : f32
    %387 = vector.broadcast %cst_177 : f32 to vector<32x128xf32>
    %388 = arith.select %386, %387, %382 : vector<32x128xi1>, vector<32x128xf32>
    %cst_178 = arith.constant 5.250000e-02 : f32
    %389 = vector.broadcast %cst_178 : f32 to vector<32x128xf32>
    %390 = arith.select %386, %389, %383 : vector<32x128xi1>, vector<32x128xf32>
    %cst_179 = arith.constant 644404.063 : f32
    %391 = vector.broadcast %cst_179 : f32 to vector<32x128xf32>
    %392 = arith.select %386, %391, %384 : vector<32x128xi1>, vector<32x128xf32>
    %c2_i32_180 = arith.constant 2 : i32
    %393 = vector.broadcast %c2_i32_180 : i32 to vector<32x128xi32>
    %394 = arith.cmpi eq, %381, %393 : vector<32x128xi32>
    %cst_181 = arith.constant 0x4B1B525D : f32
    %395 = vector.broadcast %cst_181 : f32 to vector<32x128xf32>
    %396 = arith.select %394, %395, %388 : vector<32x128xi1>, vector<32x128xf32>
    %cst_182 = arith.constant 7.000000e-02 : f32
    %397 = vector.broadcast %cst_182 : f32 to vector<32x128xf32>
    %398 = arith.select %394, %397, %390 : vector<32x128xi1>, vector<32x128xf32>
    %cst_183 = arith.constant 761653.875 : f32
    %399 = vector.broadcast %cst_183 : f32 to vector<32x128xf32>
    %400 = arith.select %394, %399, %392 : vector<32x128xi1>, vector<32x128xf32>
    %c3_i32_184 = arith.constant 3 : i32
    %401 = vector.broadcast %c3_i32_184 : i32 to vector<32x128xi32>
    %402 = arith.cmpi eq, %381, %401 : vector<32x128xi32>
    %cst_185 = arith.constant 0x4B5069A9 : f32
    %403 = vector.broadcast %cst_185 : f32 to vector<32x128xf32>
    %404 = arith.select %402, %403, %396 : vector<32x128xi1>, vector<32x128xf32>
    %cst_186 = arith.constant 0.0874999985 : f32
    %405 = vector.broadcast %cst_186 : f32 to vector<32x128xf32>
    %406 = arith.select %402, %405, %398 : vector<32x128xi1>, vector<32x128xf32>
    %cst_187 = arith.constant 939789.25 : f32
    %407 = vector.broadcast %cst_187 : f32 to vector<32x128xf32>
    %408 = arith.select %402, %407, %400 : vector<32x128xi1>, vector<32x128xf32>
    %c4_i32_188 = arith.constant 4 : i32
    %409 = vector.broadcast %c4_i32_188 : i32 to vector<32x128xi32>
    %410 = arith.cmpi eq, %381, %409 : vector<32x128xi32>
    %cst_189 = arith.constant 0x4B8B5557 : f32
    %411 = vector.broadcast %cst_189 : f32 to vector<32x128xf32>
    %412 = arith.select %410, %411, %404 : vector<32x128xi1>, vector<32x128xf32>
    %cst_190 = arith.constant 1.050000e-01 : f32
    %413 = vector.broadcast %cst_190 : f32 to vector<32x128xf32>
    %414 = arith.select %410, %413, %406 : vector<32x128xi1>, vector<32x128xf32>
    %cst_191 = arith.constant 1178813.63 : f32
    %415 = vector.broadcast %cst_191 : f32 to vector<32x128xf32>
    %416 = arith.select %410, %415, %408 : vector<32x128xi1>, vector<32x128xf32>
    %c5_i32_192 = arith.constant 5 : i32
    %417 = vector.broadcast %c5_i32_192 : i32 to vector<32x128xi32>
    %418 = arith.cmpi eq, %381, %417 : vector<32x128xi32>
    %cst_193 = arith.constant 0x4BBF6315 : f32
    %419 = vector.broadcast %cst_193 : f32 to vector<32x128xf32>
    %420 = arith.select %418, %419, %412 : vector<32x128xi1>, vector<32x128xf32>
    %cst_194 = arith.constant 1.225000e-01 : f32
    %421 = vector.broadcast %cst_194 : f32 to vector<32x128xf32>
    %422 = arith.select %418, %421, %414 : vector<32x128xi1>, vector<32x128xf32>
    %cst_195 = arith.constant 0x49B6E958 : f32
    %423 = vector.broadcast %cst_195 : f32 to vector<32x128xf32>
    %424 = arith.select %418, %423, %416 : vector<32x128xi1>, vector<32x128xf32>
    %c6_i32_196 = arith.constant 6 : i32
    %425 = vector.broadcast %c6_i32_196 : i32 to vector<32x128xi32>
    %426 = arith.cmpi eq, %381, %425 : vector<32x128xi32>
    %cst_197 = arith.constant 0x4C04C5FB : f32
    %427 = vector.broadcast %cst_197 : f32 to vector<32x128xf32>
    %428 = arith.select %426, %427, %420 : vector<32x128xi1>, vector<32x128xf32>
    %cst_198 = arith.constant 1.400000e-01 : f32
    %429 = vector.broadcast %cst_198 : f32 to vector<32x128xf32>
    %430 = arith.select %426, %429, %422 : vector<32x128xi1>, vector<32x128xf32>
    %cst_199 = arith.constant 1937406.88 : f32
    %431 = vector.broadcast %cst_199 : f32 to vector<32x128xf32>
    %432 = arith.select %426, %431, %424 : vector<32x128xi1>, vector<32x128xf32>
    %c7_i32_200 = arith.constant 7 : i32
    %433 = vector.broadcast %c7_i32_200 : i32 to vector<32x128xi32>
    %434 = arith.cmpi eq, %381, %433 : vector<32x128xi32>
    %cst_201 = arith.constant 0x4C34800A : f32
    %435 = vector.broadcast %cst_201 : f32 to vector<32x128xf32>
    %436 = arith.select %434, %435, %428 : vector<32x128xi1>, vector<32x128xf32>
    %cst_202 = arith.constant 1.575000e-01 : f32
    %437 = vector.broadcast %cst_202 : f32 to vector<32x128xf32>
    %438 = arith.select %434, %437, %430 : vector<32x128xi1>, vector<32x128xf32>
    %cst_203 = arith.constant 2546507.25 : f32
    %439 = vector.broadcast %cst_203 : f32 to vector<32x128xf32>
    %440 = arith.select %434, %439, %432 : vector<32x128xi1>, vector<32x128xf32>
    %c8_i32_204 = arith.constant 8 : i32
    %441 = vector.broadcast %c8_i32_204 : i32 to vector<32x128xi32>
    %442 = arith.cmpi eq, %381, %441 : vector<32x128xi32>
    %cst_205 = arith.constant 0x4C72808B : f32
    %443 = vector.broadcast %cst_205 : f32 to vector<32x128xf32>
    %444 = arith.select %442, %443, %436 : vector<32x128xi1>, vector<32x128xf32>
    %cst_206 = arith.constant 1.750000e-01 : f32
    %445 = vector.broadcast %cst_206 : f32 to vector<32x128xf32>
    %446 = arith.select %442, %445, %438 : vector<32x128xi1>, vector<32x128xf32>
    %cst_207 = arith.constant 3374555.25 : f32
    %447 = vector.broadcast %cst_207 : f32 to vector<32x128xf32>
    %448 = arith.select %442, %447, %440 : vector<32x128xi1>, vector<32x128xf32>
    %c9_i32_208 = arith.constant 9 : i32
    %449 = vector.broadcast %c9_i32_208 : i32 to vector<32x128xi32>
    %450 = arith.cmpi eq, %381, %449 : vector<32x128xi32>
    %cst_209 = arith.constant 0x4CA21B59 : f32
    %451 = vector.broadcast %cst_209 : f32 to vector<32x128xf32>
    %452 = arith.select %450, %451, %444 : vector<32x128xi1>, vector<32x128xf32>
    %cst_210 = arith.constant 1.925000e-01 : f32
    %453 = vector.broadcast %cst_210 : f32 to vector<32x128xf32>
    %454 = arith.select %450, %453, %446 : vector<32x128xi1>, vector<32x128xf32>
    %cst_211 = arith.constant 4487038.5 : f32
    %455 = vector.broadcast %cst_211 : f32 to vector<32x128xf32>
    %456 = arith.select %450, %455, %448 : vector<32x128xi1>, vector<32x128xf32>
    %c10_i32_212 = arith.constant 10 : i32
    %457 = vector.broadcast %c10_i32_212 : i32 to vector<32x128xi32>
    %458 = arith.cmpi eq, %381, %457 : vector<32x128xi32>
    %cst_213 = arith.constant 0x4CD64D26 : f32
    %459 = vector.broadcast %cst_213 : f32 to vector<32x128xf32>
    %460 = arith.select %458, %459, %452 : vector<32x128xi1>, vector<32x128xf32>
    %cst_214 = arith.constant 2.100000e-01 : f32
    %461 = vector.broadcast %cst_214 : f32 to vector<32x128xf32>
    %462 = arith.select %458, %461, %454 : vector<32x128xi1>, vector<32x128xf32>
    %cst_215 = arith.constant 0x4AB652CE : f32
    %463 = vector.broadcast %cst_215 : f32 to vector<32x128xf32>
    %464 = arith.select %458, %463, %456 : vector<32x128xi1>, vector<32x128xf32>
    %c11_i32_216 = arith.constant 11 : i32
    %465 = vector.broadcast %c11_i32_216 : i32 to vector<32x128xi32>
    %466 = arith.cmpi eq, %381, %465 : vector<32x128xi32>
    %cst_217 = arith.constant 0x4D0A2F85 : f32
    %467 = vector.broadcast %cst_217 : f32 to vector<32x128xf32>
    %468 = arith.select %466, %467, %460 : vector<32x128xi1>, vector<32x128xf32>
    %cst_218 = arith.constant 2.275000e-01 : f32
    %469 = vector.broadcast %cst_218 : f32 to vector<32x128xf32>
    %470 = arith.select %466, %469, %462 : vector<32x128xi1>, vector<32x128xf32>
    %cst_219 = arith.constant 7.940600e+06 : f32
    %471 = vector.broadcast %cst_219 : f32 to vector<32x128xf32>
    %472 = arith.select %466, %471, %464 : vector<32x128xi1>, vector<32x128xf32>
    %c12_i32_220 = arith.constant 12 : i32
    %473 = vector.broadcast %c12_i32_220 : i32 to vector<32x128xi32>
    %474 = arith.cmpi eq, %381, %473 : vector<32x128xi32>
    %cst_221 = arith.constant 0x4D2AA536 : f32
    %475 = vector.broadcast %cst_221 : f32 to vector<32x128xf32>
    %476 = arith.select %474, %475, %468 : vector<32x128xi1>, vector<32x128xf32>
    %cst_222 = arith.constant 2.450000e-01 : f32
    %477 = vector.broadcast %cst_222 : f32 to vector<32x128xf32>
    %478 = arith.select %474, %477, %470 : vector<32x128xi1>, vector<32x128xf32>
    %cst_223 = arith.constant 0x4B1FDB1D : f32
    %479 = vector.broadcast %cst_223 : f32 to vector<32x128xf32>
    %480 = arith.select %474, %479, %472 : vector<32x128xi1>, vector<32x128xf32>
    %c13_i32_224 = arith.constant 13 : i32
    %481 = vector.broadcast %c13_i32_224 : i32 to vector<32x128xi32>
    %482 = arith.cmpi eq, %381, %481 : vector<32x128xi32>
    %cst_225 = arith.constant 0x4D443E30 : f32
    %483 = vector.broadcast %cst_225 : f32 to vector<32x128xf32>
    %484 = arith.select %482, %483, %476 : vector<32x128xi1>, vector<32x128xf32>
    %cst_226 = arith.constant 2.625000e-01 : f32
    %485 = vector.broadcast %cst_226 : f32 to vector<32x128xf32>
    %486 = arith.select %482, %485, %478 : vector<32x128xi1>, vector<32x128xf32>
    %cst_227 = arith.constant 0x4B4FA2F6 : f32
    %487 = vector.broadcast %cst_227 : f32 to vector<32x128xf32>
    %488 = arith.select %482, %487, %480 : vector<32x128xi1>, vector<32x128xf32>
    %c14_i32_228 = arith.constant 14 : i32
    %489 = vector.broadcast %c14_i32_228 : i32 to vector<32x128xi32>
    %490 = arith.cmpi eq, %381, %489 : vector<32x128xi32>
    %cst_229 = arith.constant 0x4D4BA701 : f32
    %491 = vector.broadcast %cst_229 : f32 to vector<32x128xf32>
    %492 = arith.select %490, %491, %484 : vector<32x128xi1>, vector<32x128xf32>
    %cst_230 = arith.constant 2.800000e-01 : f32
    %493 = vector.broadcast %cst_230 : f32 to vector<32x128xf32>
    %494 = arith.select %490, %493, %486 : vector<32x128xi1>, vector<32x128xf32>
    %cst_231 = arith.constant 0x4B834AD5 : f32
    %495 = vector.broadcast %cst_231 : f32 to vector<32x128xf32>
    %496 = arith.select %490, %495, %488 : vector<32x128xi1>, vector<32x128xf32>
    %c15_i32_232 = arith.constant 15 : i32
    %497 = vector.broadcast %c15_i32_232 : i32 to vector<32x128xi32>
    %498 = arith.cmpi eq, %381, %497 : vector<32x128xi32>
    %cst_233 = arith.constant 0x4D3A9BDD : f32
    %499 = vector.broadcast %cst_233 : f32 to vector<32x128xf32>
    %500 = arith.select %498, %499, %492 : vector<32x128xi1>, vector<32x128xf32>
    %cst_234 = arith.constant 2.975000e-01 : f32
    %501 = vector.broadcast %cst_234 : f32 to vector<32x128xf32>
    %502 = arith.select %498, %501, %494 : vector<32x128xi1>, vector<32x128xf32>
    %cst_235 = arith.constant 0x4B9FCDBD : f32
    %503 = vector.broadcast %cst_235 : f32 to vector<32x128xf32>
    %504 = arith.select %498, %503, %496 : vector<32x128xi1>, vector<32x128xf32>
    %c16_i32_236 = arith.constant 16 : i32
    %505 = vector.broadcast %c16_i32_236 : i32 to vector<32x128xi32>
    %506 = arith.cmpi eq, %381, %505 : vector<32x128xi32>
    %cst_237 = arith.constant 0x4D17E5C5 : f32
    %507 = vector.broadcast %cst_237 : f32 to vector<32x128xf32>
    %508 = arith.select %506, %507, %500 : vector<32x128xi1>, vector<32x128xf32>
    %cst_238 = arith.constant 3.150000e-01 : f32
    %509 = vector.broadcast %cst_238 : f32 to vector<32x128xf32>
    %510 = arith.select %506, %509, %502 : vector<32x128xi1>, vector<32x128xf32>
    %cst_239 = arith.constant 0x4BB9EDCB : f32
    %511 = vector.broadcast %cst_239 : f32 to vector<32x128xf32>
    %512 = arith.select %506, %511, %504 : vector<32x128xi1>, vector<32x128xf32>
    %c17_i32_240 = arith.constant 17 : i32
    %513 = vector.broadcast %c17_i32_240 : i32 to vector<32x128xi32>
    %514 = arith.cmpi eq, %381, %513 : vector<32x128xi32>
    %cst_241 = arith.constant 0x4CE26970 : f32
    %515 = vector.broadcast %cst_241 : f32 to vector<32x128xf32>
    %516 = arith.select %514, %515, %508 : vector<32x128xi1>, vector<32x128xf32>
    %cst_242 = arith.constant 3.325000e-01 : f32
    %517 = vector.broadcast %cst_242 : f32 to vector<32x128xf32>
    %518 = arith.select %514, %517, %510 : vector<32x128xi1>, vector<32x128xf32>
    %cst_243 = arith.constant 0x4BCF31CE : f32
    %519 = vector.broadcast %cst_243 : f32 to vector<32x128xf32>
    %520 = arith.select %514, %519, %512 : vector<32x128xi1>, vector<32x128xf32>
    %521 = arith.subf %369, %518 : vector<32x128xf32>
    %522 = arith.mulf %516, %521 : vector<32x128xf32>
    %523 = arith.addf %522, %520 : vector<32x128xf32>
    %cst_244 = arith.constant 1.000000e+00 : f32
    %524 = vector.broadcast %cst_244 : f32 to vector<32x128xf32>
    %525 = arith.divf %524, %523 : vector<32x128xf32>
    %cst_245 = arith.constant 2285464.5 : f32
    %526 = vector.broadcast %cst_245 : f32 to vector<32x128xf32>
    %527 = arith.subf %523, %526 : vector<32x128xf32>
    %cst_246 = arith.constant 2.000000e+00 : f32
    %528 = vector.broadcast %cst_246 : f32 to vector<32x128xf32>
    %529 = arith.mulf %527, %528 : vector<32x128xf32>
    %cst_247 = arith.constant 3.14159274 : f32
    %530 = vector.broadcast %cst_247 : f32 to vector<32x128xf32>
    %531 = arith.mulf %529, %530 : vector<32x128xf32>
    %cst_248 = arith.constant 4.37547811E-7 : f32
    %532 = vector.broadcast %cst_248 : f32 to vector<32x128xf32>
    %533 = arith.addf %532, %525 : vector<32x128xf32>
    %534 = arith.mulf %531, %533 : vector<32x128xf32>
    %cst_249 = arith.constant 3.14159274 : f32
    %535 = vector.broadcast %cst_249 : f32 to vector<32x128xf32>
    %536 = arith.cmpf oge, %534, %535 : vector<32x128xf32>
    %cst_250 = arith.constant 1.000000e+00 : f32
    %cst_251 = arith.constant 0.000000e+00 : f32
    %537 = vector.broadcast %cst_250 : f32 to vector<32x128xf32>
    %538 = vector.broadcast %cst_251 : f32 to vector<32x128xf32>
    %539 = arith.select %536, %537, %538 : vector<32x128xi1>, vector<32x128xf32>
    %c0_252 = arith.constant 0 : index
    %540 = memref.load %arg1[%c0_252] : memref<21xf32, #tpu.memory_space<smem>>
    %541 = vector.broadcast %540 : f32 to vector<32x128xf32>
    %542 = arith.mulf %541, %179 : vector<32x128xf32>
    %c1_253 = arith.constant 1 : index
    %543 = memref.load %arg1[%c1_253] : memref<21xf32, #tpu.memory_space<smem>>
    %544 = vector.broadcast %543 : f32 to vector<32x128xf32>
    %545 = arith.mulf %544, %359 : vector<32x128xf32>
    %546 = arith.addf %542, %545 : vector<32x128xf32>
    %c2_254 = arith.constant 2 : index
    %547 = memref.load %arg1[%c2_254] : memref<21xf32, #tpu.memory_space<smem>>
    %548 = vector.broadcast %547 : f32 to vector<32x128xf32>
    %549 = arith.mulf %548, %539 : vector<32x128xf32>
    %550 = arith.addf %546, %549 : vector<32x128xf32>
    %cst_255 = arith.constant 1.000000e+00 : f32
    %551 = vector.broadcast %cst_255 : f32 to vector<32x128xf32>
    %552 = arith.mulf %550, %551 : vector<32x128xf32>
    %cst_256 = arith.constant 1.500000e-01 : f32
    %553 = vector.broadcast %cst_256 : f32 to vector<32x128xf32>
    %554 = arith.addf %553, %552 : vector<32x128xf32>
    %cst_257 = arith.constant 1.500000e-02 : f32
    %555 = vector.broadcast %cst_257 : f32 to vector<32x128xf32>
    %556 = arith.subf %554, %555 : vector<32x128xf32>
    %cst_258 = arith.constant 0.000000e+00 : f32
    %557 = vector.broadcast %cst_258 : f32 to vector<32x128xf32>
    %558 = arith.maximumf %556, %557 : vector<32x128xf32>
    %cst_259 = arith.constant 5.250000e-02 : f32
    %559 = vector.broadcast %cst_259 : f32 to vector<32x128xf32>
    %560 = arith.subf %558, %559 : vector<32x128xf32>
    %cst_260 = arith.constant 57.1428566 : f32
    %561 = vector.broadcast %cst_260 : f32 to vector<32x128xf32>
    %562 = arith.mulf %560, %561 : vector<32x128xf32>
    %cst_261 = arith.constant 5.000000e-01 : f32
    %563 = vector.broadcast %cst_261 : f32 to vector<32x128xf32>
    %564 = arith.subf %562, %563 : vector<32x128xf32>
    %565 = math.ceil %564 : vector<32x128xf32>
    %cst_262 = arith.constant 0.000000e+00 : f32
    %cst_263 = arith.constant 1.700000e+01 : f32
    %566 = vector.broadcast %cst_262 : f32 to vector<32x128xf32>
    %567 = arith.maximumf %566, %565 : vector<32x128xf32>
    %568 = vector.broadcast %cst_263 : f32 to vector<32x128xf32>
    %569 = arith.minimumf %568, %567 : vector<32x128xf32>
    %570 = arith.fptosi %569 : vector<32x128xf32> to vector<32x128xi32>
    %cst_264 = arith.constant 0x4CB74CCB : f32
    %571 = vector.broadcast %cst_264 : f32 to vector<32x128xf32>
    %cst_265 = arith.constant 3.500000e-01 : f32
    %572 = vector.broadcast %cst_265 : f32 to vector<32x128xf32>
    %cst_266 = arith.constant 0x4BDF0B1A : f32
    %573 = vector.broadcast %cst_266 : f32 to vector<32x128xf32>
    %c1_i32_267 = arith.constant 1 : i32
    %574 = vector.broadcast %c1_i32_267 : i32 to vector<32x128xi32>
    %575 = arith.cmpi eq, %570, %574 : vector<32x128xi32>
    %cst_268 = arith.constant 6699988.5 : f32
    %576 = vector.broadcast %cst_268 : f32 to vector<32x128xf32>
    %577 = arith.select %575, %576, %571 : vector<32x128xi1>, vector<32x128xf32>
    %cst_269 = arith.constant 5.250000e-02 : f32
    %578 = vector.broadcast %cst_269 : f32 to vector<32x128xf32>
    %579 = arith.select %575, %578, %572 : vector<32x128xi1>, vector<32x128xf32>
    %cst_270 = arith.constant 644404.063 : f32
    %580 = vector.broadcast %cst_270 : f32 to vector<32x128xf32>
    %581 = arith.select %575, %580, %573 : vector<32x128xi1>, vector<32x128xf32>
    %c2_i32_271 = arith.constant 2 : i32
    %582 = vector.broadcast %c2_i32_271 : i32 to vector<32x128xi32>
    %583 = arith.cmpi eq, %570, %582 : vector<32x128xi32>
    %cst_272 = arith.constant 0x4B1B525D : f32
    %584 = vector.broadcast %cst_272 : f32 to vector<32x128xf32>
    %585 = arith.select %583, %584, %577 : vector<32x128xi1>, vector<32x128xf32>
    %cst_273 = arith.constant 7.000000e-02 : f32
    %586 = vector.broadcast %cst_273 : f32 to vector<32x128xf32>
    %587 = arith.select %583, %586, %579 : vector<32x128xi1>, vector<32x128xf32>
    %cst_274 = arith.constant 761653.875 : f32
    %588 = vector.broadcast %cst_274 : f32 to vector<32x128xf32>
    %589 = arith.select %583, %588, %581 : vector<32x128xi1>, vector<32x128xf32>
    %c3_i32_275 = arith.constant 3 : i32
    %590 = vector.broadcast %c3_i32_275 : i32 to vector<32x128xi32>
    %591 = arith.cmpi eq, %570, %590 : vector<32x128xi32>
    %cst_276 = arith.constant 0x4B5069A9 : f32
    %592 = vector.broadcast %cst_276 : f32 to vector<32x128xf32>
    %593 = arith.select %591, %592, %585 : vector<32x128xi1>, vector<32x128xf32>
    %cst_277 = arith.constant 0.0874999985 : f32
    %594 = vector.broadcast %cst_277 : f32 to vector<32x128xf32>
    %595 = arith.select %591, %594, %587 : vector<32x128xi1>, vector<32x128xf32>
    %cst_278 = arith.constant 939789.25 : f32
    %596 = vector.broadcast %cst_278 : f32 to vector<32x128xf32>
    %597 = arith.select %591, %596, %589 : vector<32x128xi1>, vector<32x128xf32>
    %c4_i32_279 = arith.constant 4 : i32
    %598 = vector.broadcast %c4_i32_279 : i32 to vector<32x128xi32>
    %599 = arith.cmpi eq, %570, %598 : vector<32x128xi32>
    %cst_280 = arith.constant 0x4B8B5557 : f32
    %600 = vector.broadcast %cst_280 : f32 to vector<32x128xf32>
    %601 = arith.select %599, %600, %593 : vector<32x128xi1>, vector<32x128xf32>
    %cst_281 = arith.constant 1.050000e-01 : f32
    %602 = vector.broadcast %cst_281 : f32 to vector<32x128xf32>
    %603 = arith.select %599, %602, %595 : vector<32x128xi1>, vector<32x128xf32>
    %cst_282 = arith.constant 1178813.63 : f32
    %604 = vector.broadcast %cst_282 : f32 to vector<32x128xf32>
    %605 = arith.select %599, %604, %597 : vector<32x128xi1>, vector<32x128xf32>
    %c5_i32_283 = arith.constant 5 : i32
    %606 = vector.broadcast %c5_i32_283 : i32 to vector<32x128xi32>
    %607 = arith.cmpi eq, %570, %606 : vector<32x128xi32>
    %cst_284 = arith.constant 0x4BBF6315 : f32
    %608 = vector.broadcast %cst_284 : f32 to vector<32x128xf32>
    %609 = arith.select %607, %608, %601 : vector<32x128xi1>, vector<32x128xf32>
    %cst_285 = arith.constant 1.225000e-01 : f32
    %610 = vector.broadcast %cst_285 : f32 to vector<32x128xf32>
    %611 = arith.select %607, %610, %603 : vector<32x128xi1>, vector<32x128xf32>
    %cst_286 = arith.constant 0x49B6E958 : f32
    %612 = vector.broadcast %cst_286 : f32 to vector<32x128xf32>
    %613 = arith.select %607, %612, %605 : vector<32x128xi1>, vector<32x128xf32>
    %c6_i32_287 = arith.constant 6 : i32
    %614 = vector.broadcast %c6_i32_287 : i32 to vector<32x128xi32>
    %615 = arith.cmpi eq, %570, %614 : vector<32x128xi32>
    %cst_288 = arith.constant 0x4C04C5FB : f32
    %616 = vector.broadcast %cst_288 : f32 to vector<32x128xf32>
    %617 = arith.select %615, %616, %609 : vector<32x128xi1>, vector<32x128xf32>
    %cst_289 = arith.constant 1.400000e-01 : f32
    %618 = vector.broadcast %cst_289 : f32 to vector<32x128xf32>
    %619 = arith.select %615, %618, %611 : vector<32x128xi1>, vector<32x128xf32>
    %cst_290 = arith.constant 1937406.88 : f32
    %620 = vector.broadcast %cst_290 : f32 to vector<32x128xf32>
    %621 = arith.select %615, %620, %613 : vector<32x128xi1>, vector<32x128xf32>
    %c7_i32_291 = arith.constant 7 : i32
    %622 = vector.broadcast %c7_i32_291 : i32 to vector<32x128xi32>
    %623 = arith.cmpi eq, %570, %622 : vector<32x128xi32>
    %cst_292 = arith.constant 0x4C34800A : f32
    %624 = vector.broadcast %cst_292 : f32 to vector<32x128xf32>
    %625 = arith.select %623, %624, %617 : vector<32x128xi1>, vector<32x128xf32>
    %cst_293 = arith.constant 1.575000e-01 : f32
    %626 = vector.broadcast %cst_293 : f32 to vector<32x128xf32>
    %627 = arith.select %623, %626, %619 : vector<32x128xi1>, vector<32x128xf32>
    %cst_294 = arith.constant 2546507.25 : f32
    %628 = vector.broadcast %cst_294 : f32 to vector<32x128xf32>
    %629 = arith.select %623, %628, %621 : vector<32x128xi1>, vector<32x128xf32>
    %c8_i32_295 = arith.constant 8 : i32
    %630 = vector.broadcast %c8_i32_295 : i32 to vector<32x128xi32>
    %631 = arith.cmpi eq, %570, %630 : vector<32x128xi32>
    %cst_296 = arith.constant 0x4C72808B : f32
    %632 = vector.broadcast %cst_296 : f32 to vector<32x128xf32>
    %633 = arith.select %631, %632, %625 : vector<32x128xi1>, vector<32x128xf32>
    %cst_297 = arith.constant 1.750000e-01 : f32
    %634 = vector.broadcast %cst_297 : f32 to vector<32x128xf32>
    %635 = arith.select %631, %634, %627 : vector<32x128xi1>, vector<32x128xf32>
    %cst_298 = arith.constant 3374555.25 : f32
    %636 = vector.broadcast %cst_298 : f32 to vector<32x128xf32>
    %637 = arith.select %631, %636, %629 : vector<32x128xi1>, vector<32x128xf32>
    %c9_i32_299 = arith.constant 9 : i32
    %638 = vector.broadcast %c9_i32_299 : i32 to vector<32x128xi32>
    %639 = arith.cmpi eq, %570, %638 : vector<32x128xi32>
    %cst_300 = arith.constant 0x4CA21B59 : f32
    %640 = vector.broadcast %cst_300 : f32 to vector<32x128xf32>
    %641 = arith.select %639, %640, %633 : vector<32x128xi1>, vector<32x128xf32>
    %cst_301 = arith.constant 1.925000e-01 : f32
    %642 = vector.broadcast %cst_301 : f32 to vector<32x128xf32>
    %643 = arith.select %639, %642, %635 : vector<32x128xi1>, vector<32x128xf32>
    %cst_302 = arith.constant 4487038.5 : f32
    %644 = vector.broadcast %cst_302 : f32 to vector<32x128xf32>
    %645 = arith.select %639, %644, %637 : vector<32x128xi1>, vector<32x128xf32>
    %c10_i32_303 = arith.constant 10 : i32
    %646 = vector.broadcast %c10_i32_303 : i32 to vector<32x128xi32>
    %647 = arith.cmpi eq, %570, %646 : vector<32x128xi32>
    %cst_304 = arith.constant 0x4CD64D26 : f32
    %648 = vector.broadcast %cst_304 : f32 to vector<32x128xf32>
    %649 = arith.select %647, %648, %641 : vector<32x128xi1>, vector<32x128xf32>
    %cst_305 = arith.constant 2.100000e-01 : f32
    %650 = vector.broadcast %cst_305 : f32 to vector<32x128xf32>
    %651 = arith.select %647, %650, %643 : vector<32x128xi1>, vector<32x128xf32>
    %cst_306 = arith.constant 0x4AB652CE : f32
    %652 = vector.broadcast %cst_306 : f32 to vector<32x128xf32>
    %653 = arith.select %647, %652, %645 : vector<32x128xi1>, vector<32x128xf32>
    %c11_i32_307 = arith.constant 11 : i32
    %654 = vector.broadcast %c11_i32_307 : i32 to vector<32x128xi32>
    %655 = arith.cmpi eq, %570, %654 : vector<32x128xi32>
    %cst_308 = arith.constant 0x4D0A2F85 : f32
    %656 = vector.broadcast %cst_308 : f32 to vector<32x128xf32>
    %657 = arith.select %655, %656, %649 : vector<32x128xi1>, vector<32x128xf32>
    %cst_309 = arith.constant 2.275000e-01 : f32
    %658 = vector.broadcast %cst_309 : f32 to vector<32x128xf32>
    %659 = arith.select %655, %658, %651 : vector<32x128xi1>, vector<32x128xf32>
    %cst_310 = arith.constant 7.940600e+06 : f32
    %660 = vector.broadcast %cst_310 : f32 to vector<32x128xf32>
    %661 = arith.select %655, %660, %653 : vector<32x128xi1>, vector<32x128xf32>
    %c12_i32_311 = arith.constant 12 : i32
    %662 = vector.broadcast %c12_i32_311 : i32 to vector<32x128xi32>
    %663 = arith.cmpi eq, %570, %662 : vector<32x128xi32>
    %cst_312 = arith.constant 0x4D2AA536 : f32
    %664 = vector.broadcast %cst_312 : f32 to vector<32x128xf32>
    %665 = arith.select %663, %664, %657 : vector<32x128xi1>, vector<32x128xf32>
    %cst_313 = arith.constant 2.450000e-01 : f32
    %666 = vector.broadcast %cst_313 : f32 to vector<32x128xf32>
    %667 = arith.select %663, %666, %659 : vector<32x128xi1>, vector<32x128xf32>
    %cst_314 = arith.constant 0x4B1FDB1D : f32
    %668 = vector.broadcast %cst_314 : f32 to vector<32x128xf32>
    %669 = arith.select %663, %668, %661 : vector<32x128xi1>, vector<32x128xf32>
    %c13_i32_315 = arith.constant 13 : i32
    %670 = vector.broadcast %c13_i32_315 : i32 to vector<32x128xi32>
    %671 = arith.cmpi eq, %570, %670 : vector<32x128xi32>
    %cst_316 = arith.constant 0x4D443E30 : f32
    %672 = vector.broadcast %cst_316 : f32 to vector<32x128xf32>
    %673 = arith.select %671, %672, %665 : vector<32x128xi1>, vector<32x128xf32>
    %cst_317 = arith.constant 2.625000e-01 : f32
    %674 = vector.broadcast %cst_317 : f32 to vector<32x128xf32>
    %675 = arith.select %671, %674, %667 : vector<32x128xi1>, vector<32x128xf32>
    %cst_318 = arith.constant 0x4B4FA2F6 : f32
    %676 = vector.broadcast %cst_318 : f32 to vector<32x128xf32>
    %677 = arith.select %671, %676, %669 : vector<32x128xi1>, vector<32x128xf32>
    %c14_i32_319 = arith.constant 14 : i32
    %678 = vector.broadcast %c14_i32_319 : i32 to vector<32x128xi32>
    %679 = arith.cmpi eq, %570, %678 : vector<32x128xi32>
    %cst_320 = arith.constant 0x4D4BA701 : f32
    %680 = vector.broadcast %cst_320 : f32 to vector<32x128xf32>
    %681 = arith.select %679, %680, %673 : vector<32x128xi1>, vector<32x128xf32>
    %cst_321 = arith.constant 2.800000e-01 : f32
    %682 = vector.broadcast %cst_321 : f32 to vector<32x128xf32>
    %683 = arith.select %679, %682, %675 : vector<32x128xi1>, vector<32x128xf32>
    %cst_322 = arith.constant 0x4B834AD5 : f32
    %684 = vector.broadcast %cst_322 : f32 to vector<32x128xf32>
    %685 = arith.select %679, %684, %677 : vector<32x128xi1>, vector<32x128xf32>
    %c15_i32_323 = arith.constant 15 : i32
    %686 = vector.broadcast %c15_i32_323 : i32 to vector<32x128xi32>
    %687 = arith.cmpi eq, %570, %686 : vector<32x128xi32>
    %cst_324 = arith.constant 0x4D3A9BDD : f32
    %688 = vector.broadcast %cst_324 : f32 to vector<32x128xf32>
    %689 = arith.select %687, %688, %681 : vector<32x128xi1>, vector<32x128xf32>
    %cst_325 = arith.constant 2.975000e-01 : f32
    %690 = vector.broadcast %cst_325 : f32 to vector<32x128xf32>
    %691 = arith.select %687, %690, %683 : vector<32x128xi1>, vector<32x128xf32>
    %cst_326 = arith.constant 0x4B9FCDBD : f32
    %692 = vector.broadcast %cst_326 : f32 to vector<32x128xf32>
    %693 = arith.select %687, %692, %685 : vector<32x128xi1>, vector<32x128xf32>
    %c16_i32_327 = arith.constant 16 : i32
    %694 = vector.broadcast %c16_i32_327 : i32 to vector<32x128xi32>
    %695 = arith.cmpi eq, %570, %694 : vector<32x128xi32>
    %cst_328 = arith.constant 0x4D17E5C5 : f32
    %696 = vector.broadcast %cst_328 : f32 to vector<32x128xf32>
    %697 = arith.select %695, %696, %689 : vector<32x128xi1>, vector<32x128xf32>
    %cst_329 = arith.constant 3.150000e-01 : f32
    %698 = vector.broadcast %cst_329 : f32 to vector<32x128xf32>
    %699 = arith.select %695, %698, %691 : vector<32x128xi1>, vector<32x128xf32>
    %cst_330 = arith.constant 0x4BB9EDCB : f32
    %700 = vector.broadcast %cst_330 : f32 to vector<32x128xf32>
    %701 = arith.select %695, %700, %693 : vector<32x128xi1>, vector<32x128xf32>
    %c17_i32_331 = arith.constant 17 : i32
    %702 = vector.broadcast %c17_i32_331 : i32 to vector<32x128xi32>
    %703 = arith.cmpi eq, %570, %702 : vector<32x128xi32>
    %cst_332 = arith.constant 0x4CE26970 : f32
    %704 = vector.broadcast %cst_332 : f32 to vector<32x128xf32>
    %705 = arith.select %703, %704, %697 : vector<32x128xi1>, vector<32x128xf32>
    %cst_333 = arith.constant 3.325000e-01 : f32
    %706 = vector.broadcast %cst_333 : f32 to vector<32x128xf32>
    %707 = arith.select %703, %706, %699 : vector<32x128xi1>, vector<32x128xf32>
    %cst_334 = arith.constant 0x4BCF31CE : f32
    %708 = vector.broadcast %cst_334 : f32 to vector<32x128xf32>
    %709 = arith.select %703, %708, %701 : vector<32x128xi1>, vector<32x128xf32>
    %710 = arith.subf %558, %707 : vector<32x128xf32>
    %711 = arith.mulf %705, %710 : vector<32x128xf32>
    %712 = arith.addf %711, %709 : vector<32x128xf32>
    %cst_335 = arith.constant 1.000000e+00 : f32
    %713 = vector.broadcast %cst_335 : f32 to vector<32x128xf32>
    %714 = arith.divf %713, %712 : vector<32x128xf32>
    %cst_336 = arith.constant 2285464.5 : f32
    %715 = vector.broadcast %cst_336 : f32 to vector<32x128xf32>
    %716 = arith.subf %712, %715 : vector<32x128xf32>
    %cst_337 = arith.constant 2.000000e+00 : f32
    %717 = vector.broadcast %cst_337 : f32 to vector<32x128xf32>
    %718 = arith.mulf %716, %717 : vector<32x128xf32>
    %cst_338 = arith.constant 3.14159274 : f32
    %719 = vector.broadcast %cst_338 : f32 to vector<32x128xf32>
    %720 = arith.mulf %718, %719 : vector<32x128xf32>
    %cst_339 = arith.constant 4.37547811E-7 : f32
    %721 = vector.broadcast %cst_339 : f32 to vector<32x128xf32>
    %722 = arith.addf %721, %714 : vector<32x128xf32>
    %723 = arith.mulf %720, %722 : vector<32x128xf32>
    %cst_340 = arith.constant 3.14159274 : f32
    %724 = vector.broadcast %cst_340 : f32 to vector<32x128xf32>
    %725 = arith.cmpf oge, %723, %724 : vector<32x128xf32>
    %cst_341 = arith.constant 1.000000e+00 : f32
    %cst_342 = arith.constant 0.000000e+00 : f32
    %726 = vector.broadcast %cst_341 : f32 to vector<32x128xf32>
    %727 = vector.broadcast %cst_342 : f32 to vector<32x128xf32>
    %728 = arith.select %725, %726, %727 : vector<32x128xi1>, vector<32x128xf32>
    %c3 = arith.constant 3 : index
    %729 = memref.load %arg1[%c3] : memref<21xf32, #tpu.memory_space<smem>>
    %730 = vector.broadcast %729 : f32 to vector<32x128xf32>
    %731 = arith.mulf %730, %179 : vector<32x128xf32>
    %c4 = arith.constant 4 : index
    %732 = memref.load %arg1[%c4] : memref<21xf32, #tpu.memory_space<smem>>
    %733 = vector.broadcast %732 : f32 to vector<32x128xf32>
    %734 = arith.mulf %733, %359 : vector<32x128xf32>
    %735 = arith.addf %731, %734 : vector<32x128xf32>
    %c5 = arith.constant 5 : index
    %736 = memref.load %arg1[%c5] : memref<21xf32, #tpu.memory_space<smem>>
    %737 = vector.broadcast %736 : f32 to vector<32x128xf32>
    %738 = arith.mulf %737, %539 : vector<32x128xf32>
    %739 = arith.addf %735, %738 : vector<32x128xf32>
    %cst_343 = arith.constant 1.000000e+00 : f32
    %740 = vector.broadcast %cst_343 : f32 to vector<32x128xf32>
    %741 = arith.mulf %739, %740 : vector<32x128xf32>
    %cst_344 = arith.constant 1.500000e-01 : f32
    %742 = vector.broadcast %cst_344 : f32 to vector<32x128xf32>
    %743 = arith.addf %742, %741 : vector<32x128xf32>
    %cst_345 = arith.constant 1.500000e-02 : f32
    %744 = vector.broadcast %cst_345 : f32 to vector<32x128xf32>
    %745 = arith.subf %743, %744 : vector<32x128xf32>
    %cst_346 = arith.constant 0.000000e+00 : f32
    %746 = vector.broadcast %cst_346 : f32 to vector<32x128xf32>
    %747 = arith.maximumf %745, %746 : vector<32x128xf32>
    %cst_347 = arith.constant 5.250000e-02 : f32
    %748 = vector.broadcast %cst_347 : f32 to vector<32x128xf32>
    %749 = arith.subf %747, %748 : vector<32x128xf32>
    %cst_348 = arith.constant 57.1428566 : f32
    %750 = vector.broadcast %cst_348 : f32 to vector<32x128xf32>
    %751 = arith.mulf %749, %750 : vector<32x128xf32>
    %cst_349 = arith.constant 5.000000e-01 : f32
    %752 = vector.broadcast %cst_349 : f32 to vector<32x128xf32>
    %753 = arith.subf %751, %752 : vector<32x128xf32>
    %754 = math.ceil %753 : vector<32x128xf32>
    %cst_350 = arith.constant 0.000000e+00 : f32
    %cst_351 = arith.constant 1.700000e+01 : f32
    %755 = vector.broadcast %cst_350 : f32 to vector<32x128xf32>
    %756 = arith.maximumf %755, %754 : vector<32x128xf32>
    %757 = vector.broadcast %cst_351 : f32 to vector<32x128xf32>
    %758 = arith.minimumf %757, %756 : vector<32x128xf32>
    %759 = arith.fptosi %758 : vector<32x128xf32> to vector<32x128xi32>
    %cst_352 = arith.constant 0x4CB74CCB : f32
    %760 = vector.broadcast %cst_352 : f32 to vector<32x128xf32>
    %cst_353 = arith.constant 3.500000e-01 : f32
    %761 = vector.broadcast %cst_353 : f32 to vector<32x128xf32>
    %cst_354 = arith.constant 0x4BDF0B1A : f32
    %762 = vector.broadcast %cst_354 : f32 to vector<32x128xf32>
    %c1_i32_355 = arith.constant 1 : i32
    %763 = vector.broadcast %c1_i32_355 : i32 to vector<32x128xi32>
    %764 = arith.cmpi eq, %759, %763 : vector<32x128xi32>
    %cst_356 = arith.constant 6699988.5 : f32
    %765 = vector.broadcast %cst_356 : f32 to vector<32x128xf32>
    %766 = arith.select %764, %765, %760 : vector<32x128xi1>, vector<32x128xf32>
    %cst_357 = arith.constant 5.250000e-02 : f32
    %767 = vector.broadcast %cst_357 : f32 to vector<32x128xf32>
    %768 = arith.select %764, %767, %761 : vector<32x128xi1>, vector<32x128xf32>
    %cst_358 = arith.constant 644404.063 : f32
    %769 = vector.broadcast %cst_358 : f32 to vector<32x128xf32>
    %770 = arith.select %764, %769, %762 : vector<32x128xi1>, vector<32x128xf32>
    %c2_i32_359 = arith.constant 2 : i32
    %771 = vector.broadcast %c2_i32_359 : i32 to vector<32x128xi32>
    %772 = arith.cmpi eq, %759, %771 : vector<32x128xi32>
    %cst_360 = arith.constant 0x4B1B525D : f32
    %773 = vector.broadcast %cst_360 : f32 to vector<32x128xf32>
    %774 = arith.select %772, %773, %766 : vector<32x128xi1>, vector<32x128xf32>
    %cst_361 = arith.constant 7.000000e-02 : f32
    %775 = vector.broadcast %cst_361 : f32 to vector<32x128xf32>
    %776 = arith.select %772, %775, %768 : vector<32x128xi1>, vector<32x128xf32>
    %cst_362 = arith.constant 761653.875 : f32
    %777 = vector.broadcast %cst_362 : f32 to vector<32x128xf32>
    %778 = arith.select %772, %777, %770 : vector<32x128xi1>, vector<32x128xf32>
    %c3_i32_363 = arith.constant 3 : i32
    %779 = vector.broadcast %c3_i32_363 : i32 to vector<32x128xi32>
    %780 = arith.cmpi eq, %759, %779 : vector<32x128xi32>
    %cst_364 = arith.constant 0x4B5069A9 : f32
    %781 = vector.broadcast %cst_364 : f32 to vector<32x128xf32>
    %782 = arith.select %780, %781, %774 : vector<32x128xi1>, vector<32x128xf32>
    %cst_365 = arith.constant 0.0874999985 : f32
    %783 = vector.broadcast %cst_365 : f32 to vector<32x128xf32>
    %784 = arith.select %780, %783, %776 : vector<32x128xi1>, vector<32x128xf32>
    %cst_366 = arith.constant 939789.25 : f32
    %785 = vector.broadcast %cst_366 : f32 to vector<32x128xf32>
    %786 = arith.select %780, %785, %778 : vector<32x128xi1>, vector<32x128xf32>
    %c4_i32_367 = arith.constant 4 : i32
    %787 = vector.broadcast %c4_i32_367 : i32 to vector<32x128xi32>
    %788 = arith.cmpi eq, %759, %787 : vector<32x128xi32>
    %cst_368 = arith.constant 0x4B8B5557 : f32
    %789 = vector.broadcast %cst_368 : f32 to vector<32x128xf32>
    %790 = arith.select %788, %789, %782 : vector<32x128xi1>, vector<32x128xf32>
    %cst_369 = arith.constant 1.050000e-01 : f32
    %791 = vector.broadcast %cst_369 : f32 to vector<32x128xf32>
    %792 = arith.select %788, %791, %784 : vector<32x128xi1>, vector<32x128xf32>
    %cst_370 = arith.constant 1178813.63 : f32
    %793 = vector.broadcast %cst_370 : f32 to vector<32x128xf32>
    %794 = arith.select %788, %793, %786 : vector<32x128xi1>, vector<32x128xf32>
    %c5_i32_371 = arith.constant 5 : i32
    %795 = vector.broadcast %c5_i32_371 : i32 to vector<32x128xi32>
    %796 = arith.cmpi eq, %759, %795 : vector<32x128xi32>
    %cst_372 = arith.constant 0x4BBF6315 : f32
    %797 = vector.broadcast %cst_372 : f32 to vector<32x128xf32>
    %798 = arith.select %796, %797, %790 : vector<32x128xi1>, vector<32x128xf32>
    %cst_373 = arith.constant 1.225000e-01 : f32
    %799 = vector.broadcast %cst_373 : f32 to vector<32x128xf32>
    %800 = arith.select %796, %799, %792 : vector<32x128xi1>, vector<32x128xf32>
    %cst_374 = arith.constant 0x49B6E958 : f32
    %801 = vector.broadcast %cst_374 : f32 to vector<32x128xf32>
    %802 = arith.select %796, %801, %794 : vector<32x128xi1>, vector<32x128xf32>
    %c6_i32_375 = arith.constant 6 : i32
    %803 = vector.broadcast %c6_i32_375 : i32 to vector<32x128xi32>
    %804 = arith.cmpi eq, %759, %803 : vector<32x128xi32>
    %cst_376 = arith.constant 0x4C04C5FB : f32
    %805 = vector.broadcast %cst_376 : f32 to vector<32x128xf32>
    %806 = arith.select %804, %805, %798 : vector<32x128xi1>, vector<32x128xf32>
    %cst_377 = arith.constant 1.400000e-01 : f32
    %807 = vector.broadcast %cst_377 : f32 to vector<32x128xf32>
    %808 = arith.select %804, %807, %800 : vector<32x128xi1>, vector<32x128xf32>
    %cst_378 = arith.constant 1937406.88 : f32
    %809 = vector.broadcast %cst_378 : f32 to vector<32x128xf32>
    %810 = arith.select %804, %809, %802 : vector<32x128xi1>, vector<32x128xf32>
    %c7_i32_379 = arith.constant 7 : i32
    %811 = vector.broadcast %c7_i32_379 : i32 to vector<32x128xi32>
    %812 = arith.cmpi eq, %759, %811 : vector<32x128xi32>
    %cst_380 = arith.constant 0x4C34800A : f32
    %813 = vector.broadcast %cst_380 : f32 to vector<32x128xf32>
    %814 = arith.select %812, %813, %806 : vector<32x128xi1>, vector<32x128xf32>
    %cst_381 = arith.constant 1.575000e-01 : f32
    %815 = vector.broadcast %cst_381 : f32 to vector<32x128xf32>
    %816 = arith.select %812, %815, %808 : vector<32x128xi1>, vector<32x128xf32>
    %cst_382 = arith.constant 2546507.25 : f32
    %817 = vector.broadcast %cst_382 : f32 to vector<32x128xf32>
    %818 = arith.select %812, %817, %810 : vector<32x128xi1>, vector<32x128xf32>
    %c8_i32_383 = arith.constant 8 : i32
    %819 = vector.broadcast %c8_i32_383 : i32 to vector<32x128xi32>
    %820 = arith.cmpi eq, %759, %819 : vector<32x128xi32>
    %cst_384 = arith.constant 0x4C72808B : f32
    %821 = vector.broadcast %cst_384 : f32 to vector<32x128xf32>
    %822 = arith.select %820, %821, %814 : vector<32x128xi1>, vector<32x128xf32>
    %cst_385 = arith.constant 1.750000e-01 : f32
    %823 = vector.broadcast %cst_385 : f32 to vector<32x128xf32>
    %824 = arith.select %820, %823, %816 : vector<32x128xi1>, vector<32x128xf32>
    %cst_386 = arith.constant 3374555.25 : f32
    %825 = vector.broadcast %cst_386 : f32 to vector<32x128xf32>
    %826 = arith.select %820, %825, %818 : vector<32x128xi1>, vector<32x128xf32>
    %c9_i32_387 = arith.constant 9 : i32
    %827 = vector.broadcast %c9_i32_387 : i32 to vector<32x128xi32>
    %828 = arith.cmpi eq, %759, %827 : vector<32x128xi32>
    %cst_388 = arith.constant 0x4CA21B59 : f32
    %829 = vector.broadcast %cst_388 : f32 to vector<32x128xf32>
    %830 = arith.select %828, %829, %822 : vector<32x128xi1>, vector<32x128xf32>
    %cst_389 = arith.constant 1.925000e-01 : f32
    %831 = vector.broadcast %cst_389 : f32 to vector<32x128xf32>
    %832 = arith.select %828, %831, %824 : vector<32x128xi1>, vector<32x128xf32>
    %cst_390 = arith.constant 4487038.5 : f32
    %833 = vector.broadcast %cst_390 : f32 to vector<32x128xf32>
    %834 = arith.select %828, %833, %826 : vector<32x128xi1>, vector<32x128xf32>
    %c10_i32_391 = arith.constant 10 : i32
    %835 = vector.broadcast %c10_i32_391 : i32 to vector<32x128xi32>
    %836 = arith.cmpi eq, %759, %835 : vector<32x128xi32>
    %cst_392 = arith.constant 0x4CD64D26 : f32
    %837 = vector.broadcast %cst_392 : f32 to vector<32x128xf32>
    %838 = arith.select %836, %837, %830 : vector<32x128xi1>, vector<32x128xf32>
    %cst_393 = arith.constant 2.100000e-01 : f32
    %839 = vector.broadcast %cst_393 : f32 to vector<32x128xf32>
    %840 = arith.select %836, %839, %832 : vector<32x128xi1>, vector<32x128xf32>
    %cst_394 = arith.constant 0x4AB652CE : f32
    %841 = vector.broadcast %cst_394 : f32 to vector<32x128xf32>
    %842 = arith.select %836, %841, %834 : vector<32x128xi1>, vector<32x128xf32>
    %c11_i32_395 = arith.constant 11 : i32
    %843 = vector.broadcast %c11_i32_395 : i32 to vector<32x128xi32>
    %844 = arith.cmpi eq, %759, %843 : vector<32x128xi32>
    %cst_396 = arith.constant 0x4D0A2F85 : f32
    %845 = vector.broadcast %cst_396 : f32 to vector<32x128xf32>
    %846 = arith.select %844, %845, %838 : vector<32x128xi1>, vector<32x128xf32>
    %cst_397 = arith.constant 2.275000e-01 : f32
    %847 = vector.broadcast %cst_397 : f32 to vector<32x128xf32>
    %848 = arith.select %844, %847, %840 : vector<32x128xi1>, vector<32x128xf32>
    %cst_398 = arith.constant 7.940600e+06 : f32
    %849 = vector.broadcast %cst_398 : f32 to vector<32x128xf32>
    %850 = arith.select %844, %849, %842 : vector<32x128xi1>, vector<32x128xf32>
    %c12_i32_399 = arith.constant 12 : i32
    %851 = vector.broadcast %c12_i32_399 : i32 to vector<32x128xi32>
    %852 = arith.cmpi eq, %759, %851 : vector<32x128xi32>
    %cst_400 = arith.constant 0x4D2AA536 : f32
    %853 = vector.broadcast %cst_400 : f32 to vector<32x128xf32>
    %854 = arith.select %852, %853, %846 : vector<32x128xi1>, vector<32x128xf32>
    %cst_401 = arith.constant 2.450000e-01 : f32
    %855 = vector.broadcast %cst_401 : f32 to vector<32x128xf32>
    %856 = arith.select %852, %855, %848 : vector<32x128xi1>, vector<32x128xf32>
    %cst_402 = arith.constant 0x4B1FDB1D : f32
    %857 = vector.broadcast %cst_402 : f32 to vector<32x128xf32>
    %858 = arith.select %852, %857, %850 : vector<32x128xi1>, vector<32x128xf32>
    %c13_i32_403 = arith.constant 13 : i32
    %859 = vector.broadcast %c13_i32_403 : i32 to vector<32x128xi32>
    %860 = arith.cmpi eq, %759, %859 : vector<32x128xi32>
    %cst_404 = arith.constant 0x4D443E30 : f32
    %861 = vector.broadcast %cst_404 : f32 to vector<32x128xf32>
    %862 = arith.select %860, %861, %854 : vector<32x128xi1>, vector<32x128xf32>
    %cst_405 = arith.constant 2.625000e-01 : f32
    %863 = vector.broadcast %cst_405 : f32 to vector<32x128xf32>
    %864 = arith.select %860, %863, %856 : vector<32x128xi1>, vector<32x128xf32>
    %cst_406 = arith.constant 0x4B4FA2F6 : f32
    %865 = vector.broadcast %cst_406 : f32 to vector<32x128xf32>
    %866 = arith.select %860, %865, %858 : vector<32x128xi1>, vector<32x128xf32>
    %c14_i32_407 = arith.constant 14 : i32
    %867 = vector.broadcast %c14_i32_407 : i32 to vector<32x128xi32>
    %868 = arith.cmpi eq, %759, %867 : vector<32x128xi32>
    %cst_408 = arith.constant 0x4D4BA701 : f32
    %869 = vector.broadcast %cst_408 : f32 to vector<32x128xf32>
    %870 = arith.select %868, %869, %862 : vector<32x128xi1>, vector<32x128xf32>
    %cst_409 = arith.constant 2.800000e-01 : f32
    %871 = vector.broadcast %cst_409 : f32 to vector<32x128xf32>
    %872 = arith.select %868, %871, %864 : vector<32x128xi1>, vector<32x128xf32>
    %cst_410 = arith.constant 0x4B834AD5 : f32
    %873 = vector.broadcast %cst_410 : f32 to vector<32x128xf32>
    %874 = arith.select %868, %873, %866 : vector<32x128xi1>, vector<32x128xf32>
    %c15_i32_411 = arith.constant 15 : i32
    %875 = vector.broadcast %c15_i32_411 : i32 to vector<32x128xi32>
    %876 = arith.cmpi eq, %759, %875 : vector<32x128xi32>
    %cst_412 = arith.constant 0x4D3A9BDD : f32
    %877 = vector.broadcast %cst_412 : f32 to vector<32x128xf32>
    %878 = arith.select %876, %877, %870 : vector<32x128xi1>, vector<32x128xf32>
    %cst_413 = arith.constant 2.975000e-01 : f32
    %879 = vector.broadcast %cst_413 : f32 to vector<32x128xf32>
    %880 = arith.select %876, %879, %872 : vector<32x128xi1>, vector<32x128xf32>
    %cst_414 = arith.constant 0x4B9FCDBD : f32
    %881 = vector.broadcast %cst_414 : f32 to vector<32x128xf32>
    %882 = arith.select %876, %881, %874 : vector<32x128xi1>, vector<32x128xf32>
    %c16_i32_415 = arith.constant 16 : i32
    %883 = vector.broadcast %c16_i32_415 : i32 to vector<32x128xi32>
    %884 = arith.cmpi eq, %759, %883 : vector<32x128xi32>
    %cst_416 = arith.constant 0x4D17E5C5 : f32
    %885 = vector.broadcast %cst_416 : f32 to vector<32x128xf32>
    %886 = arith.select %884, %885, %878 : vector<32x128xi1>, vector<32x128xf32>
    %cst_417 = arith.constant 3.150000e-01 : f32
    %887 = vector.broadcast %cst_417 : f32 to vector<32x128xf32>
    %888 = arith.select %884, %887, %880 : vector<32x128xi1>, vector<32x128xf32>
    %cst_418 = arith.constant 0x4BB9EDCB : f32
    %889 = vector.broadcast %cst_418 : f32 to vector<32x128xf32>
    %890 = arith.select %884, %889, %882 : vector<32x128xi1>, vector<32x128xf32>
    %c17_i32_419 = arith.constant 17 : i32
    %891 = vector.broadcast %c17_i32_419 : i32 to vector<32x128xi32>
    %892 = arith.cmpi eq, %759, %891 : vector<32x128xi32>
    %cst_420 = arith.constant 0x4CE26970 : f32
    %893 = vector.broadcast %cst_420 : f32 to vector<32x128xf32>
    %894 = arith.select %892, %893, %886 : vector<32x128xi1>, vector<32x128xf32>
    %cst_421 = arith.constant 3.325000e-01 : f32
    %895 = vector.broadcast %cst_421 : f32 to vector<32x128xf32>
    %896 = arith.select %892, %895, %888 : vector<32x128xi1>, vector<32x128xf32>
    %cst_422 = arith.constant 0x4BCF31CE : f32
    %897 = vector.broadcast %cst_422 : f32 to vector<32x128xf32>
    %898 = arith.select %892, %897, %890 : vector<32x128xi1>, vector<32x128xf32>
    %899 = arith.subf %747, %896 : vector<32x128xf32>
    %900 = arith.mulf %894, %899 : vector<32x128xf32>
    %901 = arith.addf %900, %898 : vector<32x128xf32>
    %cst_423 = arith.constant 1.000000e+00 : f32
    %902 = vector.broadcast %cst_423 : f32 to vector<32x128xf32>
    %903 = arith.divf %902, %901 : vector<32x128xf32>
    %cst_424 = arith.constant 2285464.5 : f32
    %904 = vector.broadcast %cst_424 : f32 to vector<32x128xf32>
    %905 = arith.subf %901, %904 : vector<32x128xf32>
    %cst_425 = arith.constant 2.000000e+00 : f32
    %906 = vector.broadcast %cst_425 : f32 to vector<32x128xf32>
    %907 = arith.mulf %905, %906 : vector<32x128xf32>
    %cst_426 = arith.constant 3.14159274 : f32
    %908 = vector.broadcast %cst_426 : f32 to vector<32x128xf32>
    %909 = arith.mulf %907, %908 : vector<32x128xf32>
    %cst_427 = arith.constant 4.37547811E-7 : f32
    %910 = vector.broadcast %cst_427 : f32 to vector<32x128xf32>
    %911 = arith.addf %910, %903 : vector<32x128xf32>
    %912 = arith.mulf %909, %911 : vector<32x128xf32>
    %cst_428 = arith.constant 3.14159274 : f32
    %913 = vector.broadcast %cst_428 : f32 to vector<32x128xf32>
    %914 = arith.cmpf oge, %912, %913 : vector<32x128xf32>
    %cst_429 = arith.constant 1.000000e+00 : f32
    %cst_430 = arith.constant 0.000000e+00 : f32
    %915 = vector.broadcast %cst_429 : f32 to vector<32x128xf32>
    %916 = vector.broadcast %cst_430 : f32 to vector<32x128xf32>
    %917 = arith.select %914, %915, %916 : vector<32x128xi1>, vector<32x128xf32>
    %c6 = arith.constant 6 : index
    %918 = memref.load %arg1[%c6] : memref<21xf32, #tpu.memory_space<smem>>
    %919 = vector.broadcast %918 : f32 to vector<32x128xf32>
    %920 = arith.mulf %919, %179 : vector<32x128xf32>
    %c7 = arith.constant 7 : index
    %921 = memref.load %arg1[%c7] : memref<21xf32, #tpu.memory_space<smem>>
    %922 = vector.broadcast %921 : f32 to vector<32x128xf32>
    %923 = arith.mulf %922, %359 : vector<32x128xf32>
    %924 = arith.addf %920, %923 : vector<32x128xf32>
    %c8 = arith.constant 8 : index
    %925 = memref.load %arg1[%c8] : memref<21xf32, #tpu.memory_space<smem>>
    %926 = vector.broadcast %925 : f32 to vector<32x128xf32>
    %927 = arith.mulf %926, %539 : vector<32x128xf32>
    %928 = arith.addf %924, %927 : vector<32x128xf32>
    %cst_431 = arith.constant 1.000000e+00 : f32
    %929 = vector.broadcast %cst_431 : f32 to vector<32x128xf32>
    %930 = arith.mulf %928, %929 : vector<32x128xf32>
    %cst_432 = arith.constant 1.500000e-01 : f32
    %931 = vector.broadcast %cst_432 : f32 to vector<32x128xf32>
    %932 = arith.addf %931, %930 : vector<32x128xf32>
    %cst_433 = arith.constant 1.500000e-02 : f32
    %933 = vector.broadcast %cst_433 : f32 to vector<32x128xf32>
    %934 = arith.subf %932, %933 : vector<32x128xf32>
    %cst_434 = arith.constant 0.000000e+00 : f32
    %935 = vector.broadcast %cst_434 : f32 to vector<32x128xf32>
    %936 = arith.maximumf %934, %935 : vector<32x128xf32>
    %cst_435 = arith.constant 5.250000e-02 : f32
    %937 = vector.broadcast %cst_435 : f32 to vector<32x128xf32>
    %938 = arith.subf %936, %937 : vector<32x128xf32>
    %cst_436 = arith.constant 57.1428566 : f32
    %939 = vector.broadcast %cst_436 : f32 to vector<32x128xf32>
    %940 = arith.mulf %938, %939 : vector<32x128xf32>
    %cst_437 = arith.constant 5.000000e-01 : f32
    %941 = vector.broadcast %cst_437 : f32 to vector<32x128xf32>
    %942 = arith.subf %940, %941 : vector<32x128xf32>
    %943 = math.ceil %942 : vector<32x128xf32>
    %cst_438 = arith.constant 0.000000e+00 : f32
    %cst_439 = arith.constant 1.700000e+01 : f32
    %944 = vector.broadcast %cst_438 : f32 to vector<32x128xf32>
    %945 = arith.maximumf %944, %943 : vector<32x128xf32>
    %946 = vector.broadcast %cst_439 : f32 to vector<32x128xf32>
    %947 = arith.minimumf %946, %945 : vector<32x128xf32>
    %948 = arith.fptosi %947 : vector<32x128xf32> to vector<32x128xi32>
    %cst_440 = arith.constant 0x4CB74CCB : f32
    %949 = vector.broadcast %cst_440 : f32 to vector<32x128xf32>
    %cst_441 = arith.constant 3.500000e-01 : f32
    %950 = vector.broadcast %cst_441 : f32 to vector<32x128xf32>
    %cst_442 = arith.constant 0x4BDF0B1A : f32
    %951 = vector.broadcast %cst_442 : f32 to vector<32x128xf32>
    %c1_i32_443 = arith.constant 1 : i32
    %952 = vector.broadcast %c1_i32_443 : i32 to vector<32x128xi32>
    %953 = arith.cmpi eq, %948, %952 : vector<32x128xi32>
    %cst_444 = arith.constant 6699988.5 : f32
    %954 = vector.broadcast %cst_444 : f32 to vector<32x128xf32>
    %955 = arith.select %953, %954, %949 : vector<32x128xi1>, vector<32x128xf32>
    %cst_445 = arith.constant 5.250000e-02 : f32
    %956 = vector.broadcast %cst_445 : f32 to vector<32x128xf32>
    %957 = arith.select %953, %956, %950 : vector<32x128xi1>, vector<32x128xf32>
    %cst_446 = arith.constant 644404.063 : f32
    %958 = vector.broadcast %cst_446 : f32 to vector<32x128xf32>
    %959 = arith.select %953, %958, %951 : vector<32x128xi1>, vector<32x128xf32>
    %c2_i32_447 = arith.constant 2 : i32
    %960 = vector.broadcast %c2_i32_447 : i32 to vector<32x128xi32>
    %961 = arith.cmpi eq, %948, %960 : vector<32x128xi32>
    %cst_448 = arith.constant 0x4B1B525D : f32
    %962 = vector.broadcast %cst_448 : f32 to vector<32x128xf32>
    %963 = arith.select %961, %962, %955 : vector<32x128xi1>, vector<32x128xf32>
    %cst_449 = arith.constant 7.000000e-02 : f32
    %964 = vector.broadcast %cst_449 : f32 to vector<32x128xf32>
    %965 = arith.select %961, %964, %957 : vector<32x128xi1>, vector<32x128xf32>
    %cst_450 = arith.constant 761653.875 : f32
    %966 = vector.broadcast %cst_450 : f32 to vector<32x128xf32>
    %967 = arith.select %961, %966, %959 : vector<32x128xi1>, vector<32x128xf32>
    %c3_i32_451 = arith.constant 3 : i32
    %968 = vector.broadcast %c3_i32_451 : i32 to vector<32x128xi32>
    %969 = arith.cmpi eq, %948, %968 : vector<32x128xi32>
    %cst_452 = arith.constant 0x4B5069A9 : f32
    %970 = vector.broadcast %cst_452 : f32 to vector<32x128xf32>
    %971 = arith.select %969, %970, %963 : vector<32x128xi1>, vector<32x128xf32>
    %cst_453 = arith.constant 0.0874999985 : f32
    %972 = vector.broadcast %cst_453 : f32 to vector<32x128xf32>
    %973 = arith.select %969, %972, %965 : vector<32x128xi1>, vector<32x128xf32>
    %cst_454 = arith.constant 939789.25 : f32
    %974 = vector.broadcast %cst_454 : f32 to vector<32x128xf32>
    %975 = arith.select %969, %974, %967 : vector<32x128xi1>, vector<32x128xf32>
    %c4_i32_455 = arith.constant 4 : i32
    %976 = vector.broadcast %c4_i32_455 : i32 to vector<32x128xi32>
    %977 = arith.cmpi eq, %948, %976 : vector<32x128xi32>
    %cst_456 = arith.constant 0x4B8B5557 : f32
    %978 = vector.broadcast %cst_456 : f32 to vector<32x128xf32>
    %979 = arith.select %977, %978, %971 : vector<32x128xi1>, vector<32x128xf32>
    %cst_457 = arith.constant 1.050000e-01 : f32
    %980 = vector.broadcast %cst_457 : f32 to vector<32x128xf32>
    %981 = arith.select %977, %980, %973 : vector<32x128xi1>, vector<32x128xf32>
    %cst_458 = arith.constant 1178813.63 : f32
    %982 = vector.broadcast %cst_458 : f32 to vector<32x128xf32>
    %983 = arith.select %977, %982, %975 : vector<32x128xi1>, vector<32x128xf32>
    %c5_i32_459 = arith.constant 5 : i32
    %984 = vector.broadcast %c5_i32_459 : i32 to vector<32x128xi32>
    %985 = arith.cmpi eq, %948, %984 : vector<32x128xi32>
    %cst_460 = arith.constant 0x4BBF6315 : f32
    %986 = vector.broadcast %cst_460 : f32 to vector<32x128xf32>
    %987 = arith.select %985, %986, %979 : vector<32x128xi1>, vector<32x128xf32>
    %cst_461 = arith.constant 1.225000e-01 : f32
    %988 = vector.broadcast %cst_461 : f32 to vector<32x128xf32>
    %989 = arith.select %985, %988, %981 : vector<32x128xi1>, vector<32x128xf32>
    %cst_462 = arith.constant 0x49B6E958 : f32
    %990 = vector.broadcast %cst_462 : f32 to vector<32x128xf32>
    %991 = arith.select %985, %990, %983 : vector<32x128xi1>, vector<32x128xf32>
    %c6_i32_463 = arith.constant 6 : i32
    %992 = vector.broadcast %c6_i32_463 : i32 to vector<32x128xi32>
    %993 = arith.cmpi eq, %948, %992 : vector<32x128xi32>
    %cst_464 = arith.constant 0x4C04C5FB : f32
    %994 = vector.broadcast %cst_464 : f32 to vector<32x128xf32>
    %995 = arith.select %993, %994, %987 : vector<32x128xi1>, vector<32x128xf32>
    %cst_465 = arith.constant 1.400000e-01 : f32
    %996 = vector.broadcast %cst_465 : f32 to vector<32x128xf32>
    %997 = arith.select %993, %996, %989 : vector<32x128xi1>, vector<32x128xf32>
    %cst_466 = arith.constant 1937406.88 : f32
    %998 = vector.broadcast %cst_466 : f32 to vector<32x128xf32>
    %999 = arith.select %993, %998, %991 : vector<32x128xi1>, vector<32x128xf32>
    %c7_i32_467 = arith.constant 7 : i32
    %1000 = vector.broadcast %c7_i32_467 : i32 to vector<32x128xi32>
    %1001 = arith.cmpi eq, %948, %1000 : vector<32x128xi32>
    %cst_468 = arith.constant 0x4C34800A : f32
    %1002 = vector.broadcast %cst_468 : f32 to vector<32x128xf32>
    %1003 = arith.select %1001, %1002, %995 : vector<32x128xi1>, vector<32x128xf32>
    %cst_469 = arith.constant 1.575000e-01 : f32
    %1004 = vector.broadcast %cst_469 : f32 to vector<32x128xf32>
    %1005 = arith.select %1001, %1004, %997 : vector<32x128xi1>, vector<32x128xf32>
    %cst_470 = arith.constant 2546507.25 : f32
    %1006 = vector.broadcast %cst_470 : f32 to vector<32x128xf32>
    %1007 = arith.select %1001, %1006, %999 : vector<32x128xi1>, vector<32x128xf32>
    %c8_i32_471 = arith.constant 8 : i32
    %1008 = vector.broadcast %c8_i32_471 : i32 to vector<32x128xi32>
    %1009 = arith.cmpi eq, %948, %1008 : vector<32x128xi32>
    %cst_472 = arith.constant 0x4C72808B : f32
    %1010 = vector.broadcast %cst_472 : f32 to vector<32x128xf32>
    %1011 = arith.select %1009, %1010, %1003 : vector<32x128xi1>, vector<32x128xf32>
    %cst_473 = arith.constant 1.750000e-01 : f32
    %1012 = vector.broadcast %cst_473 : f32 to vector<32x128xf32>
    %1013 = arith.select %1009, %1012, %1005 : vector<32x128xi1>, vector<32x128xf32>
    %cst_474 = arith.constant 3374555.25 : f32
    %1014 = vector.broadcast %cst_474 : f32 to vector<32x128xf32>
    %1015 = arith.select %1009, %1014, %1007 : vector<32x128xi1>, vector<32x128xf32>
    %c9_i32_475 = arith.constant 9 : i32
    %1016 = vector.broadcast %c9_i32_475 : i32 to vector<32x128xi32>
    %1017 = arith.cmpi eq, %948, %1016 : vector<32x128xi32>
    %cst_476 = arith.constant 0x4CA21B59 : f32
    %1018 = vector.broadcast %cst_476 : f32 to vector<32x128xf32>
    %1019 = arith.select %1017, %1018, %1011 : vector<32x128xi1>, vector<32x128xf32>
    %cst_477 = arith.constant 1.925000e-01 : f32
    %1020 = vector.broadcast %cst_477 : f32 to vector<32x128xf32>
    %1021 = arith.select %1017, %1020, %1013 : vector<32x128xi1>, vector<32x128xf32>
    %cst_478 = arith.constant 4487038.5 : f32
    %1022 = vector.broadcast %cst_478 : f32 to vector<32x128xf32>
    %1023 = arith.select %1017, %1022, %1015 : vector<32x128xi1>, vector<32x128xf32>
    %c10_i32_479 = arith.constant 10 : i32
    %1024 = vector.broadcast %c10_i32_479 : i32 to vector<32x128xi32>
    %1025 = arith.cmpi eq, %948, %1024 : vector<32x128xi32>
    %cst_480 = arith.constant 0x4CD64D26 : f32
    %1026 = vector.broadcast %cst_480 : f32 to vector<32x128xf32>
    %1027 = arith.select %1025, %1026, %1019 : vector<32x128xi1>, vector<32x128xf32>
    %cst_481 = arith.constant 2.100000e-01 : f32
    %1028 = vector.broadcast %cst_481 : f32 to vector<32x128xf32>
    %1029 = arith.select %1025, %1028, %1021 : vector<32x128xi1>, vector<32x128xf32>
    %cst_482 = arith.constant 0x4AB652CE : f32
    %1030 = vector.broadcast %cst_482 : f32 to vector<32x128xf32>
    %1031 = arith.select %1025, %1030, %1023 : vector<32x128xi1>, vector<32x128xf32>
    %c11_i32_483 = arith.constant 11 : i32
    %1032 = vector.broadcast %c11_i32_483 : i32 to vector<32x128xi32>
    %1033 = arith.cmpi eq, %948, %1032 : vector<32x128xi32>
    %cst_484 = arith.constant 0x4D0A2F85 : f32
    %1034 = vector.broadcast %cst_484 : f32 to vector<32x128xf32>
    %1035 = arith.select %1033, %1034, %1027 : vector<32x128xi1>, vector<32x128xf32>
    %cst_485 = arith.constant 2.275000e-01 : f32
    %1036 = vector.broadcast %cst_485 : f32 to vector<32x128xf32>
    %1037 = arith.select %1033, %1036, %1029 : vector<32x128xi1>, vector<32x128xf32>
    %cst_486 = arith.constant 7.940600e+06 : f32
    %1038 = vector.broadcast %cst_486 : f32 to vector<32x128xf32>
    %1039 = arith.select %1033, %1038, %1031 : vector<32x128xi1>, vector<32x128xf32>
    %c12_i32_487 = arith.constant 12 : i32
    %1040 = vector.broadcast %c12_i32_487 : i32 to vector<32x128xi32>
    %1041 = arith.cmpi eq, %948, %1040 : vector<32x128xi32>
    %cst_488 = arith.constant 0x4D2AA536 : f32
    %1042 = vector.broadcast %cst_488 : f32 to vector<32x128xf32>
    %1043 = arith.select %1041, %1042, %1035 : vector<32x128xi1>, vector<32x128xf32>
    %cst_489 = arith.constant 2.450000e-01 : f32
    %1044 = vector.broadcast %cst_489 : f32 to vector<32x128xf32>
    %1045 = arith.select %1041, %1044, %1037 : vector<32x128xi1>, vector<32x128xf32>
    %cst_490 = arith.constant 0x4B1FDB1D : f32
    %1046 = vector.broadcast %cst_490 : f32 to vector<32x128xf32>
    %1047 = arith.select %1041, %1046, %1039 : vector<32x128xi1>, vector<32x128xf32>
    %c13_i32_491 = arith.constant 13 : i32
    %1048 = vector.broadcast %c13_i32_491 : i32 to vector<32x128xi32>
    %1049 = arith.cmpi eq, %948, %1048 : vector<32x128xi32>
    %cst_492 = arith.constant 0x4D443E30 : f32
    %1050 = vector.broadcast %cst_492 : f32 to vector<32x128xf32>
    %1051 = arith.select %1049, %1050, %1043 : vector<32x128xi1>, vector<32x128xf32>
    %cst_493 = arith.constant 2.625000e-01 : f32
    %1052 = vector.broadcast %cst_493 : f32 to vector<32x128xf32>
    %1053 = arith.select %1049, %1052, %1045 : vector<32x128xi1>, vector<32x128xf32>
    %cst_494 = arith.constant 0x4B4FA2F6 : f32
    %1054 = vector.broadcast %cst_494 : f32 to vector<32x128xf32>
    %1055 = arith.select %1049, %1054, %1047 : vector<32x128xi1>, vector<32x128xf32>
    %c14_i32_495 = arith.constant 14 : i32
    %1056 = vector.broadcast %c14_i32_495 : i32 to vector<32x128xi32>
    %1057 = arith.cmpi eq, %948, %1056 : vector<32x128xi32>
    %cst_496 = arith.constant 0x4D4BA701 : f32
    %1058 = vector.broadcast %cst_496 : f32 to vector<32x128xf32>
    %1059 = arith.select %1057, %1058, %1051 : vector<32x128xi1>, vector<32x128xf32>
    %cst_497 = arith.constant 2.800000e-01 : f32
    %1060 = vector.broadcast %cst_497 : f32 to vector<32x128xf32>
    %1061 = arith.select %1057, %1060, %1053 : vector<32x128xi1>, vector<32x128xf32>
    %cst_498 = arith.constant 0x4B834AD5 : f32
    %1062 = vector.broadcast %cst_498 : f32 to vector<32x128xf32>
    %1063 = arith.select %1057, %1062, %1055 : vector<32x128xi1>, vector<32x128xf32>
    %c15_i32_499 = arith.constant 15 : i32
    %1064 = vector.broadcast %c15_i32_499 : i32 to vector<32x128xi32>
    %1065 = arith.cmpi eq, %948, %1064 : vector<32x128xi32>
    %cst_500 = arith.constant 0x4D3A9BDD : f32
    %1066 = vector.broadcast %cst_500 : f32 to vector<32x128xf32>
    %1067 = arith.select %1065, %1066, %1059 : vector<32x128xi1>, vector<32x128xf32>
    %cst_501 = arith.constant 2.975000e-01 : f32
    %1068 = vector.broadcast %cst_501 : f32 to vector<32x128xf32>
    %1069 = arith.select %1065, %1068, %1061 : vector<32x128xi1>, vector<32x128xf32>
    %cst_502 = arith.constant 0x4B9FCDBD : f32
    %1070 = vector.broadcast %cst_502 : f32 to vector<32x128xf32>
    %1071 = arith.select %1065, %1070, %1063 : vector<32x128xi1>, vector<32x128xf32>
    %c16_i32_503 = arith.constant 16 : i32
    %1072 = vector.broadcast %c16_i32_503 : i32 to vector<32x128xi32>
    %1073 = arith.cmpi eq, %948, %1072 : vector<32x128xi32>
    %cst_504 = arith.constant 0x4D17E5C5 : f32
    %1074 = vector.broadcast %cst_504 : f32 to vector<32x128xf32>
    %1075 = arith.select %1073, %1074, %1067 : vector<32x128xi1>, vector<32x128xf32>
    %cst_505 = arith.constant 3.150000e-01 : f32
    %1076 = vector.broadcast %cst_505 : f32 to vector<32x128xf32>
    %1077 = arith.select %1073, %1076, %1069 : vector<32x128xi1>, vector<32x128xf32>
    %cst_506 = arith.constant 0x4BB9EDCB : f32
    %1078 = vector.broadcast %cst_506 : f32 to vector<32x128xf32>
    %1079 = arith.select %1073, %1078, %1071 : vector<32x128xi1>, vector<32x128xf32>
    %c17_i32_507 = arith.constant 17 : i32
    %1080 = vector.broadcast %c17_i32_507 : i32 to vector<32x128xi32>
    %1081 = arith.cmpi eq, %948, %1080 : vector<32x128xi32>
    %cst_508 = arith.constant 0x4CE26970 : f32
    %1082 = vector.broadcast %cst_508 : f32 to vector<32x128xf32>
    %1083 = arith.select %1081, %1082, %1075 : vector<32x128xi1>, vector<32x128xf32>
    %cst_509 = arith.constant 3.325000e-01 : f32
    %1084 = vector.broadcast %cst_509 : f32 to vector<32x128xf32>
    %1085 = arith.select %1081, %1084, %1077 : vector<32x128xi1>, vector<32x128xf32>
    %cst_510 = arith.constant 0x4BCF31CE : f32
    %1086 = vector.broadcast %cst_510 : f32 to vector<32x128xf32>
    %1087 = arith.select %1081, %1086, %1079 : vector<32x128xi1>, vector<32x128xf32>
    %1088 = arith.subf %936, %1085 : vector<32x128xf32>
    %1089 = arith.mulf %1083, %1088 : vector<32x128xf32>
    %1090 = arith.addf %1089, %1087 : vector<32x128xf32>
    %cst_511 = arith.constant 1.000000e+00 : f32
    %1091 = vector.broadcast %cst_511 : f32 to vector<32x128xf32>
    %1092 = arith.divf %1091, %1090 : vector<32x128xf32>
    %cst_512 = arith.constant 2285464.5 : f32
    %1093 = vector.broadcast %cst_512 : f32 to vector<32x128xf32>
    %1094 = arith.subf %1090, %1093 : vector<32x128xf32>
    %cst_513 = arith.constant 2.000000e+00 : f32
    %1095 = vector.broadcast %cst_513 : f32 to vector<32x128xf32>
    %1096 = arith.mulf %1094, %1095 : vector<32x128xf32>
    %cst_514 = arith.constant 3.14159274 : f32
    %1097 = vector.broadcast %cst_514 : f32 to vector<32x128xf32>
    %1098 = arith.mulf %1096, %1097 : vector<32x128xf32>
    %cst_515 = arith.constant 4.37547811E-7 : f32
    %1099 = vector.broadcast %cst_515 : f32 to vector<32x128xf32>
    %1100 = arith.addf %1099, %1092 : vector<32x128xf32>
    %1101 = arith.mulf %1098, %1100 : vector<32x128xf32>
    %cst_516 = arith.constant 3.14159274 : f32
    %1102 = vector.broadcast %cst_516 : f32 to vector<32x128xf32>
    %1103 = arith.cmpf oge, %1101, %1102 : vector<32x128xf32>
    %cst_517 = arith.constant 1.000000e+00 : f32
    %cst_518 = arith.constant 0.000000e+00 : f32
    %1104 = vector.broadcast %cst_517 : f32 to vector<32x128xf32>
    %1105 = vector.broadcast %cst_518 : f32 to vector<32x128xf32>
    %1106 = arith.select %1103, %1104, %1105 : vector<32x128xi1>, vector<32x128xf32>
    %c9 = arith.constant 9 : index
    %1107 = memref.load %arg1[%c9] : memref<21xf32, #tpu.memory_space<smem>>
    %1108 = vector.broadcast %1107 : f32 to vector<32x128xf32>
    %1109 = arith.mulf %1108, %728 : vector<32x128xf32>
    %c10 = arith.constant 10 : index
    %1110 = memref.load %arg1[%c10] : memref<21xf32, #tpu.memory_space<smem>>
    %1111 = vector.broadcast %1110 : f32 to vector<32x128xf32>
    %1112 = arith.mulf %1111, %917 : vector<32x128xf32>
    %1113 = arith.addf %1109, %1112 : vector<32x128xf32>
    %c11 = arith.constant 11 : index
    %1114 = memref.load %arg1[%c11] : memref<21xf32, #tpu.memory_space<smem>>
    %1115 = vector.broadcast %1114 : f32 to vector<32x128xf32>
    %1116 = arith.mulf %1115, %1106 : vector<32x128xf32>
    %1117 = arith.addf %1113, %1116 : vector<32x128xf32>
    %cst_519 = arith.constant 1.000000e+00 : f32
    %1118 = vector.broadcast %cst_519 : f32 to vector<32x128xf32>
    %1119 = arith.mulf %1117, %1118 : vector<32x128xf32>
    %cst_520 = arith.constant 1.500000e-01 : f32
    %1120 = vector.broadcast %cst_520 : f32 to vector<32x128xf32>
    %1121 = arith.addf %1120, %1119 : vector<32x128xf32>
    %cst_521 = arith.constant 1.500000e-02 : f32
    %1122 = vector.broadcast %cst_521 : f32 to vector<32x128xf32>
    %1123 = arith.subf %1121, %1122 : vector<32x128xf32>
    %cst_522 = arith.constant 0.000000e+00 : f32
    %1124 = vector.broadcast %cst_522 : f32 to vector<32x128xf32>
    %1125 = arith.maximumf %1123, %1124 : vector<32x128xf32>
    %cst_523 = arith.constant 5.250000e-02 : f32
    %1126 = vector.broadcast %cst_523 : f32 to vector<32x128xf32>
    %1127 = arith.subf %1125, %1126 : vector<32x128xf32>
    %cst_524 = arith.constant 57.1428566 : f32
    %1128 = vector.broadcast %cst_524 : f32 to vector<32x128xf32>
    %1129 = arith.mulf %1127, %1128 : vector<32x128xf32>
    %cst_525 = arith.constant 5.000000e-01 : f32
    %1130 = vector.broadcast %cst_525 : f32 to vector<32x128xf32>
    %1131 = arith.subf %1129, %1130 : vector<32x128xf32>
    %1132 = math.ceil %1131 : vector<32x128xf32>
    %cst_526 = arith.constant 0.000000e+00 : f32
    %cst_527 = arith.constant 1.700000e+01 : f32
    %1133 = vector.broadcast %cst_526 : f32 to vector<32x128xf32>
    %1134 = arith.maximumf %1133, %1132 : vector<32x128xf32>
    %1135 = vector.broadcast %cst_527 : f32 to vector<32x128xf32>
    %1136 = arith.minimumf %1135, %1134 : vector<32x128xf32>
    %1137 = arith.fptosi %1136 : vector<32x128xf32> to vector<32x128xi32>
    %cst_528 = arith.constant 0x4CB74CCB : f32
    %1138 = vector.broadcast %cst_528 : f32 to vector<32x128xf32>
    %cst_529 = arith.constant 3.500000e-01 : f32
    %1139 = vector.broadcast %cst_529 : f32 to vector<32x128xf32>
    %cst_530 = arith.constant 0x4BDF0B1A : f32
    %1140 = vector.broadcast %cst_530 : f32 to vector<32x128xf32>
    %c1_i32_531 = arith.constant 1 : i32
    %1141 = vector.broadcast %c1_i32_531 : i32 to vector<32x128xi32>
    %1142 = arith.cmpi eq, %1137, %1141 : vector<32x128xi32>
    %cst_532 = arith.constant 6699988.5 : f32
    %1143 = vector.broadcast %cst_532 : f32 to vector<32x128xf32>
    %1144 = arith.select %1142, %1143, %1138 : vector<32x128xi1>, vector<32x128xf32>
    %cst_533 = arith.constant 5.250000e-02 : f32
    %1145 = vector.broadcast %cst_533 : f32 to vector<32x128xf32>
    %1146 = arith.select %1142, %1145, %1139 : vector<32x128xi1>, vector<32x128xf32>
    %cst_534 = arith.constant 644404.063 : f32
    %1147 = vector.broadcast %cst_534 : f32 to vector<32x128xf32>
    %1148 = arith.select %1142, %1147, %1140 : vector<32x128xi1>, vector<32x128xf32>
    %c2_i32_535 = arith.constant 2 : i32
    %1149 = vector.broadcast %c2_i32_535 : i32 to vector<32x128xi32>
    %1150 = arith.cmpi eq, %1137, %1149 : vector<32x128xi32>
    %cst_536 = arith.constant 0x4B1B525D : f32
    %1151 = vector.broadcast %cst_536 : f32 to vector<32x128xf32>
    %1152 = arith.select %1150, %1151, %1144 : vector<32x128xi1>, vector<32x128xf32>
    %cst_537 = arith.constant 7.000000e-02 : f32
    %1153 = vector.broadcast %cst_537 : f32 to vector<32x128xf32>
    %1154 = arith.select %1150, %1153, %1146 : vector<32x128xi1>, vector<32x128xf32>
    %cst_538 = arith.constant 761653.875 : f32
    %1155 = vector.broadcast %cst_538 : f32 to vector<32x128xf32>
    %1156 = arith.select %1150, %1155, %1148 : vector<32x128xi1>, vector<32x128xf32>
    %c3_i32_539 = arith.constant 3 : i32
    %1157 = vector.broadcast %c3_i32_539 : i32 to vector<32x128xi32>
    %1158 = arith.cmpi eq, %1137, %1157 : vector<32x128xi32>
    %cst_540 = arith.constant 0x4B5069A9 : f32
    %1159 = vector.broadcast %cst_540 : f32 to vector<32x128xf32>
    %1160 = arith.select %1158, %1159, %1152 : vector<32x128xi1>, vector<32x128xf32>
    %cst_541 = arith.constant 0.0874999985 : f32
    %1161 = vector.broadcast %cst_541 : f32 to vector<32x128xf32>
    %1162 = arith.select %1158, %1161, %1154 : vector<32x128xi1>, vector<32x128xf32>
    %cst_542 = arith.constant 939789.25 : f32
    %1163 = vector.broadcast %cst_542 : f32 to vector<32x128xf32>
    %1164 = arith.select %1158, %1163, %1156 : vector<32x128xi1>, vector<32x128xf32>
    %c4_i32_543 = arith.constant 4 : i32
    %1165 = vector.broadcast %c4_i32_543 : i32 to vector<32x128xi32>
    %1166 = arith.cmpi eq, %1137, %1165 : vector<32x128xi32>
    %cst_544 = arith.constant 0x4B8B5557 : f32
    %1167 = vector.broadcast %cst_544 : f32 to vector<32x128xf32>
    %1168 = arith.select %1166, %1167, %1160 : vector<32x128xi1>, vector<32x128xf32>
    %cst_545 = arith.constant 1.050000e-01 : f32
    %1169 = vector.broadcast %cst_545 : f32 to vector<32x128xf32>
    %1170 = arith.select %1166, %1169, %1162 : vector<32x128xi1>, vector<32x128xf32>
    %cst_546 = arith.constant 1178813.63 : f32
    %1171 = vector.broadcast %cst_546 : f32 to vector<32x128xf32>
    %1172 = arith.select %1166, %1171, %1164 : vector<32x128xi1>, vector<32x128xf32>
    %c5_i32_547 = arith.constant 5 : i32
    %1173 = vector.broadcast %c5_i32_547 : i32 to vector<32x128xi32>
    %1174 = arith.cmpi eq, %1137, %1173 : vector<32x128xi32>
    %cst_548 = arith.constant 0x4BBF6315 : f32
    %1175 = vector.broadcast %cst_548 : f32 to vector<32x128xf32>
    %1176 = arith.select %1174, %1175, %1168 : vector<32x128xi1>, vector<32x128xf32>
    %cst_549 = arith.constant 1.225000e-01 : f32
    %1177 = vector.broadcast %cst_549 : f32 to vector<32x128xf32>
    %1178 = arith.select %1174, %1177, %1170 : vector<32x128xi1>, vector<32x128xf32>
    %cst_550 = arith.constant 0x49B6E958 : f32
    %1179 = vector.broadcast %cst_550 : f32 to vector<32x128xf32>
    %1180 = arith.select %1174, %1179, %1172 : vector<32x128xi1>, vector<32x128xf32>
    %c6_i32_551 = arith.constant 6 : i32
    %1181 = vector.broadcast %c6_i32_551 : i32 to vector<32x128xi32>
    %1182 = arith.cmpi eq, %1137, %1181 : vector<32x128xi32>
    %cst_552 = arith.constant 0x4C04C5FB : f32
    %1183 = vector.broadcast %cst_552 : f32 to vector<32x128xf32>
    %1184 = arith.select %1182, %1183, %1176 : vector<32x128xi1>, vector<32x128xf32>
    %cst_553 = arith.constant 1.400000e-01 : f32
    %1185 = vector.broadcast %cst_553 : f32 to vector<32x128xf32>
    %1186 = arith.select %1182, %1185, %1178 : vector<32x128xi1>, vector<32x128xf32>
    %cst_554 = arith.constant 1937406.88 : f32
    %1187 = vector.broadcast %cst_554 : f32 to vector<32x128xf32>
    %1188 = arith.select %1182, %1187, %1180 : vector<32x128xi1>, vector<32x128xf32>
    %c7_i32_555 = arith.constant 7 : i32
    %1189 = vector.broadcast %c7_i32_555 : i32 to vector<32x128xi32>
    %1190 = arith.cmpi eq, %1137, %1189 : vector<32x128xi32>
    %cst_556 = arith.constant 0x4C34800A : f32
    %1191 = vector.broadcast %cst_556 : f32 to vector<32x128xf32>
    %1192 = arith.select %1190, %1191, %1184 : vector<32x128xi1>, vector<32x128xf32>
    %cst_557 = arith.constant 1.575000e-01 : f32
    %1193 = vector.broadcast %cst_557 : f32 to vector<32x128xf32>
    %1194 = arith.select %1190, %1193, %1186 : vector<32x128xi1>, vector<32x128xf32>
    %cst_558 = arith.constant 2546507.25 : f32
    %1195 = vector.broadcast %cst_558 : f32 to vector<32x128xf32>
    %1196 = arith.select %1190, %1195, %1188 : vector<32x128xi1>, vector<32x128xf32>
    %c8_i32_559 = arith.constant 8 : i32
    %1197 = vector.broadcast %c8_i32_559 : i32 to vector<32x128xi32>
    %1198 = arith.cmpi eq, %1137, %1197 : vector<32x128xi32>
    %cst_560 = arith.constant 0x4C72808B : f32
    %1199 = vector.broadcast %cst_560 : f32 to vector<32x128xf32>
    %1200 = arith.select %1198, %1199, %1192 : vector<32x128xi1>, vector<32x128xf32>
    %cst_561 = arith.constant 1.750000e-01 : f32
    %1201 = vector.broadcast %cst_561 : f32 to vector<32x128xf32>
    %1202 = arith.select %1198, %1201, %1194 : vector<32x128xi1>, vector<32x128xf32>
    %cst_562 = arith.constant 3374555.25 : f32
    %1203 = vector.broadcast %cst_562 : f32 to vector<32x128xf32>
    %1204 = arith.select %1198, %1203, %1196 : vector<32x128xi1>, vector<32x128xf32>
    %c9_i32_563 = arith.constant 9 : i32
    %1205 = vector.broadcast %c9_i32_563 : i32 to vector<32x128xi32>
    %1206 = arith.cmpi eq, %1137, %1205 : vector<32x128xi32>
    %cst_564 = arith.constant 0x4CA21B59 : f32
    %1207 = vector.broadcast %cst_564 : f32 to vector<32x128xf32>
    %1208 = arith.select %1206, %1207, %1200 : vector<32x128xi1>, vector<32x128xf32>
    %cst_565 = arith.constant 1.925000e-01 : f32
    %1209 = vector.broadcast %cst_565 : f32 to vector<32x128xf32>
    %1210 = arith.select %1206, %1209, %1202 : vector<32x128xi1>, vector<32x128xf32>
    %cst_566 = arith.constant 4487038.5 : f32
    %1211 = vector.broadcast %cst_566 : f32 to vector<32x128xf32>
    %1212 = arith.select %1206, %1211, %1204 : vector<32x128xi1>, vector<32x128xf32>
    %c10_i32_567 = arith.constant 10 : i32
    %1213 = vector.broadcast %c10_i32_567 : i32 to vector<32x128xi32>
    %1214 = arith.cmpi eq, %1137, %1213 : vector<32x128xi32>
    %cst_568 = arith.constant 0x4CD64D26 : f32
    %1215 = vector.broadcast %cst_568 : f32 to vector<32x128xf32>
    %1216 = arith.select %1214, %1215, %1208 : vector<32x128xi1>, vector<32x128xf32>
    %cst_569 = arith.constant 2.100000e-01 : f32
    %1217 = vector.broadcast %cst_569 : f32 to vector<32x128xf32>
    %1218 = arith.select %1214, %1217, %1210 : vector<32x128xi1>, vector<32x128xf32>
    %cst_570 = arith.constant 0x4AB652CE : f32
    %1219 = vector.broadcast %cst_570 : f32 to vector<32x128xf32>
    %1220 = arith.select %1214, %1219, %1212 : vector<32x128xi1>, vector<32x128xf32>
    %c11_i32_571 = arith.constant 11 : i32
    %1221 = vector.broadcast %c11_i32_571 : i32 to vector<32x128xi32>
    %1222 = arith.cmpi eq, %1137, %1221 : vector<32x128xi32>
    %cst_572 = arith.constant 0x4D0A2F85 : f32
    %1223 = vector.broadcast %cst_572 : f32 to vector<32x128xf32>
    %1224 = arith.select %1222, %1223, %1216 : vector<32x128xi1>, vector<32x128xf32>
    %cst_573 = arith.constant 2.275000e-01 : f32
    %1225 = vector.broadcast %cst_573 : f32 to vector<32x128xf32>
    %1226 = arith.select %1222, %1225, %1218 : vector<32x128xi1>, vector<32x128xf32>
    %cst_574 = arith.constant 7.940600e+06 : f32
    %1227 = vector.broadcast %cst_574 : f32 to vector<32x128xf32>
    %1228 = arith.select %1222, %1227, %1220 : vector<32x128xi1>, vector<32x128xf32>
    %c12_i32_575 = arith.constant 12 : i32
    %1229 = vector.broadcast %c12_i32_575 : i32 to vector<32x128xi32>
    %1230 = arith.cmpi eq, %1137, %1229 : vector<32x128xi32>
    %cst_576 = arith.constant 0x4D2AA536 : f32
    %1231 = vector.broadcast %cst_576 : f32 to vector<32x128xf32>
    %1232 = arith.select %1230, %1231, %1224 : vector<32x128xi1>, vector<32x128xf32>
    %cst_577 = arith.constant 2.450000e-01 : f32
    %1233 = vector.broadcast %cst_577 : f32 to vector<32x128xf32>
    %1234 = arith.select %1230, %1233, %1226 : vector<32x128xi1>, vector<32x128xf32>
    %cst_578 = arith.constant 0x4B1FDB1D : f32
    %1235 = vector.broadcast %cst_578 : f32 to vector<32x128xf32>
    %1236 = arith.select %1230, %1235, %1228 : vector<32x128xi1>, vector<32x128xf32>
    %c13_i32_579 = arith.constant 13 : i32
    %1237 = vector.broadcast %c13_i32_579 : i32 to vector<32x128xi32>
    %1238 = arith.cmpi eq, %1137, %1237 : vector<32x128xi32>
    %cst_580 = arith.constant 0x4D443E30 : f32
    %1239 = vector.broadcast %cst_580 : f32 to vector<32x128xf32>
    %1240 = arith.select %1238, %1239, %1232 : vector<32x128xi1>, vector<32x128xf32>
    %cst_581 = arith.constant 2.625000e-01 : f32
    %1241 = vector.broadcast %cst_581 : f32 to vector<32x128xf32>
    %1242 = arith.select %1238, %1241, %1234 : vector<32x128xi1>, vector<32x128xf32>
    %cst_582 = arith.constant 0x4B4FA2F6 : f32
    %1243 = vector.broadcast %cst_582 : f32 to vector<32x128xf32>
    %1244 = arith.select %1238, %1243, %1236 : vector<32x128xi1>, vector<32x128xf32>
    %c14_i32_583 = arith.constant 14 : i32
    %1245 = vector.broadcast %c14_i32_583 : i32 to vector<32x128xi32>
    %1246 = arith.cmpi eq, %1137, %1245 : vector<32x128xi32>
    %cst_584 = arith.constant 0x4D4BA701 : f32
    %1247 = vector.broadcast %cst_584 : f32 to vector<32x128xf32>
    %1248 = arith.select %1246, %1247, %1240 : vector<32x128xi1>, vector<32x128xf32>
    %cst_585 = arith.constant 2.800000e-01 : f32
    %1249 = vector.broadcast %cst_585 : f32 to vector<32x128xf32>
    %1250 = arith.select %1246, %1249, %1242 : vector<32x128xi1>, vector<32x128xf32>
    %cst_586 = arith.constant 0x4B834AD5 : f32
    %1251 = vector.broadcast %cst_586 : f32 to vector<32x128xf32>
    %1252 = arith.select %1246, %1251, %1244 : vector<32x128xi1>, vector<32x128xf32>
    %c15_i32_587 = arith.constant 15 : i32
    %1253 = vector.broadcast %c15_i32_587 : i32 to vector<32x128xi32>
    %1254 = arith.cmpi eq, %1137, %1253 : vector<32x128xi32>
    %cst_588 = arith.constant 0x4D3A9BDD : f32
    %1255 = vector.broadcast %cst_588 : f32 to vector<32x128xf32>
    %1256 = arith.select %1254, %1255, %1248 : vector<32x128xi1>, vector<32x128xf32>
    %cst_589 = arith.constant 2.975000e-01 : f32
    %1257 = vector.broadcast %cst_589 : f32 to vector<32x128xf32>
    %1258 = arith.select %1254, %1257, %1250 : vector<32x128xi1>, vector<32x128xf32>
    %cst_590 = arith.constant 0x4B9FCDBD : f32
    %1259 = vector.broadcast %cst_590 : f32 to vector<32x128xf32>
    %1260 = arith.select %1254, %1259, %1252 : vector<32x128xi1>, vector<32x128xf32>
    %c16_i32_591 = arith.constant 16 : i32
    %1261 = vector.broadcast %c16_i32_591 : i32 to vector<32x128xi32>
    %1262 = arith.cmpi eq, %1137, %1261 : vector<32x128xi32>
    %cst_592 = arith.constant 0x4D17E5C5 : f32
    %1263 = vector.broadcast %cst_592 : f32 to vector<32x128xf32>
    %1264 = arith.select %1262, %1263, %1256 : vector<32x128xi1>, vector<32x128xf32>
    %cst_593 = arith.constant 3.150000e-01 : f32
    %1265 = vector.broadcast %cst_593 : f32 to vector<32x128xf32>
    %1266 = arith.select %1262, %1265, %1258 : vector<32x128xi1>, vector<32x128xf32>
    %cst_594 = arith.constant 0x4BB9EDCB : f32
    %1267 = vector.broadcast %cst_594 : f32 to vector<32x128xf32>
    %1268 = arith.select %1262, %1267, %1260 : vector<32x128xi1>, vector<32x128xf32>
    %c17_i32_595 = arith.constant 17 : i32
    %1269 = vector.broadcast %c17_i32_595 : i32 to vector<32x128xi32>
    %1270 = arith.cmpi eq, %1137, %1269 : vector<32x128xi32>
    %cst_596 = arith.constant 0x4CE26970 : f32
    %1271 = vector.broadcast %cst_596 : f32 to vector<32x128xf32>
    %1272 = arith.select %1270, %1271, %1264 : vector<32x128xi1>, vector<32x128xf32>
    %cst_597 = arith.constant 3.325000e-01 : f32
    %1273 = vector.broadcast %cst_597 : f32 to vector<32x128xf32>
    %1274 = arith.select %1270, %1273, %1266 : vector<32x128xi1>, vector<32x128xf32>
    %cst_598 = arith.constant 0x4BCF31CE : f32
    %1275 = vector.broadcast %cst_598 : f32 to vector<32x128xf32>
    %1276 = arith.select %1270, %1275, %1268 : vector<32x128xi1>, vector<32x128xf32>
    %1277 = arith.subf %1125, %1274 : vector<32x128xf32>
    %1278 = arith.mulf %1272, %1277 : vector<32x128xf32>
    %1279 = arith.addf %1278, %1276 : vector<32x128xf32>
    %cst_599 = arith.constant 1.000000e+00 : f32
    %1280 = vector.broadcast %cst_599 : f32 to vector<32x128xf32>
    %1281 = arith.divf %1280, %1279 : vector<32x128xf32>
    %cst_600 = arith.constant 2285464.5 : f32
    %1282 = vector.broadcast %cst_600 : f32 to vector<32x128xf32>
    %1283 = arith.subf %1279, %1282 : vector<32x128xf32>
    %cst_601 = arith.constant 2.000000e+00 : f32
    %1284 = vector.broadcast %cst_601 : f32 to vector<32x128xf32>
    %1285 = arith.mulf %1283, %1284 : vector<32x128xf32>
    %cst_602 = arith.constant 3.14159274 : f32
    %1286 = vector.broadcast %cst_602 : f32 to vector<32x128xf32>
    %1287 = arith.mulf %1285, %1286 : vector<32x128xf32>
    %cst_603 = arith.constant 4.37547811E-7 : f32
    %1288 = vector.broadcast %cst_603 : f32 to vector<32x128xf32>
    %1289 = arith.addf %1288, %1281 : vector<32x128xf32>
    %1290 = arith.mulf %1287, %1289 : vector<32x128xf32>
    %cst_604 = arith.constant 3.14159274 : f32
    %1291 = vector.broadcast %cst_604 : f32 to vector<32x128xf32>
    %1292 = arith.cmpf oge, %1290, %1291 : vector<32x128xf32>
    %cst_605 = arith.constant 1.000000e+00 : f32
    %cst_606 = arith.constant 0.000000e+00 : f32
    %1293 = vector.broadcast %cst_605 : f32 to vector<32x128xf32>
    %1294 = vector.broadcast %cst_606 : f32 to vector<32x128xf32>
    %1295 = arith.select %1292, %1293, %1294 : vector<32x128xi1>, vector<32x128xf32>
    %c12 = arith.constant 12 : index
    %1296 = memref.load %arg1[%c12] : memref<21xf32, #tpu.memory_space<smem>>
    %1297 = vector.broadcast %1296 : f32 to vector<32x128xf32>
    %1298 = arith.mulf %1297, %728 : vector<32x128xf32>
    %c13 = arith.constant 13 : index
    %1299 = memref.load %arg1[%c13] : memref<21xf32, #tpu.memory_space<smem>>
    %1300 = vector.broadcast %1299 : f32 to vector<32x128xf32>
    %1301 = arith.mulf %1300, %917 : vector<32x128xf32>
    %1302 = arith.addf %1298, %1301 : vector<32x128xf32>
    %c14 = arith.constant 14 : index
    %1303 = memref.load %arg1[%c14] : memref<21xf32, #tpu.memory_space<smem>>
    %1304 = vector.broadcast %1303 : f32 to vector<32x128xf32>
    %1305 = arith.mulf %1304, %1106 : vector<32x128xf32>
    %1306 = arith.addf %1302, %1305 : vector<32x128xf32>
    %cst_607 = arith.constant 1.000000e+00 : f32
    %1307 = vector.broadcast %cst_607 : f32 to vector<32x128xf32>
    %1308 = arith.mulf %1306, %1307 : vector<32x128xf32>
    %cst_608 = arith.constant 1.500000e-01 : f32
    %1309 = vector.broadcast %cst_608 : f32 to vector<32x128xf32>
    %1310 = arith.addf %1309, %1308 : vector<32x128xf32>
    %cst_609 = arith.constant 1.500000e-02 : f32
    %1311 = vector.broadcast %cst_609 : f32 to vector<32x128xf32>
    %1312 = arith.subf %1310, %1311 : vector<32x128xf32>
    %cst_610 = arith.constant 0.000000e+00 : f32
    %1313 = vector.broadcast %cst_610 : f32 to vector<32x128xf32>
    %1314 = arith.maximumf %1312, %1313 : vector<32x128xf32>
    %cst_611 = arith.constant 5.250000e-02 : f32
    %1315 = vector.broadcast %cst_611 : f32 to vector<32x128xf32>
    %1316 = arith.subf %1314, %1315 : vector<32x128xf32>
    %cst_612 = arith.constant 57.1428566 : f32
    %1317 = vector.broadcast %cst_612 : f32 to vector<32x128xf32>
    %1318 = arith.mulf %1316, %1317 : vector<32x128xf32>
    %cst_613 = arith.constant 5.000000e-01 : f32
    %1319 = vector.broadcast %cst_613 : f32 to vector<32x128xf32>
    %1320 = arith.subf %1318, %1319 : vector<32x128xf32>
    %1321 = math.ceil %1320 : vector<32x128xf32>
    %cst_614 = arith.constant 0.000000e+00 : f32
    %cst_615 = arith.constant 1.700000e+01 : f32
    %1322 = vector.broadcast %cst_614 : f32 to vector<32x128xf32>
    %1323 = arith.maximumf %1322, %1321 : vector<32x128xf32>
    %1324 = vector.broadcast %cst_615 : f32 to vector<32x128xf32>
    %1325 = arith.minimumf %1324, %1323 : vector<32x128xf32>
    %1326 = arith.fptosi %1325 : vector<32x128xf32> to vector<32x128xi32>
    %cst_616 = arith.constant 0x4CB74CCB : f32
    %1327 = vector.broadcast %cst_616 : f32 to vector<32x128xf32>
    %cst_617 = arith.constant 3.500000e-01 : f32
    %1328 = vector.broadcast %cst_617 : f32 to vector<32x128xf32>
    %cst_618 = arith.constant 0x4BDF0B1A : f32
    %1329 = vector.broadcast %cst_618 : f32 to vector<32x128xf32>
    %c1_i32_619 = arith.constant 1 : i32
    %1330 = vector.broadcast %c1_i32_619 : i32 to vector<32x128xi32>
    %1331 = arith.cmpi eq, %1326, %1330 : vector<32x128xi32>
    %cst_620 = arith.constant 6699988.5 : f32
    %1332 = vector.broadcast %cst_620 : f32 to vector<32x128xf32>
    %1333 = arith.select %1331, %1332, %1327 : vector<32x128xi1>, vector<32x128xf32>
    %cst_621 = arith.constant 5.250000e-02 : f32
    %1334 = vector.broadcast %cst_621 : f32 to vector<32x128xf32>
    %1335 = arith.select %1331, %1334, %1328 : vector<32x128xi1>, vector<32x128xf32>
    %cst_622 = arith.constant 644404.063 : f32
    %1336 = vector.broadcast %cst_622 : f32 to vector<32x128xf32>
    %1337 = arith.select %1331, %1336, %1329 : vector<32x128xi1>, vector<32x128xf32>
    %c2_i32_623 = arith.constant 2 : i32
    %1338 = vector.broadcast %c2_i32_623 : i32 to vector<32x128xi32>
    %1339 = arith.cmpi eq, %1326, %1338 : vector<32x128xi32>
    %cst_624 = arith.constant 0x4B1B525D : f32
    %1340 = vector.broadcast %cst_624 : f32 to vector<32x128xf32>
    %1341 = arith.select %1339, %1340, %1333 : vector<32x128xi1>, vector<32x128xf32>
    %cst_625 = arith.constant 7.000000e-02 : f32
    %1342 = vector.broadcast %cst_625 : f32 to vector<32x128xf32>
    %1343 = arith.select %1339, %1342, %1335 : vector<32x128xi1>, vector<32x128xf32>
    %cst_626 = arith.constant 761653.875 : f32
    %1344 = vector.broadcast %cst_626 : f32 to vector<32x128xf32>
    %1345 = arith.select %1339, %1344, %1337 : vector<32x128xi1>, vector<32x128xf32>
    %c3_i32_627 = arith.constant 3 : i32
    %1346 = vector.broadcast %c3_i32_627 : i32 to vector<32x128xi32>
    %1347 = arith.cmpi eq, %1326, %1346 : vector<32x128xi32>
    %cst_628 = arith.constant 0x4B5069A9 : f32
    %1348 = vector.broadcast %cst_628 : f32 to vector<32x128xf32>
    %1349 = arith.select %1347, %1348, %1341 : vector<32x128xi1>, vector<32x128xf32>
    %cst_629 = arith.constant 0.0874999985 : f32
    %1350 = vector.broadcast %cst_629 : f32 to vector<32x128xf32>
    %1351 = arith.select %1347, %1350, %1343 : vector<32x128xi1>, vector<32x128xf32>
    %cst_630 = arith.constant 939789.25 : f32
    %1352 = vector.broadcast %cst_630 : f32 to vector<32x128xf32>
    %1353 = arith.select %1347, %1352, %1345 : vector<32x128xi1>, vector<32x128xf32>
    %c4_i32_631 = arith.constant 4 : i32
    %1354 = vector.broadcast %c4_i32_631 : i32 to vector<32x128xi32>
    %1355 = arith.cmpi eq, %1326, %1354 : vector<32x128xi32>
    %cst_632 = arith.constant 0x4B8B5557 : f32
    %1356 = vector.broadcast %cst_632 : f32 to vector<32x128xf32>
    %1357 = arith.select %1355, %1356, %1349 : vector<32x128xi1>, vector<32x128xf32>
    %cst_633 = arith.constant 1.050000e-01 : f32
    %1358 = vector.broadcast %cst_633 : f32 to vector<32x128xf32>
    %1359 = arith.select %1355, %1358, %1351 : vector<32x128xi1>, vector<32x128xf32>
    %cst_634 = arith.constant 1178813.63 : f32
    %1360 = vector.broadcast %cst_634 : f32 to vector<32x128xf32>
    %1361 = arith.select %1355, %1360, %1353 : vector<32x128xi1>, vector<32x128xf32>
    %c5_i32_635 = arith.constant 5 : i32
    %1362 = vector.broadcast %c5_i32_635 : i32 to vector<32x128xi32>
    %1363 = arith.cmpi eq, %1326, %1362 : vector<32x128xi32>
    %cst_636 = arith.constant 0x4BBF6315 : f32
    %1364 = vector.broadcast %cst_636 : f32 to vector<32x128xf32>
    %1365 = arith.select %1363, %1364, %1357 : vector<32x128xi1>, vector<32x128xf32>
    %cst_637 = arith.constant 1.225000e-01 : f32
    %1366 = vector.broadcast %cst_637 : f32 to vector<32x128xf32>
    %1367 = arith.select %1363, %1366, %1359 : vector<32x128xi1>, vector<32x128xf32>
    %cst_638 = arith.constant 0x49B6E958 : f32
    %1368 = vector.broadcast %cst_638 : f32 to vector<32x128xf32>
    %1369 = arith.select %1363, %1368, %1361 : vector<32x128xi1>, vector<32x128xf32>
    %c6_i32_639 = arith.constant 6 : i32
    %1370 = vector.broadcast %c6_i32_639 : i32 to vector<32x128xi32>
    %1371 = arith.cmpi eq, %1326, %1370 : vector<32x128xi32>
    %cst_640 = arith.constant 0x4C04C5FB : f32
    %1372 = vector.broadcast %cst_640 : f32 to vector<32x128xf32>
    %1373 = arith.select %1371, %1372, %1365 : vector<32x128xi1>, vector<32x128xf32>
    %cst_641 = arith.constant 1.400000e-01 : f32
    %1374 = vector.broadcast %cst_641 : f32 to vector<32x128xf32>
    %1375 = arith.select %1371, %1374, %1367 : vector<32x128xi1>, vector<32x128xf32>
    %cst_642 = arith.constant 1937406.88 : f32
    %1376 = vector.broadcast %cst_642 : f32 to vector<32x128xf32>
    %1377 = arith.select %1371, %1376, %1369 : vector<32x128xi1>, vector<32x128xf32>
    %c7_i32_643 = arith.constant 7 : i32
    %1378 = vector.broadcast %c7_i32_643 : i32 to vector<32x128xi32>
    %1379 = arith.cmpi eq, %1326, %1378 : vector<32x128xi32>
    %cst_644 = arith.constant 0x4C34800A : f32
    %1380 = vector.broadcast %cst_644 : f32 to vector<32x128xf32>
    %1381 = arith.select %1379, %1380, %1373 : vector<32x128xi1>, vector<32x128xf32>
    %cst_645 = arith.constant 1.575000e-01 : f32
    %1382 = vector.broadcast %cst_645 : f32 to vector<32x128xf32>
    %1383 = arith.select %1379, %1382, %1375 : vector<32x128xi1>, vector<32x128xf32>
    %cst_646 = arith.constant 2546507.25 : f32
    %1384 = vector.broadcast %cst_646 : f32 to vector<32x128xf32>
    %1385 = arith.select %1379, %1384, %1377 : vector<32x128xi1>, vector<32x128xf32>
    %c8_i32_647 = arith.constant 8 : i32
    %1386 = vector.broadcast %c8_i32_647 : i32 to vector<32x128xi32>
    %1387 = arith.cmpi eq, %1326, %1386 : vector<32x128xi32>
    %cst_648 = arith.constant 0x4C72808B : f32
    %1388 = vector.broadcast %cst_648 : f32 to vector<32x128xf32>
    %1389 = arith.select %1387, %1388, %1381 : vector<32x128xi1>, vector<32x128xf32>
    %cst_649 = arith.constant 1.750000e-01 : f32
    %1390 = vector.broadcast %cst_649 : f32 to vector<32x128xf32>
    %1391 = arith.select %1387, %1390, %1383 : vector<32x128xi1>, vector<32x128xf32>
    %cst_650 = arith.constant 3374555.25 : f32
    %1392 = vector.broadcast %cst_650 : f32 to vector<32x128xf32>
    %1393 = arith.select %1387, %1392, %1385 : vector<32x128xi1>, vector<32x128xf32>
    %c9_i32_651 = arith.constant 9 : i32
    %1394 = vector.broadcast %c9_i32_651 : i32 to vector<32x128xi32>
    %1395 = arith.cmpi eq, %1326, %1394 : vector<32x128xi32>
    %cst_652 = arith.constant 0x4CA21B59 : f32
    %1396 = vector.broadcast %cst_652 : f32 to vector<32x128xf32>
    %1397 = arith.select %1395, %1396, %1389 : vector<32x128xi1>, vector<32x128xf32>
    %cst_653 = arith.constant 1.925000e-01 : f32
    %1398 = vector.broadcast %cst_653 : f32 to vector<32x128xf32>
    %1399 = arith.select %1395, %1398, %1391 : vector<32x128xi1>, vector<32x128xf32>
    %cst_654 = arith.constant 4487038.5 : f32
    %1400 = vector.broadcast %cst_654 : f32 to vector<32x128xf32>
    %1401 = arith.select %1395, %1400, %1393 : vector<32x128xi1>, vector<32x128xf32>
    %c10_i32_655 = arith.constant 10 : i32
    %1402 = vector.broadcast %c10_i32_655 : i32 to vector<32x128xi32>
    %1403 = arith.cmpi eq, %1326, %1402 : vector<32x128xi32>
    %cst_656 = arith.constant 0x4CD64D26 : f32
    %1404 = vector.broadcast %cst_656 : f32 to vector<32x128xf32>
    %1405 = arith.select %1403, %1404, %1397 : vector<32x128xi1>, vector<32x128xf32>
    %cst_657 = arith.constant 2.100000e-01 : f32
    %1406 = vector.broadcast %cst_657 : f32 to vector<32x128xf32>
    %1407 = arith.select %1403, %1406, %1399 : vector<32x128xi1>, vector<32x128xf32>
    %cst_658 = arith.constant 0x4AB652CE : f32
    %1408 = vector.broadcast %cst_658 : f32 to vector<32x128xf32>
    %1409 = arith.select %1403, %1408, %1401 : vector<32x128xi1>, vector<32x128xf32>
    %c11_i32_659 = arith.constant 11 : i32
    %1410 = vector.broadcast %c11_i32_659 : i32 to vector<32x128xi32>
    %1411 = arith.cmpi eq, %1326, %1410 : vector<32x128xi32>
    %cst_660 = arith.constant 0x4D0A2F85 : f32
    %1412 = vector.broadcast %cst_660 : f32 to vector<32x128xf32>
    %1413 = arith.select %1411, %1412, %1405 : vector<32x128xi1>, vector<32x128xf32>
    %cst_661 = arith.constant 2.275000e-01 : f32
    %1414 = vector.broadcast %cst_661 : f32 to vector<32x128xf32>
    %1415 = arith.select %1411, %1414, %1407 : vector<32x128xi1>, vector<32x128xf32>
    %cst_662 = arith.constant 7.940600e+06 : f32
    %1416 = vector.broadcast %cst_662 : f32 to vector<32x128xf32>
    %1417 = arith.select %1411, %1416, %1409 : vector<32x128xi1>, vector<32x128xf32>
    %c12_i32_663 = arith.constant 12 : i32
    %1418 = vector.broadcast %c12_i32_663 : i32 to vector<32x128xi32>
    %1419 = arith.cmpi eq, %1326, %1418 : vector<32x128xi32>
    %cst_664 = arith.constant 0x4D2AA536 : f32
    %1420 = vector.broadcast %cst_664 : f32 to vector<32x128xf32>
    %1421 = arith.select %1419, %1420, %1413 : vector<32x128xi1>, vector<32x128xf32>
    %cst_665 = arith.constant 2.450000e-01 : f32
    %1422 = vector.broadcast %cst_665 : f32 to vector<32x128xf32>
    %1423 = arith.select %1419, %1422, %1415 : vector<32x128xi1>, vector<32x128xf32>
    %cst_666 = arith.constant 0x4B1FDB1D : f32
    %1424 = vector.broadcast %cst_666 : f32 to vector<32x128xf32>
    %1425 = arith.select %1419, %1424, %1417 : vector<32x128xi1>, vector<32x128xf32>
    %c13_i32_667 = arith.constant 13 : i32
    %1426 = vector.broadcast %c13_i32_667 : i32 to vector<32x128xi32>
    %1427 = arith.cmpi eq, %1326, %1426 : vector<32x128xi32>
    %cst_668 = arith.constant 0x4D443E30 : f32
    %1428 = vector.broadcast %cst_668 : f32 to vector<32x128xf32>
    %1429 = arith.select %1427, %1428, %1421 : vector<32x128xi1>, vector<32x128xf32>
    %cst_669 = arith.constant 2.625000e-01 : f32
    %1430 = vector.broadcast %cst_669 : f32 to vector<32x128xf32>
    %1431 = arith.select %1427, %1430, %1423 : vector<32x128xi1>, vector<32x128xf32>
    %cst_670 = arith.constant 0x4B4FA2F6 : f32
    %1432 = vector.broadcast %cst_670 : f32 to vector<32x128xf32>
    %1433 = arith.select %1427, %1432, %1425 : vector<32x128xi1>, vector<32x128xf32>
    %c14_i32_671 = arith.constant 14 : i32
    %1434 = vector.broadcast %c14_i32_671 : i32 to vector<32x128xi32>
    %1435 = arith.cmpi eq, %1326, %1434 : vector<32x128xi32>
    %cst_672 = arith.constant 0x4D4BA701 : f32
    %1436 = vector.broadcast %cst_672 : f32 to vector<32x128xf32>
    %1437 = arith.select %1435, %1436, %1429 : vector<32x128xi1>, vector<32x128xf32>
    %cst_673 = arith.constant 2.800000e-01 : f32
    %1438 = vector.broadcast %cst_673 : f32 to vector<32x128xf32>
    %1439 = arith.select %1435, %1438, %1431 : vector<32x128xi1>, vector<32x128xf32>
    %cst_674 = arith.constant 0x4B834AD5 : f32
    %1440 = vector.broadcast %cst_674 : f32 to vector<32x128xf32>
    %1441 = arith.select %1435, %1440, %1433 : vector<32x128xi1>, vector<32x128xf32>
    %c15_i32_675 = arith.constant 15 : i32
    %1442 = vector.broadcast %c15_i32_675 : i32 to vector<32x128xi32>
    %1443 = arith.cmpi eq, %1326, %1442 : vector<32x128xi32>
    %cst_676 = arith.constant 0x4D3A9BDD : f32
    %1444 = vector.broadcast %cst_676 : f32 to vector<32x128xf32>
    %1445 = arith.select %1443, %1444, %1437 : vector<32x128xi1>, vector<32x128xf32>
    %cst_677 = arith.constant 2.975000e-01 : f32
    %1446 = vector.broadcast %cst_677 : f32 to vector<32x128xf32>
    %1447 = arith.select %1443, %1446, %1439 : vector<32x128xi1>, vector<32x128xf32>
    %cst_678 = arith.constant 0x4B9FCDBD : f32
    %1448 = vector.broadcast %cst_678 : f32 to vector<32x128xf32>
    %1449 = arith.select %1443, %1448, %1441 : vector<32x128xi1>, vector<32x128xf32>
    %c16_i32_679 = arith.constant 16 : i32
    %1450 = vector.broadcast %c16_i32_679 : i32 to vector<32x128xi32>
    %1451 = arith.cmpi eq, %1326, %1450 : vector<32x128xi32>
    %cst_680 = arith.constant 0x4D17E5C5 : f32
    %1452 = vector.broadcast %cst_680 : f32 to vector<32x128xf32>
    %1453 = arith.select %1451, %1452, %1445 : vector<32x128xi1>, vector<32x128xf32>
    %cst_681 = arith.constant 3.150000e-01 : f32
    %1454 = vector.broadcast %cst_681 : f32 to vector<32x128xf32>
    %1455 = arith.select %1451, %1454, %1447 : vector<32x128xi1>, vector<32x128xf32>
    %cst_682 = arith.constant 0x4BB9EDCB : f32
    %1456 = vector.broadcast %cst_682 : f32 to vector<32x128xf32>
    %1457 = arith.select %1451, %1456, %1449 : vector<32x128xi1>, vector<32x128xf32>
    %c17_i32_683 = arith.constant 17 : i32
    %1458 = vector.broadcast %c17_i32_683 : i32 to vector<32x128xi32>
    %1459 = arith.cmpi eq, %1326, %1458 : vector<32x128xi32>
    %cst_684 = arith.constant 0x4CE26970 : f32
    %1460 = vector.broadcast %cst_684 : f32 to vector<32x128xf32>
    %1461 = arith.select %1459, %1460, %1453 : vector<32x128xi1>, vector<32x128xf32>
    %cst_685 = arith.constant 3.325000e-01 : f32
    %1462 = vector.broadcast %cst_685 : f32 to vector<32x128xf32>
    %1463 = arith.select %1459, %1462, %1455 : vector<32x128xi1>, vector<32x128xf32>
    %cst_686 = arith.constant 0x4BCF31CE : f32
    %1464 = vector.broadcast %cst_686 : f32 to vector<32x128xf32>
    %1465 = arith.select %1459, %1464, %1457 : vector<32x128xi1>, vector<32x128xf32>
    %1466 = arith.subf %1314, %1463 : vector<32x128xf32>
    %1467 = arith.mulf %1461, %1466 : vector<32x128xf32>
    %1468 = arith.addf %1467, %1465 : vector<32x128xf32>
    %cst_687 = arith.constant 1.000000e+00 : f32
    %1469 = vector.broadcast %cst_687 : f32 to vector<32x128xf32>
    %1470 = arith.divf %1469, %1468 : vector<32x128xf32>
    %cst_688 = arith.constant 2285464.5 : f32
    %1471 = vector.broadcast %cst_688 : f32 to vector<32x128xf32>
    %1472 = arith.subf %1468, %1471 : vector<32x128xf32>
    %cst_689 = arith.constant 2.000000e+00 : f32
    %1473 = vector.broadcast %cst_689 : f32 to vector<32x128xf32>
    %1474 = arith.mulf %1472, %1473 : vector<32x128xf32>
    %cst_690 = arith.constant 3.14159274 : f32
    %1475 = vector.broadcast %cst_690 : f32 to vector<32x128xf32>
    %1476 = arith.mulf %1474, %1475 : vector<32x128xf32>
    %cst_691 = arith.constant 4.37547811E-7 : f32
    %1477 = vector.broadcast %cst_691 : f32 to vector<32x128xf32>
    %1478 = arith.addf %1477, %1470 : vector<32x128xf32>
    %1479 = arith.mulf %1476, %1478 : vector<32x128xf32>
    %cst_692 = arith.constant 3.14159274 : f32
    %1480 = vector.broadcast %cst_692 : f32 to vector<32x128xf32>
    %1481 = arith.cmpf oge, %1479, %1480 : vector<32x128xf32>
    %cst_693 = arith.constant 1.000000e+00 : f32
    %cst_694 = arith.constant 0.000000e+00 : f32
    %1482 = vector.broadcast %cst_693 : f32 to vector<32x128xf32>
    %1483 = vector.broadcast %cst_694 : f32 to vector<32x128xf32>
    %1484 = arith.select %1481, %1482, %1483 : vector<32x128xi1>, vector<32x128xf32>
    %c15 = arith.constant 15 : index
    %1485 = memref.load %arg1[%c15] : memref<21xf32, #tpu.memory_space<smem>>
    %1486 = vector.broadcast %1485 : f32 to vector<32x128xf32>
    %1487 = arith.mulf %1486, %728 : vector<32x128xf32>
    %c16 = arith.constant 16 : index
    %1488 = memref.load %arg1[%c16] : memref<21xf32, #tpu.memory_space<smem>>
    %1489 = vector.broadcast %1488 : f32 to vector<32x128xf32>
    %1490 = arith.mulf %1489, %917 : vector<32x128xf32>
    %1491 = arith.addf %1487, %1490 : vector<32x128xf32>
    %c17 = arith.constant 17 : index
    %1492 = memref.load %arg1[%c17] : memref<21xf32, #tpu.memory_space<smem>>
    %1493 = vector.broadcast %1492 : f32 to vector<32x128xf32>
    %1494 = arith.mulf %1493, %1106 : vector<32x128xf32>
    %1495 = arith.addf %1491, %1494 : vector<32x128xf32>
    %cst_695 = arith.constant 1.000000e+00 : f32
    %1496 = vector.broadcast %cst_695 : f32 to vector<32x128xf32>
    %1497 = arith.mulf %1495, %1496 : vector<32x128xf32>
    %cst_696 = arith.constant 1.500000e-01 : f32
    %1498 = vector.broadcast %cst_696 : f32 to vector<32x128xf32>
    %1499 = arith.addf %1498, %1497 : vector<32x128xf32>
    %cst_697 = arith.constant 1.500000e-02 : f32
    %1500 = vector.broadcast %cst_697 : f32 to vector<32x128xf32>
    %1501 = arith.subf %1499, %1500 : vector<32x128xf32>
    %cst_698 = arith.constant 0.000000e+00 : f32
    %1502 = vector.broadcast %cst_698 : f32 to vector<32x128xf32>
    %1503 = arith.maximumf %1501, %1502 : vector<32x128xf32>
    %cst_699 = arith.constant 5.250000e-02 : f32
    %1504 = vector.broadcast %cst_699 : f32 to vector<32x128xf32>
    %1505 = arith.subf %1503, %1504 : vector<32x128xf32>
    %cst_700 = arith.constant 57.1428566 : f32
    %1506 = vector.broadcast %cst_700 : f32 to vector<32x128xf32>
    %1507 = arith.mulf %1505, %1506 : vector<32x128xf32>
    %cst_701 = arith.constant 5.000000e-01 : f32
    %1508 = vector.broadcast %cst_701 : f32 to vector<32x128xf32>
    %1509 = arith.subf %1507, %1508 : vector<32x128xf32>
    %1510 = math.ceil %1509 : vector<32x128xf32>
    %cst_702 = arith.constant 0.000000e+00 : f32
    %cst_703 = arith.constant 1.700000e+01 : f32
    %1511 = vector.broadcast %cst_702 : f32 to vector<32x128xf32>
    %1512 = arith.maximumf %1511, %1510 : vector<32x128xf32>
    %1513 = vector.broadcast %cst_703 : f32 to vector<32x128xf32>
    %1514 = arith.minimumf %1513, %1512 : vector<32x128xf32>
    %1515 = arith.fptosi %1514 : vector<32x128xf32> to vector<32x128xi32>
    %cst_704 = arith.constant 0x4CB74CCB : f32
    %1516 = vector.broadcast %cst_704 : f32 to vector<32x128xf32>
    %cst_705 = arith.constant 3.500000e-01 : f32
    %1517 = vector.broadcast %cst_705 : f32 to vector<32x128xf32>
    %cst_706 = arith.constant 0x4BDF0B1A : f32
    %1518 = vector.broadcast %cst_706 : f32 to vector<32x128xf32>
    %c1_i32_707 = arith.constant 1 : i32
    %1519 = vector.broadcast %c1_i32_707 : i32 to vector<32x128xi32>
    %1520 = arith.cmpi eq, %1515, %1519 : vector<32x128xi32>
    %cst_708 = arith.constant 6699988.5 : f32
    %1521 = vector.broadcast %cst_708 : f32 to vector<32x128xf32>
    %1522 = arith.select %1520, %1521, %1516 : vector<32x128xi1>, vector<32x128xf32>
    %cst_709 = arith.constant 5.250000e-02 : f32
    %1523 = vector.broadcast %cst_709 : f32 to vector<32x128xf32>
    %1524 = arith.select %1520, %1523, %1517 : vector<32x128xi1>, vector<32x128xf32>
    %cst_710 = arith.constant 644404.063 : f32
    %1525 = vector.broadcast %cst_710 : f32 to vector<32x128xf32>
    %1526 = arith.select %1520, %1525, %1518 : vector<32x128xi1>, vector<32x128xf32>
    %c2_i32_711 = arith.constant 2 : i32
    %1527 = vector.broadcast %c2_i32_711 : i32 to vector<32x128xi32>
    %1528 = arith.cmpi eq, %1515, %1527 : vector<32x128xi32>
    %cst_712 = arith.constant 0x4B1B525D : f32
    %1529 = vector.broadcast %cst_712 : f32 to vector<32x128xf32>
    %1530 = arith.select %1528, %1529, %1522 : vector<32x128xi1>, vector<32x128xf32>
    %cst_713 = arith.constant 7.000000e-02 : f32
    %1531 = vector.broadcast %cst_713 : f32 to vector<32x128xf32>
    %1532 = arith.select %1528, %1531, %1524 : vector<32x128xi1>, vector<32x128xf32>
    %cst_714 = arith.constant 761653.875 : f32
    %1533 = vector.broadcast %cst_714 : f32 to vector<32x128xf32>
    %1534 = arith.select %1528, %1533, %1526 : vector<32x128xi1>, vector<32x128xf32>
    %c3_i32_715 = arith.constant 3 : i32
    %1535 = vector.broadcast %c3_i32_715 : i32 to vector<32x128xi32>
    %1536 = arith.cmpi eq, %1515, %1535 : vector<32x128xi32>
    %cst_716 = arith.constant 0x4B5069A9 : f32
    %1537 = vector.broadcast %cst_716 : f32 to vector<32x128xf32>
    %1538 = arith.select %1536, %1537, %1530 : vector<32x128xi1>, vector<32x128xf32>
    %cst_717 = arith.constant 0.0874999985 : f32
    %1539 = vector.broadcast %cst_717 : f32 to vector<32x128xf32>
    %1540 = arith.select %1536, %1539, %1532 : vector<32x128xi1>, vector<32x128xf32>
    %cst_718 = arith.constant 939789.25 : f32
    %1541 = vector.broadcast %cst_718 : f32 to vector<32x128xf32>
    %1542 = arith.select %1536, %1541, %1534 : vector<32x128xi1>, vector<32x128xf32>
    %c4_i32_719 = arith.constant 4 : i32
    %1543 = vector.broadcast %c4_i32_719 : i32 to vector<32x128xi32>
    %1544 = arith.cmpi eq, %1515, %1543 : vector<32x128xi32>
    %cst_720 = arith.constant 0x4B8B5557 : f32
    %1545 = vector.broadcast %cst_720 : f32 to vector<32x128xf32>
    %1546 = arith.select %1544, %1545, %1538 : vector<32x128xi1>, vector<32x128xf32>
    %cst_721 = arith.constant 1.050000e-01 : f32
    %1547 = vector.broadcast %cst_721 : f32 to vector<32x128xf32>
    %1548 = arith.select %1544, %1547, %1540 : vector<32x128xi1>, vector<32x128xf32>
    %cst_722 = arith.constant 1178813.63 : f32
    %1549 = vector.broadcast %cst_722 : f32 to vector<32x128xf32>
    %1550 = arith.select %1544, %1549, %1542 : vector<32x128xi1>, vector<32x128xf32>
    %c5_i32_723 = arith.constant 5 : i32
    %1551 = vector.broadcast %c5_i32_723 : i32 to vector<32x128xi32>
    %1552 = arith.cmpi eq, %1515, %1551 : vector<32x128xi32>
    %cst_724 = arith.constant 0x4BBF6315 : f32
    %1553 = vector.broadcast %cst_724 : f32 to vector<32x128xf32>
    %1554 = arith.select %1552, %1553, %1546 : vector<32x128xi1>, vector<32x128xf32>
    %cst_725 = arith.constant 1.225000e-01 : f32
    %1555 = vector.broadcast %cst_725 : f32 to vector<32x128xf32>
    %1556 = arith.select %1552, %1555, %1548 : vector<32x128xi1>, vector<32x128xf32>
    %cst_726 = arith.constant 0x49B6E958 : f32
    %1557 = vector.broadcast %cst_726 : f32 to vector<32x128xf32>
    %1558 = arith.select %1552, %1557, %1550 : vector<32x128xi1>, vector<32x128xf32>
    %c6_i32_727 = arith.constant 6 : i32
    %1559 = vector.broadcast %c6_i32_727 : i32 to vector<32x128xi32>
    %1560 = arith.cmpi eq, %1515, %1559 : vector<32x128xi32>
    %cst_728 = arith.constant 0x4C04C5FB : f32
    %1561 = vector.broadcast %cst_728 : f32 to vector<32x128xf32>
    %1562 = arith.select %1560, %1561, %1554 : vector<32x128xi1>, vector<32x128xf32>
    %cst_729 = arith.constant 1.400000e-01 : f32
    %1563 = vector.broadcast %cst_729 : f32 to vector<32x128xf32>
    %1564 = arith.select %1560, %1563, %1556 : vector<32x128xi1>, vector<32x128xf32>
    %cst_730 = arith.constant 1937406.88 : f32
    %1565 = vector.broadcast %cst_730 : f32 to vector<32x128xf32>
    %1566 = arith.select %1560, %1565, %1558 : vector<32x128xi1>, vector<32x128xf32>
    %c7_i32_731 = arith.constant 7 : i32
    %1567 = vector.broadcast %c7_i32_731 : i32 to vector<32x128xi32>
    %1568 = arith.cmpi eq, %1515, %1567 : vector<32x128xi32>
    %cst_732 = arith.constant 0x4C34800A : f32
    %1569 = vector.broadcast %cst_732 : f32 to vector<32x128xf32>
    %1570 = arith.select %1568, %1569, %1562 : vector<32x128xi1>, vector<32x128xf32>
    %cst_733 = arith.constant 1.575000e-01 : f32
    %1571 = vector.broadcast %cst_733 : f32 to vector<32x128xf32>
    %1572 = arith.select %1568, %1571, %1564 : vector<32x128xi1>, vector<32x128xf32>
    %cst_734 = arith.constant 2546507.25 : f32
    %1573 = vector.broadcast %cst_734 : f32 to vector<32x128xf32>
    %1574 = arith.select %1568, %1573, %1566 : vector<32x128xi1>, vector<32x128xf32>
    %c8_i32_735 = arith.constant 8 : i32
    %1575 = vector.broadcast %c8_i32_735 : i32 to vector<32x128xi32>
    %1576 = arith.cmpi eq, %1515, %1575 : vector<32x128xi32>
    %cst_736 = arith.constant 0x4C72808B : f32
    %1577 = vector.broadcast %cst_736 : f32 to vector<32x128xf32>
    %1578 = arith.select %1576, %1577, %1570 : vector<32x128xi1>, vector<32x128xf32>
    %cst_737 = arith.constant 1.750000e-01 : f32
    %1579 = vector.broadcast %cst_737 : f32 to vector<32x128xf32>
    %1580 = arith.select %1576, %1579, %1572 : vector<32x128xi1>, vector<32x128xf32>
    %cst_738 = arith.constant 3374555.25 : f32
    %1581 = vector.broadcast %cst_738 : f32 to vector<32x128xf32>
    %1582 = arith.select %1576, %1581, %1574 : vector<32x128xi1>, vector<32x128xf32>
    %c9_i32_739 = arith.constant 9 : i32
    %1583 = vector.broadcast %c9_i32_739 : i32 to vector<32x128xi32>
    %1584 = arith.cmpi eq, %1515, %1583 : vector<32x128xi32>
    %cst_740 = arith.constant 0x4CA21B59 : f32
    %1585 = vector.broadcast %cst_740 : f32 to vector<32x128xf32>
    %1586 = arith.select %1584, %1585, %1578 : vector<32x128xi1>, vector<32x128xf32>
    %cst_741 = arith.constant 1.925000e-01 : f32
    %1587 = vector.broadcast %cst_741 : f32 to vector<32x128xf32>
    %1588 = arith.select %1584, %1587, %1580 : vector<32x128xi1>, vector<32x128xf32>
    %cst_742 = arith.constant 4487038.5 : f32
    %1589 = vector.broadcast %cst_742 : f32 to vector<32x128xf32>
    %1590 = arith.select %1584, %1589, %1582 : vector<32x128xi1>, vector<32x128xf32>
    %c10_i32_743 = arith.constant 10 : i32
    %1591 = vector.broadcast %c10_i32_743 : i32 to vector<32x128xi32>
    %1592 = arith.cmpi eq, %1515, %1591 : vector<32x128xi32>
    %cst_744 = arith.constant 0x4CD64D26 : f32
    %1593 = vector.broadcast %cst_744 : f32 to vector<32x128xf32>
    %1594 = arith.select %1592, %1593, %1586 : vector<32x128xi1>, vector<32x128xf32>
    %cst_745 = arith.constant 2.100000e-01 : f32
    %1595 = vector.broadcast %cst_745 : f32 to vector<32x128xf32>
    %1596 = arith.select %1592, %1595, %1588 : vector<32x128xi1>, vector<32x128xf32>
    %cst_746 = arith.constant 0x4AB652CE : f32
    %1597 = vector.broadcast %cst_746 : f32 to vector<32x128xf32>
    %1598 = arith.select %1592, %1597, %1590 : vector<32x128xi1>, vector<32x128xf32>
    %c11_i32_747 = arith.constant 11 : i32
    %1599 = vector.broadcast %c11_i32_747 : i32 to vector<32x128xi32>
    %1600 = arith.cmpi eq, %1515, %1599 : vector<32x128xi32>
    %cst_748 = arith.constant 0x4D0A2F85 : f32
    %1601 = vector.broadcast %cst_748 : f32 to vector<32x128xf32>
    %1602 = arith.select %1600, %1601, %1594 : vector<32x128xi1>, vector<32x128xf32>
    %cst_749 = arith.constant 2.275000e-01 : f32
    %1603 = vector.broadcast %cst_749 : f32 to vector<32x128xf32>
    %1604 = arith.select %1600, %1603, %1596 : vector<32x128xi1>, vector<32x128xf32>
    %cst_750 = arith.constant 7.940600e+06 : f32
    %1605 = vector.broadcast %cst_750 : f32 to vector<32x128xf32>
    %1606 = arith.select %1600, %1605, %1598 : vector<32x128xi1>, vector<32x128xf32>
    %c12_i32_751 = arith.constant 12 : i32
    %1607 = vector.broadcast %c12_i32_751 : i32 to vector<32x128xi32>
    %1608 = arith.cmpi eq, %1515, %1607 : vector<32x128xi32>
    %cst_752 = arith.constant 0x4D2AA536 : f32
    %1609 = vector.broadcast %cst_752 : f32 to vector<32x128xf32>
    %1610 = arith.select %1608, %1609, %1602 : vector<32x128xi1>, vector<32x128xf32>
    %cst_753 = arith.constant 2.450000e-01 : f32
    %1611 = vector.broadcast %cst_753 : f32 to vector<32x128xf32>
    %1612 = arith.select %1608, %1611, %1604 : vector<32x128xi1>, vector<32x128xf32>
    %cst_754 = arith.constant 0x4B1FDB1D : f32
    %1613 = vector.broadcast %cst_754 : f32 to vector<32x128xf32>
    %1614 = arith.select %1608, %1613, %1606 : vector<32x128xi1>, vector<32x128xf32>
    %c13_i32_755 = arith.constant 13 : i32
    %1615 = vector.broadcast %c13_i32_755 : i32 to vector<32x128xi32>
    %1616 = arith.cmpi eq, %1515, %1615 : vector<32x128xi32>
    %cst_756 = arith.constant 0x4D443E30 : f32
    %1617 = vector.broadcast %cst_756 : f32 to vector<32x128xf32>
    %1618 = arith.select %1616, %1617, %1610 : vector<32x128xi1>, vector<32x128xf32>
    %cst_757 = arith.constant 2.625000e-01 : f32
    %1619 = vector.broadcast %cst_757 : f32 to vector<32x128xf32>
    %1620 = arith.select %1616, %1619, %1612 : vector<32x128xi1>, vector<32x128xf32>
    %cst_758 = arith.constant 0x4B4FA2F6 : f32
    %1621 = vector.broadcast %cst_758 : f32 to vector<32x128xf32>
    %1622 = arith.select %1616, %1621, %1614 : vector<32x128xi1>, vector<32x128xf32>
    %c14_i32_759 = arith.constant 14 : i32
    %1623 = vector.broadcast %c14_i32_759 : i32 to vector<32x128xi32>
    %1624 = arith.cmpi eq, %1515, %1623 : vector<32x128xi32>
    %cst_760 = arith.constant 0x4D4BA701 : f32
    %1625 = vector.broadcast %cst_760 : f32 to vector<32x128xf32>
    %1626 = arith.select %1624, %1625, %1618 : vector<32x128xi1>, vector<32x128xf32>
    %cst_761 = arith.constant 2.800000e-01 : f32
    %1627 = vector.broadcast %cst_761 : f32 to vector<32x128xf32>
    %1628 = arith.select %1624, %1627, %1620 : vector<32x128xi1>, vector<32x128xf32>
    %cst_762 = arith.constant 0x4B834AD5 : f32
    %1629 = vector.broadcast %cst_762 : f32 to vector<32x128xf32>
    %1630 = arith.select %1624, %1629, %1622 : vector<32x128xi1>, vector<32x128xf32>
    %c15_i32_763 = arith.constant 15 : i32
    %1631 = vector.broadcast %c15_i32_763 : i32 to vector<32x128xi32>
    %1632 = arith.cmpi eq, %1515, %1631 : vector<32x128xi32>
    %cst_764 = arith.constant 0x4D3A9BDD : f32
    %1633 = vector.broadcast %cst_764 : f32 to vector<32x128xf32>
    %1634 = arith.select %1632, %1633, %1626 : vector<32x128xi1>, vector<32x128xf32>
    %cst_765 = arith.constant 2.975000e-01 : f32
    %1635 = vector.broadcast %cst_765 : f32 to vector<32x128xf32>
    %1636 = arith.select %1632, %1635, %1628 : vector<32x128xi1>, vector<32x128xf32>
    %cst_766 = arith.constant 0x4B9FCDBD : f32
    %1637 = vector.broadcast %cst_766 : f32 to vector<32x128xf32>
    %1638 = arith.select %1632, %1637, %1630 : vector<32x128xi1>, vector<32x128xf32>
    %c16_i32_767 = arith.constant 16 : i32
    %1639 = vector.broadcast %c16_i32_767 : i32 to vector<32x128xi32>
    %1640 = arith.cmpi eq, %1515, %1639 : vector<32x128xi32>
    %cst_768 = arith.constant 0x4D17E5C5 : f32
    %1641 = vector.broadcast %cst_768 : f32 to vector<32x128xf32>
    %1642 = arith.select %1640, %1641, %1634 : vector<32x128xi1>, vector<32x128xf32>
    %cst_769 = arith.constant 3.150000e-01 : f32
    %1643 = vector.broadcast %cst_769 : f32 to vector<32x128xf32>
    %1644 = arith.select %1640, %1643, %1636 : vector<32x128xi1>, vector<32x128xf32>
    %cst_770 = arith.constant 0x4BB9EDCB : f32
    %1645 = vector.broadcast %cst_770 : f32 to vector<32x128xf32>
    %1646 = arith.select %1640, %1645, %1638 : vector<32x128xi1>, vector<32x128xf32>
    %c17_i32_771 = arith.constant 17 : i32
    %1647 = vector.broadcast %c17_i32_771 : i32 to vector<32x128xi32>
    %1648 = arith.cmpi eq, %1515, %1647 : vector<32x128xi32>
    %cst_772 = arith.constant 0x4CE26970 : f32
    %1649 = vector.broadcast %cst_772 : f32 to vector<32x128xf32>
    %1650 = arith.select %1648, %1649, %1642 : vector<32x128xi1>, vector<32x128xf32>
    %cst_773 = arith.constant 3.325000e-01 : f32
    %1651 = vector.broadcast %cst_773 : f32 to vector<32x128xf32>
    %1652 = arith.select %1648, %1651, %1644 : vector<32x128xi1>, vector<32x128xf32>
    %cst_774 = arith.constant 0x4BCF31CE : f32
    %1653 = vector.broadcast %cst_774 : f32 to vector<32x128xf32>
    %1654 = arith.select %1648, %1653, %1646 : vector<32x128xi1>, vector<32x128xf32>
    %1655 = arith.subf %1503, %1652 : vector<32x128xf32>
    %1656 = arith.mulf %1650, %1655 : vector<32x128xf32>
    %1657 = arith.addf %1656, %1654 : vector<32x128xf32>
    %cst_775 = arith.constant 1.000000e+00 : f32
    %1658 = vector.broadcast %cst_775 : f32 to vector<32x128xf32>
    %1659 = arith.divf %1658, %1657 : vector<32x128xf32>
    %cst_776 = arith.constant 2285464.5 : f32
    %1660 = vector.broadcast %cst_776 : f32 to vector<32x128xf32>
    %1661 = arith.subf %1657, %1660 : vector<32x128xf32>
    %cst_777 = arith.constant 2.000000e+00 : f32
    %1662 = vector.broadcast %cst_777 : f32 to vector<32x128xf32>
    %1663 = arith.mulf %1661, %1662 : vector<32x128xf32>
    %cst_778 = arith.constant 3.14159274 : f32
    %1664 = vector.broadcast %cst_778 : f32 to vector<32x128xf32>
    %1665 = arith.mulf %1663, %1664 : vector<32x128xf32>
    %cst_779 = arith.constant 4.37547811E-7 : f32
    %1666 = vector.broadcast %cst_779 : f32 to vector<32x128xf32>
    %1667 = arith.addf %1666, %1659 : vector<32x128xf32>
    %1668 = arith.mulf %1665, %1667 : vector<32x128xf32>
    %cst_780 = arith.constant 3.14159274 : f32
    %1669 = vector.broadcast %cst_780 : f32 to vector<32x128xf32>
    %1670 = arith.cmpf oge, %1668, %1669 : vector<32x128xf32>
    %cst_781 = arith.constant 1.000000e+00 : f32
    %cst_782 = arith.constant 0.000000e+00 : f32
    %1671 = vector.broadcast %cst_781 : f32 to vector<32x128xf32>
    %1672 = vector.broadcast %cst_782 : f32 to vector<32x128xf32>
    %1673 = arith.select %1670, %1671, %1672 : vector<32x128xi1>, vector<32x128xf32>
    %c18 = arith.constant 18 : index
    %1674 = memref.load %arg1[%c18] : memref<21xf32, #tpu.memory_space<smem>>
    %1675 = vector.broadcast %1674 : f32 to vector<32x128xf32>
    %1676 = arith.mulf %1675, %1295 : vector<32x128xf32>
    %c19 = arith.constant 19 : index
    %1677 = memref.load %arg1[%c19] : memref<21xf32, #tpu.memory_space<smem>>
    %1678 = vector.broadcast %1677 : f32 to vector<32x128xf32>
    %1679 = arith.mulf %1678, %1484 : vector<32x128xf32>
    %1680 = arith.addf %1676, %1679 : vector<32x128xf32>
    %c20 = arith.constant 20 : index
    %1681 = memref.load %arg1[%c20] : memref<21xf32, #tpu.memory_space<smem>>
    %1682 = vector.broadcast %1681 : f32 to vector<32x128xf32>
    %1683 = arith.mulf %1682, %1673 : vector<32x128xf32>
    %1684 = arith.addf %1680, %1683 : vector<32x128xf32>
    %cst_783 = arith.constant 1.000000e+00 : f32
    %1685 = vector.broadcast %cst_783 : f32 to vector<32x128xf32>
    %1686 = arith.mulf %1684, %1685 : vector<32x128xf32>
    %cst_784 = arith.constant 1.500000e-01 : f32
    %1687 = vector.broadcast %cst_784 : f32 to vector<32x128xf32>
    %1688 = arith.addf %1687, %1686 : vector<32x128xf32>
    %cst_785 = arith.constant 1.500000e-02 : f32
    %1689 = vector.broadcast %cst_785 : f32 to vector<32x128xf32>
    %1690 = arith.subf %1688, %1689 : vector<32x128xf32>
    %cst_786 = arith.constant 0.000000e+00 : f32
    %1691 = vector.broadcast %cst_786 : f32 to vector<32x128xf32>
    %1692 = arith.maximumf %1690, %1691 : vector<32x128xf32>
    %cst_787 = arith.constant 5.250000e-02 : f32
    %1693 = vector.broadcast %cst_787 : f32 to vector<32x128xf32>
    %1694 = arith.subf %1692, %1693 : vector<32x128xf32>
    %cst_788 = arith.constant 57.1428566 : f32
    %1695 = vector.broadcast %cst_788 : f32 to vector<32x128xf32>
    %1696 = arith.mulf %1694, %1695 : vector<32x128xf32>
    %cst_789 = arith.constant 5.000000e-01 : f32
    %1697 = vector.broadcast %cst_789 : f32 to vector<32x128xf32>
    %1698 = arith.subf %1696, %1697 : vector<32x128xf32>
    %1699 = math.ceil %1698 : vector<32x128xf32>
    %cst_790 = arith.constant 0.000000e+00 : f32
    %cst_791 = arith.constant 1.700000e+01 : f32
    %1700 = vector.broadcast %cst_790 : f32 to vector<32x128xf32>
    %1701 = arith.maximumf %1700, %1699 : vector<32x128xf32>
    %1702 = vector.broadcast %cst_791 : f32 to vector<32x128xf32>
    %1703 = arith.minimumf %1702, %1701 : vector<32x128xf32>
    %1704 = arith.fptosi %1703 : vector<32x128xf32> to vector<32x128xi32>
    %cst_792 = arith.constant 0x4CB74CCB : f32
    %1705 = vector.broadcast %cst_792 : f32 to vector<32x128xf32>
    %cst_793 = arith.constant 3.500000e-01 : f32
    %1706 = vector.broadcast %cst_793 : f32 to vector<32x128xf32>
    %cst_794 = arith.constant 0x4BDF0B1A : f32
    %1707 = vector.broadcast %cst_794 : f32 to vector<32x128xf32>
    %c1_i32_795 = arith.constant 1 : i32
    %1708 = vector.broadcast %c1_i32_795 : i32 to vector<32x128xi32>
    %1709 = arith.cmpi eq, %1704, %1708 : vector<32x128xi32>
    %cst_796 = arith.constant 6699988.5 : f32
    %1710 = vector.broadcast %cst_796 : f32 to vector<32x128xf32>
    %1711 = arith.select %1709, %1710, %1705 : vector<32x128xi1>, vector<32x128xf32>
    %cst_797 = arith.constant 5.250000e-02 : f32
    %1712 = vector.broadcast %cst_797 : f32 to vector<32x128xf32>
    %1713 = arith.select %1709, %1712, %1706 : vector<32x128xi1>, vector<32x128xf32>
    %cst_798 = arith.constant 644404.063 : f32
    %1714 = vector.broadcast %cst_798 : f32 to vector<32x128xf32>
    %1715 = arith.select %1709, %1714, %1707 : vector<32x128xi1>, vector<32x128xf32>
    %c2_i32_799 = arith.constant 2 : i32
    %1716 = vector.broadcast %c2_i32_799 : i32 to vector<32x128xi32>
    %1717 = arith.cmpi eq, %1704, %1716 : vector<32x128xi32>
    %cst_800 = arith.constant 0x4B1B525D : f32
    %1718 = vector.broadcast %cst_800 : f32 to vector<32x128xf32>
    %1719 = arith.select %1717, %1718, %1711 : vector<32x128xi1>, vector<32x128xf32>
    %cst_801 = arith.constant 7.000000e-02 : f32
    %1720 = vector.broadcast %cst_801 : f32 to vector<32x128xf32>
    %1721 = arith.select %1717, %1720, %1713 : vector<32x128xi1>, vector<32x128xf32>
    %cst_802 = arith.constant 761653.875 : f32
    %1722 = vector.broadcast %cst_802 : f32 to vector<32x128xf32>
    %1723 = arith.select %1717, %1722, %1715 : vector<32x128xi1>, vector<32x128xf32>
    %c3_i32_803 = arith.constant 3 : i32
    %1724 = vector.broadcast %c3_i32_803 : i32 to vector<32x128xi32>
    %1725 = arith.cmpi eq, %1704, %1724 : vector<32x128xi32>
    %cst_804 = arith.constant 0x4B5069A9 : f32
    %1726 = vector.broadcast %cst_804 : f32 to vector<32x128xf32>
    %1727 = arith.select %1725, %1726, %1719 : vector<32x128xi1>, vector<32x128xf32>
    %cst_805 = arith.constant 0.0874999985 : f32
    %1728 = vector.broadcast %cst_805 : f32 to vector<32x128xf32>
    %1729 = arith.select %1725, %1728, %1721 : vector<32x128xi1>, vector<32x128xf32>
    %cst_806 = arith.constant 939789.25 : f32
    %1730 = vector.broadcast %cst_806 : f32 to vector<32x128xf32>
    %1731 = arith.select %1725, %1730, %1723 : vector<32x128xi1>, vector<32x128xf32>
    %c4_i32_807 = arith.constant 4 : i32
    %1732 = vector.broadcast %c4_i32_807 : i32 to vector<32x128xi32>
    %1733 = arith.cmpi eq, %1704, %1732 : vector<32x128xi32>
    %cst_808 = arith.constant 0x4B8B5557 : f32
    %1734 = vector.broadcast %cst_808 : f32 to vector<32x128xf32>
    %1735 = arith.select %1733, %1734, %1727 : vector<32x128xi1>, vector<32x128xf32>
    %cst_809 = arith.constant 1.050000e-01 : f32
    %1736 = vector.broadcast %cst_809 : f32 to vector<32x128xf32>
    %1737 = arith.select %1733, %1736, %1729 : vector<32x128xi1>, vector<32x128xf32>
    %cst_810 = arith.constant 1178813.63 : f32
    %1738 = vector.broadcast %cst_810 : f32 to vector<32x128xf32>
    %1739 = arith.select %1733, %1738, %1731 : vector<32x128xi1>, vector<32x128xf32>
    %c5_i32_811 = arith.constant 5 : i32
    %1740 = vector.broadcast %c5_i32_811 : i32 to vector<32x128xi32>
    %1741 = arith.cmpi eq, %1704, %1740 : vector<32x128xi32>
    %cst_812 = arith.constant 0x4BBF6315 : f32
    %1742 = vector.broadcast %cst_812 : f32 to vector<32x128xf32>
    %1743 = arith.select %1741, %1742, %1735 : vector<32x128xi1>, vector<32x128xf32>
    %cst_813 = arith.constant 1.225000e-01 : f32
    %1744 = vector.broadcast %cst_813 : f32 to vector<32x128xf32>
    %1745 = arith.select %1741, %1744, %1737 : vector<32x128xi1>, vector<32x128xf32>
    %cst_814 = arith.constant 0x49B6E958 : f32
    %1746 = vector.broadcast %cst_814 : f32 to vector<32x128xf32>
    %1747 = arith.select %1741, %1746, %1739 : vector<32x128xi1>, vector<32x128xf32>
    %c6_i32_815 = arith.constant 6 : i32
    %1748 = vector.broadcast %c6_i32_815 : i32 to vector<32x128xi32>
    %1749 = arith.cmpi eq, %1704, %1748 : vector<32x128xi32>
    %cst_816 = arith.constant 0x4C04C5FB : f32
    %1750 = vector.broadcast %cst_816 : f32 to vector<32x128xf32>
    %1751 = arith.select %1749, %1750, %1743 : vector<32x128xi1>, vector<32x128xf32>
    %cst_817 = arith.constant 1.400000e-01 : f32
    %1752 = vector.broadcast %cst_817 : f32 to vector<32x128xf32>
    %1753 = arith.select %1749, %1752, %1745 : vector<32x128xi1>, vector<32x128xf32>
    %cst_818 = arith.constant 1937406.88 : f32
    %1754 = vector.broadcast %cst_818 : f32 to vector<32x128xf32>
    %1755 = arith.select %1749, %1754, %1747 : vector<32x128xi1>, vector<32x128xf32>
    %c7_i32_819 = arith.constant 7 : i32
    %1756 = vector.broadcast %c7_i32_819 : i32 to vector<32x128xi32>
    %1757 = arith.cmpi eq, %1704, %1756 : vector<32x128xi32>
    %cst_820 = arith.constant 0x4C34800A : f32
    %1758 = vector.broadcast %cst_820 : f32 to vector<32x128xf32>
    %1759 = arith.select %1757, %1758, %1751 : vector<32x128xi1>, vector<32x128xf32>
    %cst_821 = arith.constant 1.575000e-01 : f32
    %1760 = vector.broadcast %cst_821 : f32 to vector<32x128xf32>
    %1761 = arith.select %1757, %1760, %1753 : vector<32x128xi1>, vector<32x128xf32>
    %cst_822 = arith.constant 2546507.25 : f32
    %1762 = vector.broadcast %cst_822 : f32 to vector<32x128xf32>
    %1763 = arith.select %1757, %1762, %1755 : vector<32x128xi1>, vector<32x128xf32>
    %c8_i32_823 = arith.constant 8 : i32
    %1764 = vector.broadcast %c8_i32_823 : i32 to vector<32x128xi32>
    %1765 = arith.cmpi eq, %1704, %1764 : vector<32x128xi32>
    %cst_824 = arith.constant 0x4C72808B : f32
    %1766 = vector.broadcast %cst_824 : f32 to vector<32x128xf32>
    %1767 = arith.select %1765, %1766, %1759 : vector<32x128xi1>, vector<32x128xf32>
    %cst_825 = arith.constant 1.750000e-01 : f32
    %1768 = vector.broadcast %cst_825 : f32 to vector<32x128xf32>
    %1769 = arith.select %1765, %1768, %1761 : vector<32x128xi1>, vector<32x128xf32>
    %cst_826 = arith.constant 3374555.25 : f32
    %1770 = vector.broadcast %cst_826 : f32 to vector<32x128xf32>
    %1771 = arith.select %1765, %1770, %1763 : vector<32x128xi1>, vector<32x128xf32>
    %c9_i32_827 = arith.constant 9 : i32
    %1772 = vector.broadcast %c9_i32_827 : i32 to vector<32x128xi32>
    %1773 = arith.cmpi eq, %1704, %1772 : vector<32x128xi32>
    %cst_828 = arith.constant 0x4CA21B59 : f32
    %1774 = vector.broadcast %cst_828 : f32 to vector<32x128xf32>
    %1775 = arith.select %1773, %1774, %1767 : vector<32x128xi1>, vector<32x128xf32>
    %cst_829 = arith.constant 1.925000e-01 : f32
    %1776 = vector.broadcast %cst_829 : f32 to vector<32x128xf32>
    %1777 = arith.select %1773, %1776, %1769 : vector<32x128xi1>, vector<32x128xf32>
    %cst_830 = arith.constant 4487038.5 : f32
    %1778 = vector.broadcast %cst_830 : f32 to vector<32x128xf32>
    %1779 = arith.select %1773, %1778, %1771 : vector<32x128xi1>, vector<32x128xf32>
    %c10_i32_831 = arith.constant 10 : i32
    %1780 = vector.broadcast %c10_i32_831 : i32 to vector<32x128xi32>
    %1781 = arith.cmpi eq, %1704, %1780 : vector<32x128xi32>
    %cst_832 = arith.constant 0x4CD64D26 : f32
    %1782 = vector.broadcast %cst_832 : f32 to vector<32x128xf32>
    %1783 = arith.select %1781, %1782, %1775 : vector<32x128xi1>, vector<32x128xf32>
    %cst_833 = arith.constant 2.100000e-01 : f32
    %1784 = vector.broadcast %cst_833 : f32 to vector<32x128xf32>
    %1785 = arith.select %1781, %1784, %1777 : vector<32x128xi1>, vector<32x128xf32>
    %cst_834 = arith.constant 0x4AB652CE : f32
    %1786 = vector.broadcast %cst_834 : f32 to vector<32x128xf32>
    %1787 = arith.select %1781, %1786, %1779 : vector<32x128xi1>, vector<32x128xf32>
    %c11_i32_835 = arith.constant 11 : i32
    %1788 = vector.broadcast %c11_i32_835 : i32 to vector<32x128xi32>
    %1789 = arith.cmpi eq, %1704, %1788 : vector<32x128xi32>
    %cst_836 = arith.constant 0x4D0A2F85 : f32
    %1790 = vector.broadcast %cst_836 : f32 to vector<32x128xf32>
    %1791 = arith.select %1789, %1790, %1783 : vector<32x128xi1>, vector<32x128xf32>
    %cst_837 = arith.constant 2.275000e-01 : f32
    %1792 = vector.broadcast %cst_837 : f32 to vector<32x128xf32>
    %1793 = arith.select %1789, %1792, %1785 : vector<32x128xi1>, vector<32x128xf32>
    %cst_838 = arith.constant 7.940600e+06 : f32
    %1794 = vector.broadcast %cst_838 : f32 to vector<32x128xf32>
    %1795 = arith.select %1789, %1794, %1787 : vector<32x128xi1>, vector<32x128xf32>
    %c12_i32_839 = arith.constant 12 : i32
    %1796 = vector.broadcast %c12_i32_839 : i32 to vector<32x128xi32>
    %1797 = arith.cmpi eq, %1704, %1796 : vector<32x128xi32>
    %cst_840 = arith.constant 0x4D2AA536 : f32
    %1798 = vector.broadcast %cst_840 : f32 to vector<32x128xf32>
    %1799 = arith.select %1797, %1798, %1791 : vector<32x128xi1>, vector<32x128xf32>
    %cst_841 = arith.constant 2.450000e-01 : f32
    %1800 = vector.broadcast %cst_841 : f32 to vector<32x128xf32>
    %1801 = arith.select %1797, %1800, %1793 : vector<32x128xi1>, vector<32x128xf32>
    %cst_842 = arith.constant 0x4B1FDB1D : f32
    %1802 = vector.broadcast %cst_842 : f32 to vector<32x128xf32>
    %1803 = arith.select %1797, %1802, %1795 : vector<32x128xi1>, vector<32x128xf32>
    %c13_i32_843 = arith.constant 13 : i32
    %1804 = vector.broadcast %c13_i32_843 : i32 to vector<32x128xi32>
    %1805 = arith.cmpi eq, %1704, %1804 : vector<32x128xi32>
    %cst_844 = arith.constant 0x4D443E30 : f32
    %1806 = vector.broadcast %cst_844 : f32 to vector<32x128xf32>
    %1807 = arith.select %1805, %1806, %1799 : vector<32x128xi1>, vector<32x128xf32>
    %cst_845 = arith.constant 2.625000e-01 : f32
    %1808 = vector.broadcast %cst_845 : f32 to vector<32x128xf32>
    %1809 = arith.select %1805, %1808, %1801 : vector<32x128xi1>, vector<32x128xf32>
    %cst_846 = arith.constant 0x4B4FA2F6 : f32
    %1810 = vector.broadcast %cst_846 : f32 to vector<32x128xf32>
    %1811 = arith.select %1805, %1810, %1803 : vector<32x128xi1>, vector<32x128xf32>
    %c14_i32_847 = arith.constant 14 : i32
    %1812 = vector.broadcast %c14_i32_847 : i32 to vector<32x128xi32>
    %1813 = arith.cmpi eq, %1704, %1812 : vector<32x128xi32>
    %cst_848 = arith.constant 0x4D4BA701 : f32
    %1814 = vector.broadcast %cst_848 : f32 to vector<32x128xf32>
    %1815 = arith.select %1813, %1814, %1807 : vector<32x128xi1>, vector<32x128xf32>
    %cst_849 = arith.constant 2.800000e-01 : f32
    %1816 = vector.broadcast %cst_849 : f32 to vector<32x128xf32>
    %1817 = arith.select %1813, %1816, %1809 : vector<32x128xi1>, vector<32x128xf32>
    %cst_850 = arith.constant 0x4B834AD5 : f32
    %1818 = vector.broadcast %cst_850 : f32 to vector<32x128xf32>
    %1819 = arith.select %1813, %1818, %1811 : vector<32x128xi1>, vector<32x128xf32>
    %c15_i32_851 = arith.constant 15 : i32
    %1820 = vector.broadcast %c15_i32_851 : i32 to vector<32x128xi32>
    %1821 = arith.cmpi eq, %1704, %1820 : vector<32x128xi32>
    %cst_852 = arith.constant 0x4D3A9BDD : f32
    %1822 = vector.broadcast %cst_852 : f32 to vector<32x128xf32>
    %1823 = arith.select %1821, %1822, %1815 : vector<32x128xi1>, vector<32x128xf32>
    %cst_853 = arith.constant 2.975000e-01 : f32
    %1824 = vector.broadcast %cst_853 : f32 to vector<32x128xf32>
    %1825 = arith.select %1821, %1824, %1817 : vector<32x128xi1>, vector<32x128xf32>
    %cst_854 = arith.constant 0x4B9FCDBD : f32
    %1826 = vector.broadcast %cst_854 : f32 to vector<32x128xf32>
    %1827 = arith.select %1821, %1826, %1819 : vector<32x128xi1>, vector<32x128xf32>
    %c16_i32_855 = arith.constant 16 : i32
    %1828 = vector.broadcast %c16_i32_855 : i32 to vector<32x128xi32>
    %1829 = arith.cmpi eq, %1704, %1828 : vector<32x128xi32>
    %cst_856 = arith.constant 0x4D17E5C5 : f32
    %1830 = vector.broadcast %cst_856 : f32 to vector<32x128xf32>
    %1831 = arith.select %1829, %1830, %1823 : vector<32x128xi1>, vector<32x128xf32>
    %cst_857 = arith.constant 3.150000e-01 : f32
    %1832 = vector.broadcast %cst_857 : f32 to vector<32x128xf32>
    %1833 = arith.select %1829, %1832, %1825 : vector<32x128xi1>, vector<32x128xf32>
    %cst_858 = arith.constant 0x4BB9EDCB : f32
    %1834 = vector.broadcast %cst_858 : f32 to vector<32x128xf32>
    %1835 = arith.select %1829, %1834, %1827 : vector<32x128xi1>, vector<32x128xf32>
    %c17_i32_859 = arith.constant 17 : i32
    %1836 = vector.broadcast %c17_i32_859 : i32 to vector<32x128xi32>
    %1837 = arith.cmpi eq, %1704, %1836 : vector<32x128xi32>
    %cst_860 = arith.constant 0x4CE26970 : f32
    %1838 = vector.broadcast %cst_860 : f32 to vector<32x128xf32>
    %1839 = arith.select %1837, %1838, %1831 : vector<32x128xi1>, vector<32x128xf32>
    %cst_861 = arith.constant 3.325000e-01 : f32
    %1840 = vector.broadcast %cst_861 : f32 to vector<32x128xf32>
    %1841 = arith.select %1837, %1840, %1833 : vector<32x128xi1>, vector<32x128xf32>
    %cst_862 = arith.constant 0x4BCF31CE : f32
    %1842 = vector.broadcast %cst_862 : f32 to vector<32x128xf32>
    %1843 = arith.select %1837, %1842, %1835 : vector<32x128xi1>, vector<32x128xf32>
    %1844 = arith.subf %1692, %1841 : vector<32x128xf32>
    %1845 = arith.mulf %1839, %1844 : vector<32x128xf32>
    %1846 = arith.addf %1845, %1843 : vector<32x128xf32>
    %cst_863 = arith.constant 1.000000e+00 : f32
    %1847 = vector.broadcast %cst_863 : f32 to vector<32x128xf32>
    %1848 = arith.divf %1847, %1846 : vector<32x128xf32>
    %cst_864 = arith.constant 2285464.5 : f32
    %1849 = vector.broadcast %cst_864 : f32 to vector<32x128xf32>
    %1850 = arith.subf %1846, %1849 : vector<32x128xf32>
    %cst_865 = arith.constant 2.000000e+00 : f32
    %1851 = vector.broadcast %cst_865 : f32 to vector<32x128xf32>
    %1852 = arith.mulf %1850, %1851 : vector<32x128xf32>
    %cst_866 = arith.constant 3.14159274 : f32
    %1853 = vector.broadcast %cst_866 : f32 to vector<32x128xf32>
    %1854 = arith.mulf %1852, %1853 : vector<32x128xf32>
    %cst_867 = arith.constant 4.37547811E-7 : f32
    %1855 = vector.broadcast %cst_867 : f32 to vector<32x128xf32>
    %1856 = arith.addf %1855, %1848 : vector<32x128xf32>
    %1857 = arith.mulf %1854, %1856 : vector<32x128xf32>
    %cst_868 = arith.constant 3.14159274 : f32
    %1858 = vector.broadcast %cst_868 : f32 to vector<32x128xf32>
    %1859 = arith.cmpf oge, %1857, %1858 : vector<32x128xf32>
    %cst_869 = arith.constant 1.000000e+00 : f32
    %cst_870 = arith.constant 0.000000e+00 : f32
    %1860 = vector.broadcast %cst_869 : f32 to vector<32x128xf32>
    %1861 = vector.broadcast %cst_870 : f32 to vector<32x128xf32>
    %1862 = arith.select %1859, %1860, %1861 : vector<32x128xi1>, vector<32x128xf32>
    %c0_871 = arith.constant 0 : index
    %c0_872 = arith.constant 0 : index
    %1863 = vector.load %arg3[%c0_871, %c0_872] : memref<32x128xf32, #tpu.memory_space<vmem>>, vector<32x128xf32>
    tpu.vector_store %arg3[%c0_871, %c0_872], %1862 {strides = array<i32>} : memref<32x128xf32, #tpu.memory_space<vmem>>, vector<32x128xf32>,
    return
  }
  func.func @transform_0(%arg0: i32) -> i32 {
    %c0_i32 = arith.constant 0 : i32
    %c0_i32_0 = arith.constant 0 : i32
    return %c0_i32 : i32
  }
  func.func @transform_1(%arg0: i32) -> (i32, i32, i32) {
    %c0_i32 = arith.constant 0 : i32
    %c0_i32_0 = arith.constant 0 : i32
    %c0_i32_1 = arith.constant 0 : i32
    return %c0_i32, %arg0, %c0_i32_0 : i32, i32, i32
  }
  func.func @transform_2(%arg0: i32) -> (i32, i32) {
    %c0_i32 = arith.constant 0 : i32
    %c0_i32_0 = arith.constant 0 : i32
    return %arg0, %c0_i32 : i32, i32
  }
}

</mosaic_0001>

<llo_original>
// kernel: tpu_custom_call.1
$region0: #{tpu_custom_call.1}
  #allocation0 [shape = 'u32[]', space=smem, size = 0x4, offset = 0x4, fixed_abs, tag = 'smem constant byte address 0x4 - core index']
  #allocation1 [shape = 'u32[72,128]{1,0:T(1,128)}', space=vmem, size = 0x9000, scoped, tag = 'internal scratch']
  #allocation8 [shape = 's32[]', space=sflag, size = 0x4, offset = 0, fixed_abs, tag = 'sflag constant byte address 0x0 - dummy sync flag']
  %s0 = inlined_call_operand.hbm [shape: f32[21], index: 0, kind: input, shape index: {}]
  %s1 = inlined_call_operand.hbm [shape: f32[3,64,128], index: 1, kind: input, shape index: {}]
  %s2 = inlined_call_operand.hbm [shape: f32[64,128], index: 2, kind: output, shape index: {}]
  %s3 = sld [smem:[#allocation0]]
  $region49: #{tpu_custom_call.1} parent=0
    _
  %s5 = ssub.s32 1, %s3
  %s6 = scalar_select 0, %s5, %s3
  $region1: #{tpu_custom_call.1} parent=0
    #allocation2 [shape = 'u8[512]{0}', space=smem, size = 0x200, scoped, tag = 'input window, operand 0, single buffered']
    #allocation3 [shape = 's32[2]{0}', space=sflag, size = 0x8, scoped, tag = 'scoped memory for tpu_custom_call.1']
    #allocation4 [shape = 's32[2]{0}', space=sflag, size = 0x8, scoped, tag = 'scoped memory for tpu_custom_call.1']
    #allocation5 [shape = 's32[2]{0}', space=sflag, size = 0x8, scoped, tag = 'scoped memory for tpu_custom_call.1']
    #allocation6 [shape = 'u8[98304]{0}', space=vmem, size = 0x18000, scoped, tag = 'input window, operand 1']
    #allocation7 [shape = 'u8[32768]{0}', space=vmem, size = 0x8000, scoped, tag = 'output window, operand 0']
    %7 = vsyncpa [#allocation5], 0
    %8 = vsyncpa [#allocation3], 0
    %s9 = scalar_lea.sflag [#allocation3], 1
    %10 = vsyncpa %s9, 0
    %11 = vsyncpa [#allocation4], 0
    %s12 = scalar_lea.sflag [#allocation4], 1
    %13 = vsyncpa %s12, 0
    loop: start=0, step=1, limit=4
    $region2: #{tpu_custom_call.1} parent=1 // loop_pre_header
      _
    $region3: #{tpu_custom_call.1} parent=1 // loop_header
      %s15 = sphi 0, %s19
      %p16 = scmp.ge.s32.totalorder %s15, 4
      %s23 = sphi 0, %s23
      %s25 = sphi 0, %s23
      %s26 = sphi 0, %s25
      %s40 = sphi 0, %s26
      %s46 = sphi 0, %s48
      %s49 = sphi 0, %s46
      %s50 = sphi 0, %s49
      %s66 = sphi 0, %s50
      %s72 = sphi 0, %s74
      %s75 = sphi 0, %s72
      %s76 = sphi 0, %s75
      %s92 = sphi 0, %s76
    $region4: #{tpu_custom_call.1} parent=1 // loop_header_branch
      %18 = sbr.rel (%p16) target = $region8
    $region5: #{tpu_custom_call.1} parent=1 // loop_body
      %s20 = ssub.s32 %s15, 1
      %s21 = ssub.s32 %s15, 2
      %s22 = sadd.s32 %s15, 1
      %s24 = sadd.s32 %s23, 1
      %p27 = scmp.eq.s32.totalorder %s15, 1
      %p28 = scmp.ne.s32.totalorder %s23, %s25
      %p29 = scmp.eq.s32.totalorder %s15, 0
      %p30 = por %p28, %p29
      %p31 = scmp.ne.s32.totalorder %s23, %s25
      %p32 = scmp.eq.s32.totalorder %s20, 1
      %p33 = por %p31, %p32
      %p34 = scmp.ne.s32.totalorder %s25, %s26
      %p35 = scmp.eq.s32.totalorder %s20, 0
      %p36 = por %p34, %p35
      %p37 = scmp.ne.s32.totalorder %s25, %s26
      %p38 = scmp.eq.s32.totalorder %s21, 1
      %p39 = por %p37, %p38
      %p41 = scmp.ne.s32.totalorder %s26, %s40
      %p42 = scmp.eq.s32.totalorder %s21, 0
      %p43 = por %p41, %p42
      %s44 = ssub.s32 %s15, %s22
      %p45 = scmp.eq.s32.totalorder %s44, 0
      %s47 = sadd.s32 %s46, 1
      %s48 = scalar_select %p45, %s46, %s47
      %p51 = pneg %p45
      %p52 = scmp.eq.s32.totalorder %s15, 1
      %p53 = por %p51, %p52
      %p54 = scmp.ne.s32.totalorder %s46, %s49
      %p55 = scmp.eq.s32.totalorder %s15, 0
      %p56 = por %p54, %p55
      %p57 = scmp.ne.s32.totalorder %s46, %s49
      %p58 = scmp.eq.s32.totalorder %s20, 1
      %p59 = por %p57, %p58
      %p60 = scmp.ne.s32.totalorder %s49, %s50
      %p61 = scmp.eq.s32.totalorder %s20, 0
      %p62 = por %p60, %p61
      %p63 = scmp.ne.s32.totalorder %s49, %s50
      %p64 = scmp.eq.s32.totalorder %s21, 1
      %p65 = por %p63, %p64
      %p67 = scmp.ne.s32.totalorder %s50, %s66
      %p68 = scmp.eq.s32.totalorder %s21, 0
      %p69 = por %p67, %p68
      %s70 = ssub.s32 %s15, %s22
      %p71 = scmp.eq.s32.totalorder %s70, 0
      %s73 = sadd.s32 %s72, 1
      %s74 = scalar_select %p71, %s72, %s73
      %p77 = pneg %p71
      %p78 = scmp.eq.s32.totalorder %s15, 1
      %p79 = por %p77, %p78
      %p80 = scmp.ne.s32.totalorder %s72, %s75
      %p81 = scmp.eq.s32.totalorder %s15, 0
      %p82 = por %p80, %p81
      %p83 = scmp.ne.s32.totalorder %s72, %s75
      %p84 = scmp.eq.s32.totalorder %s20, 1
      %p85 = por %p83, %p84
      %p86 = scmp.ne.s32.totalorder %s75, %s76
      %p87 = scmp.eq.s32.totalorder %s20, 0
      %p88 = por %p86, %p87
      %p89 = scmp.ne.s32.totalorder %s75, %s76
      %p90 = scmp.eq.s32.totalorder %s21, 1
      %p91 = por %p89, %p90
      %p93 = scmp.ne.s32.totalorder %s76, %s92
      %p94 = scmp.eq.s32.totalorder %s21, 0
      %p95 = por %p93, %p94
      %p96 = scmp.le.s32.totalorder 1, %s15
      %p97 = scmp.lt.s32.totalorder %s15, 3
      %p98 = pnand %p96, %p97
      %p99 = pneg %p98
      // Predicated region
      $region9: #{tpu_custom_call.1} parent=5 // pred_check
        _
      $region10: #{tpu_custom_call.1} parent=5 // pred_check_branch
        %101 = sbr.rel (%p98) target = $region12
      $region11: #{tpu_custom_call.1} parent=5 // pred_region
        %s102 = ssub.s32 %s15, 1
        // Predicated region
        $region13: #{tpu_custom_call.1} parent=11 // pred_check
          %p103 = pneg %p36
        $region14: #{tpu_custom_call.1} parent=11 // pred_check_branch
          %105 = sbr.rel (%p103) target = $region16
        $region15: #{tpu_custom_call.1} parent=11 // pred_region
          %107 = vsyncadd [#allocation5], 0
          %s109 = sshll.u32 %s0, 4
          %s110 = int_to_ptr.hbm [resolvable:$true] %s109
          %112 = dma.hbm_to_smem %s110, 16, [#allocation2], [#allocation5]
        $region16: #{tpu_custom_call.1} parent=11 // pred_fallthru
          _
      $region12: #{tpu_custom_call.1} parent=5 // pred_fallthru
        _
      %p113 = scmp.lt.s32.totalorder %s15, 2
      // Predicated region
      $region17: #{tpu_custom_call.1} parent=5 // pred_check
        %p114 = pneg %p113
      $region18: #{tpu_custom_call.1} parent=5 // pred_check_branch
        %116 = sbr.rel (%p114) target = $region20
      $region19: #{tpu_custom_call.1} parent=5 // pred_region
        // Predicated region
        $region21: #{tpu_custom_call.1} parent=19 // pred_check
          %p117 = pneg %p56
        $region22: #{tpu_custom_call.1} parent=19 // pred_check_branch
          %119 = sbr.rel (%p117) target = $region24
        $region23: #{tpu_custom_call.1} parent=19 // pred_region
          #allocation9 [shape = 'u32[6]{0}', space=smem, size = 0x18, scoped, tag = 'DMA stride descriptor']
          %s120 = sand.u32 %s46, 1
          %s121 = scalar_lea.sflag [#allocation3], %s120
          %s122 = sand.u32 %s46, 1
          %s123 = smul.addr %s122, 96
          %s124 = scalar_lea.vmem [#allocation6], %s123
          %s125 = smul.u32 4, %s15
          %127 = vsyncadd %s121, 0
          %s128 = smul.addr %s125, 8
          %s129 = scalar_lea.hbm %s1, %s128
          %s131 = sshll.u32 1, 14
          %s132 = sxor.u32 4294967295, %s131
          %s134 = sld [smem:[#allocation0]]
          %s135 = sadd.s32 2, %s134
          %s137 = sshll.u32 7, 26
          %s138 = sxor.u32 4294967295, %s137
          %s139 = sand.u32 0, %s138
          %s140 = sshll.u32 %s135, 26
          %s141 = sor.u32 %s139, %s140
          %s142 = sshll.u32 %s129, 4
          %s143 = int_to_ptr.hbm [resolvable:$true] %s142
          %s144 = sshll.u32 %s124, 4
          %s145 = int_to_ptr.vmem [resolvable:$true] %s144
          %151 = sst [smem:[#allocation9]] 1024
          %s152 = scalar_lea.smem [#allocation9], 1
          %153 = sst [smem:[%s152]] 512
          %s154 = scalar_lea.smem [#allocation9], 2
          %155 = sst [smem:[%s154]] 4
          %s156 = scalar_lea.smem [#allocation9], 3
          %157 = sst [smem:[%s156]] 128
          %s158 = scalar_lea.smem [#allocation9], 4
          %159 = sst [smem:[%s158]] 128
          %s160 = scalar_lea.smem [#allocation9], 5
          %161 = sst [smem:[%s160]] 8
          %163 = dma.general %s143, 1536, %s145, %s121, [#allocation8], [#allocation9], %s141, 0
        $region24: #{tpu_custom_call.1} parent=19 // pred_fallthru
          _
      $region20: #{tpu_custom_call.1} parent=5 // pred_fallthru
        _
      %p164 = scmp.le.s32.totalorder 1, %s15
      %p165 = scmp.lt.s32.totalorder %s15, 3
      %p166 = pnand %p164, %p165
      %p167 = pneg %p166
      // Predicated region
      $region25: #{tpu_custom_call.1} parent=5 // pred_check
        _
      $region26: #{tpu_custom_call.1} parent=5 // pred_check_branch
        %169 = sbr.rel (%p166) target = $region28
      $region27: #{tpu_custom_call.1} parent=5 // pred_region
        %s170 = ssub.s32 %s15, 1
        // Predicated region
        $region29: #{tpu_custom_call.1} parent=27 // pred_check
          %p171 = pneg %p36
        $region30: #{tpu_custom_call.1} parent=27 // pred_check_branch
          %173 = sbr.rel (%p171) target = $region32
        $region31: #{tpu_custom_call.1} parent=27 // pred_region
          %175 = dma.done [#allocation5], 16
        $region32: #{tpu_custom_call.1} parent=27 // pred_fallthru
          _
        %s176 = sand.u32 %s49, 1
        %s177 = scalar_lea.sflag [#allocation3], %s176
        %s178 = sand.u32 %s49, 1
        %s179 = smul.addr %s178, 96
        %s180 = scalar_lea.vmem [#allocation6], %s179
        // Predicated region
        $region33: #{tpu_custom_call.1} parent=27 // pred_check
          %p181 = pneg %p62
        $region34: #{tpu_custom_call.1} parent=27 // pred_check_branch
          %183 = sbr.rel (%p181) target = $region36
        $region35: #{tpu_custom_call.1} parent=27 // pred_region
          %185 = dma.done %s177, 1536
        $region36: #{tpu_custom_call.1} parent=27 // pred_fallthru
          _
        %186 = sfence
        %p187 = pneg %p36
        %p188 = pneg %p33
        %s189 = sand.u32 %s49, 1
        %s190 = scalar_lea.sflag [#allocation3], %s189
        %s191 = sand.u32 %s49, 1
        %s192 = smul.addr %s191, 96
        %s193 = scalar_lea.vmem [#allocation6], %s192
        %p194 = pneg %p62
        %p195 = pneg %p59
        %p196 = pneg %p88
        %p197 = pneg %p85
        %s198 = sand.u32 %s75, 1
        %s199 = scalar_lea.sflag [#allocation4], %s198
        %s200 = sand.u32 %s75, 1
        %s201 = smul.addr %s200, 32
        %s202 = scalar_lea.vmem [#allocation7], %s201
        %s203 = smul.u32 4, %s20
        %s204 = smul.u32 4, %s20
        %v205 = vld [vmem:[%s180] sm:$0xff]
        %v206 = vld [vmem:[%s180 + $0x8] sm:$0xff]
        %v207 = vld [vmem:[%s180 + $0x10] sm:$0xff]
        %v208 = vld [vmem:[%s180 + $0x18] sm:$0xff]
        %v209 = vadd.f32 %v205, 0.15
        %v210 = vadd.f32 %v206, 0.15
        %v211 = vadd.f32 %v207, 0.15
        %v212 = vadd.f32 %v208, 0.15
        %v213 = vsub.f32 %v209, 0.015
        %v214 = vsub.f32 %v210, 0.015
        %v215 = vsub.f32 %v211, 0.015
        %v216 = vsub.f32 %v212, 0.015
        %v217 = vmax.f32 %v213, 0.0
        %v218 = vmax.f32 %v214, 0.0
        %v219 = vmax.f32 %v215, 0.0
        %v220 = vmax.f32 %v216, 0.0
        %v221 = vsub.f32 %v217, 0.0525
        %v222 = vsub.f32 %v218, 0.0525
        %v223 = vsub.f32 %v219, 0.0525
        %v224 = vsub.f32 %v220, 0.0525
        %v225 = vmul.f32 %v221, 57.142857
        %v226 = vmul.f32 %v222, 57.142857
        %v227 = vmul.f32 %v223, 57.142857
        %v228 = vmul.f32 %v224, 57.142857
        %v229 = vsub.f32 %v225, 0.5
        %v230 = vsub.f32 %v226, 0.5
        %v231 = vsub.f32 %v227, 0.5
        %v232 = vsub.f32 %v228, 0.5
        %v233 = vceil.f32 %v229
        %v234 = vceil.f32 %v230
        %v235 = vceil.f32 %v231
        %v236 = vceil.f32 %v232
        %v237 = vmax.f32 %v233, 0.0
        %v238 = vmax.f32 %v234, 0.0
        %v239 = vmax.f32 %v235, 0.0
        %v240 = vmax.f32 %v236, 0.0
        %v241 = vmin.f32 %v237, 17.0
        %v242 = vmin.f32 %v238, 17.0
        %v243 = vmin.f32 %v239, 17.0
        %v244 = vmin.f32 %v240, 17.0
        %v245 = vcvt.f32.s32.to.zero.pseudo %v241
        %v246 = vcvt.f32.s32.to.zero.pseudo %v242
        %v247 = vcvt.f32.s32.to.zero.pseudo %v243
        %v248 = vcvt.f32.s32.to.zero.pseudo %v244
        %vm249 = vcmp.eq.s32.totalorder %v245, 1
        %vm250 = vcmp.eq.s32.totalorder %v246, 1
        %vm251 = vcmp.eq.s32.totalorder %v247, 1
        %vm252 = vcmp.eq.s32.totalorder %v248, 1
        %v253 = vsel %vm249, 6699988.5, 96101976.0
        %v254 = vsel %vm250, 6699988.5, 96101976.0
        %v255 = vsel %vm251, 6699988.5, 96101976.0
        %v256 = vsel %vm252, 6699988.5, 96101976.0
        %v257 = vsel %vm249, 0.0525, 0.35
        %v258 = vsel %vm250, 0.0525, 0.35
        %v259 = vsel %vm251, 0.0525, 0.35
        %v260 = vsel %vm252, 0.0525, 0.35
        %v261 = vsel %vm249, 644404.06, 29234740.0
        %v262 = vsel %vm250, 644404.06, 29234740.0
        %v263 = vsel %vm251, 644404.06, 29234740.0
        %v264 = vsel %vm252, 644404.06, 29234740.0
        %vm265 = vcmp.eq.s32.totalorder %v245, 2
        %vm266 = vcmp.eq.s32.totalorder %v246, 2
        %vm267 = vcmp.eq.s32.totalorder %v247, 2
        %vm268 = vcmp.eq.s32.totalorder %v248, 2
        %v269 = vsel %vm265, 10179165.0, %v253
        %v270 = vsel %vm266, 10179165.0, %v254
        %v271 = vsel %vm267, 10179165.0, %v255
        %v272 = vsel %vm268, 10179165.0, %v256
        %v273 = vsel %vm265, 0.07, %v257
        %v274 = vsel %vm266, 0.07, %v258
        %v275 = vsel %vm267, 0.07, %v259
        %v276 = vsel %vm268, 0.07, %v260
        %v277 = vsel %vm265, 761653.9, %v261
        %v278 = vsel %vm266, 761653.9, %v262
        %v279 = vsel %vm267, 761653.9, %v263
        %v280 = vsel %vm268, 761653.9, %v264
        %vm281 = vcmp.eq.s32.totalorder %v245, 3
        %vm282 = vcmp.eq.s32.totalorder %v246, 3
        %vm283 = vcmp.eq.s32.totalorder %v247, 3
        %vm284 = vcmp.eq.s32.totalorder %v248, 3
        %v285 = vsel %vm281, 13658537.0, %v269
        %v286 = vsel %vm282, 13658537.0, %v270
        %v287 = vsel %vm283, 13658537.0, %v271
        %v288 = vsel %vm284, 13658537.0, %v272
        %v289 = vsel %vm281, 0.0875, %v273
        %v290 = vsel %vm282, 0.0875, %v274
        %v291 = vsel %vm283, 0.0875, %v275
        %v292 = vsel %vm284, 0.0875, %v276
        %v293 = vsel %vm281, 939789.25, %v277
        %v294 = vsel %vm282, 939789.25, %v278
        %v295 = vsel %vm283, 939789.25, %v279
        %v296 = vsel %vm284, 939789.25, %v280
        %vm297 = vcmp.eq.s32.totalorder %v245, 4
        %vm298 = vcmp.eq.s32.totalorder %v246, 4
        %vm299 = vcmp.eq.s32.totalorder %v247, 4
        %vm300 = vcmp.eq.s32.totalorder %v248, 4
        %v301 = vsel %vm297, 18262702.0, %v285
        %v302 = vsel %vm298, 18262702.0, %v286
        %v303 = vsel %vm299, 18262702.0, %v287
        %v304 = vsel %vm300, 18262702.0, %v288
        %v305 = vsel %vm297, 0.105, %v289
        %v306 = vsel %vm298, 0.105, %v290
        %v307 = vsel %vm299, 0.105, %v291
        %v308 = vsel %vm300, 0.105, %v292
        %v309 = vsel %vm297, 1178813.6, %v293
        %v310 = vsel %vm298, 1178813.6, %v294
        %v311 = vsel %vm299, 1178813.6, %v295
        %v312 = vsel %vm300, 1178813.6, %v296
        %vm313 = vcmp.eq.s32.totalorder %v245, 5
        %vm314 = vcmp.eq.s32.totalorder %v246, 5
        %vm315 = vcmp.eq.s32.totalorder %v247, 5
        %vm316 = vcmp.eq.s32.totalorder %v248, 5
        %v317 = vsel %vm313, 25085482.0, %v301
        %v318 = vsel %vm314, 25085482.0, %v302
        %v319 = vsel %vm315, 25085482.0, %v303
        %v320 = vsel %vm316, 25085482.0, %v304
        %v321 = vsel %vm313, 0.1225, %v305
        %v322 = vsel %vm314, 0.1225, %v306
        %v323 = vsel %vm315, 0.1225, %v307
        %v324 = vsel %vm316, 0.1225, %v308
        %v325 = vsel %vm313, 1498411.0, %v309
        %v326 = vsel %vm314, 1498411.0, %v310
        %v327 = vsel %vm315, 1498411.0, %v311
        %v328 = vsel %vm316, 1498411.0, %v312
        %vm329 = vcmp.eq.s32.totalorder %v245, 6
        %vm330 = vcmp.eq.s32.totalorder %v246, 6
        %vm331 = vcmp.eq.s32.totalorder %v247, 6
        %vm332 = vcmp.eq.s32.totalorder %v248, 6
        %v333 = vsel %vm329, 34805740.0, %v317
        %v334 = vsel %vm330, 34805740.0, %v318
        %v335 = vsel %vm331, 34805740.0, %v319
        %v336 = vsel %vm332, 34805740.0, %v320
        %v337 = vsel %vm329, 0.14, %v321
        %v338 = vsel %vm330, 0.14, %v322
        %v339 = vsel %vm331, 0.14, %v323
        %v340 = vsel %vm332, 0.14, %v324
        %v341 = vsel %vm329, 1937406.9, %v325
        %v342 = vsel %vm330, 1937406.9, %v326
        %v343 = vsel %vm331, 1937406.9, %v327
        %v344 = vsel %vm332, 1937406.9, %v328
        %vm345 = vcmp.eq.s32.totalorder %v245, 7
        %vm346 = vcmp.eq.s32.totalorder %v246, 7
        %vm347 = vcmp.eq.s32.totalorder %v247, 7
        %vm348 = vcmp.eq.s32.totalorder %v248, 7
        %v349 = vsel %vm345, 47317032.0, %v333
        %v350 = vsel %vm346, 47317032.0, %v334
        %v351 = vsel %vm347, 47317032.0, %v335
        %v352 = vsel %vm348, 47317032.0, %v336
        %v353 = vsel %vm345, 0.1575, %v337
        %v354 = vsel %vm346, 0.1575, %v338
        %v355 = vsel %vm347, 0.1575, %v339
        %v356 = vsel %vm348, 0.1575, %v340
        %v357 = vsel %vm345, 2546507.3, %v341
        %v358 = vsel %vm346, 2546507.3, %v342
        %v359 = vsel %vm347, 2546507.3, %v343
        %v360 = vsel %vm348, 2546507.3, %v344
        %vm361 = vcmp.eq.s32.totalorder %v245, 8
        %vm362 = vcmp.eq.s32.totalorder %v246, 8
        %vm363 = vcmp.eq.s32.totalorder %v247, 8
        %vm364 = vcmp.eq.s32.totalorder %v248, 8
        %v365 = vsel %vm361, 63570476.0, %v349
        %v366 = vsel %vm362, 63570476.0, %v350
        %v367 = vsel %vm363, 63570476.0, %v351
        %v368 = vsel %vm364, 63570476.0, %v352
        %v369 = vsel %vm361, 0.175, %v353
        %v370 = vsel %vm362, 0.175, %v354
        %v371 = vsel %vm363, 0.175, %v355
        %v372 = vsel %vm364, 0.175, %v356
        %v373 = vsel %vm361, 3374555.3, %v357
        %v374 = vsel %vm362, 3374555.3, %v358
        %v375 = vsel %vm363, 3374555.3, %v359
        %v376 = vsel %vm364, 3374555.3, %v360
        %vm377 = vcmp.eq.s32.totalorder %v245, 9
        %vm378 = vcmp.eq.s32.totalorder %v246, 9
        %vm379 = vcmp.eq.s32.totalorder %v247, 9
        %vm380 = vcmp.eq.s32.totalorder %v248, 9
        %v381 = vsel %vm377, 84990664.0, %v365
        %v382 = vsel %vm378, 84990664.0, %v366
        %v383 = vsel %vm379, 84990664.0, %v367
        %v384 = vsel %vm380, 84990664.0, %v368
        %v385 = vsel %vm377, 0.1925, %v369
        %v386 = vsel %vm378, 0.1925, %v370
        %v387 = vsel %vm379, 0.1925, %v371
        %v388 = vsel %vm380, 0.1925, %v372
        %v389 = vsel %vm377, 4487038.5, %v373
        %v390 = vsel %vm378, 4487038.5, %v374
        %v391 = vsel %vm379, 4487038.5, %v375
        %v392 = vsel %vm380, 4487038.5, %v376
        %vm393 = vcmp.eq.s32.totalorder %v245, 10
        %vm394 = vcmp.eq.s32.totalorder %v246, 10
        %vm395 = vcmp.eq.s32.totalorder %v247, 10
        %vm396 = vcmp.eq.s32.totalorder %v248, 10
        %v397 = vsel %vm393, 1.1235563e+08, %v381
        %v398 = vsel %vm394, 1.1235563e+08, %v382
        %v399 = vsel %vm395, 1.1235563e+08, %v383
        %v400 = vsel %vm396, 1.1235563e+08, %v384
        %v401 = vsel %vm393, 0.21, %v385
        %v402 = vsel %vm394, 0.21, %v386
        %v403 = vsel %vm395, 0.21, %v387
        %v404 = vsel %vm396, 0.21, %v388
        %v405 = vsel %vm393, 5974375.0, %v389
        %v406 = vsel %vm394, 5974375.0, %v390
        %v407 = vsel %vm395, 5974375.0, %v391
        %v408 = vsel %vm396, 5974375.0, %v392
        %vm409 = vcmp.eq.s32.totalorder %v245, 11
        %vm410 = vcmp.eq.s32.totalorder %v246, 11
        %vm411 = vcmp.eq.s32.totalorder %v247, 11
        %vm412 = vcmp.eq.s32.totalorder %v248, 11
        %v413 = vsel %vm409, 1.4489813e+08, %v397
        %v414 = vsel %vm410, 1.4489813e+08, %v398
        %v415 = vsel %vm411, 1.4489813e+08, %v399
        %v416 = vsel %vm412, 1.4489813e+08, %v400
        %v417 = vsel %vm409, 0.2275, %v401
        %v418 = vsel %vm410, 0.2275, %v402
        %v419 = vsel %vm411, 0.2275, %v403
        %v420 = vsel %vm412, 0.2275, %v404
        %v421 = vsel %vm409, 7940600.0, %v405
        %v422 = vsel %vm410, 7940600.0, %v406
        %v423 = vsel %vm411, 7940600.0, %v407
        %v424 = vsel %vm412, 7940600.0, %v408
        %vm425 = vcmp.eq.s32.totalorder %v245, 12
        %vm426 = vcmp.eq.s32.totalorder %v246, 12
        %vm427 = vcmp.eq.s32.totalorder %v247, 12
        %vm428 = vcmp.eq.s32.totalorder %v248, 12
        %v429 = vsel %vm425, 1.7893462e+08, %v413
        %v430 = vsel %vm426, 1.7893462e+08, %v414
        %v431 = vsel %vm427, 1.7893462e+08, %v415
        %v432 = vsel %vm428, 1.7893462e+08, %v416
        %v433 = vsel %vm425, 0.245, %v417
        %v434 = vsel %vm426, 0.245, %v418
        %v435 = vsel %vm427, 0.245, %v419
        %v436 = vsel %vm428, 0.245, %v420
        %v437 = vsel %vm425, 10476317.0, %v421
        %v438 = vsel %vm426, 10476317.0, %v422
        %v439 = vsel %vm427, 10476317.0, %v423
        %v440 = vsel %vm428, 10476317.0, %v424
        %vm441 = vcmp.eq.s32.totalorder %v245, 13
        %vm442 = vcmp.eq.s32.totalorder %v246, 13
        %vm443 = vcmp.eq.s32.totalorder %v247, 13
        %vm444 = vcmp.eq.s32.totalorder %v248, 13
        %v445 = vsel %vm441, 2.0577562e+08, %v429
        %v446 = vsel %vm442, 2.0577562e+08, %v430
        %v447 = vsel %vm443, 2.0577562e+08, %v431
        %v448 = vsel %vm444, 2.0577562e+08, %v432
        %v449 = vsel %vm441, 0.2625, %v433
        %v450 = vsel %vm442, 0.2625, %v434
        %v451 = vsel %vm443, 0.2625, %v435
        %v452 = vsel %vm444, 0.2625, %v436
        %v453 = vsel %vm441, 13607670.0, %v437
        %v454 = vsel %vm442, 13607670.0, %v438
        %v455 = vsel %vm443, 13607670.0, %v439
        %v456 = vsel %vm444, 13607670.0, %v440
        %vm457 = vcmp.eq.s32.totalorder %v245, 14
        %vm458 = vcmp.eq.s32.totalorder %v246, 14
        %vm459 = vcmp.eq.s32.totalorder %v247, 14
        %vm460 = vcmp.eq.s32.totalorder %v248, 14
        %v461 = vsel %vm457, 2.1354498e+08, %v445
        %v462 = vsel %vm458, 2.1354498e+08, %v446
        %v463 = vsel %vm459, 2.1354498e+08, %v447
        %v464 = vsel %vm460, 2.1354498e+08, %v448
        %v465 = vsel %vm457, 0.28, %v449
        %v466 = vsel %vm458, 0.28, %v450
        %v467 = vsel %vm459, 0.28, %v451
        %v468 = vsel %vm460, 0.28, %v452
        %v469 = vsel %vm457, 17208746.0, %v453
        %v470 = vsel %vm458, 17208746.0, %v454
        %v471 = vsel %vm459, 17208746.0, %v455
        %v472 = vsel %vm460, 17208746.0, %v456
        %vm473 = vcmp.eq.s32.totalorder %v245, 15
        %vm474 = vcmp.eq.s32.totalorder %v246, 15
        %vm475 = vcmp.eq.s32.totalorder %v247, 15
        %vm476 = vcmp.eq.s32.totalorder %v248, 15
        %v477 = vsel %vm473, 1.9567355e+08, %v461
        %v478 = vsel %vm474, 1.9567355e+08, %v462
        %v479 = vsel %vm475, 1.9567355e+08, %v463
        %v480 = vsel %vm476, 1.9567355e+08, %v464
        %v481 = vsel %vm473, 0.2975, %v465
        %v482 = vsel %vm474, 0.2975, %v466
        %v483 = vsel %vm475, 0.2975, %v467
        %v484 = vsel %vm476, 0.2975, %v468
        %v485 = vsel %vm473, 20945786.0, %v469
        %v486 = vsel %vm474, 20945786.0, %v470
        %v487 = vsel %vm475, 20945786.0, %v471
        %v488 = vsel %vm476, 20945786.0, %v472
        %vm489 = vcmp.eq.s32.totalorder %v245, 16
        %vm490 = vcmp.eq.s32.totalorder %v246, 16
        %vm491 = vcmp.eq.s32.totalorder %v247, 16
        %vm492 = vcmp.eq.s32.totalorder %v248, 16
        %v493 = vsel %vm489, 1.5927611e+08, %v477
        %v494 = vsel %vm490, 1.5927611e+08, %v478
        %v495 = vsel %vm491, 1.5927611e+08, %v479
        %v496 = vsel %vm492, 1.5927611e+08, %v480
        %v497 = vsel %vm489, 0.315, %v481
        %v498 = vsel %vm490, 0.315, %v482
        %v499 = vsel %vm491, 0.315, %v483
        %v500 = vsel %vm492, 0.315, %v484
        %v501 = vsel %vm489, 24370070.0, %v485
        %v502 = vsel %vm490, 24370070.0, %v486
        %v503 = vsel %vm491, 24370070.0, %v487
        %v504 = vsel %vm492, 24370070.0, %v488
        %vm505 = vcmp.eq.s32.totalorder %v245, 17
        %vm506 = vcmp.eq.s32.totalorder %v246, 17
        %vm507 = vcmp.eq.s32.totalorder %v247, 17
        %vm508 = vcmp.eq.s32.totalorder %v248, 17
        %v509 = vsel %vm505, 1.18705024e+08, %v493
        %v510 = vsel %vm506, 1.18705024e+08, %v494
        %v511 = vsel %vm507, 1.18705024e+08, %v495
        %v512 = vsel %vm508, 1.18705024e+08, %v496
        %v513 = vsel %vm505, 0.3325, %v497
        %v514 = vsel %vm506, 0.3325, %v498
        %v515 = vsel %vm507, 0.3325, %v499
        %v516 = vsel %vm508, 0.3325, %v500
        %v517 = vsel %vm505, 27157404.0, %v501
        %v518 = vsel %vm506, 27157404.0, %v502
        %v519 = vsel %vm507, 27157404.0, %v503
        %v520 = vsel %vm508, 27157404.0, %v504
        %v521 = vsub.f32 %v217, %v513
        %v522 = vsub.f32 %v218, %v514
        %v523 = vsub.f32 %v219, %v515
        %v524 = vsub.f32 %v220, %v516
        %v525 = vmul.f32 %v509, %v521
        %v526 = vmul.f32 %v510, %v522
        %v527 = vmul.f32 %v511, %v523
        %v528 = vmul.f32 %v512, %v524
        %v529 = vadd.f32 %v525, %v517
        %v530 = vadd.f32 %v526, %v518
        %v531 = vadd.f32 %v527, %v519
        %v532 = vadd.f32 %v528, %v520
        %v533 = vrcp.pop %v529
        %v534 = vmul.f32 %v529, %v533
        %v535 = vsub.f32 1.0, %v534
        %v536 = vmul.f32 %v533, %v535
        %v537 = vadd.f32 %v533, %v536
        %vm538 = vweird.f32 %v529
        %vm539 = vweird.f32 %v533
        %vm540 = vmor %vm538, %vm539
        %v541 = vsel %vm540, %v533, %v537
        %v542 = vand.u32 2147483647, %v529
        %vm543 = vcmp.eq.f32.partialorder %v542, 8.507059e+37
        %v544 = vand.u32 %v529, 2147483648
        %v545 = vor.u32 1.1754944e-38, %v544
        %v546 = vsel %vm543, %v545, %v541
        %v547 = vmul.f32 1.0, %v546
        %v548 = vrcp.pop %v530
        %v549 = vmul.f32 %v530, %v548
        %v550 = vsub.f32 1.0, %v549
        %v551 = vmul.f32 %v548, %v550
        %v552 = vadd.f32 %v548, %v551
        %vm553 = vweird.f32 %v530
        %vm554 = vweird.f32 %v548
        %vm555 = vmor %vm553, %vm554
        %v556 = vsel %vm555, %v548, %v552
        %v557 = vand.u32 2147483647, %v530
        %vm558 = vcmp.eq.f32.partialorder %v557, 8.507059e+37
        %v559 = vand.u32 %v530, 2147483648
        %v560 = vor.u32 1.1754944e-38, %v559
        %v561 = vsel %vm558, %v560, %v556
        %v562 = vmul.f32 1.0, %v561
        %v563 = vrcp.pop %v531
        %v564 = vmul.f32 %v531, %v563
        %v565 = vsub.f32 1.0, %v564
        %v566 = vmul.f32 %v563, %v565
        %v567 = vadd.f32 %v563, %v566
        %vm568 = vweird.f32 %v531
        %vm569 = vweird.f32 %v563
        %vm570 = vmor %vm568, %vm569
        %v571 = vsel %vm570, %v563, %v567
        %v572 = vand.u32 2147483647, %v531
        %vm573 = vcmp.eq.f32.partialorder %v572, 8.507059e+37
        %v574 = vand.u32 %v531, 2147483648
        %v575 = vor.u32 1.1754944e-38, %v574
        %v576 = vsel %vm573, %v575, %v571
        %v577 = vmul.f32 1.0, %v576
        %v578 = vrcp.pop %v532
        %v579 = vmul.f32 %v532, %v578
        %v580 = vsub.f32 1.0, %v579
        %v581 = vmul.f32 %v578, %v580
        %v582 = vadd.f32 %v578, %v581
        %vm583 = vweird.f32 %v532
        %vm584 = vweird.f32 %v578
        %vm585 = vmor %vm583, %vm584
        %v586 = vsel %vm585, %v578, %v582
        %v587 = vand.u32 2147483647, %v532
        %vm588 = vcmp.eq.f32.partialorder %v587, 8.507059e+37
        %v589 = vand.u32 %v532, 2147483648
        %v590 = vor.u32 1.1754944e-38, %v589
        %v591 = vsel %vm588, %v590, %v586
        %v592 = vmul.f32 1.0, %v591
        %v593 = vsub.f32 %v529, 2285464.5
        %v594 = vsub.f32 %v530, 2285464.5
        %v595 = vsub.f32 %v531, 2285464.5
        %v596 = vsub.f32 %v532, 2285464.5
        %v597 = vmul.f32 %v593, 2.0
        %v598 = vmul.f32 %v594, 2.0
        %v599 = vmul.f32 %v595, 2.0
        %v600 = vmul.f32 %v596, 2.0
        %v601 = vmul.f32 %v597, 3.1415927
        %v602 = vmul.f32 %v598, 3.1415927
        %v603 = vmul.f32 %v599, 3.1415927
        %v604 = vmul.f32 %v600, 3.1415927
        %v605 = vadd.f32 %v547, 4.375478e-07
        %v606 = vadd.f32 %v562, 4.375478e-07
        %v607 = vadd.f32 %v577, 4.375478e-07
        %v608 = vadd.f32 %v592, 4.375478e-07
        %v609 = vmul.f32 %v601, %v605
        %v610 = vmul.f32 %v602, %v606
        %v611 = vmul.f32 %v603, %v607
        %v612 = vmul.f32 %v604, %v608
        %vm613 = vcmp.ge.f32.partialorder %v609, 3.1415927
        %vm614 = vcmp.ge.f32.partialorder %v610, 3.1415927
        %vm615 = vcmp.ge.f32.partialorder %v611, 3.1415927
        %vm616 = vcmp.ge.f32.partialorder %v612, 3.1415927
        %v617 = vsel %vm613, 1.0, 0.0
        %v618 = vsel %vm614, 1.0, 0.0
        %v619 = vsel %vm615, 1.0, 0.0
        %v620 = vsel %vm616, 1.0, 0.0
        %s621 = scalar_lea.vmem %s180, 32 [#allocation6]
        %v622 = vld [vmem:[%s621] sm:$0xff]
        %v623 = vld [vmem:[%s621 + $0x8] sm:$0xff]
        %v624 = vld [vmem:[%s621 + $0x10] sm:$0xff]
        %v625 = vld [vmem:[%s621 + $0x18] sm:$0xff]
        %v626 = vadd.f32 %v622, 0.15
        %v627 = vadd.f32 %v623, 0.15
        %v628 = vadd.f32 %v624, 0.15
        %v629 = vadd.f32 %v625, 0.15
        %v630 = vsub.f32 %v626, 0.015
        %v631 = vsub.f32 %v627, 0.015
        %v632 = vsub.f32 %v628, 0.015
        %v633 = vsub.f32 %v629, 0.015
        %v634 = vmax.f32 %v630, 0.0
        %v635 = vmax.f32 %v631, 0.0
        %v636 = vmax.f32 %v632, 0.0
        %v637 = vmax.f32 %v633, 0.0
        %v638 = vsub.f32 %v634, 0.0525
        %v639 = vsub.f32 %v635, 0.0525
        %v640 = vsub.f32 %v636, 0.0525
        %v641 = vsub.f32 %v637, 0.0525
        %v642 = vmul.f32 %v638, 57.142857
        %v643 = vmul.f32 %v639, 57.142857
        %v644 = vmul.f32 %v640, 57.142857
        %v645 = vmul.f32 %v641, 57.142857
        %v646 = vsub.f32 %v642, 0.5
        %v647 = vsub.f32 %v643, 0.5
        %v648 = vsub.f32 %v644, 0.5
        %v649 = vsub.f32 %v645, 0.5
        %v650 = vceil.f32 %v646
        %v651 = vceil.f32 %v647
        %v652 = vceil.f32 %v648
        %v653 = vceil.f32 %v649
        %v654 = vmax.f32 %v650, 0.0
        %v655 = vmax.f32 %v651, 0.0
        %v656 = vmax.f32 %v652, 0.0
        %v657 = vmax.f32 %v653, 0.0
        %v658 = vmin.f32 %v654, 17.0
        %v659 = vmin.f32 %v655, 17.0
        %v660 = vmin.f32 %v656, 17.0
        %v661 = vmin.f32 %v657, 17.0
        %v662 = vcvt.f32.s32.to.zero.pseudo %v658
        %v663 = vcvt.f32.s32.to.zero.pseudo %v659
        %v664 = vcvt.f32.s32.to.zero.pseudo %v660
        %v665 = vcvt.f32.s32.to.zero.pseudo %v661
        %vm666 = vcmp.eq.s32.totalorder %v662, 1
        %vm667 = vcmp.eq.s32.totalorder %v663, 1
        %vm668 = vcmp.eq.s32.totalorder %v664, 1
        %vm669 = vcmp.eq.s32.totalorder %v665, 1
        %v670 = vsel %vm666, 6699988.5, 96101976.0
        %v671 = vsel %vm667, 6699988.5, 96101976.0
        %v672 = vsel %vm668, 6699988.5, 96101976.0
        %v673 = vsel %vm669, 6699988.5, 96101976.0
        %v674 = vsel %vm666, 0.0525, 0.35
        %v675 = vsel %vm667, 0.0525, 0.35
        %v676 = vsel %vm668, 0.0525, 0.35
        %v677 = vsel %vm669, 0.0525, 0.35
        %v678 = vsel %vm666, 644404.06, 29234740.0
        %v679 = vsel %vm667, 644404.06, 29234740.0
        %v680 = vsel %vm668, 644404.06, 29234740.0
        %v681 = vsel %vm669, 644404.06, 29234740.0
        %vm682 = vcmp.eq.s32.totalorder %v662, 2
        %vm683 = vcmp.eq.s32.totalorder %v663, 2
        %vm684 = vcmp.eq.s32.totalorder %v664, 2
        %vm685 = vcmp.eq.s32.totalorder %v665, 2
        %v686 = vsel %vm682, 10179165.0, %v670
        %v687 = vsel %vm683, 10179165.0, %v671
        %v688 = vsel %vm684, 10179165.0, %v672
        %v689 = vsel %vm685, 10179165.0, %v673
        %v690 = vsel %vm682, 0.07, %v674
        %v691 = vsel %vm683, 0.07, %v675
        %v692 = vsel %vm684, 0.07, %v676
        %v693 = vsel %vm685, 0.07, %v677
        %v694 = vsel %vm682, 761653.9, %v678
        %v695 = vsel %vm683, 761653.9, %v679
        %v696 = vsel %vm684, 761653.9, %v680
        %v697 = vsel %vm685, 761653.9, %v681
        %vm698 = vcmp.eq.s32.totalorder %v662, 3
        %vm699 = vcmp.eq.s32.totalorder %v663, 3
        %vm700 = vcmp.eq.s32.totalorder %v664, 3
        %vm701 = vcmp.eq.s32.totalorder %v665, 3
        %v702 = vsel %vm698, 13658537.0, %v686
        %v703 = vsel %vm699, 13658537.0, %v687
        %v704 = vsel %vm700, 13658537.0, %v688
        %v705 = vsel %vm701, 13658537.0, %v689
        %v706 = vsel %vm698, 0.0875, %v690
        %v707 = vsel %vm699, 0.0875, %v691
        %v708 = vsel %vm700, 0.0875, %v692
        %v709 = vsel %vm701, 0.0875, %v693
        %v710 = vsel %vm698, 939789.25, %v694
        %v711 = vsel %vm699, 939789.25, %v695
        %v712 = vsel %vm700, 939789.25, %v696
        %v713 = vsel %vm701, 939789.25, %v697
        %vm714 = vcmp.eq.s32.totalorder %v662, 4
        %vm715 = vcmp.eq.s32.totalorder %v663, 4
        %vm716 = vcmp.eq.s32.totalorder %v664, 4
        %vm717 = vcmp.eq.s32.totalorder %v665, 4
        %v718 = vsel %vm714, 18262702.0, %v702
        %v719 = vsel %vm715, 18262702.0, %v703
        %v720 = vsel %vm716, 18262702.0, %v704
        %v721 = vsel %vm717, 18262702.0, %v705
        %v722 = vsel %vm714, 0.105, %v706
        %v723 = vsel %vm715, 0.105, %v707
        %v724 = vsel %vm716, 0.105, %v708
        %v725 = vsel %vm717, 0.105, %v709
        %v726 = vsel %vm714, 1178813.6, %v710
        %v727 = vsel %vm715, 1178813.6, %v711
        %v728 = vsel %vm716, 1178813.6, %v712
        %v729 = vsel %vm717, 1178813.6, %v713
        %vm730 = vcmp.eq.s32.totalorder %v662, 5
        %vm731 = vcmp.eq.s32.totalorder %v663, 5
        %vm732 = vcmp.eq.s32.totalorder %v664, 5
        %vm733 = vcmp.eq.s32.totalorder %v665, 5
        %v734 = vsel %vm730, 25085482.0, %v718
        %v735 = vsel %vm731, 25085482.0, %v719
        %v736 = vsel %vm732, 25085482.0, %v720
        %v737 = vsel %vm733, 25085482.0, %v721
        %v738 = vsel %vm730, 0.1225, %v722
        %v739 = vsel %vm731, 0.1225, %v723
        %v740 = vsel %vm732, 0.1225, %v724
        %v741 = vsel %vm733, 0.1225, %v725
        %v742 = vsel %vm730, 1498411.0, %v726
        %v743 = vsel %vm731, 1498411.0, %v727
        %v744 = vsel %vm732, 1498411.0, %v728
        %v745 = vsel %vm733, 1498411.0, %v729
        %vm746 = vcmp.eq.s32.totalorder %v662, 6
        %vm747 = vcmp.eq.s32.totalorder %v663, 6
        %vm748 = vcmp.eq.s32.totalorder %v664, 6
        %vm749 = vcmp.eq.s32.totalorder %v665, 6
        %v750 = vsel %vm746, 34805740.0, %v734
        %v751 = vsel %vm747, 34805740.0, %v735
        %v752 = vsel %vm748, 34805740.0, %v736
        %v753 = vsel %vm749, 34805740.0, %v737
        %v754 = vsel %vm746, 0.14, %v738
        %v755 = vsel %vm747, 0.14, %v739
        %v756 = vsel %vm748, 0.14, %v740
        %v757 = vsel %vm749, 0.14, %v741
        %v758 = vsel %vm746, 1937406.9, %v742
        %v759 = vsel %vm747, 1937406.9, %v743
        %v760 = vsel %vm748, 1937406.9, %v744
        %v761 = vsel %vm749, 1937406.9, %v745
        %vm762 = vcmp.eq.s32.totalorder %v662, 7
        %vm763 = vcmp.eq.s32.totalorder %v663, 7
        %vm764 = vcmp.eq.s32.totalorder %v664, 7
        %vm765 = vcmp.eq.s32.totalorder %v665, 7
        %v766 = vsel %vm762, 47317032.0, %v750
        %v767 = vsel %vm763, 47317032.0, %v751
        %v768 = vsel %vm764, 47317032.0, %v752
        %v769 = vsel %vm765, 47317032.0, %v753
        %v770 = vsel %vm762, 0.1575, %v754
        %v771 = vsel %vm763, 0.1575, %v755
        %v772 = vsel %vm764, 0.1575, %v756
        %v773 = vsel %vm765, 0.1575, %v757
        %v774 = vsel %vm762, 2546507.3, %v758
        %v775 = vsel %vm763, 2546507.3, %v759
        %v776 = vsel %vm764, 2546507.3, %v760
        %v777 = vsel %vm765, 2546507.3, %v761
        %vm778 = vcmp.eq.s32.totalorder %v662, 8
        %vm779 = vcmp.eq.s32.totalorder %v663, 8
        %vm780 = vcmp.eq.s32.totalorder %v664, 8
        %vm781 = vcmp.eq.s32.totalorder %v665, 8
        %v782 = vsel %vm778, 63570476.0, %v766
        %v783 = vsel %vm779, 63570476.0, %v767
        %v784 = vsel %vm780, 63570476.0, %v768
        %v785 = vsel %vm781, 63570476.0, %v769
        %v786 = vsel %vm778, 0.175, %v770
        %v787 = vsel %vm779, 0.175, %v771
        %v788 = vsel %vm780, 0.175, %v772
        %v789 = vsel %vm781, 0.175, %v773
        %v790 = vsel %vm778, 3374555.3, %v774
        %v791 = vsel %vm779, 3374555.3, %v775
        %v792 = vsel %vm780, 3374555.3, %v776
        %v793 = vsel %vm781, 3374555.3, %v777
        %vm794 = vcmp.eq.s32.totalorder %v662, 9
        %vm795 = vcmp.eq.s32.totalorder %v663, 9
        %vm796 = vcmp.eq.s32.totalorder %v664, 9
        %vm797 = vcmp.eq.s32.totalorder %v665, 9
        %v798 = vsel %vm794, 84990664.0, %v782
        %v799 = vsel %vm795, 84990664.0, %v783
        %v800 = vsel %vm796, 84990664.0, %v784
        %v801 = vsel %vm797, 84990664.0, %v785
        %v802 = vsel %vm794, 0.1925, %v786
        %v803 = vsel %vm795, 0.1925, %v787
        %v804 = vsel %vm796, 0.1925, %v788
        %v805 = vsel %vm797, 0.1925, %v789
        %v806 = vsel %vm794, 4487038.5, %v790
        %v807 = vsel %vm795, 4487038.5, %v791
        %v808 = vsel %vm796, 4487038.5, %v792
        %v809 = vsel %vm797, 4487038.5, %v793
        %vm810 = vcmp.eq.s32.totalorder %v662, 10
        %vm811 = vcmp.eq.s32.totalorder %v663, 10
        %vm812 = vcmp.eq.s32.totalorder %v664, 10
        %vm813 = vcmp.eq.s32.totalorder %v665, 10
        %v814 = vsel %vm810, 1.1235563e+08, %v798
        %v815 = vsel %vm811, 1.1235563e+08, %v799
        %v816 = vsel %vm812, 1.1235563e+08, %v800
        %v817 = vsel %vm813, 1.1235563e+08, %v801
        %v818 = vsel %vm810, 0.21, %v802
        %v819 = vsel %vm811, 0.21, %v803
        %v820 = vsel %vm812, 0.21, %v804
        %v821 = vsel %vm813, 0.21, %v805
        %v822 = vsel %vm810, 5974375.0, %v806
        %v823 = vsel %vm811, 5974375.0, %v807
        %v824 = vsel %vm812, 5974375.0, %v808
        %v825 = vsel %vm813, 5974375.0, %v809
        %vm826 = vcmp.eq.s32.totalorder %v662, 11
        %vm827 = vcmp.eq.s32.totalorder %v663, 11
        %vm828 = vcmp.eq.s32.totalorder %v664, 11
        %vm829 = vcmp.eq.s32.totalorder %v665, 11
        %v830 = vsel %vm826, 1.4489813e+08, %v814
        %v831 = vsel %vm827, 1.4489813e+08, %v815
        %v832 = vsel %vm828, 1.4489813e+08, %v816
        %v833 = vsel %vm829, 1.4489813e+08, %v817
        %v834 = vsel %vm826, 0.2275, %v818
        %v835 = vsel %vm827, 0.2275, %v819
        %v836 = vsel %vm828, 0.2275, %v820
        %v837 = vsel %vm829, 0.2275, %v821
        %v838 = vsel %vm826, 7940600.0, %v822
        %v839 = vsel %vm827, 7940600.0, %v823
        %v840 = vsel %vm828, 7940600.0, %v824
        %v841 = vsel %vm829, 7940600.0, %v825
        %vm842 = vcmp.eq.s32.totalorder %v662, 12
        %vm843 = vcmp.eq.s32.totalorder %v663, 12
        %vm844 = vcmp.eq.s32.totalorder %v664, 12
        %vm845 = vcmp.eq.s32.totalorder %v665, 12
        %v846 = vsel %vm842, 1.7893462e+08, %v830
        %v847 = vsel %vm843, 1.7893462e+08, %v831
        %v848 = vsel %vm844, 1.7893462e+08, %v832
        %v849 = vsel %vm845, 1.7893462e+08, %v833
        %v850 = vsel %vm842, 0.245, %v834
        %v851 = vsel %vm843, 0.245, %v835
        %v852 = vsel %vm844, 0.245, %v836
        %v853 = vsel %vm845, 0.245, %v837
        %v854 = vsel %vm842, 10476317.0, %v838
        %v855 = vsel %vm843, 10476317.0, %v839
        %v856 = vsel %vm844, 10476317.0, %v840
        %v857 = vsel %vm845, 10476317.0, %v841
        %vm858 = vcmp.eq.s32.totalorder %v662, 13
        %vm859 = vcmp.eq.s32.totalorder %v663, 13
        %vm860 = vcmp.eq.s32.totalorder %v664, 13
        %vm861 = vcmp.eq.s32.totalorder %v665, 13
        %v862 = vsel %vm858, 2.0577562e+08, %v846
        %v863 = vsel %vm859, 2.0577562e+08, %v847
        %v864 = vsel %vm860, 2.0577562e+08, %v848
        %v865 = vsel %vm861, 2.0577562e+08, %v849
        %v866 = vsel %vm858, 0.2625, %v850
        %v867 = vsel %vm859, 0.2625, %v851
        %v868 = vsel %vm860, 0.2625, %v852
        %v869 = vsel %vm861, 0.2625, %v853
        %v870 = vsel %vm858, 13607670.0, %v854
        %v871 = vsel %vm859, 13607670.0, %v855
        %v872 = vsel %vm860, 13607670.0, %v856
        %v873 = vsel %vm861, 13607670.0, %v857
        %vm874 = vcmp.eq.s32.totalorder %v662, 14
        %vm875 = vcmp.eq.s32.totalorder %v663, 14
        %vm876 = vcmp.eq.s32.totalorder %v664, 14
        %vm877 = vcmp.eq.s32.totalorder %v665, 14
        %v878 = vsel %vm874, 2.1354498e+08, %v862
        %v879 = vsel %vm875, 2.1354498e+08, %v863
        %v880 = vsel %vm876, 2.1354498e+08, %v864
        %v881 = vsel %vm877, 2.1354498e+08, %v865
        %v882 = vsel %vm874, 0.28, %v866
        %v883 = vsel %vm875, 0.28, %v867
        %v884 = vsel %vm876, 0.28, %v868
        %v885 = vsel %vm877, 0.28, %v869
        %v886 = vsel %vm874, 17208746.0, %v870
        %v887 = vsel %vm875, 17208746.0, %v871
        %v888 = vsel %vm876, 17208746.0, %v872
        %v889 = vsel %vm877, 17208746.0, %v873
        %vm890 = vcmp.eq.s32.totalorder %v662, 15
        %vm891 = vcmp.eq.s32.totalorder %v663, 15
        %vm892 = vcmp.eq.s32.totalorder %v664, 15
        %vm893 = vcmp.eq.s32.totalorder %v665, 15
        %v894 = vsel %vm890, 1.9567355e+08, %v878
        %v895 = vsel %vm891, 1.9567355e+08, %v879
        %v896 = vsel %vm892, 1.9567355e+08, %v880
        %v897 = vsel %vm893, 1.9567355e+08, %v881
        %v898 = vsel %vm890, 0.2975, %v882
        %v899 = vsel %vm891, 0.2975, %v883
        %v900 = vsel %vm892, 0.2975, %v884
        %v901 = vsel %vm893, 0.2975, %v885
        %v902 = vsel %vm890, 20945786.0, %v886
        %v903 = vsel %vm891, 20945786.0, %v887
        %v904 = vsel %vm892, 20945786.0, %v888
        %v905 = vsel %vm893, 20945786.0, %v889
        %vm906 = vcmp.eq.s32.totalorder %v662, 16
        %vm907 = vcmp.eq.s32.totalorder %v663, 16
        %vm908 = vcmp.eq.s32.totalorder %v664, 16
        %vm909 = vcmp.eq.s32.totalorder %v665, 16
        %v910 = vsel %vm906, 1.5927611e+08, %v894
        %v911 = vsel %vm907, 1.5927611e+08, %v895
        %v912 = vsel %vm908, 1.5927611e+08, %v896
        %v913 = vsel %vm909, 1.5927611e+08, %v897
        %v914 = vsel %vm906, 0.315, %v898
        %v915 = vsel %vm907, 0.315, %v899
        %v916 = vsel %vm908, 0.315, %v900
        %v917 = vsel %vm909, 0.315, %v901
        %v918 = vsel %vm906, 24370070.0, %v902
        %v919 = vsel %vm907, 24370070.0, %v903
        %v920 = vsel %vm908, 24370070.0, %v904
        %v921 = vsel %vm909, 24370070.0, %v905
        %vm922 = vcmp.eq.s32.totalorder %v662, 17
        %vm923 = vcmp.eq.s32.totalorder %v663, 17
        %vm924 = vcmp.eq.s32.totalorder %v664, 17
        %vm925 = vcmp.eq.s32.totalorder %v665, 17
        %v926 = vsel %vm922, 1.18705024e+08, %v910
        %v927 = vsel %vm923, 1.18705024e+08, %v911
        %v928 = vsel %vm924, 1.18705024e+08, %v912
        %v929 = vsel %vm925, 1.18705024e+08, %v913
        %v930 = vsel %vm922, 0.3325, %v914
        %v931 = vsel %vm923, 0.3325, %v915
        %v932 = vsel %vm924, 0.3325, %v916
        %v933 = vsel %vm925, 0.3325, %v917
        %v934 = vsel %vm922, 27157404.0, %v918
        %v935 = vsel %vm923, 27157404.0, %v919
        %v936 = vsel %vm924, 27157404.0, %v920
        %v937 = vsel %vm925, 27157404.0, %v921
        %v938 = vsub.f32 %v634, %v930
        %v939 = vsub.f32 %v635, %v931
        %v940 = vsub.f32 %v636, %v932
        %v941 = vsub.f32 %v637, %v933
        %v942 = vmul.f32 %v926, %v938
        %v943 = vmul.f32 %v927, %v939
        %v944 = vmul.f32 %v928, %v940
        %v945 = vmul.f32 %v929, %v941
        %v946 = vadd.f32 %v942, %v934
        %v947 = vadd.f32 %v943, %v935
        %v948 = vadd.f32 %v944, %v936
        %v949 = vadd.f32 %v945, %v937
        %v950 = vrcp.pop %v946
        %v951 = vmul.f32 %v946, %v950
        %v952 = vsub.f32 1.0, %v951
        %v953 = vmul.f32 %v950, %v952
        %v954 = vadd.f32 %v950, %v953
        %vm955 = vweird.f32 %v946
        %vm956 = vweird.f32 %v950
        %vm957 = vmor %vm955, %vm956
        %v958 = vsel %vm957, %v950, %v954
        %v959 = vand.u32 2147483647, %v946
        %vm960 = vcmp.eq.f32.partialorder %v959, 8.507059e+37
        %v961 = vand.u32 %v946, 2147483648
        %v962 = vor.u32 1.1754944e-38, %v961
        %v963 = vsel %vm960, %v962, %v958
        %v964 = vmul.f32 1.0, %v963
        %v965 = vrcp.pop %v947
        %v966 = vmul.f32 %v947, %v965
        %v967 = vsub.f32 1.0, %v966
        %v968 = vmul.f32 %v965, %v967
        %v969 = vadd.f32 %v965, %v968
        %vm970 = vweird.f32 %v947
        %vm971 = vweird.f32 %v965
        %vm972 = vmor %vm970, %vm971
        %v973 = vsel %vm972, %v965, %v969
        %v974 = vand.u32 2147483647, %v947
        %vm975 = vcmp.eq.f32.partialorder %v974, 8.507059e+37
        %v976 = vand.u32 %v947, 2147483648
        %v977 = vor.u32 1.1754944e-38, %v976
        %v978 = vsel %vm975, %v977, %v973
        %v979 = vmul.f32 1.0, %v978
        %v980 = vrcp.pop %v948
        %v981 = vmul.f32 %v948, %v980
        %v982 = vsub.f32 1.0, %v981
        %v983 = vmul.f32 %v980, %v982
        %v984 = vadd.f32 %v980, %v983
        %vm985 = vweird.f32 %v948
        %vm986 = vweird.f32 %v980
        %vm987 = vmor %vm985, %vm986
        %v988 = vsel %vm987, %v980, %v984
        %v989 = vand.u32 2147483647, %v948
        %vm990 = vcmp.eq.f32.partialorder %v989, 8.507059e+37
        %v991 = vand.u32 %v948, 2147483648
        %v992 = vor.u32 1.1754944e-38, %v991
        %v993 = vsel %vm990, %v992, %v988
        %v994 = vmul.f32 1.0, %v993
        %v995 = vrcp.pop %v949
        %v996 = vmul.f32 %v949, %v995
        %v997 = vsub.f32 1.0, %v996
        %v998 = vmul.f32 %v995, %v997
        %v999 = vadd.f32 %v995, %v998
        %vm1000 = vweird.f32 %v949
        %vm1001 = vweird.f32 %v995
        %vm1002 = vmor %vm1000, %vm1001
        %v1003 = vsel %vm1002, %v995, %v999
        %v1004 = vand.u32 2147483647, %v949
        %vm1005 = vcmp.eq.f32.partialorder %v1004, 8.507059e+37
        %v1006 = vand.u32 %v949, 2147483648
        %v1007 = vor.u32 1.1754944e-38, %v1006
        %v1008 = vsel %vm1005, %v1007, %v1003
        %v1009 = vmul.f32 1.0, %v1008
        %v1010 = vsub.f32 %v946, 2285464.5
        %v1011 = vsub.f32 %v947, 2285464.5
        %v1012 = vsub.f32 %v948, 2285464.5
        %v1013 = vsub.f32 %v949, 2285464.5
        %v1014 = vmul.f32 %v1010, 2.0
        %v1015 = vmul.f32 %v1011, 2.0
        %v1016 = vmul.f32 %v1012, 2.0
        %v1017 = vmul.f32 %v1013, 2.0
        %v1018 = vmul.f32 %v1014, 3.1415927
        %v1019 = vmul.f32 %v1015, 3.1415927
        %v1020 = vmul.f32 %v1016, 3.1415927
        %v1021 = vmul.f32 %v1017, 3.1415927
        %v1022 = vadd.f32 %v964, 4.375478e-07
        %v1023 = vadd.f32 %v979, 4.375478e-07
        %v1024 = vadd.f32 %v994, 4.375478e-07
        %v1025 = vadd.f32 %v1009, 4.375478e-07
        %v1026 = vmul.f32 %v1018, %v1022
        %v1027 = vmul.f32 %v1019, %v1023
        %v1028 = vmul.f32 %v1020, %v1024
        %v1029 = vmul.f32 %v1021, %v1025
        %vm1030 = vcmp.ge.f32.partialorder %v1026, 3.1415927
        %vm1031 = vcmp.ge.f32.partialorder %v1027, 3.1415927
        %vm1032 = vcmp.ge.f32.partialorder %v1028, 3.1415927
        %vm1033 = vcmp.ge.f32.partialorder %v1029, 3.1415927
        %v1034 = vsel %vm1030, 1.0, 0.0
        %v1035 = vsel %vm1031, 1.0, 0.0
        %v1036 = vsel %vm1032, 1.0, 0.0
        %v1037 = vsel %vm1033, 1.0, 0.0
        %s1038 = scalar_lea.vmem %s180, 64 [#allocation6]
        %v1039 = vld [vmem:[%s1038] sm:$0xff]
        %v1040 = vld [vmem:[%s1038 + $0x8] sm:$0xff]
        %v1041 = vld [vmem:[%s1038 + $0x10] sm:$0xff]
        %v1042 = vld [vmem:[%s1038 + $0x18] sm:$0xff]
        %v1043 = vadd.f32 %v1039, 0.15
        %v1044 = vadd.f32 %v1040, 0.15
        %v1045 = vadd.f32 %v1041, 0.15
        %v1046 = vadd.f32 %v1042, 0.15
        %v1047 = vsub.f32 %v1043, 0.015
        %v1048 = vsub.f32 %v1044, 0.015
        %v1049 = vsub.f32 %v1045, 0.015
        %v1050 = vsub.f32 %v1046, 0.015
        %v1051 = vmax.f32 %v1047, 0.0
        %v1052 = vmax.f32 %v1048, 0.0
        %v1053 = vmax.f32 %v1049, 0.0
        %v1054 = vmax.f32 %v1050, 0.0
        %v1055 = vsub.f32 %v1051, 0.0525
        %v1056 = vsub.f32 %v1052, 0.0525
        %v1057 = vsub.f32 %v1053, 0.0525
        %v1058 = vsub.f32 %v1054, 0.0525
        %v1059 = vmul.f32 %v1055, 57.142857
        %v1060 = vmul.f32 %v1056, 57.142857
        %v1061 = vmul.f32 %v1057, 57.142857
        %v1062 = vmul.f32 %v1058, 57.142857
        %v1063 = vsub.f32 %v1059, 0.5
        %v1064 = vsub.f32 %v1060, 0.5
        %v1065 = vsub.f32 %v1061, 0.5
        %v1066 = vsub.f32 %v1062, 0.5
        %v1067 = vceil.f32 %v1063
        %v1068 = vceil.f32 %v1064
        %v1069 = vceil.f32 %v1065
        %v1070 = vceil.f32 %v1066
        %v1071 = vmax.f32 %v1067, 0.0
        %v1072 = vmax.f32 %v1068, 0.0
        %v1073 = vmax.f32 %v1069, 0.0
        %v1074 = vmax.f32 %v1070, 0.0
        %v1075 = vmin.f32 %v1071, 17.0
        %v1076 = vmin.f32 %v1072, 17.0
        %v1077 = vmin.f32 %v1073, 17.0
        %v1078 = vmin.f32 %v1074, 17.0
        %v1079 = vcvt.f32.s32.to.zero.pseudo %v1075
        %v1080 = vcvt.f32.s32.to.zero.pseudo %v1076
        %v1081 = vcvt.f32.s32.to.zero.pseudo %v1077
        %v1082 = vcvt.f32.s32.to.zero.pseudo %v1078
        %vm1083 = vcmp.eq.s32.totalorder %v1079, 1
        %vm1084 = vcmp.eq.s32.totalorder %v1080, 1
        %vm1085 = vcmp.eq.s32.totalorder %v1081, 1
        %vm1086 = vcmp.eq.s32.totalorder %v1082, 1
        %v1087 = vsel %vm1083, 6699988.5, 96101976.0
        %v1088 = vsel %vm1084, 6699988.5, 96101976.0
        %v1089 = vsel %vm1085, 6699988.5, 96101976.0
        %v1090 = vsel %vm1086, 6699988.5, 96101976.0
        %v1091 = vsel %vm1083, 0.0525, 0.35
        %v1092 = vsel %vm1084, 0.0525, 0.35
        %v1093 = vsel %vm1085, 0.0525, 0.35
        %v1094 = vsel %vm1086, 0.0525, 0.35
        %v1095 = vsel %vm1083, 644404.06, 29234740.0
        %v1096 = vsel %vm1084, 644404.06, 29234740.0
        %v1097 = vsel %vm1085, 644404.06, 29234740.0
        %v1098 = vsel %vm1086, 644404.06, 29234740.0
        %vm1099 = vcmp.eq.s32.totalorder %v1079, 2
        %vm1100 = vcmp.eq.s32.totalorder %v1080, 2
        %vm1101 = vcmp.eq.s32.totalorder %v1081, 2
        %vm1102 = vcmp.eq.s32.totalorder %v1082, 2
        %v1103 = vsel %vm1099, 10179165.0, %v1087
        %v1104 = vsel %vm1100, 10179165.0, %v1088
        %v1105 = vsel %vm1101, 10179165.0, %v1089
        %v1106 = vsel %vm1102, 10179165.0, %v1090
        %v1107 = vsel %vm1099, 0.07, %v1091
        %v1108 = vsel %vm1100, 0.07, %v1092
        %v1109 = vsel %vm1101, 0.07, %v1093
        %v1110 = vsel %vm1102, 0.07, %v1094
        %v1111 = vsel %vm1099, 761653.9, %v1095
        %v1112 = vsel %vm1100, 761653.9, %v1096
        %v1113 = vsel %vm1101, 761653.9, %v1097
        %v1114 = vsel %vm1102, 761653.9, %v1098
        %vm1115 = vcmp.eq.s32.totalorder %v1079, 3
        %vm1116 = vcmp.eq.s32.totalorder %v1080, 3
        %vm1117 = vcmp.eq.s32.totalorder %v1081, 3
        %vm1118 = vcmp.eq.s32.totalorder %v1082, 3
        %v1119 = vsel %vm1115, 13658537.0, %v1103
        %v1120 = vsel %vm1116, 13658537.0, %v1104
        %v1121 = vsel %vm1117, 13658537.0, %v1105
        %v1122 = vsel %vm1118, 13658537.0, %v1106
        %v1123 = vsel %vm1115, 0.0875, %v1107
        %v1124 = vsel %vm1116, 0.0875, %v1108
        %v1125 = vsel %vm1117, 0.0875, %v1109
        %v1126 = vsel %vm1118, 0.0875, %v1110
        %v1127 = vsel %vm1115, 939789.25, %v1111
        %v1128 = vsel %vm1116, 939789.25, %v1112
        %v1129 = vsel %vm1117, 939789.25, %v1113
        %v1130 = vsel %vm1118, 939789.25, %v1114
        %vm1131 = vcmp.eq.s32.totalorder %v1079, 4
        %vm1132 = vcmp.eq.s32.totalorder %v1080, 4
        %vm1133 = vcmp.eq.s32.totalorder %v1081, 4
        %vm1134 = vcmp.eq.s32.totalorder %v1082, 4
        %v1135 = vsel %vm1131, 18262702.0, %v1119
        %v1136 = vsel %vm1132, 18262702.0, %v1120
        %v1137 = vsel %vm1133, 18262702.0, %v1121
        %v1138 = vsel %vm1134, 18262702.0, %v1122
        %v1139 = vsel %vm1131, 0.105, %v1123
        %v1140 = vsel %vm1132, 0.105, %v1124
        %v1141 = vsel %vm1133, 0.105, %v1125
        %v1142 = vsel %vm1134, 0.105, %v1126
        %v1143 = vsel %vm1131, 1178813.6, %v1127
        %v1144 = vsel %vm1132, 1178813.6, %v1128
        %v1145 = vsel %vm1133, 1178813.6, %v1129
        %v1146 = vsel %vm1134, 1178813.6, %v1130
        %vm1147 = vcmp.eq.s32.totalorder %v1079, 5
        %vm1148 = vcmp.eq.s32.totalorder %v1080, 5
        %vm1149 = vcmp.eq.s32.totalorder %v1081, 5
        %vm1150 = vcmp.eq.s32.totalorder %v1082, 5
        %v1151 = vsel %vm1147, 25085482.0, %v1135
        %v1152 = vsel %vm1148, 25085482.0, %v1136
        %v1153 = vsel %vm1149, 25085482.0, %v1137
        %v1154 = vsel %vm1150, 25085482.0, %v1138
        %v1155 = vsel %vm1147, 0.1225, %v1139
        %v1156 = vsel %vm1148, 0.1225, %v1140
        %v1157 = vsel %vm1149, 0.1225, %v1141
        %v1158 = vsel %vm1150, 0.1225, %v1142
        %v1159 = vsel %vm1147, 1498411.0, %v1143
        %v1160 = vsel %vm1148, 1498411.0, %v1144
        %v1161 = vsel %vm1149, 1498411.0, %v1145
        %v1162 = vsel %vm1150, 1498411.0, %v1146
        %vm1163 = vcmp.eq.s32.totalorder %v1079, 6
        %vm1164 = vcmp.eq.s32.totalorder %v1080, 6
        %vm1165 = vcmp.eq.s32.totalorder %v1081, 6
        %vm1166 = vcmp.eq.s32.totalorder %v1082, 6
        %v1167 = vsel %vm1163, 34805740.0, %v1151
        %v1168 = vsel %vm1164, 34805740.0, %v1152
        %v1169 = vsel %vm1165, 34805740.0, %v1153
        %v1170 = vsel %vm1166, 34805740.0, %v1154
        %v1171 = vsel %vm1163, 0.14, %v1155
        %v1172 = vsel %vm1164, 0.14, %v1156
        %v1173 = vsel %vm1165, 0.14, %v1157
        %v1174 = vsel %vm1166, 0.14, %v1158
        %v1175 = vsel %vm1163, 1937406.9, %v1159
        %v1176 = vsel %vm1164, 1937406.9, %v1160
        %v1177 = vsel %vm1165, 1937406.9, %v1161
        %v1178 = vsel %vm1166, 1937406.9, %v1162
        %vm1179 = vcmp.eq.s32.totalorder %v1079, 7
        %vm1180 = vcmp.eq.s32.totalorder %v1080, 7
        %vm1181 = vcmp.eq.s32.totalorder %v1081, 7
        %vm1182 = vcmp.eq.s32.totalorder %v1082, 7
        %v1183 = vsel %vm1179, 47317032.0, %v1167
        %v1184 = vsel %vm1180, 47317032.0, %v1168
        %v1185 = vsel %vm1181, 47317032.0, %v1169
        %v1186 = vsel %vm1182, 47317032.0, %v1170
        %v1187 = vsel %vm1179, 0.1575, %v1171
        %v1188 = vsel %vm1180, 0.1575, %v1172
        %v1189 = vsel %vm1181, 0.1575, %v1173
        %v1190 = vsel %vm1182, 0.1575, %v1174
        %v1191 = vsel %vm1179, 2546507.3, %v1175
        %v1192 = vsel %vm1180, 2546507.3, %v1176
        %v1193 = vsel %vm1181, 2546507.3, %v1177
        %v1194 = vsel %vm1182, 2546507.3, %v1178
        %vm1195 = vcmp.eq.s32.totalorder %v1079, 8
        %vm1196 = vcmp.eq.s32.totalorder %v1080, 8
        %vm1197 = vcmp.eq.s32.totalorder %v1081, 8
        %vm1198 = vcmp.eq.s32.totalorder %v1082, 8
        %v1199 = vsel %vm1195, 63570476.0, %v1183
        %v1200 = vsel %vm1196, 63570476.0, %v1184
        %v1201 = vsel %vm1197, 63570476.0, %v1185
        %v1202 = vsel %vm1198, 63570476.0, %v1186
        %v1203 = vsel %vm1195, 0.175, %v1187
        %v1204 = vsel %vm1196, 0.175, %v1188
        %v1205 = vsel %vm1197, 0.175, %v1189
        %v1206 = vsel %vm1198, 0.175, %v1190
        %v1207 = vsel %vm1195, 3374555.3, %v1191
        %v1208 = vsel %vm1196, 3374555.3, %v1192
        %v1209 = vsel %vm1197, 3374555.3, %v1193
        %v1210 = vsel %vm1198, 3374555.3, %v1194
        %vm1211 = vcmp.eq.s32.totalorder %v1079, 9
        %vm1212 = vcmp.eq.s32.totalorder %v1080, 9
        %vm1213 = vcmp.eq.s32.totalorder %v1081, 9
        %vm1214 = vcmp.eq.s32.totalorder %v1082, 9
        %v1215 = vsel %vm1211, 84990664.0, %v1199
        %v1216 = vsel %vm1212, 84990664.0, %v1200
        %v1217 = vsel %vm1213, 84990664.0, %v1201
        %v1218 = vsel %vm1214, 84990664.0, %v1202
        %v1219 = vsel %vm1211, 0.1925, %v1203
        %v1220 = vsel %vm1212, 0.1925, %v1204
        %v1221 = vsel %vm1213, 0.1925, %v1205
        %v1222 = vsel %vm1214, 0.1925, %v1206
        %v1223 = vsel %vm1211, 4487038.5, %v1207
        %v1224 = vsel %vm1212, 4487038.5, %v1208
        %v1225 = vsel %vm1213, 4487038.5, %v1209
        %v1226 = vsel %vm1214, 4487038.5, %v1210
        %vm1227 = vcmp.eq.s32.totalorder %v1079, 10
        %vm1228 = vcmp.eq.s32.totalorder %v1080, 10
        %vm1229 = vcmp.eq.s32.totalorder %v1081, 10
        %vm1230 = vcmp.eq.s32.totalorder %v1082, 10
        %v1231 = vsel %vm1227, 1.1235563e+08, %v1215
        %v1232 = vsel %vm1228, 1.1235563e+08, %v1216
        %v1233 = vsel %vm1229, 1.1235563e+08, %v1217
        %v1234 = vsel %vm1230, 1.1235563e+08, %v1218
        %v1235 = vsel %vm1227, 0.21, %v1219
        %v1236 = vsel %vm1228, 0.21, %v1220
        %v1237 = vsel %vm1229, 0.21, %v1221
        %v1238 = vsel %vm1230, 0.21, %v1222
        %v1239 = vsel %vm1227, 5974375.0, %v1223
        %v1240 = vsel %vm1228, 5974375.0, %v1224
        %v1241 = vsel %vm1229, 5974375.0, %v1225
        %v1242 = vsel %vm1230, 5974375.0, %v1226
        %vm1243 = vcmp.eq.s32.totalorder %v1079, 11
        %vm1244 = vcmp.eq.s32.totalorder %v1080, 11
        %vm1245 = vcmp.eq.s32.totalorder %v1081, 11
        %vm1246 = vcmp.eq.s32.totalorder %v1082, 11
        %v1247 = vsel %vm1243, 1.4489813e+08, %v1231
        %v1248 = vsel %vm1244, 1.4489813e+08, %v1232
        %v1249 = vsel %vm1245, 1.4489813e+08, %v1233
        %v1250 = vsel %vm1246, 1.4489813e+08, %v1234
        %v1251 = vsel %vm1243, 0.2275, %v1235
        %v1252 = vsel %vm1244, 0.2275, %v1236
        %v1253 = vsel %vm1245, 0.2275, %v1237
        %v1254 = vsel %vm1246, 0.2275, %v1238
        %v1255 = vsel %vm1243, 7940600.0, %v1239
        %v1256 = vsel %vm1244, 7940600.0, %v1240
        %v1257 = vsel %vm1245, 7940600.0, %v1241
        %v1258 = vsel %vm1246, 7940600.0, %v1242
        %vm1259 = vcmp.eq.s32.totalorder %v1079, 12
        %vm1260 = vcmp.eq.s32.totalorder %v1080, 12
        %vm1261 = vcmp.eq.s32.totalorder %v1081, 12
        %vm1262 = vcmp.eq.s32.totalorder %v1082, 12
        %v1263 = vsel %vm1259, 1.7893462e+08, %v1247
        %v1264 = vsel %vm1260, 1.7893462e+08, %v1248
        %v1265 = vsel %vm1261, 1.7893462e+08, %v1249
        %v1266 = vsel %vm1262, 1.7893462e+08, %v1250
        %v1267 = vsel %vm1259, 0.245, %v1251
        %v1268 = vsel %vm1260, 0.245, %v1252
        %v1269 = vsel %vm1261, 0.245, %v1253
        %v1270 = vsel %vm1262, 0.245, %v1254
        %v1271 = vsel %vm1259, 10476317.0, %v1255
        %v1272 = vsel %vm1260, 10476317.0, %v1256
        %v1273 = vsel %vm1261, 10476317.0, %v1257
        %v1274 = vsel %vm1262, 10476317.0, %v1258
        %vm1275 = vcmp.eq.s32.totalorder %v1079, 13
        %vm1276 = vcmp.eq.s32.totalorder %v1080, 13
        %vm1277 = vcmp.eq.s32.totalorder %v1081, 13
        %vm1278 = vcmp.eq.s32.totalorder %v1082, 13
        %v1279 = vsel %vm1275, 2.0577562e+08, %v1263
        %v1280 = vsel %vm1276, 2.0577562e+08, %v1264
        %v1281 = vsel %vm1277, 2.0577562e+08, %v1265
        %v1282 = vsel %vm1278, 2.0577562e+08, %v1266
        %v1283 = vsel %vm1275, 0.2625, %v1267
        %v1284 = vsel %vm1276, 0.2625, %v1268
        %v1285 = vsel %vm1277, 0.2625, %v1269
        %v1286 = vsel %vm1278, 0.2625, %v1270
        %v1287 = vsel %vm1275, 13607670.0, %v1271
        %v1288 = vsel %vm1276, 13607670.0, %v1272
        %v1289 = vsel %vm1277, 13607670.0, %v1273
        %v1290 = vsel %vm1278, 13607670.0, %v1274
        %vm1291 = vcmp.eq.s32.totalorder %v1079, 14
        %vm1292 = vcmp.eq.s32.totalorder %v1080, 14
        %vm1293 = vcmp.eq.s32.totalorder %v1081, 14
        %vm1294 = vcmp.eq.s32.totalorder %v1082, 14
        %v1295 = vsel %vm1291, 2.1354498e+08, %v1279
        %v1296 = vsel %vm1292, 2.1354498e+08, %v1280
        %v1297 = vsel %vm1293, 2.1354498e+08, %v1281
        %v1298 = vsel %vm1294, 2.1354498e+08, %v1282
        %v1299 = vsel %vm1291, 0.28, %v1283
        %v1300 = vsel %vm1292, 0.28, %v1284
        %v1301 = vsel %vm1293, 0.28, %v1285
        %v1302 = vsel %vm1294, 0.28, %v1286
        %v1303 = vsel %vm1291, 17208746.0, %v1287
        %v1304 = vsel %vm1292, 17208746.0, %v1288
        %v1305 = vsel %vm1293, 17208746.0, %v1289
        %v1306 = vsel %vm1294, 17208746.0, %v1290
        %vm1307 = vcmp.eq.s32.totalorder %v1079, 15
        %vm1308 = vcmp.eq.s32.totalorder %v1080, 15
        %vm1309 = vcmp.eq.s32.totalorder %v1081, 15
        %vm1310 = vcmp.eq.s32.totalorder %v1082, 15
        %v1311 = vsel %vm1307, 1.9567355e+08, %v1295
        %v1312 = vsel %vm1308, 1.9567355e+08, %v1296
        %v1313 = vsel %vm1309, 1.9567355e+08, %v1297
        %v1314 = vsel %vm1310, 1.9567355e+08, %v1298
        %v1315 = vsel %vm1307, 0.2975, %v1299
        %v1316 = vsel %vm1308, 0.2975, %v1300
        %v1317 = vsel %vm1309, 0.2975, %v1301
        %v1318 = vsel %vm1310, 0.2975, %v1302
        %v1319 = vsel %vm1307, 20945786.0, %v1303
        %v1320 = vsel %vm1308, 20945786.0, %v1304
        %v1321 = vsel %vm1309, 20945786.0, %v1305
        %v1322 = vsel %vm1310, 20945786.0, %v1306
        %vm1323 = vcmp.eq.s32.totalorder %v1079, 16
        %vm1324 = vcmp.eq.s32.totalorder %v1080, 16
        %vm1325 = vcmp.eq.s32.totalorder %v1081, 16
        %vm1326 = vcmp.eq.s32.totalorder %v1082, 16
        %v1327 = vsel %vm1323, 1.5927611e+08, %v1311
        %v1328 = vsel %vm1324, 1.5927611e+08, %v1312
        %v1329 = vsel %vm1325, 1.5927611e+08, %v1313
        %v1330 = vsel %vm1326, 1.5927611e+08, %v1314
        %v1331 = vsel %vm1323, 0.315, %v1315
        %v1332 = vsel %vm1324, 0.315, %v1316
        %v1333 = vsel %vm1325, 0.315, %v1317
        %v1334 = vsel %vm1326, 0.315, %v1318
        %v1335 = vsel %vm1323, 24370070.0, %v1319
        %v1336 = vsel %vm1324, 24370070.0, %v1320
        %v1337 = vsel %vm1325, 24370070.0, %v1321
        %v1338 = vsel %vm1326, 24370070.0, %v1322
        %vm1339 = vcmp.eq.s32.totalorder %v1079, 17
        %vm1340 = vcmp.eq.s32.totalorder %v1080, 17
        %vm1341 = vcmp.eq.s32.totalorder %v1081, 17
        %vm1342 = vcmp.eq.s32.totalorder %v1082, 17
        %v1343 = vsel %vm1339, 1.18705024e+08, %v1327
        %v1344 = vsel %vm1340, 1.18705024e+08, %v1328
        %v1345 = vsel %vm1341, 1.18705024e+08, %v1329
        %v1346 = vsel %vm1342, 1.18705024e+08, %v1330
        %v1347 = vsel %vm1339, 0.3325, %v1331
        %v1348 = vsel %vm1340, 0.3325, %v1332
        %v1349 = vsel %vm1341, 0.3325, %v1333
        %v1350 = vsel %vm1342, 0.3325, %v1334
        %v1351 = vsel %vm1339, 27157404.0, %v1335
        %v1352 = vsel %vm1340, 27157404.0, %v1336
        %v1353 = vsel %vm1341, 27157404.0, %v1337
        %v1354 = vsel %vm1342, 27157404.0, %v1338
        %v1355 = vsub.f32 %v1051, %v1347
        %v1356 = vsub.f32 %v1052, %v1348
        %v1357 = vsub.f32 %v1053, %v1349
        %v1358 = vsub.f32 %v1054, %v1350
        %v1359 = vmul.f32 %v1343, %v1355
        %v1360 = vmul.f32 %v1344, %v1356
        %v1361 = vmul.f32 %v1345, %v1357
        %v1362 = vmul.f32 %v1346, %v1358
        %v1363 = vadd.f32 %v1359, %v1351
        %v1364 = vadd.f32 %v1360, %v1352
        %v1365 = vadd.f32 %v1361, %v1353
        %v1366 = vadd.f32 %v1362, %v1354
        %v1367 = vrcp.pop %v1363
        %v1368 = vmul.f32 %v1363, %v1367
        %v1369 = vsub.f32 1.0, %v1368
        %v1370 = vmul.f32 %v1367, %v1369
        %v1371 = vadd.f32 %v1367, %v1370
        %vm1372 = vweird.f32 %v1363
        %vm1373 = vweird.f32 %v1367
        %vm1374 = vmor %vm1372, %vm1373
        %v1375 = vsel %vm1374, %v1367, %v1371
        %v1376 = vand.u32 2147483647, %v1363
        %vm1377 = vcmp.eq.f32.partialorder %v1376, 8.507059e+37
        %v1378 = vand.u32 %v1363, 2147483648
        %v1379 = vor.u32 1.1754944e-38, %v1378
        %v1380 = vsel %vm1377, %v1379, %v1375
        %v1381 = vmul.f32 1.0, %v1380
        %v1382 = vrcp.pop %v1364
        %v1383 = vmul.f32 %v1364, %v1382
        %v1384 = vsub.f32 1.0, %v1383
        %v1385 = vmul.f32 %v1382, %v1384
        %v1386 = vadd.f32 %v1382, %v1385
        %vm1387 = vweird.f32 %v1364
        %vm1388 = vweird.f32 %v1382
        %vm1389 = vmor %vm1387, %vm1388
        %v1390 = vsel %vm1389, %v1382, %v1386
        %v1391 = vand.u32 2147483647, %v1364
        %vm1392 = vcmp.eq.f32.partialorder %v1391, 8.507059e+37
        %v1393 = vand.u32 %v1364, 2147483648
        %v1394 = vor.u32 1.1754944e-38, %v1393
        %v1395 = vsel %vm1392, %v1394, %v1390
        %v1396 = vmul.f32 1.0, %v1395
        %v1397 = vrcp.pop %v1365
        %v1398 = vmul.f32 %v1365, %v1397
        %v1399 = vsub.f32 1.0, %v1398
        %v1400 = vmul.f32 %v1397, %v1399
        %v1401 = vadd.f32 %v1397, %v1400
        %vm1402 = vweird.f32 %v1365
        %vm1403 = vweird.f32 %v1397
        %vm1404 = vmor %vm1402, %vm1403
        %v1405 = vsel %vm1404, %v1397, %v1401
        %v1406 = vand.u32 2147483647, %v1365
        %vm1407 = vcmp.eq.f32.partialorder %v1406, 8.507059e+37
        %v1408 = vand.u32 %v1365, 2147483648
        %v1409 = vor.u32 1.1754944e-38, %v1408
        %v1410 = vsel %vm1407, %v1409, %v1405
        %v1411 = vmul.f32 1.0, %v1410
        %v1412 = vrcp.pop %v1366
        %v1413 = vmul.f32 %v1366, %v1412
        %v1414 = vsub.f32 1.0, %v1413
        %v1415 = vmul.f32 %v1412, %v1414
        %v1416 = vadd.f32 %v1412, %v1415
        %vm1417 = vweird.f32 %v1366
        %vm1418 = vweird.f32 %v1412
        %vm1419 = vmor %vm1417, %vm1418
        %v1420 = vsel %vm1419, %v1412, %v1416
        %v1421 = vand.u32 2147483647, %v1366
        %vm1422 = vcmp.eq.f32.partialorder %v1421, 8.507059e+37
        %v1423 = vand.u32 %v1366, 2147483648
        %v1424 = vor.u32 1.1754944e-38, %v1423
        %v1425 = vsel %vm1422, %v1424, %v1420
        %v1426 = vmul.f32 1.0, %v1425
        %v1427 = vsub.f32 %v1363, 2285464.5
        %v1428 = vsub.f32 %v1364, 2285464.5
        %v1429 = vsub.f32 %v1365, 2285464.5
        %v1430 = vsub.f32 %v1366, 2285464.5
        %v1431 = vmul.f32 %v1427, 2.0
        %v1432 = vmul.f32 %v1428, 2.0
        %v1433 = vmul.f32 %v1429, 2.0
        %v1434 = vmul.f32 %v1430, 2.0
        %v1435 = vmul.f32 %v1431, 3.1415927
        %v1436 = vmul.f32 %v1432, 3.1415927
        %v1437 = vmul.f32 %v1433, 3.1415927
        %v1438 = vmul.f32 %v1434, 3.1415927
        %v1439 = vadd.f32 %v1381, 4.375478e-07
        %v1440 = vadd.f32 %v1396, 4.375478e-07
        %v1441 = vadd.f32 %v1411, 4.375478e-07
        %v1442 = vadd.f32 %v1426, 4.375478e-07
        %v1443 = vmul.f32 %v1435, %v1439
        %v1444 = vmul.f32 %v1436, %v1440
        %v1445 = vmul.f32 %v1437, %v1441
        %v1446 = vmul.f32 %v1438, %v1442
        %vm1447 = vcmp.ge.f32.partialorder %v1443, 3.1415927
        %vm1448 = vcmp.ge.f32.partialorder %v1444, 3.1415927
        %vm1449 = vcmp.ge.f32.partialorder %v1445, 3.1415927
        %vm1450 = vcmp.ge.f32.partialorder %v1446, 3.1415927
        %v1451 = vsel %vm1447, 1.0, 0.0
        %v1452 = vsel %vm1448, 1.0, 0.0
        %v1453 = vsel %vm1449, 1.0, 0.0
        %v1454 = vsel %vm1450, 1.0, 0.0
        %s1455 = sld [smem:[#allocation2]]
        %v1456 = vstv %s1455
        %v1457 = vmul.f32 %v1456, %v617
        %v1458 = vmul.f32 %v1456, %v618
        %v1459 = vmul.f32 %v1456, %v619
        %v1460 = vmul.f32 %v1456, %v620
        %s1461 = sld [smem:[#allocation2 + $0x1]]
        %v1462 = vstv %s1461
        %v1463 = vmul.f32 %v1462, %v1034
        %v1464 = vmul.f32 %v1462, %v1035
        %v1465 = vmul.f32 %v1462, %v1036
        %v1466 = vmul.f32 %v1462, %v1037
        %v1467 = vadd.f32 %v1457, %v1463
        %v1468 = vadd.f32 %v1458, %v1464
        %v1469 = vadd.f32 %v1459, %v1465
        %v1470 = vadd.f32 %v1460, %v1466
        %s1471 = sld [smem:[#allocation2 + $0x2]]
        %v1472 = vstv %s1471
        %v1473 = vmul.f32 %v1472, %v1451
        %v1474 = vmul.f32 %v1472, %v1452
        %v1475 = vmul.f32 %v1472, %v1453
        %v1476 = vmul.f32 %v1472, %v1454
        %v1477 = vadd.f32 %v1467, %v1473
        %v1478 = vadd.f32 %v1468, %v1474
        %v1479 = vadd.f32 %v1469, %v1475
        %v1480 = vadd.f32 %v1470, %v1476
        %v1481 = vadd.f32 %v1477, 0.15
        %v1482 = vadd.f32 %v1478, 0.15
        %v1483 = vadd.f32 %v1479, 0.15
        %v1484 = vadd.f32 %v1480, 0.15
        %v1485 = vsub.f32 %v1481, 0.015
        %v1486 = vsub.f32 %v1482, 0.015
        %v1487 = vsub.f32 %v1483, 0.015
        %v1488 = vsub.f32 %v1484, 0.015
        %v1489 = vmax.f32 %v1485, 0.0
        %v1490 = vmax.f32 %v1486, 0.0
        %v1491 = vmax.f32 %v1487, 0.0
        %v1492 = vmax.f32 %v1488, 0.0
        %v1493 = vsub.f32 %v1489, 0.0525
        %v1494 = vsub.f32 %v1490, 0.0525
        %v1495 = vsub.f32 %v1491, 0.0525
        %v1496 = vsub.f32 %v1492, 0.0525
        %v1497 = vmul.f32 %v1493, 57.142857
        %v1498 = vmul.f32 %v1494, 57.142857
        %v1499 = vmul.f32 %v1495, 57.142857
        %v1500 = vmul.f32 %v1496, 57.142857
        %v1501 = vsub.f32 %v1497, 0.5
        %v1502 = vsub.f32 %v1498, 0.5
        %v1503 = vsub.f32 %v1499, 0.5
        %v1504 = vsub.f32 %v1500, 0.5
        %v1505 = vceil.f32 %v1501
        %v1506 = vceil.f32 %v1502
        %v1507 = vceil.f32 %v1503
        %v1508 = vceil.f32 %v1504
        %v1509 = vmax.f32 %v1505, 0.0
        %v1510 = vmax.f32 %v1506, 0.0
        %v1511 = vmax.f32 %v1507, 0.0
        %v1512 = vmax.f32 %v1508, 0.0
        %v1513 = vmin.f32 %v1509, 17.0
        %v1514 = vmin.f32 %v1510, 17.0
        %v1515 = vmin.f32 %v1511, 17.0
        %v1516 = vmin.f32 %v1512, 17.0
        %v1517 = vcvt.f32.s32.to.zero.pseudo %v1513
        %v1518 = vcvt.f32.s32.to.zero.pseudo %v1514
        %v1519 = vcvt.f32.s32.to.zero.pseudo %v1515
        %v1520 = vcvt.f32.s32.to.zero.pseudo %v1516
        %vm1521 = vcmp.eq.s32.totalorder %v1517, 1
        %vm1522 = vcmp.eq.s32.totalorder %v1518, 1
        %vm1523 = vcmp.eq.s32.totalorder %v1519, 1
        %vm1524 = vcmp.eq.s32.totalorder %v1520, 1
        %v1525 = vsel %vm1521, 6699988.5, 96101976.0
        %v1526 = vsel %vm1522, 6699988.5, 96101976.0
        %v1527 = vsel %vm1523, 6699988.5, 96101976.0
        %v1528 = vsel %vm1524, 6699988.5, 96101976.0
        %v1529 = vsel %vm1521, 0.0525, 0.35
        %v1530 = vsel %vm1522, 0.0525, 0.35
        %v1531 = vsel %vm1523, 0.0525, 0.35
        %v1532 = vsel %vm1524, 0.0525, 0.35
        %v1533 = vsel %vm1521, 644404.06, 29234740.0
        %v1534 = vsel %vm1522, 644404.06, 29234740.0
        %v1535 = vsel %vm1523, 644404.06, 29234740.0
        %v1536 = vsel %vm1524, 644404.06, 29234740.0
        %vm1537 = vcmp.eq.s32.totalorder %v1517, 2
        %vm1538 = vcmp.eq.s32.totalorder %v1518, 2
        %vm1539 = vcmp.eq.s32.totalorder %v1519, 2
        %vm1540 = vcmp.eq.s32.totalorder %v1520, 2
        %v1541 = vsel %vm1537, 10179165.0, %v1525
        %v1542 = vsel %vm1538, 10179165.0, %v1526
        %v1543 = vsel %vm1539, 10179165.0, %v1527
        %v1544 = vsel %vm1540, 10179165.0, %v1528
        %v1545 = vsel %vm1537, 0.07, %v1529
        %v1546 = vsel %vm1538, 0.07, %v1530
        %v1547 = vsel %vm1539, 0.07, %v1531
        %v1548 = vsel %vm1540, 0.07, %v1532
        %v1549 = vsel %vm1537, 761653.9, %v1533
        %v1550 = vsel %vm1538, 761653.9, %v1534
        %v1551 = vsel %vm1539, 761653.9, %v1535
        %v1552 = vsel %vm1540, 761653.9, %v1536
        %vm1553 = vcmp.eq.s32.totalorder %v1517, 3
        %vm1554 = vcmp.eq.s32.totalorder %v1518, 3
        %vm1555 = vcmp.eq.s32.totalorder %v1519, 3
        %vm1556 = vcmp.eq.s32.totalorder %v1520, 3
        %v1557 = vsel %vm1553, 13658537.0, %v1541
        %v1558 = vsel %vm1554, 13658537.0, %v1542
        %v1559 = vsel %vm1555, 13658537.0, %v1543
        %v1560 = vsel %vm1556, 13658537.0, %v1544
        %v1561 = vsel %vm1553, 0.0875, %v1545
        %v1562 = vsel %vm1554, 0.0875, %v1546
        %v1563 = vsel %vm1555, 0.0875, %v1547
        %v1564 = vsel %vm1556, 0.0875, %v1548
        %v1565 = vsel %vm1553, 939789.25, %v1549
        %v1566 = vsel %vm1554, 939789.25, %v1550
        %v1567 = vsel %vm1555, 939789.25, %v1551
        %v1568 = vsel %vm1556, 939789.25, %v1552
        %vm1569 = vcmp.eq.s32.totalorder %v1517, 4
        %vm1570 = vcmp.eq.s32.totalorder %v1518, 4
        %vm1571 = vcmp.eq.s32.totalorder %v1519, 4
        %vm1572 = vcmp.eq.s32.totalorder %v1520, 4
        %v1573 = vsel %vm1569, 18262702.0, %v1557
        %v1574 = vsel %vm1570, 18262702.0, %v1558
        %v1575 = vsel %vm1571, 18262702.0, %v1559
        %v1576 = vsel %vm1572, 18262702.0, %v1560
        %v1577 = vsel %vm1569, 0.105, %v1561
        %v1578 = vsel %vm1570, 0.105, %v1562
        %v1579 = vsel %vm1571, 0.105, %v1563
        %v1580 = vsel %vm1572, 0.105, %v1564
        %v1581 = vsel %vm1569, 1178813.6, %v1565
        %v1582 = vsel %vm1570, 1178813.6, %v1566
        %v1583 = vsel %vm1571, 1178813.6, %v1567
        %v1584 = vsel %vm1572, 1178813.6, %v1568
        %vm1585 = vcmp.eq.s32.totalorder %v1517, 5
        %vm1586 = vcmp.eq.s32.totalorder %v1518, 5
        %vm1587 = vcmp.eq.s32.totalorder %v1519, 5
        %vm1588 = vcmp.eq.s32.totalorder %v1520, 5
        %v1589 = vsel %vm1585, 25085482.0, %v1573
        %v1590 = vsel %vm1586, 25085482.0, %v1574
        %v1591 = vsel %vm1587, 25085482.0, %v1575
        %v1592 = vsel %vm1588, 25085482.0, %v1576
        %v1593 = vsel %vm1585, 0.1225, %v1577
        %v1594 = vsel %vm1586, 0.1225, %v1578
        %v1595 = vsel %vm1587, 0.1225, %v1579
        %v1596 = vsel %vm1588, 0.1225, %v1580
        %v1597 = vsel %vm1585, 1498411.0, %v1581
        %v1598 = vsel %vm1586, 1498411.0, %v1582
        %v1599 = vsel %vm1587, 1498411.0, %v1583
        %v1600 = vsel %vm1588, 1498411.0, %v1584
        %vm1601 = vcmp.eq.s32.totalorder %v1517, 6
        %vm1602 = vcmp.eq.s32.totalorder %v1518, 6
        %vm1603 = vcmp.eq.s32.totalorder %v1519, 6
        %vm1604 = vcmp.eq.s32.totalorder %v1520, 6
        %v1605 = vsel %vm1601, 34805740.0, %v1589
        %v1606 = vsel %vm1602, 34805740.0, %v1590
        %v1607 = vsel %vm1603, 34805740.0, %v1591
        %v1608 = vsel %vm1604, 34805740.0, %v1592
        %v1609 = vsel %vm1601, 0.14, %v1593
        %v1610 = vsel %vm1602, 0.14, %v1594
        %v1611 = vsel %vm1603, 0.14, %v1595
        %v1612 = vsel %vm1604, 0.14, %v1596
        %v1613 = vsel %vm1601, 1937406.9, %v1597
        %v1614 = vsel %vm1602, 1937406.9, %v1598
        %v1615 = vsel %vm1603, 1937406.9, %v1599
        %v1616 = vsel %vm1604, 1937406.9, %v1600
        %vm1617 = vcmp.eq.s32.totalorder %v1517, 7
        %vm1618 = vcmp.eq.s32.totalorder %v1518, 7
        %vm1619 = vcmp.eq.s32.totalorder %v1519, 7
        %vm1620 = vcmp.eq.s32.totalorder %v1520, 7
        %v1621 = vsel %vm1617, 47317032.0, %v1605
        %v1622 = vsel %vm1618, 47317032.0, %v1606
        %v1623 = vsel %vm1619, 47317032.0, %v1607
        %v1624 = vsel %vm1620, 47317032.0, %v1608
        %v1625 = vsel %vm1617, 0.1575, %v1609
        %v1626 = vsel %vm1618, 0.1575, %v1610
        %v1627 = vsel %vm1619, 0.1575, %v1611
        %v1628 = vsel %vm1620, 0.1575, %v1612
        %v1629 = vsel %vm1617, 2546507.3, %v1613
        %v1630 = vsel %vm1618, 2546507.3, %v1614
        %v1631 = vsel %vm1619, 2546507.3, %v1615
        %v1632 = vsel %vm1620, 2546507.3, %v1616
        %vm1633 = vcmp.eq.s32.totalorder %v1517, 8
        %vm1634 = vcmp.eq.s32.totalorder %v1518, 8
        %vm1635 = vcmp.eq.s32.totalorder %v1519, 8
        %vm1636 = vcmp.eq.s32.totalorder %v1520, 8
        %v1637 = vsel %vm1633, 63570476.0, %v1621
        %v1638 = vsel %vm1634, 63570476.0, %v1622
        %v1639 = vsel %vm1635, 63570476.0, %v1623
        %v1640 = vsel %vm1636, 63570476.0, %v1624
        %v1641 = vsel %vm1633, 0.175, %v1625
        %v1642 = vsel %vm1634, 0.175, %v1626
        %v1643 = vsel %vm1635, 0.175, %v1627
        %v1644 = vsel %vm1636, 0.175, %v1628
        %v1645 = vsel %vm1633, 3374555.3, %v1629
        %v1646 = vsel %vm1634, 3374555.3, %v1630
        %v1647 = vsel %vm1635, 3374555.3, %v1631
        %v1648 = vsel %vm1636, 3374555.3, %v1632
        %vm1649 = vcmp.eq.s32.totalorder %v1517, 9
        %vm1650 = vcmp.eq.s32.totalorder %v1518, 9
        %vm1651 = vcmp.eq.s32.totalorder %v1519, 9
        %vm1652 = vcmp.eq.s32.totalorder %v1520, 9
        %v1653 = vsel %vm1649, 84990664.0, %v1637
        %v1654 = vsel %vm1650, 84990664.0, %v1638
        %v1655 = vsel %vm1651, 84990664.0, %v1639
        %v1656 = vsel %vm1652, 84990664.0, %v1640
        %v1657 = vsel %vm1649, 0.1925, %v1641
        %v1658 = vsel %vm1650, 0.1925, %v1642
        %v1659 = vsel %vm1651, 0.1925, %v1643
        %v1660 = vsel %vm1652, 0.1925, %v1644
        %v1661 = vsel %vm1649, 4487038.5, %v1645
        %v1662 = vsel %vm1650, 4487038.5, %v1646
        %v1663 = vsel %vm1651, 4487038.5, %v1647
        %v1664 = vsel %vm1652, 4487038.5, %v1648
        %vm1665 = vcmp.eq.s32.totalorder %v1517, 10
        %vm1666 = vcmp.eq.s32.totalorder %v1518, 10
        %vm1667 = vcmp.eq.s32.totalorder %v1519, 10
        %vm1668 = vcmp.eq.s32.totalorder %v1520, 10
        %v1669 = vsel %vm1665, 1.1235563e+08, %v1653
        %v1670 = vsel %vm1666, 1.1235563e+08, %v1654
        %v1671 = vsel %vm1667, 1.1235563e+08, %v1655
        %v1672 = vsel %vm1668, 1.1235563e+08, %v1656
        %v1673 = vsel %vm1665, 0.21, %v1657
        %v1674 = vsel %vm1666, 0.21, %v1658
        %v1675 = vsel %vm1667, 0.21, %v1659
        %v1676 = vsel %vm1668, 0.21, %v1660
        %v1677 = vsel %vm1665, 5974375.0, %v1661
        %v1678 = vsel %vm1666, 5974375.0, %v1662
        %v1679 = vsel %vm1667, 5974375.0, %v1663
        %v1680 = vsel %vm1668, 5974375.0, %v1664
        %vm1681 = vcmp.eq.s32.totalorder %v1517, 11
        %vm1682 = vcmp.eq.s32.totalorder %v1518, 11
        %vm1683 = vcmp.eq.s32.totalorder %v1519, 11
        %vm1684 = vcmp.eq.s32.totalorder %v1520, 11
        %v1685 = vsel %vm1681, 1.4489813e+08, %v1669
        %v1686 = vsel %vm1682, 1.4489813e+08, %v1670
        %v1687 = vsel %vm1683, 1.4489813e+08, %v1671
        %v1688 = vsel %vm1684, 1.4489813e+08, %v1672
        %v1689 = vsel %vm1681, 0.2275, %v1673
        %v1690 = vsel %vm1682, 0.2275, %v1674
        %v1691 = vsel %vm1683, 0.2275, %v1675
        %v1692 = vsel %vm1684, 0.2275, %v1676
        %v1693 = vsel %vm1681, 7940600.0, %v1677
        %v1694 = vsel %vm1682, 7940600.0, %v1678
        %v1695 = vsel %vm1683, 7940600.0, %v1679
        %v1696 = vsel %vm1684, 7940600.0, %v1680
        %vm1697 = vcmp.eq.s32.totalorder %v1517, 12
        %vm1698 = vcmp.eq.s32.totalorder %v1518, 12
        %vm1699 = vcmp.eq.s32.totalorder %v1519, 12
        %vm1700 = vcmp.eq.s32.totalorder %v1520, 12
        %v1701 = vsel %vm1697, 1.7893462e+08, %v1685
        %v1702 = vsel %vm1698, 1.7893462e+08, %v1686
        %v1703 = vsel %vm1699, 1.7893462e+08, %v1687
        %v1704 = vsel %vm1700, 1.7893462e+08, %v1688
        %v1705 = vsel %vm1697, 0.245, %v1689
        %v1706 = vsel %vm1698, 0.245, %v1690
        %v1707 = vsel %vm1699, 0.245, %v1691
        %v1708 = vsel %vm1700, 0.245, %v1692
        %v1709 = vsel %vm1697, 10476317.0, %v1693
        %v1710 = vsel %vm1698, 10476317.0, %v1694
        %v1711 = vsel %vm1699, 10476317.0, %v1695
        %v1712 = vsel %vm1700, 10476317.0, %v1696
        %vm1713 = vcmp.eq.s32.totalorder %v1517, 13
        %vm1714 = vcmp.eq.s32.totalorder %v1518, 13
        %vm1715 = vcmp.eq.s32.totalorder %v1519, 13
        %vm1716 = vcmp.eq.s32.totalorder %v1520, 13
        %v1717 = vsel %vm1713, 2.0577562e+08, %v1701
        %v1718 = vsel %vm1714, 2.0577562e+08, %v1702
        %v1719 = vsel %vm1715, 2.0577562e+08, %v1703
        %v1720 = vsel %vm1716, 2.0577562e+08, %v1704
        %v1721 = vsel %vm1713, 0.2625, %v1705
        %v1722 = vsel %vm1714, 0.2625, %v1706
        %v1723 = vsel %vm1715, 0.2625, %v1707
        %v1724 = vsel %vm1716, 0.2625, %v1708
        %v1725 = vsel %vm1713, 13607670.0, %v1709
        %v1726 = vsel %vm1714, 13607670.0, %v1710
        %v1727 = vsel %vm1715, 13607670.0, %v1711
        %v1728 = vsel %vm1716, 13607670.0, %v1712
        %vm1729 = vcmp.eq.s32.totalorder %v1517, 14
        %vm1730 = vcmp.eq.s32.totalorder %v1518, 14
        %vm1731 = vcmp.eq.s32.totalorder %v1519, 14
        %vm1732 = vcmp.eq.s32.totalorder %v1520, 14
        %v1733 = vsel %vm1729, 2.1354498e+08, %v1717
        %v1734 = vsel %vm1730, 2.1354498e+08, %v1718
        %v1735 = vsel %vm1731, 2.1354498e+08, %v1719
        %v1736 = vsel %vm1732, 2.1354498e+08, %v1720
        %v1737 = vsel %vm1729, 0.28, %v1721
        %v1738 = vsel %vm1730, 0.28, %v1722
        %v1739 = vsel %vm1731, 0.28, %v1723
        %v1740 = vsel %vm1732, 0.28, %v1724
        %v1741 = vsel %vm1729, 17208746.0, %v1725
        %v1742 = vsel %vm1730, 17208746.0, %v1726
        %v1743 = vsel %vm1731, 17208746.0, %v1727
        %v1744 = vsel %vm1732, 17208746.0, %v1728
        %vm1745 = vcmp.eq.s32.totalorder %v1517, 15
        %vm1746 = vcmp.eq.s32.totalorder %v1518, 15
        %vm1747 = vcmp.eq.s32.totalorder %v1519, 15
        %vm1748 = vcmp.eq.s32.totalorder %v1520, 15
        %v1749 = vsel %vm1745, 1.9567355e+08, %v1733
        %v1750 = vsel %vm1746, 1.9567355e+08, %v1734
        %v1751 = vsel %vm1747, 1.9567355e+08, %v1735
        %v1752 = vsel %vm1748, 1.9567355e+08, %v1736
        %v1753 = vsel %vm1745, 0.2975, %v1737
        %v1754 = vsel %vm1746, 0.2975, %v1738
        %v1755 = vsel %vm1747, 0.2975, %v1739
        %v1756 = vsel %vm1748, 0.2975, %v1740
        %v1757 = vsel %vm1745, 20945786.0, %v1741
        %v1758 = vsel %vm1746, 20945786.0, %v1742
        %v1759 = vsel %vm1747, 20945786.0, %v1743
        %v1760 = vsel %vm1748, 20945786.0, %v1744
        %vm1761 = vcmp.eq.s32.totalorder %v1517, 16
        %vm1762 = vcmp.eq.s32.totalorder %v1518, 16
        %vm1763 = vcmp.eq.s32.totalorder %v1519, 16
        %vm1764 = vcmp.eq.s32.totalorder %v1520, 16
        %v1765 = vsel %vm1761, 1.5927611e+08, %v1749
        %v1766 = vsel %vm1762, 1.5927611e+08, %v1750
        %v1767 = vsel %vm1763, 1.5927611e+08, %v1751
        %v1768 = vsel %vm1764, 1.5927611e+08, %v1752
        %v1769 = vsel %vm1761, 0.315, %v1753
        %v1770 = vsel %vm1762, 0.315, %v1754
        %v1771 = vsel %vm1763, 0.315, %v1755
        %v1772 = vsel %vm1764, 0.315, %v1756
        %v1773 = vsel %vm1761, 24370070.0, %v1757
        %v1774 = vsel %vm1762, 24370070.0, %v1758
        %v1775 = vsel %vm1763, 24370070.0, %v1759
        %v1776 = vsel %vm1764, 24370070.0, %v1760
        %vm1777 = vcmp.eq.s32.totalorder %v1517, 17
        %vm1778 = vcmp.eq.s32.totalorder %v1518, 17
        %vm1779 = vcmp.eq.s32.totalorder %v1519, 17
        %vm1780 = vcmp.eq.s32.totalorder %v1520, 17
        %v1781 = vsel %vm1777, 1.18705024e+08, %v1765
        %v1782 = vsel %vm1778, 1.18705024e+08, %v1766
        %v1783 = vsel %vm1779, 1.18705024e+08, %v1767
        %v1784 = vsel %vm1780, 1.18705024e+08, %v1768
        %v1785 = vsel %vm1777, 0.3325, %v1769
        %v1786 = vsel %vm1778, 0.3325, %v1770
        %v1787 = vsel %vm1779, 0.3325, %v1771
        %v1788 = vsel %vm1780, 0.3325, %v1772
        %v1789 = vsel %vm1777, 27157404.0, %v1773
        %v1790 = vsel %vm1778, 27157404.0, %v1774
        %v1791 = vsel %vm1779, 27157404.0, %v1775
        %v1792 = vsel %vm1780, 27157404.0, %v1776
        %v1793 = vsub.f32 %v1489, %v1785
        %v1794 = vsub.f32 %v1490, %v1786
        %v1795 = vsub.f32 %v1491, %v1787
        %v1796 = vsub.f32 %v1492, %v1788
        %v1797 = vmul.f32 %v1781, %v1793
        %v1798 = vmul.f32 %v1782, %v1794
        %v1799 = vmul.f32 %v1783, %v1795
        %v1800 = vmul.f32 %v1784, %v1796
        %v1801 = vadd.f32 %v1797, %v1789
        %v1802 = vadd.f32 %v1798, %v1790
        %v1803 = vadd.f32 %v1799, %v1791
        %v1804 = vadd.f32 %v1800, %v1792
        %v1805 = vrcp.pop %v1801
        %v1806 = vmul.f32 %v1801, %v1805
        %v1807 = vsub.f32 1.0, %v1806
        %v1808 = vmul.f32 %v1805, %v1807
        %v1809 = vadd.f32 %v1805, %v1808
        %vm1810 = vweird.f32 %v1801
        %vm1811 = vweird.f32 %v1805
        %vm1812 = vmor %vm1810, %vm1811
        %v1813 = vsel %vm1812, %v1805, %v1809
        %v1814 = vand.u32 2147483647, %v1801
        %vm1815 = vcmp.eq.f32.partialorder %v1814, 8.507059e+37
        %v1816 = vand.u32 %v1801, 2147483648
        %v1817 = vor.u32 1.1754944e-38, %v1816
        %v1818 = vsel %vm1815, %v1817, %v1813
        %v1819 = vmul.f32 1.0, %v1818
        %v1820 = vrcp.pop %v1802
        %v1821 = vmul.f32 %v1802, %v1820
        %v1822 = vsub.f32 1.0, %v1821
        %v1823 = vmul.f32 %v1820, %v1822
        %v1824 = vadd.f32 %v1820, %v1823
        %vm1825 = vweird.f32 %v1802
        %vm1826 = vweird.f32 %v1820
        %vm1827 = vmor %vm1825, %vm1826
        %v1828 = vsel %vm1827, %v1820, %v1824
        %v1829 = vand.u32 2147483647, %v1802
        %vm1830 = vcmp.eq.f32.partialorder %v1829, 8.507059e+37
        %v1831 = vand.u32 %v1802, 2147483648
        %v1832 = vor.u32 1.1754944e-38, %v1831
        %v1833 = vsel %vm1830, %v1832, %v1828
        %v1834 = vmul.f32 1.0, %v1833
        %v1835 = vrcp.pop %v1803
        %v1836 = vmul.f32 %v1803, %v1835
        %v1837 = vsub.f32 1.0, %v1836
        %v1838 = vmul.f32 %v1835, %v1837
        %v1839 = vadd.f32 %v1835, %v1838
        %vm1840 = vweird.f32 %v1803
        %vm1841 = vweird.f32 %v1835
        %vm1842 = vmor %vm1840, %vm1841
        %v1843 = vsel %vm1842, %v1835, %v1839
        %v1844 = vand.u32 2147483647, %v1803
        %vm1845 = vcmp.eq.f32.partialorder %v1844, 8.507059e+37
        %v1846 = vand.u32 %v1803, 2147483648
        %v1847 = vor.u32 1.1754944e-38, %v1846
        %v1848 = vsel %vm1845, %v1847, %v1843
        %v1849 = vmul.f32 1.0, %v1848
        %v1850 = vrcp.pop %v1804
        %v1851 = vmul.f32 %v1804, %v1850
        %v1852 = vsub.f32 1.0, %v1851
        %v1853 = vmul.f32 %v1850, %v1852
        %v1854 = vadd.f32 %v1850, %v1853
        %vm1855 = vweird.f32 %v1804
        %vm1856 = vweird.f32 %v1850
        %vm1857 = vmor %vm1855, %vm1856
        %v1858 = vsel %vm1857, %v1850, %v1854
        %v1859 = vand.u32 2147483647, %v1804
        %vm1860 = vcmp.eq.f32.partialorder %v1859, 8.507059e+37
        %v1861 = vand.u32 %v1804, 2147483648
        %v1862 = vor.u32 1.1754944e-38, %v1861
        %v1863 = vsel %vm1860, %v1862, %v1858
        %v1864 = vmul.f32 1.0, %v1863
        %v1865 = vsub.f32 %v1801, 2285464.5
        %v1866 = vsub.f32 %v1802, 2285464.5
        %v1867 = vsub.f32 %v1803, 2285464.5
        %v1868 = vsub.f32 %v1804, 2285464.5
        %v1869 = vmul.f32 %v1865, 2.0
        %v1870 = vmul.f32 %v1866, 2.0
        %v1871 = vmul.f32 %v1867, 2.0
        %v1872 = vmul.f32 %v1868, 2.0
        %v1873 = vmul.f32 %v1869, 3.1415927
        %v1874 = vmul.f32 %v1870, 3.1415927
        %v1875 = vmul.f32 %v1871, 3.1415927
        %v1876 = vmul.f32 %v1872, 3.1415927
        %v1877 = vadd.f32 %v1819, 4.375478e-07
        %v1878 = vadd.f32 %v1834, 4.375478e-07
        %v1879 = vadd.f32 %v1849, 4.375478e-07
        %v1880 = vadd.f32 %v1864, 4.375478e-07
        %v1881 = vmul.f32 %v1873, %v1877
        %v1882 = vmul.f32 %v1874, %v1878
        %v1883 = vmul.f32 %v1875, %v1879
        %v1884 = vmul.f32 %v1876, %v1880
        %vm1885 = vcmp.ge.f32.partialorder %v1881, 3.1415927
        %vm1886 = vcmp.ge.f32.partialorder %v1882, 3.1415927
        %vm1887 = vcmp.ge.f32.partialorder %v1883, 3.1415927
        %vm1888 = vcmp.ge.f32.partialorder %v1884, 3.1415927
        %v1889 = vsel %vm1885, 1.0, 0.0
        %v1890 = vsel %vm1886, 1.0, 0.0
        %v1891 = vsel %vm1887, 1.0, 0.0
        %v1892 = vsel %vm1888, 1.0, 0.0
        %s1893 = sld [smem:[#allocation2 + $0x3]]
        %v1894 = vstv %s1893
        %v1895 = vmul.f32 %v1894, %v617
        %v1896 = vmul.f32 %v1894, %v618
        %v1897 = vmul.f32 %v1894, %v619
        %v1898 = vmul.f32 %v1894, %v620
        %s1899 = sld [smem:[#allocation2 + $0x4]]
        %v1900 = vstv %s1899
        %v1901 = vmul.f32 %v1900, %v1034
        %v1902 = vmul.f32 %v1900, %v1035
        %v1903 = vmul.f32 %v1900, %v1036
        %v1904 = vmul.f32 %v1900, %v1037
        %v1905 = vadd.f32 %v1895, %v1901
        %v1906 = vadd.f32 %v1896, %v1902
        %v1907 = vadd.f32 %v1897, %v1903
        %v1908 = vadd.f32 %v1898, %v1904
        %s1909 = sld [smem:[#allocation2 + $0x5]]
        %v1910 = vstv %s1909
        %v1911 = vmul.f32 %v1910, %v1451
        %v1912 = vmul.f32 %v1910, %v1452
        %v1913 = vmul.f32 %v1910, %v1453
        %v1914 = vmul.f32 %v1910, %v1454
        %v1915 = vadd.f32 %v1905, %v1911
        %v1916 = vadd.f32 %v1906, %v1912
        %v1917 = vadd.f32 %v1907, %v1913
        %v1918 = vadd.f32 %v1908, %v1914
        %v1919 = vadd.f32 %v1915, 0.15
        %v1920 = vadd.f32 %v1916, 0.15
        %v1921 = vadd.f32 %v1917, 0.15
        %v1922 = vadd.f32 %v1918, 0.15
        %v1923 = vsub.f32 %v1919, 0.015
        %v1924 = vsub.f32 %v1920, 0.015
        %v1925 = vsub.f32 %v1921, 0.015
        %v1926 = vsub.f32 %v1922, 0.015
        %v1927 = vmax.f32 %v1923, 0.0
        %v1928 = vmax.f32 %v1924, 0.0
        %v1929 = vmax.f32 %v1925, 0.0
        %v1930 = vmax.f32 %v1926, 0.0
        %v1931 = vsub.f32 %v1927, 0.0525
        %v1932 = vsub.f32 %v1928, 0.0525
        %v1933 = vsub.f32 %v1929, 0.0525
        %v1934 = vsub.f32 %v1930, 0.0525
        %v1935 = vmul.f32 %v1931, 57.142857
        %v1936 = vmul.f32 %v1932, 57.142857
        %v1937 = vmul.f32 %v1933, 57.142857
        %v1938 = vmul.f32 %v1934, 57.142857
        %v1939 = vsub.f32 %v1935, 0.5
        %v1940 = vsub.f32 %v1936, 0.5
        %v1941 = vsub.f32 %v1937, 0.5
        %v1942 = vsub.f32 %v1938, 0.5
        %v1943 = vceil.f32 %v1939
        %v1944 = vceil.f32 %v1940
        %v1945 = vceil.f32 %v1941
        %v1946 = vceil.f32 %v1942
        %v1947 = vmax.f32 %v1943, 0.0
        %v1948 = vmax.f32 %v1944, 0.0
        %v1949 = vmax.f32 %v1945, 0.0
        %v1950 = vmax.f32 %v1946, 0.0
        %v1951 = vmin.f32 %v1947, 17.0
        %v1952 = vmin.f32 %v1948, 17.0
        %v1953 = vmin.f32 %v1949, 17.0
        %v1954 = vmin.f32 %v1950, 17.0
        %v1955 = vcvt.f32.s32.to.zero.pseudo %v1951
        %v1956 = vcvt.f32.s32.to.zero.pseudo %v1952
        %v1957 = vcvt.f32.s32.to.zero.pseudo %v1953
        %v1958 = vcvt.f32.s32.to.zero.pseudo %v1954
        %vm1959 = vcmp.eq.s32.totalorder %v1955, 1
        %vm1960 = vcmp.eq.s32.totalorder %v1956, 1
        %vm1961 = vcmp.eq.s32.totalorder %v1957, 1
        %vm1962 = vcmp.eq.s32.totalorder %v1958, 1
        %v1963 = vsel %vm1959, 6699988.5, 96101976.0
        %v1964 = vsel %vm1960, 6699988.5, 96101976.0
        %v1965 = vsel %vm1961, 6699988.5, 96101976.0
        %v1966 = vsel %vm1962, 6699988.5, 96101976.0
        %v1967 = vsel %vm1959, 0.0525, 0.35
        %v1968 = vsel %vm1960, 0.0525, 0.35
        %v1969 = vsel %vm1961, 0.0525, 0.35
        %v1970 = vsel %vm1962, 0.0525, 0.35
        %v1971 = vsel %vm1959, 644404.06, 29234740.0
        %v1972 = vsel %vm1960, 644404.06, 29234740.0
        %v1973 = vsel %vm1961, 644404.06, 29234740.0
        %v1974 = vsel %vm1962, 644404.06, 29234740.0
        %vm1975 = vcmp.eq.s32.totalorder %v1955, 2
        %vm1976 = vcmp.eq.s32.totalorder %v1956, 2
        %vm1977 = vcmp.eq.s32.totalorder %v1957, 2
        %vm1978 = vcmp.eq.s32.totalorder %v1958, 2
        %v1979 = vsel %vm1975, 10179165.0, %v1963
        %v1980 = vsel %vm1976, 10179165.0, %v1964
        %v1981 = vsel %vm1977, 10179165.0, %v1965
        %v1982 = vsel %vm1978, 10179165.0, %v1966
        %v1983 = vsel %vm1975, 0.07, %v1967
        %v1984 = vsel %vm1976, 0.07, %v1968
        %v1985 = vsel %vm1977, 0.07, %v1969
        %v1986 = vsel %vm1978, 0.07, %v1970
        %v1987 = vsel %vm1975, 761653.9, %v1971
        %v1988 = vsel %vm1976, 761653.9, %v1972
        %v1989 = vsel %vm1977, 761653.9, %v1973
        %v1990 = vsel %vm1978, 761653.9, %v1974
        %vm1991 = vcmp.eq.s32.totalorder %v1955, 3
        %vm1992 = vcmp.eq.s32.totalorder %v1956, 3
        %vm1993 = vcmp.eq.s32.totalorder %v1957, 3
        %vm1994 = vcmp.eq.s32.totalorder %v1958, 3
        %v1995 = vsel %vm1991, 13658537.0, %v1979
        %v1996 = vsel %vm1992, 13658537.0, %v1980
        %v1997 = vsel %vm1993, 13658537.0, %v1981
        %v1998 = vsel %vm1994, 13658537.0, %v1982
        %v1999 = vsel %vm1991, 0.0875, %v1983
        %v2000 = vsel %vm1992, 0.0875, %v1984
        %v2001 = vsel %vm1993, 0.0875, %v1985
        %v2002 = vsel %vm1994, 0.0875, %v1986
        %v2003 = vsel %vm1991, 939789.25, %v1987
        %v2004 = vsel %vm1992, 939789.25, %v1988
        %v2005 = vsel %vm1993, 939789.25, %v1989
        %v2006 = vsel %vm1994, 939789.25, %v1990
        %vm2007 = vcmp.eq.s32.totalorder %v1955, 4
        %vm2008 = vcmp.eq.s32.totalorder %v1956, 4
        %vm2009 = vcmp.eq.s32.totalorder %v1957, 4
        %vm2010 = vcmp.eq.s32.totalorder %v1958, 4
        %v2011 = vsel %vm2007, 18262702.0, %v1995
        %v2012 = vsel %vm2008, 18262702.0, %v1996
        %v2013 = vsel %vm2009, 18262702.0, %v1997
        %v2014 = vsel %vm2010, 18262702.0, %v1998
        %v2015 = vsel %vm2007, 0.105, %v1999
        %v2016 = vsel %vm2008, 0.105, %v2000
        %v2017 = vsel %vm2009, 0.105, %v2001
        %v2018 = vsel %vm2010, 0.105, %v2002
        %v2019 = vsel %vm2007, 1178813.6, %v2003
        %v2020 = vsel %vm2008, 1178813.6, %v2004
        %v2021 = vsel %vm2009, 1178813.6, %v2005
        %v2022 = vsel %vm2010, 1178813.6, %v2006
        %vm2023 = vcmp.eq.s32.totalorder %v1955, 5
        %vm2024 = vcmp.eq.s32.totalorder %v1956, 5
        %vm2025 = vcmp.eq.s32.totalorder %v1957, 5
        %vm2026 = vcmp.eq.s32.totalorder %v1958, 5
        %v2027 = vsel %vm2023, 25085482.0, %v2011
        %v2028 = vsel %vm2024, 25085482.0, %v2012
        %v2029 = vsel %vm2025, 25085482.0, %v2013
        %v2030 = vsel %vm2026, 25085482.0, %v2014
        %v2031 = vsel %vm2023, 0.1225, %v2015
        %v2032 = vsel %vm2024, 0.1225, %v2016
        %v2033 = vsel %vm2025, 0.1225, %v2017
        %v2034 = vsel %vm2026, 0.1225, %v2018
        %v2035 = vsel %vm2023, 1498411.0, %v2019
        %v2036 = vsel %vm2024, 1498411.0, %v2020
        %v2037 = vsel %vm2025, 1498411.0, %v2021
        %v2038 = vsel %vm2026, 1498411.0, %v2022
        %vm2039 = vcmp.eq.s32.totalorder %v1955, 6
        %vm2040 = vcmp.eq.s32.totalorder %v1956, 6
        %vm2041 = vcmp.eq.s32.totalorder %v1957, 6
        %vm2042 = vcmp.eq.s32.totalorder %v1958, 6
        %v2043 = vsel %vm2039, 34805740.0, %v2027
        %v2044 = vsel %vm2040, 34805740.0, %v2028
        %v2045 = vsel %vm2041, 34805740.0, %v2029
        %v2046 = vsel %vm2042, 34805740.0, %v2030
        %v2047 = vsel %vm2039, 0.14, %v2031
        %v2048 = vsel %vm2040, 0.14, %v2032
        %v2049 = vsel %vm2041, 0.14, %v2033
        %v2050 = vsel %vm2042, 0.14, %v2034
        %v2051 = vsel %vm2039, 1937406.9, %v2035
        %v2052 = vsel %vm2040, 1937406.9, %v2036
        %v2053 = vsel %vm2041, 1937406.9, %v2037
        %v2054 = vsel %vm2042, 1937406.9, %v2038
        %vm2055 = vcmp.eq.s32.totalorder %v1955, 7
        %vm2056 = vcmp.eq.s32.totalorder %v1956, 7
        %vm2057 = vcmp.eq.s32.totalorder %v1957, 7
        %vm2058 = vcmp.eq.s32.totalorder %v1958, 7
        %v2059 = vsel %vm2055, 47317032.0, %v2043
        %v2060 = vsel %vm2056, 47317032.0, %v2044
        %v2061 = vsel %vm2057, 47317032.0, %v2045
        %v2062 = vsel %vm2058, 47317032.0, %v2046
        %v2063 = vsel %vm2055, 0.1575, %v2047
        %v2064 = vsel %vm2056, 0.1575, %v2048
        %v2065 = vsel %vm2057, 0.1575, %v2049
        %v2066 = vsel %vm2058, 0.1575, %v2050
        %v2067 = vsel %vm2055, 2546507.3, %v2051
        %v2068 = vsel %vm2056, 2546507.3, %v2052
        %v2069 = vsel %vm2057, 2546507.3, %v2053
        %v2070 = vsel %vm2058, 2546507.3, %v2054
        %vm2071 = vcmp.eq.s32.totalorder %v1955, 8
        %vm2072 = vcmp.eq.s32.totalorder %v1956, 8
        %vm2073 = vcmp.eq.s32.totalorder %v1957, 8
        %vm2074 = vcmp.eq.s32.totalorder %v1958, 8
        %v2075 = vsel %vm2071, 63570476.0, %v2059
        %v2076 = vsel %vm2072, 63570476.0, %v2060
        %v2077 = vsel %vm2073, 63570476.0, %v2061
        %v2078 = vsel %vm2074, 63570476.0, %v2062
        %v2079 = vsel %vm2071, 0.175, %v2063
        %v2080 = vsel %vm2072, 0.175, %v2064
        %v2081 = vsel %vm2073, 0.175, %v2065
        %v2082 = vsel %vm2074, 0.175, %v2066
        %v2083 = vsel %vm2071, 3374555.3, %v2067
        %v2084 = vsel %vm2072, 3374555.3, %v2068
        %v2085 = vsel %vm2073, 3374555.3, %v2069
        %v2086 = vsel %vm2074, 3374555.3, %v2070
        %vm2087 = vcmp.eq.s32.totalorder %v1955, 9
        %vm2088 = vcmp.eq.s32.totalorder %v1956, 9
        %vm2089 = vcmp.eq.s32.totalorder %v1957, 9
        %vm2090 = vcmp.eq.s32.totalorder %v1958, 9
        %v2091 = vsel %vm2087, 84990664.0, %v2075
        %v2092 = vsel %vm2088, 84990664.0, %v2076
        %v2093 = vsel %vm2089, 84990664.0, %v2077
        %v2094 = vsel %vm2090, 84990664.0, %v2078
        %v2095 = vsel %vm2087, 0.1925, %v2079
        %v2096 = vsel %vm2088, 0.1925, %v2080
        %v2097 = vsel %vm2089, 0.1925, %v2081
        %v2098 = vsel %vm2090, 0.1925, %v2082
        %v2099 = vsel %vm2087, 4487038.5, %v2083
        %v2100 = vsel %vm2088, 4487038.5, %v2084
        %v2101 = vsel %vm2089, 4487038.5, %v2085
        %v2102 = vsel %vm2090, 4487038.5, %v2086
        %vm2103 = vcmp.eq.s32.totalorder %v1955, 10
        %vm2104 = vcmp.eq.s32.totalorder %v1956, 10
        %vm2105 = vcmp.eq.s32.totalorder %v1957, 10
        %vm2106 = vcmp.eq.s32.totalorder %v1958, 10
        %v2107 = vsel %vm2103, 1.1235563e+08, %v2091
        %v2108 = vsel %vm2104, 1.1235563e+08, %v2092
        %v2109 = vsel %vm2105, 1.1235563e+08, %v2093
        %v2110 = vsel %vm2106, 1.1235563e+08, %v2094
        %v2111 = vsel %vm2103, 0.21, %v2095
        %v2112 = vsel %vm2104, 0.21, %v2096
        %v2113 = vsel %vm2105, 0.21, %v2097
        %v2114 = vsel %vm2106, 0.21, %v2098
        %v2115 = vsel %vm2103, 5974375.0, %v2099
        %v2116 = vsel %vm2104, 5974375.0, %v2100
        %v2117 = vsel %vm2105, 5974375.0, %v2101
        %v2118 = vsel %vm2106, 5974375.0, %v2102
        %vm2119 = vcmp.eq.s32.totalorder %v1955, 11
        %vm2120 = vcmp.eq.s32.totalorder %v1956, 11
        %vm2121 = vcmp.eq.s32.totalorder %v1957, 11
        %vm2122 = vcmp.eq.s32.totalorder %v1958, 11
        %v2123 = vsel %vm2119, 1.4489813e+08, %v2107
        %v2124 = vsel %vm2120, 1.4489813e+08, %v2108
        %v2125 = vsel %vm2121, 1.4489813e+08, %v2109
        %v2126 = vsel %vm2122, 1.4489813e+08, %v2110
        %v2127 = vsel %vm2119, 0.2275, %v2111
        %v2128 = vsel %vm2120, 0.2275, %v2112
        %v2129 = vsel %vm2121, 0.2275, %v2113
        %v2130 = vsel %vm2122, 0.2275, %v2114
        %v2131 = vsel %vm2119, 7940600.0, %v2115
        %v2132 = vsel %vm2120, 7940600.0, %v2116
        %v2133 = vsel %vm2121, 7940600.0, %v2117
        %v2134 = vsel %vm2122, 7940600.0, %v2118
        %vm2135 = vcmp.eq.s32.totalorder %v1955, 12
        %vm2136 = vcmp.eq.s32.totalorder %v1956, 12
        %vm2137 = vcmp.eq.s32.totalorder %v1957, 12
        %vm2138 = vcmp.eq.s32.totalorder %v1958, 12
        %v2139 = vsel %vm2135, 1.7893462e+08, %v2123
        %v2140 = vsel %vm2136, 1.7893462e+08, %v2124
        %v2141 = vsel %vm2137, 1.7893462e+08, %v2125
        %v2142 = vsel %vm2138, 1.7893462e+08, %v2126
        %v2143 = vsel %vm2135, 0.245, %v2127
        %v2144 = vsel %vm2136, 0.245, %v2128
        %v2145 = vsel %vm2137, 0.245, %v2129
        %v2146 = vsel %vm2138, 0.245, %v2130
        %v2147 = vsel %vm2135, 10476317.0, %v2131
        %v2148 = vsel %vm2136, 10476317.0, %v2132
        %v2149 = vsel %vm2137, 10476317.0, %v2133
        %v2150 = vsel %vm2138, 10476317.0, %v2134
        %vm2151 = vcmp.eq.s32.totalorder %v1955, 13
        %vm2152 = vcmp.eq.s32.totalorder %v1956, 13
        %vm2153 = vcmp.eq.s32.totalorder %v1957, 13
        %vm2154 = vcmp.eq.s32.totalorder %v1958, 13
        %v2155 = vsel %vm2151, 2.0577562e+08, %v2139
        %v2156 = vsel %vm2152, 2.0577562e+08, %v2140
        %v2157 = vsel %vm2153, 2.0577562e+08, %v2141
        %v2158 = vsel %vm2154, 2.0577562e+08, %v2142
        %v2159 = vsel %vm2151, 0.2625, %v2143
        %v2160 = vsel %vm2152, 0.2625, %v2144
        %v2161 = vsel %vm2153, 0.2625, %v2145
        %v2162 = vsel %vm2154, 0.2625, %v2146
        %v2163 = vsel %vm2151, 13607670.0, %v2147
        %v2164 = vsel %vm2152, 13607670.0, %v2148
        %v2165 = vsel %vm2153, 13607670.0, %v2149
        %v2166 = vsel %vm2154, 13607670.0, %v2150
        %vm2167 = vcmp.eq.s32.totalorder %v1955, 14
        %vm2168 = vcmp.eq.s32.totalorder %v1956, 14
        %vm2169 = vcmp.eq.s32.totalorder %v1957, 14
        %vm2170 = vcmp.eq.s32.totalorder %v1958, 14
        %v2171 = vsel %vm2167, 2.1354498e+08, %v2155
        %v2172 = vsel %vm2168, 2.1354498e+08, %v2156
        %v2173 = vsel %vm2169, 2.1354498e+08, %v2157
        %v2174 = vsel %vm2170, 2.1354498e+08, %v2158
        %v2175 = vsel %vm2167, 0.28, %v2159
        %v2176 = vsel %vm2168, 0.28, %v2160
        %v2177 = vsel %vm2169, 0.28, %v2161
        %v2178 = vsel %vm2170, 0.28, %v2162
        %v2179 = vsel %vm2167, 17208746.0, %v2163
        %v2180 = vsel %vm2168, 17208746.0, %v2164
        %v2181 = vsel %vm2169, 17208746.0, %v2165
        %v2182 = vsel %vm2170, 17208746.0, %v2166
        %vm2183 = vcmp.eq.s32.totalorder %v1955, 15
        %vm2184 = vcmp.eq.s32.totalorder %v1956, 15
        %vm2185 = vcmp.eq.s32.totalorder %v1957, 15
        %vm2186 = vcmp.eq.s32.totalorder %v1958, 15
        %v2187 = vsel %vm2183, 1.9567355e+08, %v2171
        %v2188 = vsel %vm2184, 1.9567355e+08, %v2172
        %v2189 = vsel %vm2185, 1.9567355e+08, %v2173
        %v2190 = vsel %vm2186, 1.9567355e+08, %v2174
        %v2191 = vsel %vm2183, 0.2975, %v2175
        %v2192 = vsel %vm2184, 0.2975, %v2176
        %v2193 = vsel %vm2185, 0.2975, %v2177
        %v2194 = vsel %vm2186, 0.2975, %v2178
        %v2195 = vsel %vm2183, 20945786.0, %v2179
        %v2196 = vsel %vm2184, 20945786.0, %v2180
        %v2197 = vsel %vm2185, 20945786.0, %v2181
        %v2198 = vsel %vm2186, 20945786.0, %v2182
        %vm2199 = vcmp.eq.s32.totalorder %v1955, 16
        %vm2200 = vcmp.eq.s32.totalorder %v1956, 16
        %vm2201 = vcmp.eq.s32.totalorder %v1957, 16
        %vm2202 = vcmp.eq.s32.totalorder %v1958, 16
        %v2203 = vsel %vm2199, 1.5927611e+08, %v2187
        %v2204 = vsel %vm2200, 1.5927611e+08, %v2188
        %v2205 = vsel %vm2201, 1.5927611e+08, %v2189
        %v2206 = vsel %vm2202, 1.5927611e+08, %v2190
        %v2207 = vsel %vm2199, 0.315, %v2191
        %v2208 = vsel %vm2200, 0.315, %v2192
        %v2209 = vsel %vm2201, 0.315, %v2193
        %v2210 = vsel %vm2202, 0.315, %v2194
        %v2211 = vsel %vm2199, 24370070.0, %v2195
        %v2212 = vsel %vm2200, 24370070.0, %v2196
        %v2213 = vsel %vm2201, 24370070.0, %v2197
        %v2214 = vsel %vm2202, 24370070.0, %v2198
        %vm2215 = vcmp.eq.s32.totalorder %v1955, 17
        %vm2216 = vcmp.eq.s32.totalorder %v1956, 17
        %vm2217 = vcmp.eq.s32.totalorder %v1957, 17
        %vm2218 = vcmp.eq.s32.totalorder %v1958, 17
        %v2219 = vsel %vm2215, 1.18705024e+08, %v2203
        %v2220 = vsel %vm2216, 1.18705024e+08, %v2204
        %v2221 = vsel %vm2217, 1.18705024e+08, %v2205
        %v2222 = vsel %vm2218, 1.18705024e+08, %v2206
        %v2223 = vsel %vm2215, 0.3325, %v2207
        %v2224 = vsel %vm2216, 0.3325, %v2208
        %v2225 = vsel %vm2217, 0.3325, %v2209
        %v2226 = vsel %vm2218, 0.3325, %v2210
        %v2227 = vsel %vm2215, 27157404.0, %v2211
        %v2228 = vsel %vm2216, 27157404.0, %v2212
        %v2229 = vsel %vm2217, 27157404.0, %v2213
        %v2230 = vsel %vm2218, 27157404.0, %v2214
        %v2231 = vsub.f32 %v1927, %v2223
        %v2232 = vsub.f32 %v1928, %v2224
        %v2233 = vsub.f32 %v1929, %v2225
        %v2234 = vsub.f32 %v1930, %v2226
        %v2235 = vmul.f32 %v2219, %v2231
        %v2236 = vmul.f32 %v2220, %v2232
        %v2237 = vmul.f32 %v2221, %v2233
        %v2238 = vmul.f32 %v2222, %v2234
        %v2239 = vadd.f32 %v2235, %v2227
        %v2240 = vadd.f32 %v2236, %v2228
        %v2241 = vadd.f32 %v2237, %v2229
        %v2242 = vadd.f32 %v2238, %v2230
        %v2243 = vrcp.pop %v2239
        %v2244 = vmul.f32 %v2239, %v2243
        %v2245 = vsub.f32 1.0, %v2244
        %v2246 = vmul.f32 %v2243, %v2245
        %v2247 = vadd.f32 %v2243, %v2246
        %vm2248 = vweird.f32 %v2239
        %vm2249 = vweird.f32 %v2243
        %vm2250 = vmor %vm2248, %vm2249
        %v2251 = vsel %vm2250, %v2243, %v2247
        %v2252 = vand.u32 2147483647, %v2239
        %vm2253 = vcmp.eq.f32.partialorder %v2252, 8.507059e+37
        %v2254 = vand.u32 %v2239, 2147483648
        %v2255 = vor.u32 1.1754944e-38, %v2254
        %v2256 = vsel %vm2253, %v2255, %v2251
        %v2257 = vmul.f32 1.0, %v2256
        %v2258 = vrcp.pop %v2240
        %v2259 = vmul.f32 %v2240, %v2258
        %v2260 = vsub.f32 1.0, %v2259
        %v2261 = vmul.f32 %v2258, %v2260
        %v2262 = vadd.f32 %v2258, %v2261
        %vm2263 = vweird.f32 %v2240
        %vm2264 = vweird.f32 %v2258
        %vm2265 = vmor %vm2263, %vm2264
        %v2266 = vsel %vm2265, %v2258, %v2262
        %v2267 = vand.u32 2147483647, %v2240
        %vm2268 = vcmp.eq.f32.partialorder %v2267, 8.507059e+37
        %v2269 = vand.u32 %v2240, 2147483648
        %v2270 = vor.u32 1.1754944e-38, %v2269
        %v2271 = vsel %vm2268, %v2270, %v2266
        %v2272 = vmul.f32 1.0, %v2271
        %v2273 = vrcp.pop %v2241
        %v2274 = vmul.f32 %v2241, %v2273
        %v2275 = vsub.f32 1.0, %v2274
        %v2276 = vmul.f32 %v2273, %v2275
        %v2277 = vadd.f32 %v2273, %v2276
        %vm2278 = vweird.f32 %v2241
        %vm2279 = vweird.f32 %v2273
        %vm2280 = vmor %vm2278, %vm2279
        %v2281 = vsel %vm2280, %v2273, %v2277
        %v2282 = vand.u32 2147483647, %v2241
        %vm2283 = vcmp.eq.f32.partialorder %v2282, 8.507059e+37
        %v2284 = vand.u32 %v2241, 2147483648
        %v2285 = vor.u32 1.1754944e-38, %v2284
        %v2286 = vsel %vm2283, %v2285, %v2281
        %v2287 = vmul.f32 1.0, %v2286
        %v2288 = vrcp.pop %v2242
        %v2289 = vmul.f32 %v2242, %v2288
        %v2290 = vsub.f32 1.0, %v2289
        %v2291 = vmul.f32 %v2288, %v2290
        %v2292 = vadd.f32 %v2288, %v2291
        %vm2293 = vweird.f32 %v2242
        %vm2294 = vweird.f32 %v2288
        %vm2295 = vmor %vm2293, %vm2294
        %v2296 = vsel %vm2295, %v2288, %v2292
        %v2297 = vand.u32 2147483647, %v2242
        %vm2298 = vcmp.eq.f32.partialorder %v2297, 8.507059e+37
        %v2299 = vand.u32 %v2242, 2147483648
        %v2300 = vor.u32 1.1754944e-38, %v2299
        %v2301 = vsel %vm2298, %v2300, %v2296
        %v2302 = vmul.f32 1.0, %v2301
        %v2303 = vsub.f32 %v2239, 2285464.5
        %v2304 = vsub.f32 %v2240, 2285464.5
        %v2305 = vsub.f32 %v2241, 2285464.5
        %v2306 = vsub.f32 %v2242, 2285464.5
        %v2307 = vmul.f32 %v2303, 2.0
        %v2308 = vmul.f32 %v2304, 2.0
        %v2309 = vmul.f32 %v2305, 2.0
        %v2310 = vmul.f32 %v2306, 2.0
        %v2311 = vmul.f32 %v2307, 3.1415927
        %v2312 = vmul.f32 %v2308, 3.1415927
        %v2313 = vmul.f32 %v2309, 3.1415927
        %v2314 = vmul.f32 %v2310, 3.1415927
        %v2315 = vadd.f32 %v2257, 4.375478e-07
        %v2316 = vadd.f32 %v2272, 4.375478e-07
        %v2317 = vadd.f32 %v2287, 4.375478e-07
        %v2318 = vadd.f32 %v2302, 4.375478e-07
        %v2319 = vmul.f32 %v2311, %v2315
        %v2320 = vmul.f32 %v2312, %v2316
        %v2321 = vmul.f32 %v2313, %v2317
        %v2322 = vmul.f32 %v2314, %v2318
        %vm2323 = vcmp.ge.f32.partialorder %v2319, 3.1415927
        %vm2324 = vcmp.ge.f32.partialorder %v2320, 3.1415927
        %vm2325 = vcmp.ge.f32.partialorder %v2321, 3.1415927
        %vm2326 = vcmp.ge.f32.partialorder %v2322, 3.1415927
        %v2327 = vsel %vm2323, 1.0, 0.0
        %v2328 = vsel %vm2324, 1.0, 0.0
        %v2329 = vsel %vm2325, 1.0, 0.0
        %v2330 = vsel %vm2326, 1.0, 0.0
        %s2331 = sld [smem:[#allocation2 + $0x6]]
        %v2332 = vstv %s2331
        %v2333 = vmul.f32 %v2332, %v617
        %v2334 = vmul.f32 %v2332, %v618
        %v2335 = vmul.f32 %v2332, %v619
        %v2336 = vmul.f32 %v2332, %v620
        %s2337 = sld [smem:[#allocation2 + $0x7]]
        %v2338 = vstv %s2337
        %v2339 = vmul.f32 %v2338, %v1034
        %v2340 = vmul.f32 %v2338, %v1035
        %v2341 = vmul.f32 %v2338, %v1036
        %v2342 = vmul.f32 %v2338, %v1037
        %v2343 = vadd.f32 %v2333, %v2339
        %v2344 = vadd.f32 %v2334, %v2340
        %v2345 = vadd.f32 %v2335, %v2341
        %v2346 = vadd.f32 %v2336, %v2342
        %s2347 = sld [smem:[#allocation2 + $0x8]]
        %v2348 = vstv %s2347
        %v2349 = vmul.f32 %v2348, %v1451
        %v2350 = vmul.f32 %v2348, %v1452
        %v2351 = vmul.f32 %v2348, %v1453
        %v2352 = vmul.f32 %v2348, %v1454
        %v2353 = vadd.f32 %v2343, %v2349
        %v2354 = vadd.f32 %v2344, %v2350
        %v2355 = vadd.f32 %v2345, %v2351
        %v2356 = vadd.f32 %v2346, %v2352
        %v2357 = vadd.f32 %v2353, 0.15
        %v2358 = vadd.f32 %v2354, 0.15
        %v2359 = vadd.f32 %v2355, 0.15
        %v2360 = vadd.f32 %v2356, 0.15
        %v2361 = vsub.f32 %v2357, 0.015
        %v2362 = vsub.f32 %v2358, 0.015
        %v2363 = vsub.f32 %v2359, 0.015
        %v2364 = vsub.f32 %v2360, 0.015
        %v2365 = vmax.f32 %v2361, 0.0
        %v2366 = vmax.f32 %v2362, 0.0
        %v2367 = vmax.f32 %v2363, 0.0
        %v2368 = vmax.f32 %v2364, 0.0
        %v2369 = vsub.f32 %v2365, 0.0525
        %v2370 = vsub.f32 %v2366, 0.0525
        %v2371 = vsub.f32 %v2367, 0.0525
        %v2372 = vsub.f32 %v2368, 0.0525
        %v2373 = vmul.f32 %v2369, 57.142857
        %v2374 = vmul.f32 %v2370, 57.142857
        %v2375 = vmul.f32 %v2371, 57.142857
        %v2376 = vmul.f32 %v2372, 57.142857
        %v2377 = vsub.f32 %v2373, 0.5
        %v2378 = vsub.f32 %v2374, 0.5
        %v2379 = vsub.f32 %v2375, 0.5
        %v2380 = vsub.f32 %v2376, 0.5
        %v2381 = vceil.f32 %v2377
        %v2382 = vceil.f32 %v2378
        %v2383 = vceil.f32 %v2379
        %v2384 = vceil.f32 %v2380
        %v2385 = vmax.f32 %v2381, 0.0
        %v2386 = vmax.f32 %v2382, 0.0
        %v2387 = vmax.f32 %v2383, 0.0
        %v2388 = vmax.f32 %v2384, 0.0
        %v2389 = vmin.f32 %v2385, 17.0
        %v2390 = vmin.f32 %v2386, 17.0
        %v2391 = vmin.f32 %v2387, 17.0
        %v2392 = vmin.f32 %v2388, 17.0
        %v2393 = vcvt.f32.s32.to.zero.pseudo %v2389
        %v2394 = vcvt.f32.s32.to.zero.pseudo %v2390
        %v2395 = vcvt.f32.s32.to.zero.pseudo %v2391
        %v2396 = vcvt.f32.s32.to.zero.pseudo %v2392
        %vm2397 = vcmp.eq.s32.totalorder %v2393, 1
        %vm2398 = vcmp.eq.s32.totalorder %v2394, 1
        %vm2399 = vcmp.eq.s32.totalorder %v2395, 1
        %vm2400 = vcmp.eq.s32.totalorder %v2396, 1
        %v2401 = vsel %vm2397, 6699988.5, 96101976.0
        %v2402 = vsel %vm2398, 6699988.5, 96101976.0
        %v2403 = vsel %vm2399, 6699988.5, 96101976.0
        %v2404 = vsel %vm2400, 6699988.5, 96101976.0
        %v2405 = vsel %vm2397, 0.0525, 0.35
        %v2406 = vsel %vm2398, 0.0525, 0.35
        %v2407 = vsel %vm2399, 0.0525, 0.35
        %v2408 = vsel %vm2400, 0.0525, 0.35
        %v2409 = vsel %vm2397, 644404.06, 29234740.0
        %v2410 = vsel %vm2398, 644404.06, 29234740.0
        %v2411 = vsel %vm2399, 644404.06, 29234740.0
        %v2412 = vsel %vm2400, 644404.06, 29234740.0
        %vm2413 = vcmp.eq.s32.totalorder %v2393, 2
        %vm2414 = vcmp.eq.s32.totalorder %v2394, 2
        %vm2415 = vcmp.eq.s32.totalorder %v2395, 2
        %vm2416 = vcmp.eq.s32.totalorder %v2396, 2
        %v2417 = vsel %vm2413, 10179165.0, %v2401
        %v2418 = vsel %vm2414, 10179165.0, %v2402
        %v2419 = vsel %vm2415, 10179165.0, %v2403
        %v2420 = vsel %vm2416, 10179165.0, %v2404
        %v2421 = vsel %vm2413, 0.07, %v2405
        %v2422 = vsel %vm2414, 0.07, %v2406
        %v2423 = vsel %vm2415, 0.07, %v2407
        %v2424 = vsel %vm2416, 0.07, %v2408
        %v2425 = vsel %vm2413, 761653.9, %v2409
        %v2426 = vsel %vm2414, 761653.9, %v2410
        %v2427 = vsel %vm2415, 761653.9, %v2411
        %v2428 = vsel %vm2416, 761653.9, %v2412
        %vm2429 = vcmp.eq.s32.totalorder %v2393, 3
        %vm2430 = vcmp.eq.s32.totalorder %v2394, 3
        %vm2431 = vcmp.eq.s32.totalorder %v2395, 3
        %vm2432 = vcmp.eq.s32.totalorder %v2396, 3
        %v2433 = vsel %vm2429, 13658537.0, %v2417
        %v2434 = vsel %vm2430, 13658537.0, %v2418
        %v2435 = vsel %vm2431, 13658537.0, %v2419
        %v2436 = vsel %vm2432, 13658537.0, %v2420
        %v2437 = vsel %vm2429, 0.0875, %v2421
        %v2438 = vsel %vm2430, 0.0875, %v2422
        %v2439 = vsel %vm2431, 0.0875, %v2423
        %v2440 = vsel %vm2432, 0.0875, %v2424
        %v2441 = vsel %vm2429, 939789.25, %v2425
        %v2442 = vsel %vm2430, 939789.25, %v2426
        %v2443 = vsel %vm2431, 939789.25, %v2427
        %v2444 = vsel %vm2432, 939789.25, %v2428
        %vm2445 = vcmp.eq.s32.totalorder %v2393, 4
        %vm2446 = vcmp.eq.s32.totalorder %v2394, 4
        %vm2447 = vcmp.eq.s32.totalorder %v2395, 4
        %vm2448 = vcmp.eq.s32.totalorder %v2396, 4
        %v2449 = vsel %vm2445, 18262702.0, %v2433
        %v2450 = vsel %vm2446, 18262702.0, %v2434
        %v2451 = vsel %vm2447, 18262702.0, %v2435
        %v2452 = vsel %vm2448, 18262702.0, %v2436
        %v2453 = vsel %vm2445, 0.105, %v2437
        %v2454 = vsel %vm2446, 0.105, %v2438
        %v2455 = vsel %vm2447, 0.105, %v2439
        %v2456 = vsel %vm2448, 0.105, %v2440
        %v2457 = vsel %vm2445, 1178813.6, %v2441
        %v2458 = vsel %vm2446, 1178813.6, %v2442
        %v2459 = vsel %vm2447, 1178813.6, %v2443
        %v2460 = vsel %vm2448, 1178813.6, %v2444
        %vm2461 = vcmp.eq.s32.totalorder %v2393, 5
        %vm2462 = vcmp.eq.s32.totalorder %v2394, 5
        %vm2463 = vcmp.eq.s32.totalorder %v2395, 5
        %vm2464 = vcmp.eq.s32.totalorder %v2396, 5
        %v2465 = vsel %vm2461, 25085482.0, %v2449
        %v2466 = vsel %vm2462, 25085482.0, %v2450
        %v2467 = vsel %vm2463, 25085482.0, %v2451
        %v2468 = vsel %vm2464, 25085482.0, %v2452
        %v2469 = vsel %vm2461, 0.1225, %v2453
        %v2470 = vsel %vm2462, 0.1225, %v2454
        %v2471 = vsel %vm2463, 0.1225, %v2455
        %v2472 = vsel %vm2464, 0.1225, %v2456
        %v2473 = vsel %vm2461, 1498411.0, %v2457
        %v2474 = vsel %vm2462, 1498411.0, %v2458
        %v2475 = vsel %vm2463, 1498411.0, %v2459
        %v2476 = vsel %vm2464, 1498411.0, %v2460
        %vm2477 = vcmp.eq.s32.totalorder %v2393, 6
        %vm2478 = vcmp.eq.s32.totalorder %v2394, 6
        %vm2479 = vcmp.eq.s32.totalorder %v2395, 6
        %vm2480 = vcmp.eq.s32.totalorder %v2396, 6
        %v2481 = vsel %vm2477, 34805740.0, %v2465
        %v2482 = vsel %vm2478, 34805740.0, %v2466
        %v2483 = vsel %vm2479, 34805740.0, %v2467
        %v2484 = vsel %vm2480, 34805740.0, %v2468
        %v2485 = vsel %vm2477, 0.14, %v2469
        %v2486 = vsel %vm2478, 0.14, %v2470
        %v2487 = vsel %vm2479, 0.14, %v2471
        %v2488 = vsel %vm2480, 0.14, %v2472
        %v2489 = vsel %vm2477, 1937406.9, %v2473
        %v2490 = vsel %vm2478, 1937406.9, %v2474
        %v2491 = vsel %vm2479, 1937406.9, %v2475
        %v2492 = vsel %vm2480, 1937406.9, %v2476
        %vm2493 = vcmp.eq.s32.totalorder %v2393, 7
        %vm2494 = vcmp.eq.s32.totalorder %v2394, 7
        %vm2495 = vcmp.eq.s32.totalorder %v2395, 7
        %vm2496 = vcmp.eq.s32.totalorder %v2396, 7
        %v2497 = vsel %vm2493, 47317032.0, %v2481
        %v2498 = vsel %vm2494, 47317032.0, %v2482
        %v2499 = vsel %vm2495, 47317032.0, %v2483
        %v2500 = vsel %vm2496, 47317032.0, %v2484
        %v2501 = vsel %vm2493, 0.1575, %v2485
        %v2502 = vsel %vm2494, 0.1575, %v2486
        %v2503 = vsel %vm2495, 0.1575, %v2487
        %v2504 = vsel %vm2496, 0.1575, %v2488
        %v2505 = vsel %vm2493, 2546507.3, %v2489
        %v2506 = vsel %vm2494, 2546507.3, %v2490
        %v2507 = vsel %vm2495, 2546507.3, %v2491
        %v2508 = vsel %vm2496, 2546507.3, %v2492
        %vm2509 = vcmp.eq.s32.totalorder %v2393, 8
        %vm2510 = vcmp.eq.s32.totalorder %v2394, 8
        %vm2511 = vcmp.eq.s32.totalorder %v2395, 8
        %vm2512 = vcmp.eq.s32.totalorder %v2396, 8
        %v2513 = vsel %vm2509, 63570476.0, %v2497
        %v2514 = vsel %vm2510, 63570476.0, %v2498
        %v2515 = vsel %vm2511, 63570476.0, %v2499
        %v2516 = vsel %vm2512, 63570476.0, %v2500
        %v2517 = vsel %vm2509, 0.175, %v2501
        %v2518 = vsel %vm2510, 0.175, %v2502
        %v2519 = vsel %vm2511, 0.175, %v2503
        %v2520 = vsel %vm2512, 0.175, %v2504
        %v2521 = vsel %vm2509, 3374555.3, %v2505
        %v2522 = vsel %vm2510, 3374555.3, %v2506
        %v2523 = vsel %vm2511, 3374555.3, %v2507
        %v2524 = vsel %vm2512, 3374555.3, %v2508
        %vm2525 = vcmp.eq.s32.totalorder %v2393, 9
        %vm2526 = vcmp.eq.s32.totalorder %v2394, 9
        %vm2527 = vcmp.eq.s32.totalorder %v2395, 9
        %vm2528 = vcmp.eq.s32.totalorder %v2396, 9
        %v2529 = vsel %vm2525, 84990664.0, %v2513
        %v2530 = vsel %vm2526, 84990664.0, %v2514
        %v2531 = vsel %vm2527, 84990664.0, %v2515
        %v2532 = vsel %vm2528, 84990664.0, %v2516
        %v2533 = vsel %vm2525, 0.1925, %v2517
        %v2534 = vsel %vm2526, 0.1925, %v2518
        %v2535 = vsel %vm2527, 0.1925, %v2519
        %v2536 = vsel %vm2528, 0.1925, %v2520
        %v2537 = vsel %vm2525, 4487038.5, %v2521
        %v2538 = vsel %vm2526, 4487038.5, %v2522
        %v2539 = vsel %vm2527, 4487038.5, %v2523
        %v2540 = vsel %vm2528, 4487038.5, %v2524
        %vm2541 = vcmp.eq.s32.totalorder %v2393, 10
        %vm2542 = vcmp.eq.s32.totalorder %v2394, 10
        %vm2543 = vcmp.eq.s32.totalorder %v2395, 10
        %vm2544 = vcmp.eq.s32.totalorder %v2396, 10
        %v2545 = vsel %vm2541, 1.1235563e+08, %v2529
        %v2546 = vsel %vm2542, 1.1235563e+08, %v2530
        %v2547 = vsel %vm2543, 1.1235563e+08, %v2531
        %v2548 = vsel %vm2544, 1.1235563e+08, %v2532
        %v2549 = vsel %vm2541, 0.21, %v2533
        %v2550 = vsel %vm2542, 0.21, %v2534
        %v2551 = vsel %vm2543, 0.21, %v2535
        %v2552 = vsel %vm2544, 0.21, %v2536
        %v2553 = vsel %vm2541, 5974375.0, %v2537
        %v2554 = vsel %vm2542, 5974375.0, %v2538
        %v2555 = vsel %vm2543, 5974375.0, %v2539
        %v2556 = vsel %vm2544, 5974375.0, %v2540
        %vm2557 = vcmp.eq.s32.totalorder %v2393, 11
        %vm2558 = vcmp.eq.s32.totalorder %v2394, 11
        %vm2559 = vcmp.eq.s32.totalorder %v2395, 11
        %vm2560 = vcmp.eq.s32.totalorder %v2396, 11
        %v2561 = vsel %vm2557, 1.4489813e+08, %v2545
        %v2562 = vsel %vm2558, 1.4489813e+08, %v2546
        %v2563 = vsel %vm2559, 1.4489813e+08, %v2547
        %v2564 = vsel %vm2560, 1.4489813e+08, %v2548
        %v2565 = vsel %vm2557, 0.2275, %v2549
        %v2566 = vsel %vm2558, 0.2275, %v2550
        %v2567 = vsel %vm2559, 0.2275, %v2551
        %v2568 = vsel %vm2560, 0.2275, %v2552
        %v2569 = vsel %vm2557, 7940600.0, %v2553
        %v2570 = vsel %vm2558, 7940600.0, %v2554
        %v2571 = vsel %vm2559, 7940600.0, %v2555
        %v2572 = vsel %vm2560, 7940600.0, %v2556
        %vm2573 = vcmp.eq.s32.totalorder %v2393, 12
        %vm2574 = vcmp.eq.s32.totalorder %v2394, 12
        %vm2575 = vcmp.eq.s32.totalorder %v2395, 12
        %vm2576 = vcmp.eq.s32.totalorder %v2396, 12
        %v2577 = vsel %vm2573, 1.7893462e+08, %v2561
        %v2578 = vsel %vm2574, 1.7893462e+08, %v2562
        %v2579 = vsel %vm2575, 1.7893462e+08, %v2563
        %v2580 = vsel %vm2576, 1.7893462e+08, %v2564
        %v2581 = vsel %vm2573, 0.245, %v2565
        %v2582 = vsel %vm2574, 0.245, %v2566
        %v2583 = vsel %vm2575, 0.245, %v2567
        %v2584 = vsel %vm2576, 0.245, %v2568
        %v2585 = vsel %vm2573, 10476317.0, %v2569
        %v2586 = vsel %vm2574, 10476317.0, %v2570
        %v2587 = vsel %vm2575, 10476317.0, %v2571
        %v2588 = vsel %vm2576, 10476317.0, %v2572
        %vm2589 = vcmp.eq.s32.totalorder %v2393, 13
        %vm2590 = vcmp.eq.s32.totalorder %v2394, 13
        %vm2591 = vcmp.eq.s32.totalorder %v2395, 13
        %vm2592 = vcmp.eq.s32.totalorder %v2396, 13
        %v2593 = vsel %vm2589, 2.0577562e+08, %v2577
        %v2594 = vsel %vm2590, 2.0577562e+08, %v2578
        %v2595 = vsel %vm2591, 2.0577562e+08, %v2579
        %v2596 = vsel %vm2592, 2.0577562e+08, %v2580
        %v2597 = vsel %vm2589, 0.2625, %v2581
        %v2598 = vsel %vm2590, 0.2625, %v2582
        %v2599 = vsel %vm2591, 0.2625, %v2583
        %v2600 = vsel %vm2592, 0.2625, %v2584
        %v2601 = vsel %vm2589, 13607670.0, %v2585
        %v2602 = vsel %vm2590, 13607670.0, %v2586
        %v2603 = vsel %vm2591, 13607670.0, %v2587
        %v2604 = vsel %vm2592, 13607670.0, %v2588
        %vm2605 = vcmp.eq.s32.totalorder %v2393, 14
        %vm2606 = vcmp.eq.s32.totalorder %v2394, 14
        %vm2607 = vcmp.eq.s32.totalorder %v2395, 14
        %vm2608 = vcmp.eq.s32.totalorder %v2396, 14
        %v2609 = vsel %vm2605, 2.1354498e+08, %v2593
        %v2610 = vsel %vm2606, 2.1354498e+08, %v2594
        %v2611 = vsel %vm2607, 2.1354498e+08, %v2595
        %v2612 = vsel %vm2608, 2.1354498e+08, %v2596
        %v2613 = vsel %vm2605, 0.28, %v2597
        %v2614 = vsel %vm2606, 0.28, %v2598
        %v2615 = vsel %vm2607, 0.28, %v2599
        %v2616 = vsel %vm2608, 0.28, %v2600
        %v2617 = vsel %vm2605, 17208746.0, %v2601
        %v2618 = vsel %vm2606, 17208746.0, %v2602
        %v2619 = vsel %vm2607, 17208746.0, %v2603
        %v2620 = vsel %vm2608, 17208746.0, %v2604
        %vm2621 = vcmp.eq.s32.totalorder %v2393, 15
        %vm2622 = vcmp.eq.s32.totalorder %v2394, 15
        %vm2623 = vcmp.eq.s32.totalorder %v2395, 15
        %vm2624 = vcmp.eq.s32.totalorder %v2396, 15
        %v2625 = vsel %vm2621, 1.9567355e+08, %v2609
        %v2626 = vsel %vm2622, 1.9567355e+08, %v2610
        %v2627 = vsel %vm2623, 1.9567355e+08, %v2611
        %v2628 = vsel %vm2624, 1.9567355e+08, %v2612
        %v2629 = vsel %vm2621, 0.2975, %v2613
        %v2630 = vsel %vm2622, 0.2975, %v2614
        %v2631 = vsel %vm2623, 0.2975, %v2615
        %v2632 = vsel %vm2624, 0.2975, %v2616
        %v2633 = vsel %vm2621, 20945786.0, %v2617
        %v2634 = vsel %vm2622, 20945786.0, %v2618
        %v2635 = vsel %vm2623, 20945786.0, %v2619
        %v2636 = vsel %vm2624, 20945786.0, %v2620
        %vm2637 = vcmp.eq.s32.totalorder %v2393, 16
        %vm2638 = vcmp.eq.s32.totalorder %v2394, 16
        %vm2639 = vcmp.eq.s32.totalorder %v2395, 16
        %vm2640 = vcmp.eq.s32.totalorder %v2396, 16
        %v2641 = vsel %vm2637, 1.5927611e+08, %v2625
        %v2642 = vsel %vm2638, 1.5927611e+08, %v2626
        %v2643 = vsel %vm2639, 1.5927611e+08, %v2627
        %v2644 = vsel %vm2640, 1.5927611e+08, %v2628
        %v2645 = vsel %vm2637, 0.315, %v2629
        %v2646 = vsel %vm2638, 0.315, %v2630
        %v2647 = vsel %vm2639, 0.315, %v2631
        %v2648 = vsel %vm2640, 0.315, %v2632
        %v2649 = vsel %vm2637, 24370070.0, %v2633
        %v2650 = vsel %vm2638, 24370070.0, %v2634
        %v2651 = vsel %vm2639, 24370070.0, %v2635
        %v2652 = vsel %vm2640, 24370070.0, %v2636
        %vm2653 = vcmp.eq.s32.totalorder %v2393, 17
        %vm2654 = vcmp.eq.s32.totalorder %v2394, 17
        %vm2655 = vcmp.eq.s32.totalorder %v2395, 17
        %vm2656 = vcmp.eq.s32.totalorder %v2396, 17
        %v2657 = vsel %vm2653, 1.18705024e+08, %v2641
        %v2658 = vsel %vm2654, 1.18705024e+08, %v2642
        %v2659 = vsel %vm2655, 1.18705024e+08, %v2643
        %v2660 = vsel %vm2656, 1.18705024e+08, %v2644
        %v2661 = vsel %vm2653, 0.3325, %v2645
        %v2662 = vsel %vm2654, 0.3325, %v2646
        %v2663 = vsel %vm2655, 0.3325, %v2647
        %v2664 = vsel %vm2656, 0.3325, %v2648
        %v2665 = vsel %vm2653, 27157404.0, %v2649
        %v2666 = vsel %vm2654, 27157404.0, %v2650
        %v2667 = vsel %vm2655, 27157404.0, %v2651
        %v2668 = vsel %vm2656, 27157404.0, %v2652
        %v2669 = vsub.f32 %v2365, %v2661
        %v2670 = vsub.f32 %v2366, %v2662
        %v2671 = vsub.f32 %v2367, %v2663
        %v2672 = vsub.f32 %v2368, %v2664
        %v2673 = vmul.f32 %v2657, %v2669
        %v2674 = vmul.f32 %v2658, %v2670
        %v2675 = vmul.f32 %v2659, %v2671
        %v2676 = vmul.f32 %v2660, %v2672
        %v2677 = vadd.f32 %v2673, %v2665
        %v2678 = vadd.f32 %v2674, %v2666
        %v2679 = vadd.f32 %v2675, %v2667
        %v2680 = vadd.f32 %v2676, %v2668
        %v2681 = vrcp.pop %v2677
        %v2682 = vmul.f32 %v2677, %v2681
        %v2683 = vsub.f32 1.0, %v2682
        %v2684 = vmul.f32 %v2681, %v2683
        %v2685 = vadd.f32 %v2681, %v2684
        %vm2686 = vweird.f32 %v2677
        %vm2687 = vweird.f32 %v2681
        %vm2688 = vmor %vm2686, %vm2687
        %v2689 = vsel %vm2688, %v2681, %v2685
        %v2690 = vand.u32 2147483647, %v2677
        %vm2691 = vcmp.eq.f32.partialorder %v2690, 8.507059e+37
        %v2692 = vand.u32 %v2677, 2147483648
        %v2693 = vor.u32 1.1754944e-38, %v2692
        %v2694 = vsel %vm2691, %v2693, %v2689
        %v2695 = vmul.f32 1.0, %v2694
        %v2696 = vrcp.pop %v2678
        %v2697 = vmul.f32 %v2678, %v2696
        %v2698 = vsub.f32 1.0, %v2697
        %v2699 = vmul.f32 %v2696, %v2698
        %v2700 = vadd.f32 %v2696, %v2699
        %vm2701 = vweird.f32 %v2678
        %vm2702 = vweird.f32 %v2696
        %vm2703 = vmor %vm2701, %vm2702
        %v2704 = vsel %vm2703, %v2696, %v2700
        %v2705 = vand.u32 2147483647, %v2678
        %vm2706 = vcmp.eq.f32.partialorder %v2705, 8.507059e+37
        %v2707 = vand.u32 %v2678, 2147483648
        %v2708 = vor.u32 1.1754944e-38, %v2707
        %v2709 = vsel %vm2706, %v2708, %v2704
        %v2710 = vmul.f32 1.0, %v2709
        %v2711 = vrcp.pop %v2679
        %v2712 = vmul.f32 %v2679, %v2711
        %v2713 = vsub.f32 1.0, %v2712
        %v2714 = vmul.f32 %v2711, %v2713
        %v2715 = vadd.f32 %v2711, %v2714
        %vm2716 = vweird.f32 %v2679
        %vm2717 = vweird.f32 %v2711
        %vm2718 = vmor %vm2716, %vm2717
        %v2719 = vsel %vm2718, %v2711, %v2715
        %v2720 = vand.u32 2147483647, %v2679
        %vm2721 = vcmp.eq.f32.partialorder %v2720, 8.507059e+37
        %v2722 = vand.u32 %v2679, 2147483648
        %v2723 = vor.u32 1.1754944e-38, %v2722
        %v2724 = vsel %vm2721, %v2723, %v2719
        %v2725 = vmul.f32 1.0, %v2724
        %v2726 = vrcp.pop %v2680
        %v2727 = vmul.f32 %v2680, %v2726
        %v2728 = vsub.f32 1.0, %v2727
        %v2729 = vmul.f32 %v2726, %v2728
        %v2730 = vadd.f32 %v2726, %v2729
        %vm2731 = vweird.f32 %v2680
        %vm2732 = vweird.f32 %v2726
        %vm2733 = vmor %vm2731, %vm2732
        %v2734 = vsel %vm2733, %v2726, %v2730
        %v2735 = vand.u32 2147483647, %v2680
        %vm2736 = vcmp.eq.f32.partialorder %v2735, 8.507059e+37
        %v2737 = vand.u32 %v2680, 2147483648
        %v2738 = vor.u32 1.1754944e-38, %v2737
        %v2739 = vsel %vm2736, %v2738, %v2734
        %v2740 = vmul.f32 1.0, %v2739
        %v2741 = vsub.f32 %v2677, 2285464.5
        %v2742 = vsub.f32 %v2678, 2285464.5
        %v2743 = vsub.f32 %v2679, 2285464.5
        %v2744 = vsub.f32 %v2680, 2285464.5
        %v2745 = vmul.f32 %v2741, 2.0
        %v2746 = vmul.f32 %v2742, 2.0
        %v2747 = vmul.f32 %v2743, 2.0
        %v2748 = vmul.f32 %v2744, 2.0
        %v2749 = vmul.f32 %v2745, 3.1415927
        %v2750 = vmul.f32 %v2746, 3.1415927
        %v2751 = vmul.f32 %v2747, 3.1415927
        %v2752 = vmul.f32 %v2748, 3.1415927
        %v2753 = vadd.f32 %v2695, 4.375478e-07
        %v2754 = vadd.f32 %v2710, 4.375478e-07
        %v2755 = vadd.f32 %v2725, 4.375478e-07
        %v2756 = vadd.f32 %v2740, 4.375478e-07
        %v2757 = vmul.f32 %v2749, %v2753
        %v2758 = vmul.f32 %v2750, %v2754
        %v2759 = vmul.f32 %v2751, %v2755
        %v2760 = vmul.f32 %v2752, %v2756
        %vm2761 = vcmp.ge.f32.partialorder %v2757, 3.1415927
        %vm2762 = vcmp.ge.f32.partialorder %v2758, 3.1415927
        %vm2763 = vcmp.ge.f32.partialorder %v2759, 3.1415927
        %vm2764 = vcmp.ge.f32.partialorder %v2760, 3.1415927
        %v2765 = vsel %vm2761, 1.0, 0.0
        %v2766 = vsel %vm2762, 1.0, 0.0
        %v2767 = vsel %vm2763, 1.0, 0.0
        %v2768 = vsel %vm2764, 1.0, 0.0
        %s2769 = sld [smem:[#allocation2 + $0x9]]
        %v2770 = vstv %s2769
        %v2771 = vmul.f32 %v2770, %v1889
        %v2772 = vmul.f32 %v2770, %v1890
        %v2773 = vmul.f32 %v2770, %v1891
        %v2774 = vmul.f32 %v2770, %v1892
        %s2775 = sld [smem:[#allocation2 + $0xa]]
        %v2776 = vstv %s2775
        %v2777 = vmul.f32 %v2776, %v2327
        %v2778 = vmul.f32 %v2776, %v2328
        %v2779 = vmul.f32 %v2776, %v2329
        %v2780 = vmul.f32 %v2776, %v2330
        %v2781 = vadd.f32 %v2771, %v2777
        %v2782 = vadd.f32 %v2772, %v2778
        %v2783 = vadd.f32 %v2773, %v2779
        %v2784 = vadd.f32 %v2774, %v2780
        %s2785 = sld [smem:[#allocation2 + $0xb]]
        %v2786 = vstv %s2785
        %v2787 = vmul.f32 %v2786, %v2765
        %v2788 = vmul.f32 %v2786, %v2766
        %v2789 = vmul.f32 %v2786, %v2767
        %v2790 = vmul.f32 %v2786, %v2768
        %v2791 = vadd.f32 %v2781, %v2787
        %v2792 = vadd.f32 %v2782, %v2788
        %v2793 = vadd.f32 %v2783, %v2789
        %v2794 = vadd.f32 %v2784, %v2790
        %v2795 = vadd.f32 %v2791, 0.15
        %v2796 = vadd.f32 %v2792, 0.15
        %v2797 = vadd.f32 %v2793, 0.15
        %v2798 = vadd.f32 %v2794, 0.15
        %v2799 = vsub.f32 %v2795, 0.015
        %v2800 = vsub.f32 %v2796, 0.015
        %v2801 = vsub.f32 %v2797, 0.015
        %v2802 = vsub.f32 %v2798, 0.015
        %v2803 = vmax.f32 %v2799, 0.0
        %v2804 = vmax.f32 %v2800, 0.0
        %v2805 = vmax.f32 %v2801, 0.0
        %v2806 = vmax.f32 %v2802, 0.0
        %v2807 = vsub.f32 %v2803, 0.0525
        %v2808 = vsub.f32 %v2804, 0.0525
        %v2809 = vsub.f32 %v2805, 0.0525
        %v2810 = vsub.f32 %v2806, 0.0525
        %v2811 = vmul.f32 %v2807, 57.142857
        %v2812 = vmul.f32 %v2808, 57.142857
        %v2813 = vmul.f32 %v2809, 57.142857
        %v2814 = vmul.f32 %v2810, 57.142857
        %v2815 = vsub.f32 %v2811, 0.5
        %v2816 = vsub.f32 %v2812, 0.5
        %v2817 = vsub.f32 %v2813, 0.5
        %v2818 = vsub.f32 %v2814, 0.5
        %v2819 = vceil.f32 %v2815
        %v2820 = vceil.f32 %v2816
        %v2821 = vceil.f32 %v2817
        %v2822 = vceil.f32 %v2818
        %v2823 = vmax.f32 %v2819, 0.0
        %v2824 = vmax.f32 %v2820, 0.0
        %v2825 = vmax.f32 %v2821, 0.0
        %v2826 = vmax.f32 %v2822, 0.0
        %v2827 = vmin.f32 %v2823, 17.0
        %v2828 = vmin.f32 %v2824, 17.0
        %v2829 = vmin.f32 %v2825, 17.0
        %v2830 = vmin.f32 %v2826, 17.0
        %v2831 = vcvt.f32.s32.to.zero.pseudo %v2827
        %v2832 = vcvt.f32.s32.to.zero.pseudo %v2828
        %v2833 = vcvt.f32.s32.to.zero.pseudo %v2829
        %v2834 = vcvt.f32.s32.to.zero.pseudo %v2830
        %vm2835 = vcmp.eq.s32.totalorder %v2831, 1
        %vm2836 = vcmp.eq.s32.totalorder %v2832, 1
        %vm2837 = vcmp.eq.s32.totalorder %v2833, 1
        %vm2838 = vcmp.eq.s32.totalorder %v2834, 1
        %v2839 = vsel %vm2835, 6699988.5, 96101976.0
        %v2840 = vsel %vm2836, 6699988.5, 96101976.0
        %v2841 = vsel %vm2837, 6699988.5, 96101976.0
        %v2842 = vsel %vm2838, 6699988.5, 96101976.0
        %v2843 = vsel %vm2835, 0.0525, 0.35
        %v2844 = vsel %vm2836, 0.0525, 0.35
        %v2845 = vsel %vm2837, 0.0525, 0.35
        %v2846 = vsel %vm2838, 0.0525, 0.35
        %v2847 = vsel %vm2835, 644404.06, 29234740.0
        %v2848 = vsel %vm2836, 644404.06, 29234740.0
        %v2849 = vsel %vm2837, 644404.06, 29234740.0
        %v2850 = vsel %vm2838, 644404.06, 29234740.0
        %vm2851 = vcmp.eq.s32.totalorder %v2831, 2
        %vm2852 = vcmp.eq.s32.totalorder %v2832, 2
        %vm2853 = vcmp.eq.s32.totalorder %v2833, 2
        %vm2854 = vcmp.eq.s32.totalorder %v2834, 2
        %v2855 = vsel %vm2851, 10179165.0, %v2839
        %v2856 = vsel %vm2852, 10179165.0, %v2840
        %v2857 = vsel %vm2853, 10179165.0, %v2841
        %v2858 = vsel %vm2854, 10179165.0, %v2842
        %v2859 = vsel %vm2851, 0.07, %v2843
        %v2860 = vsel %vm2852, 0.07, %v2844
        %v2861 = vsel %vm2853, 0.07, %v2845
        %v2862 = vsel %vm2854, 0.07, %v2846
        %v2863 = vsel %vm2851, 761653.9, %v2847
        %v2864 = vsel %vm2852, 761653.9, %v2848
        %v2865 = vsel %vm2853, 761653.9, %v2849
        %v2866 = vsel %vm2854, 761653.9, %v2850
        %vm2867 = vcmp.eq.s32.totalorder %v2831, 3
        %vm2868 = vcmp.eq.s32.totalorder %v2832, 3
        %vm2869 = vcmp.eq.s32.totalorder %v2833, 3
        %vm2870 = vcmp.eq.s32.totalorder %v2834, 3
        %v2871 = vsel %vm2867, 13658537.0, %v2855
        %v2872 = vsel %vm2868, 13658537.0, %v2856
        %v2873 = vsel %vm2869, 13658537.0, %v2857
        %v2874 = vsel %vm2870, 13658537.0, %v2858
        %v2875 = vsel %vm2867, 0.0875, %v2859
        %v2876 = vsel %vm2868, 0.0875, %v2860
        %v2877 = vsel %vm2869, 0.0875, %v2861
        %v2878 = vsel %vm2870, 0.0875, %v2862
        %v2879 = vsel %vm2867, 939789.25, %v2863
        %v2880 = vsel %vm2868, 939789.25, %v2864
        %v2881 = vsel %vm2869, 939789.25, %v2865
        %v2882 = vsel %vm2870, 939789.25, %v2866
        %vm2883 = vcmp.eq.s32.totalorder %v2831, 4
        %vm2884 = vcmp.eq.s32.totalorder %v2832, 4
        %vm2885 = vcmp.eq.s32.totalorder %v2833, 4
        %vm2886 = vcmp.eq.s32.totalorder %v2834, 4
        %v2887 = vsel %vm2883, 18262702.0, %v2871
        %v2888 = vsel %vm2884, 18262702.0, %v2872
        %v2889 = vsel %vm2885, 18262702.0, %v2873
        %v2890 = vsel %vm2886, 18262702.0, %v2874
        %v2891 = vsel %vm2883, 0.105, %v2875
        %v2892 = vsel %vm2884, 0.105, %v2876
        %v2893 = vsel %vm2885, 0.105, %v2877
        %v2894 = vsel %vm2886, 0.105, %v2878
        %v2895 = vsel %vm2883, 1178813.6, %v2879
        %v2896 = vsel %vm2884, 1178813.6, %v2880
        %v2897 = vsel %vm2885, 1178813.6, %v2881
        %v2898 = vsel %vm2886, 1178813.6, %v2882
        %vm2899 = vcmp.eq.s32.totalorder %v2831, 5
        %vm2900 = vcmp.eq.s32.totalorder %v2832, 5
        %vm2901 = vcmp.eq.s32.totalorder %v2833, 5
        %vm2902 = vcmp.eq.s32.totalorder %v2834, 5
        %v2903 = vsel %vm2899, 25085482.0, %v2887
        %v2904 = vsel %vm2900, 25085482.0, %v2888
        %v2905 = vsel %vm2901, 25085482.0, %v2889
        %v2906 = vsel %vm2902, 25085482.0, %v2890
        %v2907 = vsel %vm2899, 0.1225, %v2891
        %v2908 = vsel %vm2900, 0.1225, %v2892
        %v2909 = vsel %vm2901, 0.1225, %v2893
        %v2910 = vsel %vm2902, 0.1225, %v2894
        %v2911 = vsel %vm2899, 1498411.0, %v2895
        %v2912 = vsel %vm2900, 1498411.0, %v2896
        %v2913 = vsel %vm2901, 1498411.0, %v2897
        %v2914 = vsel %vm2902, 1498411.0, %v2898
        %vm2915 = vcmp.eq.s32.totalorder %v2831, 6
        %vm2916 = vcmp.eq.s32.totalorder %v2832, 6
        %vm2917 = vcmp.eq.s32.totalorder %v2833, 6
        %vm2918 = vcmp.eq.s32.totalorder %v2834, 6
        %v2919 = vsel %vm2915, 34805740.0, %v2903
        %v2920 = vsel %vm2916, 34805740.0, %v2904
        %v2921 = vsel %vm2917, 34805740.0, %v2905
        %v2922 = vsel %vm2918, 34805740.0, %v2906
        %v2923 = vsel %vm2915, 0.14, %v2907
        %v2924 = vsel %vm2916, 0.14, %v2908
        %v2925 = vsel %vm2917, 0.14, %v2909
        %v2926 = vsel %vm2918, 0.14, %v2910
        %v2927 = vsel %vm2915, 1937406.9, %v2911
        %v2928 = vsel %vm2916, 1937406.9, %v2912
        %v2929 = vsel %vm2917, 1937406.9, %v2913
        %v2930 = vsel %vm2918, 1937406.9, %v2914
        %vm2931 = vcmp.eq.s32.totalorder %v2831, 7
        %vm2932 = vcmp.eq.s32.totalorder %v2832, 7
        %vm2933 = vcmp.eq.s32.totalorder %v2833, 7
        %vm2934 = vcmp.eq.s32.totalorder %v2834, 7
        %v2935 = vsel %vm2931, 47317032.0, %v2919
        %v2936 = vsel %vm2932, 47317032.0, %v2920
        %v2937 = vsel %vm2933, 47317032.0, %v2921
        %v2938 = vsel %vm2934, 47317032.0, %v2922
        %v2939 = vsel %vm2931, 0.1575, %v2923
        %v2940 = vsel %vm2932, 0.1575, %v2924
        %v2941 = vsel %vm2933, 0.1575, %v2925
        %v2942 = vsel %vm2934, 0.1575, %v2926
        %v2943 = vsel %vm2931, 2546507.3, %v2927
        %v2944 = vsel %vm2932, 2546507.3, %v2928
        %v2945 = vsel %vm2933, 2546507.3, %v2929
        %v2946 = vsel %vm2934, 2546507.3, %v2930
        %vm2947 = vcmp.eq.s32.totalorder %v2831, 8
        %vm2948 = vcmp.eq.s32.totalorder %v2832, 8
        %vm2949 = vcmp.eq.s32.totalorder %v2833, 8
        %vm2950 = vcmp.eq.s32.totalorder %v2834, 8
        %v2951 = vsel %vm2947, 63570476.0, %v2935
        %v2952 = vsel %vm2948, 63570476.0, %v2936
        %v2953 = vsel %vm2949, 63570476.0, %v2937
        %v2954 = vsel %vm2950, 63570476.0, %v2938
        %v2955 = vsel %vm2947, 0.175, %v2939
        %v2956 = vsel %vm2948, 0.175, %v2940
        %v2957 = vsel %vm2949, 0.175, %v2941
        %v2958 = vsel %vm2950, 0.175, %v2942
        %v2959 = vsel %vm2947, 3374555.3, %v2943
        %v2960 = vsel %vm2948, 3374555.3, %v2944
        %v2961 = vsel %vm2949, 3374555.3, %v2945
        %v2962 = vsel %vm2950, 3374555.3, %v2946
        %vm2963 = vcmp.eq.s32.totalorder %v2831, 9
        %vm2964 = vcmp.eq.s32.totalorder %v2832, 9
        %vm2965 = vcmp.eq.s32.totalorder %v2833, 9
        %vm2966 = vcmp.eq.s32.totalorder %v2834, 9
        %v2967 = vsel %vm2963, 84990664.0, %v2951
        %v2968 = vsel %vm2964, 84990664.0, %v2952
        %v2969 = vsel %vm2965, 84990664.0, %v2953
        %v2970 = vsel %vm2966, 84990664.0, %v2954
        %v2971 = vsel %vm2963, 0.1925, %v2955
        %v2972 = vsel %vm2964, 0.1925, %v2956
        %v2973 = vsel %vm2965, 0.1925, %v2957
        %v2974 = vsel %vm2966, 0.1925, %v2958
        %v2975 = vsel %vm2963, 4487038.5, %v2959
        %v2976 = vsel %vm2964, 4487038.5, %v2960
        %v2977 = vsel %vm2965, 4487038.5, %v2961
        %v2978 = vsel %vm2966, 4487038.5, %v2962
        %vm2979 = vcmp.eq.s32.totalorder %v2831, 10
        %vm2980 = vcmp.eq.s32.totalorder %v2832, 10
        %vm2981 = vcmp.eq.s32.totalorder %v2833, 10
        %vm2982 = vcmp.eq.s32.totalorder %v2834, 10
        %v2983 = vsel %vm2979, 1.1235563e+08, %v2967
        %v2984 = vsel %vm2980, 1.1235563e+08, %v2968
        %v2985 = vsel %vm2981, 1.1235563e+08, %v2969
        %v2986 = vsel %vm2982, 1.1235563e+08, %v2970
        %v2987 = vsel %vm2979, 0.21, %v2971
        %v2988 = vsel %vm2980, 0.21, %v2972
        %v2989 = vsel %vm2981, 0.21, %v2973
        %v2990 = vsel %vm2982, 0.21, %v2974
        %v2991 = vsel %vm2979, 5974375.0, %v2975
        %v2992 = vsel %vm2980, 5974375.0, %v2976
        %v2993 = vsel %vm2981, 5974375.0, %v2977
        %v2994 = vsel %vm2982, 5974375.0, %v2978
        %vm2995 = vcmp.eq.s32.totalorder %v2831, 11
        %vm2996 = vcmp.eq.s32.totalorder %v2832, 11
        %vm2997 = vcmp.eq.s32.totalorder %v2833, 11
        %vm2998 = vcmp.eq.s32.totalorder %v2834, 11
        %v2999 = vsel %vm2995, 1.4489813e+08, %v2983
        %v3000 = vsel %vm2996, 1.4489813e+08, %v2984
        %v3001 = vsel %vm2997, 1.4489813e+08, %v2985
        %v3002 = vsel %vm2998, 1.4489813e+08, %v2986
        %v3003 = vsel %vm2995, 0.2275, %v2987
        %v3004 = vsel %vm2996, 0.2275, %v2988
        %v3005 = vsel %vm2997, 0.2275, %v2989
        %v3006 = vsel %vm2998, 0.2275, %v2990
        %v3007 = vsel %vm2995, 7940600.0, %v2991
        %v3008 = vsel %vm2996, 7940600.0, %v2992
        %v3009 = vsel %vm2997, 7940600.0, %v2993
        %v3010 = vsel %vm2998, 7940600.0, %v2994
        %vm3011 = vcmp.eq.s32.totalorder %v2831, 12
        %vm3012 = vcmp.eq.s32.totalorder %v2832, 12
        %vm3013 = vcmp.eq.s32.totalorder %v2833, 12
        %vm3014 = vcmp.eq.s32.totalorder %v2834, 12
        %v3015 = vsel %vm3011, 1.7893462e+08, %v2999
        %v3016 = vsel %vm3012, 1.7893462e+08, %v3000
        %v3017 = vsel %vm3013, 1.7893462e+08, %v3001
        %v3018 = vsel %vm3014, 1.7893462e+08, %v3002
        %v3019 = vsel %vm3011, 0.245, %v3003
        %v3020 = vsel %vm3012, 0.245, %v3004
        %v3021 = vsel %vm3013, 0.245, %v3005
        %v3022 = vsel %vm3014, 0.245, %v3006
        %v3023 = vsel %vm3011, 10476317.0, %v3007
        %v3024 = vsel %vm3012, 10476317.0, %v3008
        %v3025 = vsel %vm3013, 10476317.0, %v3009
        %v3026 = vsel %vm3014, 10476317.0, %v3010
        %vm3027 = vcmp.eq.s32.totalorder %v2831, 13
        %vm3028 = vcmp.eq.s32.totalorder %v2832, 13
        %vm3029 = vcmp.eq.s32.totalorder %v2833, 13
        %vm3030 = vcmp.eq.s32.totalorder %v2834, 13
        %v3031 = vsel %vm3027, 2.0577562e+08, %v3015
        %v3032 = vsel %vm3028, 2.0577562e+08, %v3016
        %v3033 = vsel %vm3029, 2.0577562e+08, %v3017
        %v3034 = vsel %vm3030, 2.0577562e+08, %v3018
        %v3035 = vsel %vm3027, 0.2625, %v3019
        %v3036 = vsel %vm3028, 0.2625, %v3020
        %v3037 = vsel %vm3029, 0.2625, %v3021
        %v3038 = vsel %vm3030, 0.2625, %v3022
        %v3039 = vsel %vm3027, 13607670.0, %v3023
        %v3040 = vsel %vm3028, 13607670.0, %v3024
        %v3041 = vsel %vm3029, 13607670.0, %v3025
        %v3042 = vsel %vm3030, 13607670.0, %v3026
        %vm3043 = vcmp.eq.s32.totalorder %v2831, 14
        %vm3044 = vcmp.eq.s32.totalorder %v2832, 14
        %vm3045 = vcmp.eq.s32.totalorder %v2833, 14
        %vm3046 = vcmp.eq.s32.totalorder %v2834, 14
        %v3047 = vsel %vm3043, 2.1354498e+08, %v3031
        %v3048 = vsel %vm3044, 2.1354498e+08, %v3032
        %v3049 = vsel %vm3045, 2.1354498e+08, %v3033
        %v3050 = vsel %vm3046, 2.1354498e+08, %v3034
        %v3051 = vsel %vm3043, 0.28, %v3035
        %v3052 = vsel %vm3044, 0.28, %v3036
        %v3053 = vsel %vm3045, 0.28, %v3037
        %v3054 = vsel %vm3046, 0.28, %v3038
        %v3055 = vsel %vm3043, 17208746.0, %v3039
        %v3056 = vsel %vm3044, 17208746.0, %v3040
        %v3057 = vsel %vm3045, 17208746.0, %v3041
        %v3058 = vsel %vm3046, 17208746.0, %v3042
        %vm3059 = vcmp.eq.s32.totalorder %v2831, 15
        %vm3060 = vcmp.eq.s32.totalorder %v2832, 15
        %vm3061 = vcmp.eq.s32.totalorder %v2833, 15
        %vm3062 = vcmp.eq.s32.totalorder %v2834, 15
        %v3063 = vsel %vm3059, 1.9567355e+08, %v3047
        %v3064 = vsel %vm3060, 1.9567355e+08, %v3048
        %v3065 = vsel %vm3061, 1.9567355e+08, %v3049
        %v3066 = vsel %vm3062, 1.9567355e+08, %v3050
        %v3067 = vsel %vm3059, 0.2975, %v3051
        %v3068 = vsel %vm3060, 0.2975, %v3052
        %v3069 = vsel %vm3061, 0.2975, %v3053
        %v3070 = vsel %vm3062, 0.2975, %v3054
        %v3071 = vsel %vm3059, 20945786.0, %v3055
        %v3072 = vsel %vm3060, 20945786.0, %v3056
        %v3073 = vsel %vm3061, 20945786.0, %v3057
        %v3074 = vsel %vm3062, 20945786.0, %v3058
        %vm3075 = vcmp.eq.s32.totalorder %v2831, 16
        %vm3076 = vcmp.eq.s32.totalorder %v2832, 16
        %vm3077 = vcmp.eq.s32.totalorder %v2833, 16
        %vm3078 = vcmp.eq.s32.totalorder %v2834, 16
        %v3079 = vsel %vm3075, 1.5927611e+08, %v3063
        %v3080 = vsel %vm3076, 1.5927611e+08, %v3064
        %v3081 = vsel %vm3077, 1.5927611e+08, %v3065
        %v3082 = vsel %vm3078, 1.5927611e+08, %v3066
        %v3083 = vsel %vm3075, 0.315, %v3067
        %v3084 = vsel %vm3076, 0.315, %v3068
        %v3085 = vsel %vm3077, 0.315, %v3069
        %v3086 = vsel %vm3078, 0.315, %v3070
        %v3087 = vsel %vm3075, 24370070.0, %v3071
        %v3088 = vsel %vm3076, 24370070.0, %v3072
        %v3089 = vsel %vm3077, 24370070.0, %v3073
        %v3090 = vsel %vm3078, 24370070.0, %v3074
        %vm3091 = vcmp.eq.s32.totalorder %v2831, 17
        %vm3092 = vcmp.eq.s32.totalorder %v2832, 17
        %vm3093 = vcmp.eq.s32.totalorder %v2833, 17
        %vm3094 = vcmp.eq.s32.totalorder %v2834, 17
        %v3095 = vsel %vm3091, 1.18705024e+08, %v3079
        %v3096 = vsel %vm3092, 1.18705024e+08, %v3080
        %v3097 = vsel %vm3093, 1.18705024e+08, %v3081
        %v3098 = vsel %vm3094, 1.18705024e+08, %v3082
        %v3099 = vsel %vm3091, 0.3325, %v3083
        %v3100 = vsel %vm3092, 0.3325, %v3084
        %v3101 = vsel %vm3093, 0.3325, %v3085
        %v3102 = vsel %vm3094, 0.3325, %v3086
        %v3103 = vsel %vm3091, 27157404.0, %v3087
        %v3104 = vsel %vm3092, 27157404.0, %v3088
        %v3105 = vsel %vm3093, 27157404.0, %v3089
        %v3106 = vsel %vm3094, 27157404.0, %v3090
        %v3107 = vsub.f32 %v2803, %v3099
        %v3108 = vsub.f32 %v2804, %v3100
        %v3109 = vsub.f32 %v2805, %v3101
        %v3110 = vsub.f32 %v2806, %v3102
        %v3111 = vmul.f32 %v3095, %v3107
        %v3112 = vmul.f32 %v3096, %v3108
        %v3113 = vmul.f32 %v3097, %v3109
        %v3114 = vmul.f32 %v3098, %v3110
        %v3115 = vadd.f32 %v3111, %v3103
        %v3116 = vadd.f32 %v3112, %v3104
        %v3117 = vadd.f32 %v3113, %v3105
        %v3118 = vadd.f32 %v3114, %v3106
        %v3119 = vrcp.pop %v3115
        %v3120 = vmul.f32 %v3115, %v3119
        %v3121 = vsub.f32 1.0, %v3120
        %v3122 = vmul.f32 %v3119, %v3121
        %v3123 = vadd.f32 %v3119, %v3122
        %vm3124 = vweird.f32 %v3115
        %vm3125 = vweird.f32 %v3119
        %vm3126 = vmor %vm3124, %vm3125
        %v3127 = vsel %vm3126, %v3119, %v3123
        %v3128 = vand.u32 2147483647, %v3115
        %vm3129 = vcmp.eq.f32.partialorder %v3128, 8.507059e+37
        %v3130 = vand.u32 %v3115, 2147483648
        %v3131 = vor.u32 1.1754944e-38, %v3130
        %v3132 = vsel %vm3129, %v3131, %v3127
        %v3133 = vmul.f32 1.0, %v3132
        %v3134 = vrcp.pop %v3116
        %v3135 = vmul.f32 %v3116, %v3134
        %v3136 = vsub.f32 1.0, %v3135
        %v3137 = vmul.f32 %v3134, %v3136
        %v3138 = vadd.f32 %v3134, %v3137
        %vm3139 = vweird.f32 %v3116
        %vm3140 = vweird.f32 %v3134
        %vm3141 = vmor %vm3139, %vm3140
        %v3142 = vsel %vm3141, %v3134, %v3138
        %v3143 = vand.u32 2147483647, %v3116
        %vm3144 = vcmp.eq.f32.partialorder %v3143, 8.507059e+37
        %v3145 = vand.u32 %v3116, 2147483648
        %v3146 = vor.u32 1.1754944e-38, %v3145
        %v3147 = vsel %vm3144, %v3146, %v3142
        %v3148 = vmul.f32 1.0, %v3147
        %v3149 = vrcp.pop %v3117
        %v3150 = vmul.f32 %v3117, %v3149
        %v3151 = vsub.f32 1.0, %v3150
        %v3152 = vmul.f32 %v3149, %v3151
        %v3153 = vadd.f32 %v3149, %v3152
        %vm3154 = vweird.f32 %v3117
        %vm3155 = vweird.f32 %v3149
        %vm3156 = vmor %vm3154, %vm3155
        %v3157 = vsel %vm3156, %v3149, %v3153
        %v3158 = vand.u32 2147483647, %v3117
        %vm3159 = vcmp.eq.f32.partialorder %v3158, 8.507059e+37
        %v3160 = vand.u32 %v3117, 2147483648
        %v3161 = vor.u32 1.1754944e-38, %v3160
        %v3162 = vsel %vm3159, %v3161, %v3157
        %v3163 = vmul.f32 1.0, %v3162
        %v3164 = vrcp.pop %v3118
        %v3165 = vmul.f32 %v3118, %v3164
        %v3166 = vsub.f32 1.0, %v3165
        %v3167 = vmul.f32 %v3164, %v3166
        %v3168 = vadd.f32 %v3164, %v3167
        %vm3169 = vweird.f32 %v3118
        %vm3170 = vweird.f32 %v3164
        %vm3171 = vmor %vm3169, %vm3170
        %v3172 = vsel %vm3171, %v3164, %v3168
        %v3173 = vand.u32 2147483647, %v3118
        %vm3174 = vcmp.eq.f32.partialorder %v3173, 8.507059e+37
        %v3175 = vand.u32 %v3118, 2147483648
        %v3176 = vor.u32 1.1754944e-38, %v3175
        %v3177 = vsel %vm3174, %v3176, %v3172
        %v3178 = vmul.f32 1.0, %v3177
        %v3179 = vsub.f32 %v3115, 2285464.5
        %v3180 = vsub.f32 %v3116, 2285464.5
        %v3181 = vsub.f32 %v3117, 2285464.5
        %v3182 = vsub.f32 %v3118, 2285464.5
        %v3183 = vmul.f32 %v3179, 2.0
        %v3184 = vmul.f32 %v3180, 2.0
        %v3185 = vmul.f32 %v3181, 2.0
        %v3186 = vmul.f32 %v3182, 2.0
        %v3187 = vmul.f32 %v3183, 3.1415927
        %v3188 = vmul.f32 %v3184, 3.1415927
        %v3189 = vmul.f32 %v3185, 3.1415927
        %v3190 = vmul.f32 %v3186, 3.1415927
        %v3191 = vadd.f32 %v3133, 4.375478e-07
        %v3192 = vadd.f32 %v3148, 4.375478e-07
        %v3193 = vadd.f32 %v3163, 4.375478e-07
        %v3194 = vadd.f32 %v3178, 4.375478e-07
        %v3195 = vmul.f32 %v3187, %v3191
        %v3196 = vmul.f32 %v3188, %v3192
        %v3197 = vmul.f32 %v3189, %v3193
        %v3198 = vmul.f32 %v3190, %v3194
        %vm3199 = vcmp.ge.f32.partialorder %v3195, 3.1415927
        %vm3200 = vcmp.ge.f32.partialorder %v3196, 3.1415927
        %vm3201 = vcmp.ge.f32.partialorder %v3197, 3.1415927
        %vm3202 = vcmp.ge.f32.partialorder %v3198, 3.1415927
        %v3203 = vsel %vm3199, 1.0, 0.0
        %v3204 = vsel %vm3200, 1.0, 0.0
        %v3205 = vsel %vm3201, 1.0, 0.0
        %v3206 = vsel %vm3202, 1.0, 0.0
        %s3207 = sld [smem:[#allocation2 + $0xc]]
        %v3208 = vstv %s3207
        %v3209 = vmul.f32 %v3208, %v1889
        %v3210 = vmul.f32 %v3208, %v1890
        %v3211 = vmul.f32 %v3208, %v1891
        %v3212 = vmul.f32 %v3208, %v1892
        %s3213 = sld [smem:[#allocation2 + $0xd]]
        %v3214 = vstv %s3213
        %v3215 = vmul.f32 %v3214, %v2327
        %v3216 = vmul.f32 %v3214, %v2328
        %v3217 = vmul.f32 %v3214, %v2329
        %v3218 = vmul.f32 %v3214, %v2330
        %v3219 = vadd.f32 %v3209, %v3215
        %v3220 = vadd.f32 %v3210, %v3216
        %v3221 = vadd.f32 %v3211, %v3217
        %v3222 = vadd.f32 %v3212, %v3218
        %s3223 = sld [smem:[#allocation2 + $0xe]]
        %v3224 = vstv %s3223
        %v3225 = vmul.f32 %v3224, %v2765
        %v3226 = vmul.f32 %v3224, %v2766
        %v3227 = vmul.f32 %v3224, %v2767
        %v3228 = vmul.f32 %v3224, %v2768
        %v3229 = vadd.f32 %v3219, %v3225
        %v3230 = vadd.f32 %v3220, %v3226
        %v3231 = vadd.f32 %v3221, %v3227
        %v3232 = vadd.f32 %v3222, %v3228
        %v3233 = vadd.f32 %v3229, 0.15
        %v3234 = vadd.f32 %v3230, 0.15
        %v3235 = vadd.f32 %v3231, 0.15
        %v3236 = vadd.f32 %v3232, 0.15
        %v3237 = vsub.f32 %v3233, 0.015
        %v3238 = vsub.f32 %v3234, 0.015
        %v3239 = vsub.f32 %v3235, 0.015
        %v3240 = vsub.f32 %v3236, 0.015
        %v3241 = vmax.f32 %v3237, 0.0
        %v3242 = vmax.f32 %v3238, 0.0
        %v3243 = vmax.f32 %v3239, 0.0
        %v3244 = vmax.f32 %v3240, 0.0
        %v3245 = vsub.f32 %v3241, 0.0525
        %v3246 = vsub.f32 %v3242, 0.0525
        %v3247 = vsub.f32 %v3243, 0.0525
        %v3248 = vsub.f32 %v3244, 0.0525
        %v3249 = vmul.f32 %v3245, 57.142857
        %v3250 = vmul.f32 %v3246, 57.142857
        %v3251 = vmul.f32 %v3247, 57.142857
        %v3252 = vmul.f32 %v3248, 57.142857
        %v3253 = vsub.f32 %v3249, 0.5
        %v3254 = vsub.f32 %v3250, 0.5
        %v3255 = vsub.f32 %v3251, 0.5
        %v3256 = vsub.f32 %v3252, 0.5
        %v3257 = vceil.f32 %v3253
        %v3258 = vceil.f32 %v3254
        %v3259 = vceil.f32 %v3255
        %v3260 = vceil.f32 %v3256
        %v3261 = vmax.f32 %v3257, 0.0
        %v3262 = vmax.f32 %v3258, 0.0
        %v3263 = vmax.f32 %v3259, 0.0
        %v3264 = vmax.f32 %v3260, 0.0
        %v3265 = vmin.f32 %v3261, 17.0
        %v3266 = vmin.f32 %v3262, 17.0
        %v3267 = vmin.f32 %v3263, 17.0
        %v3268 = vmin.f32 %v3264, 17.0
        %v3269 = vcvt.f32.s32.to.zero.pseudo %v3265
        %v3270 = vcvt.f32.s32.to.zero.pseudo %v3266
        %v3271 = vcvt.f32.s32.to.zero.pseudo %v3267
        %v3272 = vcvt.f32.s32.to.zero.pseudo %v3268
        %vm3273 = vcmp.eq.s32.totalorder %v3269, 1
        %vm3274 = vcmp.eq.s32.totalorder %v3270, 1
        %vm3275 = vcmp.eq.s32.totalorder %v3271, 1
        %vm3276 = vcmp.eq.s32.totalorder %v3272, 1
        %v3277 = vsel %vm3273, 6699988.5, 96101976.0
        %v3278 = vsel %vm3274, 6699988.5, 96101976.0
        %v3279 = vsel %vm3275, 6699988.5, 96101976.0
        %v3280 = vsel %vm3276, 6699988.5, 96101976.0
        %v3281 = vsel %vm3273, 0.0525, 0.35
        %v3282 = vsel %vm3274, 0.0525, 0.35
        %v3283 = vsel %vm3275, 0.0525, 0.35
        %v3284 = vsel %vm3276, 0.0525, 0.35
        %v3285 = vsel %vm3273, 644404.06, 29234740.0
        %v3286 = vsel %vm3274, 644404.06, 29234740.0
        %v3287 = vsel %vm3275, 644404.06, 29234740.0
        %v3288 = vsel %vm3276, 644404.06, 29234740.0
        %vm3289 = vcmp.eq.s32.totalorder %v3269, 2
        %vm3290 = vcmp.eq.s32.totalorder %v3270, 2
        %vm3291 = vcmp.eq.s32.totalorder %v3271, 2
        %vm3292 = vcmp.eq.s32.totalorder %v3272, 2
        %v3293 = vsel %vm3289, 10179165.0, %v3277
        %v3294 = vsel %vm3290, 10179165.0, %v3278
        %v3295 = vsel %vm3291, 10179165.0, %v3279
        %v3296 = vsel %vm3292, 10179165.0, %v3280
        %v3297 = vsel %vm3289, 0.07, %v3281
        %v3298 = vsel %vm3290, 0.07, %v3282
        %v3299 = vsel %vm3291, 0.07, %v3283
        %v3300 = vsel %vm3292, 0.07, %v3284
        %v3301 = vsel %vm3289, 761653.9, %v3285
        %v3302 = vsel %vm3290, 761653.9, %v3286
        %v3303 = vsel %vm3291, 761653.9, %v3287
        %v3304 = vsel %vm3292, 761653.9, %v3288
        %vm3305 = vcmp.eq.s32.totalorder %v3269, 3
        %vm3306 = vcmp.eq.s32.totalorder %v3270, 3
        %vm3307 = vcmp.eq.s32.totalorder %v3271, 3
        %vm3308 = vcmp.eq.s32.totalorder %v3272, 3
        %v3309 = vsel %vm3305, 13658537.0, %v3293
        %v3310 = vsel %vm3306, 13658537.0, %v3294
        %v3311 = vsel %vm3307, 13658537.0, %v3295
        %v3312 = vsel %vm3308, 13658537.0, %v3296
        %v3313 = vsel %vm3305, 0.0875, %v3297
        %v3314 = vsel %vm3306, 0.0875, %v3298
        %v3315 = vsel %vm3307, 0.0875, %v3299
        %v3316 = vsel %vm3308, 0.0875, %v3300
        %v3317 = vsel %vm3305, 939789.25, %v3301
        %v3318 = vsel %vm3306, 939789.25, %v3302
        %v3319 = vsel %vm3307, 939789.25, %v3303
        %v3320 = vsel %vm3308, 939789.25, %v3304
        %vm3321 = vcmp.eq.s32.totalorder %v3269, 4
        %vm3322 = vcmp.eq.s32.totalorder %v3270, 4
        %vm3323 = vcmp.eq.s32.totalorder %v3271, 4
        %vm3324 = vcmp.eq.s32.totalorder %v3272, 4
        %v3325 = vsel %vm3321, 18262702.0, %v3309
        %v3326 = vsel %vm3322, 18262702.0, %v3310
        %v3327 = vsel %vm3323, 18262702.0, %v3311
        %v3328 = vsel %vm3324, 18262702.0, %v3312
        %v3329 = vsel %vm3321, 0.105, %v3313
        %v3330 = vsel %vm3322, 0.105, %v3314
        %v3331 = vsel %vm3323, 0.105, %v3315
        %v3332 = vsel %vm3324, 0.105, %v3316
        %v3333 = vsel %vm3321, 1178813.6, %v3317
        %v3334 = vsel %vm3322, 1178813.6, %v3318
        %v3335 = vsel %vm3323, 1178813.6, %v3319
        %v3336 = vsel %vm3324, 1178813.6, %v3320
        %vm3337 = vcmp.eq.s32.totalorder %v3269, 5
        %vm3338 = vcmp.eq.s32.totalorder %v3270, 5
        %vm3339 = vcmp.eq.s32.totalorder %v3271, 5
        %vm3340 = vcmp.eq.s32.totalorder %v3272, 5
        %v3341 = vsel %vm3337, 25085482.0, %v3325
        %v3342 = vsel %vm3338, 25085482.0, %v3326
        %v3343 = vsel %vm3339, 25085482.0, %v3327
        %v3344 = vsel %vm3340, 25085482.0, %v3328
        %v3345 = vsel %vm3337, 0.1225, %v3329
        %v3346 = vsel %vm3338, 0.1225, %v3330
        %v3347 = vsel %vm3339, 0.1225, %v3331
        %v3348 = vsel %vm3340, 0.1225, %v3332
        %v3349 = vsel %vm3337, 1498411.0, %v3333
        %v3350 = vsel %vm3338, 1498411.0, %v3334
        %v3351 = vsel %vm3339, 1498411.0, %v3335
        %v3352 = vsel %vm3340, 1498411.0, %v3336
        %vm3353 = vcmp.eq.s32.totalorder %v3269, 6
        %vm3354 = vcmp.eq.s32.totalorder %v3270, 6
        %vm3355 = vcmp.eq.s32.totalorder %v3271, 6
        %vm3356 = vcmp.eq.s32.totalorder %v3272, 6
        %v3357 = vsel %vm3353, 34805740.0, %v3341
        %v3358 = vsel %vm3354, 34805740.0, %v3342
        %v3359 = vsel %vm3355, 34805740.0, %v3343
        %v3360 = vsel %vm3356, 34805740.0, %v3344
        %v3361 = vsel %vm3353, 0.14, %v3345
        %v3362 = vsel %vm3354, 0.14, %v3346
        %v3363 = vsel %vm3355, 0.14, %v3347
        %v3364 = vsel %vm3356, 0.14, %v3348
        %v3365 = vsel %vm3353, 1937406.9, %v3349
        %v3366 = vsel %vm3354, 1937406.9, %v3350
        %v3367 = vsel %vm3355, 1937406.9, %v3351
        %v3368 = vsel %vm3356, 1937406.9, %v3352
        %vm3369 = vcmp.eq.s32.totalorder %v3269, 7
        %vm3370 = vcmp.eq.s32.totalorder %v3270, 7
        %vm3371 = vcmp.eq.s32.totalorder %v3271, 7
        %vm3372 = vcmp.eq.s32.totalorder %v3272, 7
        %v3373 = vsel %vm3369, 47317032.0, %v3357
        %v3374 = vsel %vm3370, 47317032.0, %v3358
        %v3375 = vsel %vm3371, 47317032.0, %v3359
        %v3376 = vsel %vm3372, 47317032.0, %v3360
        %v3377 = vsel %vm3369, 0.1575, %v3361
        %v3378 = vsel %vm3370, 0.1575, %v3362
        %v3379 = vsel %vm3371, 0.1575, %v3363
        %v3380 = vsel %vm3372, 0.1575, %v3364
        %v3381 = vsel %vm3369, 2546507.3, %v3365
        %v3382 = vsel %vm3370, 2546507.3, %v3366
        %v3383 = vsel %vm3371, 2546507.3, %v3367
        %v3384 = vsel %vm3372, 2546507.3, %v3368
        %vm3385 = vcmp.eq.s32.totalorder %v3269, 8
        %vm3386 = vcmp.eq.s32.totalorder %v3270, 8
        %vm3387 = vcmp.eq.s32.totalorder %v3271, 8
        %vm3388 = vcmp.eq.s32.totalorder %v3272, 8
        %v3389 = vsel %vm3385, 63570476.0, %v3373
        %v3390 = vsel %vm3386, 63570476.0, %v3374
        %v3391 = vsel %vm3387, 63570476.0, %v3375
        %v3392 = vsel %vm3388, 63570476.0, %v3376
        %v3393 = vsel %vm3385, 0.175, %v3377
        %v3394 = vsel %vm3386, 0.175, %v3378
        %v3395 = vsel %vm3387, 0.175, %v3379
        %v3396 = vsel %vm3388, 0.175, %v3380
        %v3397 = vsel %vm3385, 3374555.3, %v3381
        %v3398 = vsel %vm3386, 3374555.3, %v3382
        %v3399 = vsel %vm3387, 3374555.3, %v3383
        %v3400 = vsel %vm3388, 3374555.3, %v3384
        %vm3401 = vcmp.eq.s32.totalorder %v3269, 9
        %vm3402 = vcmp.eq.s32.totalorder %v3270, 9
        %vm3403 = vcmp.eq.s32.totalorder %v3271, 9
        %vm3404 = vcmp.eq.s32.totalorder %v3272, 9
        %v3405 = vsel %vm3401, 84990664.0, %v3389
        %v3406 = vsel %vm3402, 84990664.0, %v3390
        %v3407 = vsel %vm3403, 84990664.0, %v3391
        %v3408 = vsel %vm3404, 84990664.0, %v3392
        %v3409 = vsel %vm3401, 0.1925, %v3393
        %v3410 = vsel %vm3402, 0.1925, %v3394
        %v3411 = vsel %vm3403, 0.1925, %v3395
        %v3412 = vsel %vm3404, 0.1925, %v3396
        %v3413 = vsel %vm3401, 4487038.5, %v3397
        %v3414 = vsel %vm3402, 4487038.5, %v3398
        %v3415 = vsel %vm3403, 4487038.5, %v3399
        %v3416 = vsel %vm3404, 4487038.5, %v3400
        %vm3417 = vcmp.eq.s32.totalorder %v3269, 10
        %vm3418 = vcmp.eq.s32.totalorder %v3270, 10
        %vm3419 = vcmp.eq.s32.totalorder %v3271, 10
        %vm3420 = vcmp.eq.s32.totalorder %v3272, 10
        %v3421 = vsel %vm3417, 1.1235563e+08, %v3405
        %v3422 = vsel %vm3418, 1.1235563e+08, %v3406
        %v3423 = vsel %vm3419, 1.1235563e+08, %v3407
        %v3424 = vsel %vm3420, 1.1235563e+08, %v3408
        %v3425 = vsel %vm3417, 0.21, %v3409
        %v3426 = vsel %vm3418, 0.21, %v3410
        %v3427 = vsel %vm3419, 0.21, %v3411
        %v3428 = vsel %vm3420, 0.21, %v3412
        %v3429 = vsel %vm3417, 5974375.0, %v3413
        %v3430 = vsel %vm3418, 5974375.0, %v3414
        %v3431 = vsel %vm3419, 5974375.0, %v3415
        %v3432 = vsel %vm3420, 5974375.0, %v3416
        %vm3433 = vcmp.eq.s32.totalorder %v3269, 11
        %vm3434 = vcmp.eq.s32.totalorder %v3270, 11
        %vm3435 = vcmp.eq.s32.totalorder %v3271, 11
        %vm3436 = vcmp.eq.s32.totalorder %v3272, 11
        %v3437 = vsel %vm3433, 1.4489813e+08, %v3421
        %v3438 = vsel %vm3434, 1.4489813e+08, %v3422
        %v3439 = vsel %vm3435, 1.4489813e+08, %v3423
        %v3440 = vsel %vm3436, 1.4489813e+08, %v3424
        %v3441 = vsel %vm3433, 0.2275, %v3425
        %v3442 = vsel %vm3434, 0.2275, %v3426
        %v3443 = vsel %vm3435, 0.2275, %v3427
        %v3444 = vsel %vm3436, 0.2275, %v3428
        %v3445 = vsel %vm3433, 7940600.0, %v3429
        %v3446 = vsel %vm3434, 7940600.0, %v3430
        %v3447 = vsel %vm3435, 7940600.0, %v3431
        %v3448 = vsel %vm3436, 7940600.0, %v3432
        %vm3449 = vcmp.eq.s32.totalorder %v3269, 12
        %vm3450 = vcmp.eq.s32.totalorder %v3270, 12
        %vm3451 = vcmp.eq.s32.totalorder %v3271, 12
        %vm3452 = vcmp.eq.s32.totalorder %v3272, 12
        %v3453 = vsel %vm3449, 1.7893462e+08, %v3437
        %v3454 = vsel %vm3450, 1.7893462e+08, %v3438
        %v3455 = vsel %vm3451, 1.7893462e+08, %v3439
        %v3456 = vsel %vm3452, 1.7893462e+08, %v3440
        %v3457 = vsel %vm3449, 0.245, %v3441
        %v3458 = vsel %vm3450, 0.245, %v3442
        %v3459 = vsel %vm3451, 0.245, %v3443
        %v3460 = vsel %vm3452, 0.245, %v3444
        %v3461 = vsel %vm3449, 10476317.0, %v3445
        %v3462 = vsel %vm3450, 10476317.0, %v3446
        %v3463 = vsel %vm3451, 10476317.0, %v3447
        %v3464 = vsel %vm3452, 10476317.0, %v3448
        %vm3465 = vcmp.eq.s32.totalorder %v3269, 13
        %vm3466 = vcmp.eq.s32.totalorder %v3270, 13
        %vm3467 = vcmp.eq.s32.totalorder %v3271, 13
        %vm3468 = vcmp.eq.s32.totalorder %v3272, 13
        %v3469 = vsel %vm3465, 2.0577562e+08, %v3453
        %v3470 = vsel %vm3466, 2.0577562e+08, %v3454
        %v3471 = vsel %vm3467, 2.0577562e+08, %v3455
        %v3472 = vsel %vm3468, 2.0577562e+08, %v3456
        %v3473 = vsel %vm3465, 0.2625, %v3457
        %v3474 = vsel %vm3466, 0.2625, %v3458
        %v3475 = vsel %vm3467, 0.2625, %v3459
        %v3476 = vsel %vm3468, 0.2625, %v3460
        %v3477 = vsel %vm3465, 13607670.0, %v3461
        %v3478 = vsel %vm3466, 13607670.0, %v3462
        %v3479 = vsel %vm3467, 13607670.0, %v3463
        %v3480 = vsel %vm3468, 13607670.0, %v3464
        %vm3481 = vcmp.eq.s32.totalorder %v3269, 14
        %vm3482 = vcmp.eq.s32.totalorder %v3270, 14
        %vm3483 = vcmp.eq.s32.totalorder %v3271, 14
        %vm3484 = vcmp.eq.s32.totalorder %v3272, 14
        %v3485 = vsel %vm3481, 2.1354498e+08, %v3469
        %v3486 = vsel %vm3482, 2.1354498e+08, %v3470
        %v3487 = vsel %vm3483, 2.1354498e+08, %v3471
        %v3488 = vsel %vm3484, 2.1354498e+08, %v3472
        %v3489 = vsel %vm3481, 0.28, %v3473
        %v3490 = vsel %vm3482, 0.28, %v3474
        %v3491 = vsel %vm3483, 0.28, %v3475
        %v3492 = vsel %vm3484, 0.28, %v3476
        %v3493 = vsel %vm3481, 17208746.0, %v3477
        %v3494 = vsel %vm3482, 17208746.0, %v3478
        %v3495 = vsel %vm3483, 17208746.0, %v3479
        %v3496 = vsel %vm3484, 17208746.0, %v3480
        %vm3497 = vcmp.eq.s32.totalorder %v3269, 15
        %vm3498 = vcmp.eq.s32.totalorder %v3270, 15
        %vm3499 = vcmp.eq.s32.totalorder %v3271, 15
        %vm3500 = vcmp.eq.s32.totalorder %v3272, 15
        %v3501 = vsel %vm3497, 1.9567355e+08, %v3485
        %v3502 = vsel %vm3498, 1.9567355e+08, %v3486
        %v3503 = vsel %vm3499, 1.9567355e+08, %v3487
        %v3504 = vsel %vm3500, 1.9567355e+08, %v3488
        %v3505 = vsel %vm3497, 0.2975, %v3489
        %v3506 = vsel %vm3498, 0.2975, %v3490
        %v3507 = vsel %vm3499, 0.2975, %v3491
        %v3508 = vsel %vm3500, 0.2975, %v3492
        %v3509 = vsel %vm3497, 20945786.0, %v3493
        %v3510 = vsel %vm3498, 20945786.0, %v3494
        %v3511 = vsel %vm3499, 20945786.0, %v3495
        %v3512 = vsel %vm3500, 20945786.0, %v3496
        %vm3513 = vcmp.eq.s32.totalorder %v3269, 16
        %vm3514 = vcmp.eq.s32.totalorder %v3270, 16
        %vm3515 = vcmp.eq.s32.totalorder %v3271, 16
        %vm3516 = vcmp.eq.s32.totalorder %v3272, 16
        %v3517 = vsel %vm3513, 1.5927611e+08, %v3501
        %v3518 = vsel %vm3514, 1.5927611e+08, %v3502
        %v3519 = vsel %vm3515, 1.5927611e+08, %v3503
        %v3520 = vsel %vm3516, 1.5927611e+08, %v3504
        %v3521 = vsel %vm3513, 0.315, %v3505
        %v3522 = vsel %vm3514, 0.315, %v3506
        %v3523 = vsel %vm3515, 0.315, %v3507
        %v3524 = vsel %vm3516, 0.315, %v3508
        %v3525 = vsel %vm3513, 24370070.0, %v3509
        %v3526 = vsel %vm3514, 24370070.0, %v3510
        %v3527 = vsel %vm3515, 24370070.0, %v3511
        %v3528 = vsel %vm3516, 24370070.0, %v3512
        %vm3529 = vcmp.eq.s32.totalorder %v3269, 17
        %vm3530 = vcmp.eq.s32.totalorder %v3270, 17
        %vm3531 = vcmp.eq.s32.totalorder %v3271, 17
        %vm3532 = vcmp.eq.s32.totalorder %v3272, 17
        %v3533 = vsel %vm3529, 1.18705024e+08, %v3517
        %v3534 = vsel %vm3530, 1.18705024e+08, %v3518
        %v3535 = vsel %vm3531, 1.18705024e+08, %v3519
        %v3536 = vsel %vm3532, 1.18705024e+08, %v3520
        %v3537 = vsel %vm3529, 0.3325, %v3521
        %v3538 = vsel %vm3530, 0.3325, %v3522
        %v3539 = vsel %vm3531, 0.3325, %v3523
        %v3540 = vsel %vm3532, 0.3325, %v3524
        %v3541 = vsel %vm3529, 27157404.0, %v3525
        %v3542 = vsel %vm3530, 27157404.0, %v3526
        %v3543 = vsel %vm3531, 27157404.0, %v3527
        %v3544 = vsel %vm3532, 27157404.0, %v3528
        %v3545 = vsub.f32 %v3241, %v3537
        %v3546 = vsub.f32 %v3242, %v3538
        %v3547 = vsub.f32 %v3243, %v3539
        %v3548 = vsub.f32 %v3244, %v3540
        %v3549 = vmul.f32 %v3533, %v3545
        %v3550 = vmul.f32 %v3534, %v3546
        %v3551 = vmul.f32 %v3535, %v3547
        %v3552 = vmul.f32 %v3536, %v3548
        %v3553 = vadd.f32 %v3549, %v3541
        %v3554 = vadd.f32 %v3550, %v3542
        %v3555 = vadd.f32 %v3551, %v3543
        %v3556 = vadd.f32 %v3552, %v3544
        %v3557 = vrcp.pop %v3553
        %v3558 = vmul.f32 %v3553, %v3557
        %v3559 = vsub.f32 1.0, %v3558
        %v3560 = vmul.f32 %v3557, %v3559
        %v3561 = vadd.f32 %v3557, %v3560
        %vm3562 = vweird.f32 %v3553
        %vm3563 = vweird.f32 %v3557
        %vm3564 = vmor %vm3562, %vm3563
        %v3565 = vsel %vm3564, %v3557, %v3561
        %v3566 = vand.u32 2147483647, %v3553
        %vm3567 = vcmp.eq.f32.partialorder %v3566, 8.507059e+37
        %v3568 = vand.u32 %v3553, 2147483648
        %v3569 = vor.u32 1.1754944e-38, %v3568
        %v3570 = vsel %vm3567, %v3569, %v3565
        %v3571 = vmul.f32 1.0, %v3570
        %v3572 = vrcp.pop %v3554
        %v3573 = vmul.f32 %v3554, %v3572
        %v3574 = vsub.f32 1.0, %v3573
        %v3575 = vmul.f32 %v3572, %v3574
        %v3576 = vadd.f32 %v3572, %v3575
        %vm3577 = vweird.f32 %v3554
        %vm3578 = vweird.f32 %v3572
        %vm3579 = vmor %vm3577, %vm3578
        %v3580 = vsel %vm3579, %v3572, %v3576
        %v3581 = vand.u32 2147483647, %v3554
        %vm3582 = vcmp.eq.f32.partialorder %v3581, 8.507059e+37
        %v3583 = vand.u32 %v3554, 2147483648
        %v3584 = vor.u32 1.1754944e-38, %v3583
        %v3585 = vsel %vm3582, %v3584, %v3580
        %v3586 = vmul.f32 1.0, %v3585
        %v3587 = vrcp.pop %v3555
        %v3588 = vmul.f32 %v3555, %v3587
        %v3589 = vsub.f32 1.0, %v3588
        %v3590 = vmul.f32 %v3587, %v3589
        %v3591 = vadd.f32 %v3587, %v3590
        %vm3592 = vweird.f32 %v3555
        %vm3593 = vweird.f32 %v3587
        %vm3594 = vmor %vm3592, %vm3593
        %v3595 = vsel %vm3594, %v3587, %v3591
        %v3596 = vand.u32 2147483647, %v3555
        %vm3597 = vcmp.eq.f32.partialorder %v3596, 8.507059e+37
        %v3598 = vand.u32 %v3555, 2147483648
        %v3599 = vor.u32 1.1754944e-38, %v3598
        %v3600 = vsel %vm3597, %v3599, %v3595
        %v3601 = vmul.f32 1.0, %v3600
        %v3602 = vrcp.pop %v3556
        %v3603 = vmul.f32 %v3556, %v3602
        %v3604 = vsub.f32 1.0, %v3603
        %v3605 = vmul.f32 %v3602, %v3604
        %v3606 = vadd.f32 %v3602, %v3605
        %vm3607 = vweird.f32 %v3556
        %vm3608 = vweird.f32 %v3602
        %vm3609 = vmor %vm3607, %vm3608
        %v3610 = vsel %vm3609, %v3602, %v3606
        %v3611 = vand.u32 2147483647, %v3556
        %vm3612 = vcmp.eq.f32.partialorder %v3611, 8.507059e+37
        %v3613 = vand.u32 %v3556, 2147483648
        %v3614 = vor.u32 1.1754944e-38, %v3613
        %v3615 = vsel %vm3612, %v3614, %v3610
        %v3616 = vmul.f32 1.0, %v3615
        %v3617 = vsub.f32 %v3553, 2285464.5
        %v3618 = vsub.f32 %v3554, 2285464.5
        %v3619 = vsub.f32 %v3555, 2285464.5
        %v3620 = vsub.f32 %v3556, 2285464.5
        %v3621 = vmul.f32 %v3617, 2.0
        %v3622 = vmul.f32 %v3618, 2.0
        %v3623 = vmul.f32 %v3619, 2.0
        %v3624 = vmul.f32 %v3620, 2.0
        %v3625 = vmul.f32 %v3621, 3.1415927
        %v3626 = vmul.f32 %v3622, 3.1415927
        %v3627 = vmul.f32 %v3623, 3.1415927
        %v3628 = vmul.f32 %v3624, 3.1415927
        %v3629 = vadd.f32 %v3571, 4.375478e-07
        %v3630 = vadd.f32 %v3586, 4.375478e-07
        %v3631 = vadd.f32 %v3601, 4.375478e-07
        %v3632 = vadd.f32 %v3616, 4.375478e-07
        %v3633 = vmul.f32 %v3625, %v3629
        %v3634 = vmul.f32 %v3626, %v3630
        %v3635 = vmul.f32 %v3627, %v3631
        %v3636 = vmul.f32 %v3628, %v3632
        %vm3637 = vcmp.ge.f32.partialorder %v3633, 3.1415927
        %vm3638 = vcmp.ge.f32.partialorder %v3634, 3.1415927
        %vm3639 = vcmp.ge.f32.partialorder %v3635, 3.1415927
        %vm3640 = vcmp.ge.f32.partialorder %v3636, 3.1415927
        %v3641 = vsel %vm3637, 1.0, 0.0
        %v3642 = vsel %vm3638, 1.0, 0.0
        %v3643 = vsel %vm3639, 1.0, 0.0
        %v3644 = vsel %vm3640, 1.0, 0.0
        %s3645 = sld [smem:[#allocation2 + $0xf]]
        %v3646 = vstv %s3645
        %v3647 = vmul.f32 %v3646, %v1889
        %v3648 = vmul.f32 %v3646, %v1890
        %v3649 = vmul.f32 %v3646, %v1891
        %v3650 = vmul.f32 %v3646, %v1892
        %s3651 = sld [smem:[#allocation2 + $0x10]]
        %v3652 = vstv %s3651
        %v3653 = vmul.f32 %v3652, %v2327
        %v3654 = vmul.f32 %v3652, %v2328
        %v3655 = vmul.f32 %v3652, %v2329
        %v3656 = vmul.f32 %v3652, %v2330
        %v3657 = vadd.f32 %v3647, %v3653
        %v3658 = vadd.f32 %v3648, %v3654
        %v3659 = vadd.f32 %v3649, %v3655
        %v3660 = vadd.f32 %v3650, %v3656
        %s3661 = sld [smem:[#allocation2 + $0x11]]
        %v3662 = vstv %s3661
        %v3663 = vmul.f32 %v3662, %v2765
        %v3664 = vmul.f32 %v3662, %v2766
        %v3665 = vmul.f32 %v3662, %v2767
        %v3666 = vmul.f32 %v3662, %v2768
        %v3667 = vadd.f32 %v3657, %v3663
        %v3668 = vadd.f32 %v3658, %v3664
        %v3669 = vadd.f32 %v3659, %v3665
        %v3670 = vadd.f32 %v3660, %v3666
        %v3671 = vadd.f32 %v3667, 0.15
        %v3672 = vadd.f32 %v3668, 0.15
        %v3673 = vadd.f32 %v3669, 0.15
        %v3674 = vadd.f32 %v3670, 0.15
        %v3675 = vsub.f32 %v3671, 0.015
        %v3676 = vsub.f32 %v3672, 0.015
        %v3677 = vsub.f32 %v3673, 0.015
        %v3678 = vsub.f32 %v3674, 0.015
        %v3679 = vmax.f32 %v3675, 0.0
        %v3680 = vmax.f32 %v3676, 0.0
        %v3681 = vmax.f32 %v3677, 0.0
        %v3682 = vmax.f32 %v3678, 0.0
        %v3683 = vsub.f32 %v3679, 0.0525
        %v3684 = vsub.f32 %v3680, 0.0525
        %v3685 = vsub.f32 %v3681, 0.0525
        %v3686 = vsub.f32 %v3682, 0.0525
        %v3687 = vmul.f32 %v3683, 57.142857
        %v3688 = vmul.f32 %v3684, 57.142857
        %v3689 = vmul.f32 %v3685, 57.142857
        %v3690 = vmul.f32 %v3686, 57.142857
        %v3691 = vsub.f32 %v3687, 0.5
        %v3692 = vsub.f32 %v3688, 0.5
        %v3693 = vsub.f32 %v3689, 0.5
        %v3694 = vsub.f32 %v3690, 0.5
        %v3695 = vceil.f32 %v3691
        %v3696 = vceil.f32 %v3692
        %v3697 = vceil.f32 %v3693
        %v3698 = vceil.f32 %v3694
        %v3699 = vmax.f32 %v3695, 0.0
        %v3700 = vmax.f32 %v3696, 0.0
        %v3701 = vmax.f32 %v3697, 0.0
        %v3702 = vmax.f32 %v3698, 0.0
        %v3703 = vmin.f32 %v3699, 17.0
        %v3704 = vmin.f32 %v3700, 17.0
        %v3705 = vmin.f32 %v3701, 17.0
        %v3706 = vmin.f32 %v3702, 17.0
        %v3707 = vcvt.f32.s32.to.zero.pseudo %v3703
        %v3708 = vcvt.f32.s32.to.zero.pseudo %v3704
        %v3709 = vcvt.f32.s32.to.zero.pseudo %v3705
        %v3710 = vcvt.f32.s32.to.zero.pseudo %v3706
        %vm3711 = vcmp.eq.s32.totalorder %v3707, 1
        %vm3712 = vcmp.eq.s32.totalorder %v3708, 1
        %vm3713 = vcmp.eq.s32.totalorder %v3709, 1
        %vm3714 = vcmp.eq.s32.totalorder %v3710, 1
        %v3715 = vsel %vm3711, 6699988.5, 96101976.0
        %v3716 = vsel %vm3712, 6699988.5, 96101976.0
        %v3717 = vsel %vm3713, 6699988.5, 96101976.0
        %v3718 = vsel %vm3714, 6699988.5, 96101976.0
        %v3719 = vsel %vm3711, 0.0525, 0.35
        %v3720 = vsel %vm3712, 0.0525, 0.35
        %v3721 = vsel %vm3713, 0.0525, 0.35
        %v3722 = vsel %vm3714, 0.0525, 0.35
        %v3723 = vsel %vm3711, 644404.06, 29234740.0
        %v3724 = vsel %vm3712, 644404.06, 29234740.0
        %v3725 = vsel %vm3713, 644404.06, 29234740.0
        %v3726 = vsel %vm3714, 644404.06, 29234740.0
        %vm3727 = vcmp.eq.s32.totalorder %v3707, 2
        %vm3728 = vcmp.eq.s32.totalorder %v3708, 2
        %vm3729 = vcmp.eq.s32.totalorder %v3709, 2
        %vm3730 = vcmp.eq.s32.totalorder %v3710, 2
        %v3731 = vsel %vm3727, 10179165.0, %v3715
        %v3732 = vsel %vm3728, 10179165.0, %v3716
        %v3733 = vsel %vm3729, 10179165.0, %v3717
        %v3734 = vsel %vm3730, 10179165.0, %v3718
        %v3735 = vsel %vm3727, 0.07, %v3719
        %v3736 = vsel %vm3728, 0.07, %v3720
        %v3737 = vsel %vm3729, 0.07, %v3721
        %v3738 = vsel %vm3730, 0.07, %v3722
        %v3739 = vsel %vm3727, 761653.9, %v3723
        %v3740 = vsel %vm3728, 761653.9, %v3724
        %v3741 = vsel %vm3729, 761653.9, %v3725
        %v3742 = vsel %vm3730, 761653.9, %v3726
        %vm3743 = vcmp.eq.s32.totalorder %v3707, 3
        %vm3744 = vcmp.eq.s32.totalorder %v3708, 3
        %vm3745 = vcmp.eq.s32.totalorder %v3709, 3
        %vm3746 = vcmp.eq.s32.totalorder %v3710, 3
        %v3747 = vsel %vm3743, 13658537.0, %v3731
        %v3748 = vsel %vm3744, 13658537.0, %v3732
        %v3749 = vsel %vm3745, 13658537.0, %v3733
        %v3750 = vsel %vm3746, 13658537.0, %v3734
        %v3751 = vsel %vm3743, 0.0875, %v3735
        %v3752 = vsel %vm3744, 0.0875, %v3736
        %v3753 = vsel %vm3745, 0.0875, %v3737
        %v3754 = vsel %vm3746, 0.0875, %v3738
        %v3755 = vsel %vm3743, 939789.25, %v3739
        %v3756 = vsel %vm3744, 939789.25, %v3740
        %v3757 = vsel %vm3745, 939789.25, %v3741
        %v3758 = vsel %vm3746, 939789.25, %v3742
        %vm3759 = vcmp.eq.s32.totalorder %v3707, 4
        %vm3760 = vcmp.eq.s32.totalorder %v3708, 4
        %vm3761 = vcmp.eq.s32.totalorder %v3709, 4
        %vm3762 = vcmp.eq.s32.totalorder %v3710, 4
        %v3763 = vsel %vm3759, 18262702.0, %v3747
        %v3764 = vsel %vm3760, 18262702.0, %v3748
        %v3765 = vsel %vm3761, 18262702.0, %v3749
        %v3766 = vsel %vm3762, 18262702.0, %v3750
        %v3767 = vsel %vm3759, 0.105, %v3751
        %v3768 = vsel %vm3760, 0.105, %v3752
        %v3769 = vsel %vm3761, 0.105, %v3753
        %v3770 = vsel %vm3762, 0.105, %v3754
        %v3771 = vsel %vm3759, 1178813.6, %v3755
        %v3772 = vsel %vm3760, 1178813.6, %v3756
        %v3773 = vsel %vm3761, 1178813.6, %v3757
        %v3774 = vsel %vm3762, 1178813.6, %v3758
        %vm3775 = vcmp.eq.s32.totalorder %v3707, 5
        %vm3776 = vcmp.eq.s32.totalorder %v3708, 5
        %vm3777 = vcmp.eq.s32.totalorder %v3709, 5
        %vm3778 = vcmp.eq.s32.totalorder %v3710, 5
        %v3779 = vsel %vm3775, 25085482.0, %v3763
        %v3780 = vsel %vm3776, 25085482.0, %v3764
        %v3781 = vsel %vm3777, 25085482.0, %v3765
        %v3782 = vsel %vm3778, 25085482.0, %v3766
        %v3783 = vsel %vm3775, 0.1225, %v3767
        %v3784 = vsel %vm3776, 0.1225, %v3768
        %v3785 = vsel %vm3777, 0.1225, %v3769
        %v3786 = vsel %vm3778, 0.1225, %v3770
        %v3787 = vsel %vm3775, 1498411.0, %v3771
        %v3788 = vsel %vm3776, 1498411.0, %v3772
        %v3789 = vsel %vm3777, 1498411.0, %v3773
        %v3790 = vsel %vm3778, 1498411.0, %v3774
        %vm3791 = vcmp.eq.s32.totalorder %v3707, 6
        %vm3792 = vcmp.eq.s32.totalorder %v3708, 6
        %vm3793 = vcmp.eq.s32.totalorder %v3709, 6
        %vm3794 = vcmp.eq.s32.totalorder %v3710, 6
        %v3795 = vsel %vm3791, 34805740.0, %v3779
        %v3796 = vsel %vm3792, 34805740.0, %v3780
        %v3797 = vsel %vm3793, 34805740.0, %v3781
        %v3798 = vsel %vm3794, 34805740.0, %v3782
        %v3799 = vsel %vm3791, 0.14, %v3783
        %v3800 = vsel %vm3792, 0.14, %v3784
        %v3801 = vsel %vm3793, 0.14, %v3785
        %v3802 = vsel %vm3794, 0.14, %v3786
        %v3803 = vsel %vm3791, 1937406.9, %v3787
        %v3804 = vsel %vm3792, 1937406.9, %v3788
        %v3805 = vsel %vm3793, 1937406.9, %v3789
        %v3806 = vsel %vm3794, 1937406.9, %v3790
        %vm3807 = vcmp.eq.s32.totalorder %v3707, 7
        %vm3808 = vcmp.eq.s32.totalorder %v3708, 7
        %vm3809 = vcmp.eq.s32.totalorder %v3709, 7
        %vm3810 = vcmp.eq.s32.totalorder %v3710, 7
        %v3811 = vsel %vm3807, 47317032.0, %v3795
        %v3812 = vsel %vm3808, 47317032.0, %v3796
        %v3813 = vsel %vm3809, 47317032.0, %v3797
        %v3814 = vsel %vm3810, 47317032.0, %v3798
        %v3815 = vsel %vm3807, 0.1575, %v3799
        %v3816 = vsel %vm3808, 0.1575, %v3800
        %v3817 = vsel %vm3809, 0.1575, %v3801
        %v3818 = vsel %vm3810, 0.1575, %v3802
        %v3819 = vsel %vm3807, 2546507.3, %v3803
        %v3820 = vsel %vm3808, 2546507.3, %v3804
        %v3821 = vsel %vm3809, 2546507.3, %v3805
        %v3822 = vsel %vm3810, 2546507.3, %v3806
        %vm3823 = vcmp.eq.s32.totalorder %v3707, 8
        %vm3824 = vcmp.eq.s32.totalorder %v3708, 8
        %vm3825 = vcmp.eq.s32.totalorder %v3709, 8
        %vm3826 = vcmp.eq.s32.totalorder %v3710, 8
        %v3827 = vsel %vm3823, 63570476.0, %v3811
        %v3828 = vsel %vm3824, 63570476.0, %v3812
        %v3829 = vsel %vm3825, 63570476.0, %v3813
        %v3830 = vsel %vm3826, 63570476.0, %v3814
        %v3831 = vsel %vm3823, 0.175, %v3815
        %v3832 = vsel %vm3824, 0.175, %v3816
        %v3833 = vsel %vm3825, 0.175, %v3817
        %v3834 = vsel %vm3826, 0.175, %v3818
        %v3835 = vsel %vm3823, 3374555.3, %v3819
        %v3836 = vsel %vm3824, 3374555.3, %v3820
        %v3837 = vsel %vm3825, 3374555.3, %v3821
        %v3838 = vsel %vm3826, 3374555.3, %v3822
        %vm3839 = vcmp.eq.s32.totalorder %v3707, 9
        %vm3840 = vcmp.eq.s32.totalorder %v3708, 9
        %vm3841 = vcmp.eq.s32.totalorder %v3709, 9
        %vm3842 = vcmp.eq.s32.totalorder %v3710, 9
        %v3843 = vsel %vm3839, 84990664.0, %v3827
        %v3844 = vsel %vm3840, 84990664.0, %v3828
        %v3845 = vsel %vm3841, 84990664.0, %v3829
        %v3846 = vsel %vm3842, 84990664.0, %v3830
        %v3847 = vsel %vm3839, 0.1925, %v3831
        %v3848 = vsel %vm3840, 0.1925, %v3832
        %v3849 = vsel %vm3841, 0.1925, %v3833
        %v3850 = vsel %vm3842, 0.1925, %v3834
        %v3851 = vsel %vm3839, 4487038.5, %v3835
        %v3852 = vsel %vm3840, 4487038.5, %v3836
        %v3853 = vsel %vm3841, 4487038.5, %v3837
        %v3854 = vsel %vm3842, 4487038.5, %v3838
        %vm3855 = vcmp.eq.s32.totalorder %v3707, 10
        %vm3856 = vcmp.eq.s32.totalorder %v3708, 10
        %vm3857 = vcmp.eq.s32.totalorder %v3709, 10
        %vm3858 = vcmp.eq.s32.totalorder %v3710, 10
        %v3859 = vsel %vm3855, 1.1235563e+08, %v3843
        %v3860 = vsel %vm3856, 1.1235563e+08, %v3844
        %v3861 = vsel %vm3857, 1.1235563e+08, %v3845
        %v3862 = vsel %vm3858, 1.1235563e+08, %v3846
        %v3863 = vsel %vm3855, 0.21, %v3847
        %v3864 = vsel %vm3856, 0.21, %v3848
        %v3865 = vsel %vm3857, 0.21, %v3849
        %v3866 = vsel %vm3858, 0.21, %v3850
        %v3867 = vsel %vm3855, 5974375.0, %v3851
        %v3868 = vsel %vm3856, 5974375.0, %v3852
        %v3869 = vsel %vm3857, 5974375.0, %v3853
        %v3870 = vsel %vm3858, 5974375.0, %v3854
        %vm3871 = vcmp.eq.s32.totalorder %v3707, 11
        %vm3872 = vcmp.eq.s32.totalorder %v3708, 11
        %vm3873 = vcmp.eq.s32.totalorder %v3709, 11
        %vm3874 = vcmp.eq.s32.totalorder %v3710, 11
        %v3875 = vsel %vm3871, 1.4489813e+08, %v3859
        %v3876 = vsel %vm3872, 1.4489813e+08, %v3860
        %v3877 = vsel %vm3873, 1.4489813e+08, %v3861
        %v3878 = vsel %vm3874, 1.4489813e+08, %v3862
        %v3879 = vsel %vm3871, 0.2275, %v3863
        %v3880 = vsel %vm3872, 0.2275, %v3864
        %v3881 = vsel %vm3873, 0.2275, %v3865
        %v3882 = vsel %vm3874, 0.2275, %v3866
        %v3883 = vsel %vm3871, 7940600.0, %v3867
        %v3884 = vsel %vm3872, 7940600.0, %v3868
        %v3885 = vsel %vm3873, 7940600.0, %v3869
        %v3886 = vsel %vm3874, 7940600.0, %v3870
        %vm3887 = vcmp.eq.s32.totalorder %v3707, 12
        %vm3888 = vcmp.eq.s32.totalorder %v3708, 12
        %vm3889 = vcmp.eq.s32.totalorder %v3709, 12
        %vm3890 = vcmp.eq.s32.totalorder %v3710, 12
        %v3891 = vsel %vm3887, 1.7893462e+08, %v3875
        %v3892 = vsel %vm3888, 1.7893462e+08, %v3876
        %v3893 = vsel %vm3889, 1.7893462e+08, %v3877
        %v3894 = vsel %vm3890, 1.7893462e+08, %v3878
        %v3895 = vsel %vm3887, 0.245, %v3879
        %v3896 = vsel %vm3888, 0.245, %v3880
        %v3897 = vsel %vm3889, 0.245, %v3881
        %v3898 = vsel %vm3890, 0.245, %v3882
        %v3899 = vsel %vm3887, 10476317.0, %v3883
        %v3900 = vsel %vm3888, 10476317.0, %v3884
        %v3901 = vsel %vm3889, 10476317.0, %v3885
        %v3902 = vsel %vm3890, 10476317.0, %v3886
        %vm3903 = vcmp.eq.s32.totalorder %v3707, 13
        %vm3904 = vcmp.eq.s32.totalorder %v3708, 13
        %vm3905 = vcmp.eq.s32.totalorder %v3709, 13
        %vm3906 = vcmp.eq.s32.totalorder %v3710, 13
        %v3907 = vsel %vm3903, 2.0577562e+08, %v3891
        %v3908 = vsel %vm3904, 2.0577562e+08, %v3892
        %v3909 = vsel %vm3905, 2.0577562e+08, %v3893
        %v3910 = vsel %vm3906, 2.0577562e+08, %v3894
        %v3911 = vsel %vm3903, 0.2625, %v3895
        %v3912 = vsel %vm3904, 0.2625, %v3896
        %v3913 = vsel %vm3905, 0.2625, %v3897
        %v3914 = vsel %vm3906, 0.2625, %v3898
        %v3915 = vsel %vm3903, 13607670.0, %v3899
        %v3916 = vsel %vm3904, 13607670.0, %v3900
        %v3917 = vsel %vm3905, 13607670.0, %v3901
        %v3918 = vsel %vm3906, 13607670.0, %v3902
        %vm3919 = vcmp.eq.s32.totalorder %v3707, 14
        %vm3920 = vcmp.eq.s32.totalorder %v3708, 14
        %vm3921 = vcmp.eq.s32.totalorder %v3709, 14
        %vm3922 = vcmp.eq.s32.totalorder %v3710, 14
        %v3923 = vsel %vm3919, 2.1354498e+08, %v3907
        %v3924 = vsel %vm3920, 2.1354498e+08, %v3908
        %v3925 = vsel %vm3921, 2.1354498e+08, %v3909
        %v3926 = vsel %vm3922, 2.1354498e+08, %v3910
        %v3927 = vsel %vm3919, 0.28, %v3911
        %v3928 = vsel %vm3920, 0.28, %v3912
        %v3929 = vsel %vm3921, 0.28, %v3913
        %v3930 = vsel %vm3922, 0.28, %v3914
        %v3931 = vsel %vm3919, 17208746.0, %v3915
        %v3932 = vsel %vm3920, 17208746.0, %v3916
        %v3933 = vsel %vm3921, 17208746.0, %v3917
        %v3934 = vsel %vm3922, 17208746.0, %v3918
        %vm3935 = vcmp.eq.s32.totalorder %v3707, 15
        %vm3936 = vcmp.eq.s32.totalorder %v3708, 15
        %vm3937 = vcmp.eq.s32.totalorder %v3709, 15
        %vm3938 = vcmp.eq.s32.totalorder %v3710, 15
        %v3939 = vsel %vm3935, 1.9567355e+08, %v3923
        %v3940 = vsel %vm3936, 1.9567355e+08, %v3924
        %v3941 = vsel %vm3937, 1.9567355e+08, %v3925
        %v3942 = vsel %vm3938, 1.9567355e+08, %v3926
        %v3943 = vsel %vm3935, 0.2975, %v3927
        %v3944 = vsel %vm3936, 0.2975, %v3928
        %v3945 = vsel %vm3937, 0.2975, %v3929
        %v3946 = vsel %vm3938, 0.2975, %v3930
        %v3947 = vsel %vm3935, 20945786.0, %v3931
        %v3948 = vsel %vm3936, 20945786.0, %v3932
        %v3949 = vsel %vm3937, 20945786.0, %v3933
        %v3950 = vsel %vm3938, 20945786.0, %v3934
        %vm3951 = vcmp.eq.s32.totalorder %v3707, 16
        %vm3952 = vcmp.eq.s32.totalorder %v3708, 16
        %vm3953 = vcmp.eq.s32.totalorder %v3709, 16
        %vm3954 = vcmp.eq.s32.totalorder %v3710, 16
        %v3955 = vsel %vm3951, 1.5927611e+08, %v3939
        %v3956 = vsel %vm3952, 1.5927611e+08, %v3940
        %v3957 = vsel %vm3953, 1.5927611e+08, %v3941
        %v3958 = vsel %vm3954, 1.5927611e+08, %v3942
        %v3959 = vsel %vm3951, 0.315, %v3943
        %v3960 = vsel %vm3952, 0.315, %v3944
        %v3961 = vsel %vm3953, 0.315, %v3945
        %v3962 = vsel %vm3954, 0.315, %v3946
        %v3963 = vsel %vm3951, 24370070.0, %v3947
        %v3964 = vsel %vm3952, 24370070.0, %v3948
        %v3965 = vsel %vm3953, 24370070.0, %v3949
        %v3966 = vsel %vm3954, 24370070.0, %v3950
        %vm3967 = vcmp.eq.s32.totalorder %v3707, 17
        %vm3968 = vcmp.eq.s32.totalorder %v3708, 17
        %vm3969 = vcmp.eq.s32.totalorder %v3709, 17
        %vm3970 = vcmp.eq.s32.totalorder %v3710, 17
        %v3971 = vsel %vm3967, 1.18705024e+08, %v3955
        %v3972 = vsel %vm3968, 1.18705024e+08, %v3956
        %v3973 = vsel %vm3969, 1.18705024e+08, %v3957
        %v3974 = vsel %vm3970, 1.18705024e+08, %v3958
        %v3975 = vsel %vm3967, 0.3325, %v3959
        %v3976 = vsel %vm3968, 0.3325, %v3960
        %v3977 = vsel %vm3969, 0.3325, %v3961
        %v3978 = vsel %vm3970, 0.3325, %v3962
        %v3979 = vsel %vm3967, 27157404.0, %v3963
        %v3980 = vsel %vm3968, 27157404.0, %v3964
        %v3981 = vsel %vm3969, 27157404.0, %v3965
        %v3982 = vsel %vm3970, 27157404.0, %v3966
        %v3983 = vsub.f32 %v3679, %v3975
        %v3984 = vsub.f32 %v3680, %v3976
        %v3985 = vsub.f32 %v3681, %v3977
        %v3986 = vsub.f32 %v3682, %v3978
        %v3987 = vmul.f32 %v3971, %v3983
        %v3988 = vmul.f32 %v3972, %v3984
        %v3989 = vmul.f32 %v3973, %v3985
        %v3990 = vmul.f32 %v3974, %v3986
        %v3991 = vadd.f32 %v3987, %v3979
        %v3992 = vadd.f32 %v3988, %v3980
        %v3993 = vadd.f32 %v3989, %v3981
        %v3994 = vadd.f32 %v3990, %v3982
        %v3995 = vrcp.pop %v3991
        %v3996 = vmul.f32 %v3991, %v3995
        %v3997 = vsub.f32 1.0, %v3996
        %v3998 = vmul.f32 %v3995, %v3997
        %v3999 = vadd.f32 %v3995, %v3998
        %vm4000 = vweird.f32 %v3991
        %vm4001 = vweird.f32 %v3995
        %vm4002 = vmor %vm4000, %vm4001
        %v4003 = vsel %vm4002, %v3995, %v3999
        %v4004 = vand.u32 2147483647, %v3991
        %vm4005 = vcmp.eq.f32.partialorder %v4004, 8.507059e+37
        %v4006 = vand.u32 %v3991, 2147483648
        %v4007 = vor.u32 1.1754944e-38, %v4006
        %v4008 = vsel %vm4005, %v4007, %v4003
        %v4009 = vmul.f32 1.0, %v4008
        %v4010 = vrcp.pop %v3992
        %v4011 = vmul.f32 %v3992, %v4010
        %v4012 = vsub.f32 1.0, %v4011
        %v4013 = vmul.f32 %v4010, %v4012
        %v4014 = vadd.f32 %v4010, %v4013
        %vm4015 = vweird.f32 %v3992
        %vm4016 = vweird.f32 %v4010
        %vm4017 = vmor %vm4015, %vm4016
        %v4018 = vsel %vm4017, %v4010, %v4014
        %v4019 = vand.u32 2147483647, %v3992
        %vm4020 = vcmp.eq.f32.partialorder %v4019, 8.507059e+37
        %v4021 = vand.u32 %v3992, 2147483648
        %v4022 = vor.u32 1.1754944e-38, %v4021
        %v4023 = vsel %vm4020, %v4022, %v4018
        %v4024 = vmul.f32 1.0, %v4023
        %v4025 = vrcp.pop %v3993
        %v4026 = vmul.f32 %v3993, %v4025
        %v4027 = vsub.f32 1.0, %v4026
        %v4028 = vmul.f32 %v4025, %v4027
        %v4029 = vadd.f32 %v4025, %v4028
        %vm4030 = vweird.f32 %v3993
        %vm4031 = vweird.f32 %v4025
        %vm4032 = vmor %vm4030, %vm4031
        %v4033 = vsel %vm4032, %v4025, %v4029
        %v4034 = vand.u32 2147483647, %v3993
        %vm4035 = vcmp.eq.f32.partialorder %v4034, 8.507059e+37
        %v4036 = vand.u32 %v3993, 2147483648
        %v4037 = vor.u32 1.1754944e-38, %v4036
        %v4038 = vsel %vm4035, %v4037, %v4033
        %v4039 = vmul.f32 1.0, %v4038
        %v4040 = vrcp.pop %v3994
        %v4041 = vmul.f32 %v3994, %v4040
        %v4042 = vsub.f32 1.0, %v4041
        %v4043 = vmul.f32 %v4040, %v4042
        %v4044 = vadd.f32 %v4040, %v4043
        %vm4045 = vweird.f32 %v3994
        %vm4046 = vweird.f32 %v4040
        %vm4047 = vmor %vm4045, %vm4046
        %v4048 = vsel %vm4047, %v4040, %v4044
        %v4049 = vand.u32 2147483647, %v3994
        %vm4050 = vcmp.eq.f32.partialorder %v4049, 8.507059e+37
        %v4051 = vand.u32 %v3994, 2147483648
        %v4052 = vor.u32 1.1754944e-38, %v4051
        %v4053 = vsel %vm4050, %v4052, %v4048
        %v4054 = vmul.f32 1.0, %v4053
        %v4055 = vsub.f32 %v3991, 2285464.5
        %v4056 = vsub.f32 %v3992, 2285464.5
        %v4057 = vsub.f32 %v3993, 2285464.5
        %v4058 = vsub.f32 %v3994, 2285464.5
        %v4059 = vmul.f32 %v4055, 2.0
        %v4060 = vmul.f32 %v4056, 2.0
        %v4061 = vmul.f32 %v4057, 2.0
        %v4062 = vmul.f32 %v4058, 2.0
        %v4063 = vmul.f32 %v4059, 3.1415927
        %v4064 = vmul.f32 %v4060, 3.1415927
        %v4065 = vmul.f32 %v4061, 3.1415927
        %v4066 = vmul.f32 %v4062, 3.1415927
        %v4067 = vadd.f32 %v4009, 4.375478e-07
        %v4068 = vadd.f32 %v4024, 4.375478e-07
        %v4069 = vadd.f32 %v4039, 4.375478e-07
        %v4070 = vadd.f32 %v4054, 4.375478e-07
        %v4071 = vmul.f32 %v4063, %v4067
        %v4072 = vmul.f32 %v4064, %v4068
        %v4073 = vmul.f32 %v4065, %v4069
        %v4074 = vmul.f32 %v4066, %v4070
        %vm4075 = vcmp.ge.f32.partialorder %v4071, 3.1415927
        %vm4076 = vcmp.ge.f32.partialorder %v4072, 3.1415927
        %vm4077 = vcmp.ge.f32.partialorder %v4073, 3.1415927
        %vm4078 = vcmp.ge.f32.partialorder %v4074, 3.1415927
        %v4079 = vsel %vm4075, 1.0, 0.0
        %v4080 = vsel %vm4076, 1.0, 0.0
        %v4081 = vsel %vm4077, 1.0, 0.0
        %v4082 = vsel %vm4078, 1.0, 0.0
        %s4083 = sld [smem:[#allocation2 + $0x12]]
        %v4084 = vstv %s4083
        %v4085 = vmul.f32 %v4084, %v3203
        %v4086 = vmul.f32 %v4084, %v3204
        %v4087 = vmul.f32 %v4084, %v3205
        %v4088 = vmul.f32 %v4084, %v3206
        %s4089 = sld [smem:[#allocation2 + $0x13]]
        %v4090 = vstv %s4089
        %v4091 = vmul.f32 %v4090, %v3641
        %v4092 = vmul.f32 %v4090, %v3642
        %v4093 = vmul.f32 %v4090, %v3643
        %v4094 = vmul.f32 %v4090, %v3644
        %v4095 = vadd.f32 %v4085, %v4091
        %v4096 = vadd.f32 %v4086, %v4092
        %v4097 = vadd.f32 %v4087, %v4093
        %v4098 = vadd.f32 %v4088, %v4094
        %s4099 = sld [smem:[#allocation2 + $0x14]]
        %v4100 = vstv %s4099
        %v4101 = vmul.f32 %v4100, %v4079
        %v4102 = vmul.f32 %v4100, %v4080
        %v4103 = vmul.f32 %v4100, %v4081
        %v4104 = vmul.f32 %v4100, %v4082
        %v4105 = vadd.f32 %v4095, %v4101
        %v4106 = vadd.f32 %v4096, %v4102
        %v4107 = vadd.f32 %v4097, %v4103
        %v4108 = vadd.f32 %v4098, %v4104
        %v4109 = vadd.f32 %v4105, 0.15
        %v4110 = vadd.f32 %v4106, 0.15
        %v4111 = vadd.f32 %v4107, 0.15
        %v4112 = vadd.f32 %v4108, 0.15
        %v4113 = vsub.f32 %v4109, 0.015
        %v4114 = vsub.f32 %v4110, 0.015
        %v4115 = vsub.f32 %v4111, 0.015
        %v4116 = vsub.f32 %v4112, 0.015
        %v4117 = vmax.f32 %v4113, 0.0
        %v4118 = vmax.f32 %v4114, 0.0
        %v4119 = vmax.f32 %v4115, 0.0
        %v4120 = vmax.f32 %v4116, 0.0
        %v4121 = vsub.f32 %v4117, 0.0525
        %v4122 = vsub.f32 %v4118, 0.0525
        %v4123 = vsub.f32 %v4119, 0.0525
        %v4124 = vsub.f32 %v4120, 0.0525
        %v4125 = vmul.f32 %v4121, 57.142857
        %v4126 = vmul.f32 %v4122, 57.142857
        %v4127 = vmul.f32 %v4123, 57.142857
        %v4128 = vmul.f32 %v4124, 57.142857
        %v4129 = vsub.f32 %v4125, 0.5
        %v4130 = vsub.f32 %v4126, 0.5
        %v4131 = vsub.f32 %v4127, 0.5
        %v4132 = vsub.f32 %v4128, 0.5
        %v4133 = vceil.f32 %v4129
        %v4134 = vceil.f32 %v4130
        %v4135 = vceil.f32 %v4131
        %v4136 = vceil.f32 %v4132
        %v4137 = vmax.f32 %v4133, 0.0
        %v4138 = vmax.f32 %v4134, 0.0
        %v4139 = vmax.f32 %v4135, 0.0
        %v4140 = vmax.f32 %v4136, 0.0
        %v4141 = vmin.f32 %v4137, 17.0
        %v4142 = vmin.f32 %v4138, 17.0
        %v4143 = vmin.f32 %v4139, 17.0
        %v4144 = vmin.f32 %v4140, 17.0
        %v4145 = vcvt.f32.s32.to.zero.pseudo %v4141
        %v4146 = vcvt.f32.s32.to.zero.pseudo %v4142
        %v4147 = vcvt.f32.s32.to.zero.pseudo %v4143
        %v4148 = vcvt.f32.s32.to.zero.pseudo %v4144
        %vm4149 = vcmp.eq.s32.totalorder %v4145, 1
        %vm4150 = vcmp.eq.s32.totalorder %v4146, 1
        %vm4151 = vcmp.eq.s32.totalorder %v4147, 1
        %vm4152 = vcmp.eq.s32.totalorder %v4148, 1
        %v4153 = vsel %vm4149, 6699988.5, 96101976.0
        %v4154 = vsel %vm4150, 6699988.5, 96101976.0
        %v4155 = vsel %vm4151, 6699988.5, 96101976.0
        %v4156 = vsel %vm4152, 6699988.5, 96101976.0
        %v4157 = vsel %vm4149, 0.0525, 0.35
        %v4158 = vsel %vm4150, 0.0525, 0.35
        %v4159 = vsel %vm4151, 0.0525, 0.35
        %v4160 = vsel %vm4152, 0.0525, 0.35
        %v4161 = vsel %vm4149, 644404.06, 29234740.0
        %v4162 = vsel %vm4150, 644404.06, 29234740.0
        %v4163 = vsel %vm4151, 644404.06, 29234740.0
        %v4164 = vsel %vm4152, 644404.06, 29234740.0
        %vm4165 = vcmp.eq.s32.totalorder %v4145, 2
        %vm4166 = vcmp.eq.s32.totalorder %v4146, 2
        %vm4167 = vcmp.eq.s32.totalorder %v4147, 2
        %vm4168 = vcmp.eq.s32.totalorder %v4148, 2
        %v4169 = vsel %vm4165, 10179165.0, %v4153
        %v4170 = vsel %vm4166, 10179165.0, %v4154
        %v4171 = vsel %vm4167, 10179165.0, %v4155
        %v4172 = vsel %vm4168, 10179165.0, %v4156
        %v4173 = vsel %vm4165, 0.07, %v4157
        %v4174 = vsel %vm4166, 0.07, %v4158
        %v4175 = vsel %vm4167, 0.07, %v4159
        %v4176 = vsel %vm4168, 0.07, %v4160
        %v4177 = vsel %vm4165, 761653.9, %v4161
        %v4178 = vsel %vm4166, 761653.9, %v4162
        %v4179 = vsel %vm4167, 761653.9, %v4163
        %v4180 = vsel %vm4168, 761653.9, %v4164
        %vm4181 = vcmp.eq.s32.totalorder %v4145, 3
        %vm4182 = vcmp.eq.s32.totalorder %v4146, 3
        %vm4183 = vcmp.eq.s32.totalorder %v4147, 3
        %vm4184 = vcmp.eq.s32.totalorder %v4148, 3
        %v4185 = vsel %vm4181, 13658537.0, %v4169
        %v4186 = vsel %vm4182, 13658537.0, %v4170
        %v4187 = vsel %vm4183, 13658537.0, %v4171
        %v4188 = vsel %vm4184, 13658537.0, %v4172
        %v4189 = vsel %vm4181, 0.0875, %v4173
        %v4190 = vsel %vm4182, 0.0875, %v4174
        %v4191 = vsel %vm4183, 0.0875, %v4175
        %v4192 = vsel %vm4184, 0.0875, %v4176
        %v4193 = vsel %vm4181, 939789.25, %v4177
        %v4194 = vsel %vm4182, 939789.25, %v4178
        %v4195 = vsel %vm4183, 939789.25, %v4179
        %v4196 = vsel %vm4184, 939789.25, %v4180
        %vm4197 = vcmp.eq.s32.totalorder %v4145, 4
        %vm4198 = vcmp.eq.s32.totalorder %v4146, 4
        %vm4199 = vcmp.eq.s32.totalorder %v4147, 4
        %vm4200 = vcmp.eq.s32.totalorder %v4148, 4
        %v4201 = vsel %vm4197, 18262702.0, %v4185
        %v4202 = vsel %vm4198, 18262702.0, %v4186
        %v4203 = vsel %vm4199, 18262702.0, %v4187
        %v4204 = vsel %vm4200, 18262702.0, %v4188
        %v4205 = vsel %vm4197, 0.105, %v4189
        %v4206 = vsel %vm4198, 0.105, %v4190
        %v4207 = vsel %vm4199, 0.105, %v4191
        %v4208 = vsel %vm4200, 0.105, %v4192
        %v4209 = vsel %vm4197, 1178813.6, %v4193
        %v4210 = vsel %vm4198, 1178813.6, %v4194
        %v4211 = vsel %vm4199, 1178813.6, %v4195
        %v4212 = vsel %vm4200, 1178813.6, %v4196
        %vm4213 = vcmp.eq.s32.totalorder %v4145, 5
        %vm4214 = vcmp.eq.s32.totalorder %v4146, 5
        %vm4215 = vcmp.eq.s32.totalorder %v4147, 5
        %vm4216 = vcmp.eq.s32.totalorder %v4148, 5
        %v4217 = vsel %vm4213, 25085482.0, %v4201
        %v4218 = vsel %vm4214, 25085482.0, %v4202
        %v4219 = vsel %vm4215, 25085482.0, %v4203
        %v4220 = vsel %vm4216, 25085482.0, %v4204
        %v4221 = vsel %vm4213, 0.1225, %v4205
        %v4222 = vsel %vm4214, 0.1225, %v4206
        %v4223 = vsel %vm4215, 0.1225, %v4207
        %v4224 = vsel %vm4216, 0.1225, %v4208
        %v4225 = vsel %vm4213, 1498411.0, %v4209
        %v4226 = vsel %vm4214, 1498411.0, %v4210
        %v4227 = vsel %vm4215, 1498411.0, %v4211
        %v4228 = vsel %vm4216, 1498411.0, %v4212
        %vm4229 = vcmp.eq.s32.totalorder %v4145, 6
        %vm4230 = vcmp.eq.s32.totalorder %v4146, 6
        %vm4231 = vcmp.eq.s32.totalorder %v4147, 6
        %vm4232 = vcmp.eq.s32.totalorder %v4148, 6
        %v4233 = vsel %vm4229, 34805740.0, %v4217
        %v4234 = vsel %vm4230, 34805740.0, %v4218
        %v4235 = vsel %vm4231, 34805740.0, %v4219
        %v4236 = vsel %vm4232, 34805740.0, %v4220
        %v4237 = vsel %vm4229, 0.14, %v4221
        %v4238 = vsel %vm4230, 0.14, %v4222
        %v4239 = vsel %vm4231, 0.14, %v4223
        %v4240 = vsel %vm4232, 0.14, %v4224
        %v4241 = vsel %vm4229, 1937406.9, %v4225
        %v4242 = vsel %vm4230, 1937406.9, %v4226
        %v4243 = vsel %vm4231, 1937406.9, %v4227
        %v4244 = vsel %vm4232, 1937406.9, %v4228
        %vm4245 = vcmp.eq.s32.totalorder %v4145, 7
        %vm4246 = vcmp.eq.s32.totalorder %v4146, 7
        %vm4247 = vcmp.eq.s32.totalorder %v4147, 7
        %vm4248 = vcmp.eq.s32.totalorder %v4148, 7
        %v4249 = vsel %vm4245, 47317032.0, %v4233
        %v4250 = vsel %vm4246, 47317032.0, %v4234
        %v4251 = vsel %vm4247, 47317032.0, %v4235
        %v4252 = vsel %vm4248, 47317032.0, %v4236
        %v4253 = vsel %vm4245, 0.1575, %v4237
        %v4254 = vsel %vm4246, 0.1575, %v4238
        %v4255 = vsel %vm4247, 0.1575, %v4239
        %v4256 = vsel %vm4248, 0.1575, %v4240
        %v4257 = vsel %vm4245, 2546507.3, %v4241
        %v4258 = vsel %vm4246, 2546507.3, %v4242
        %v4259 = vsel %vm4247, 2546507.3, %v4243
        %v4260 = vsel %vm4248, 2546507.3, %v4244
        %vm4261 = vcmp.eq.s32.totalorder %v4145, 8
        %vm4262 = vcmp.eq.s32.totalorder %v4146, 8
        %vm4263 = vcmp.eq.s32.totalorder %v4147, 8
        %vm4264 = vcmp.eq.s32.totalorder %v4148, 8
        %v4265 = vsel %vm4261, 63570476.0, %v4249
        %v4266 = vsel %vm4262, 63570476.0, %v4250
        %v4267 = vsel %vm4263, 63570476.0, %v4251
        %v4268 = vsel %vm4264, 63570476.0, %v4252
        %v4269 = vsel %vm4261, 0.175, %v4253
        %v4270 = vsel %vm4262, 0.175, %v4254
        %v4271 = vsel %vm4263, 0.175, %v4255
        %v4272 = vsel %vm4264, 0.175, %v4256
        %v4273 = vsel %vm4261, 3374555.3, %v4257
        %v4274 = vsel %vm4262, 3374555.3, %v4258
        %v4275 = vsel %vm4263, 3374555.3, %v4259
        %v4276 = vsel %vm4264, 3374555.3, %v4260
        %vm4277 = vcmp.eq.s32.totalorder %v4145, 9
        %vm4278 = vcmp.eq.s32.totalorder %v4146, 9
        %vm4279 = vcmp.eq.s32.totalorder %v4147, 9
        %vm4280 = vcmp.eq.s32.totalorder %v4148, 9
        %v4281 = vsel %vm4277, 84990664.0, %v4265
        %v4282 = vsel %vm4278, 84990664.0, %v4266
        %v4283 = vsel %vm4279, 84990664.0, %v4267
        %v4284 = vsel %vm4280, 84990664.0, %v4268
        %v4285 = vsel %vm4277, 0.1925, %v4269
        %v4286 = vsel %vm4278, 0.1925, %v4270
        %v4287 = vsel %vm4279, 0.1925, %v4271
        %v4288 = vsel %vm4280, 0.1925, %v4272
        %v4289 = vsel %vm4277, 4487038.5, %v4273
        %v4290 = vsel %vm4278, 4487038.5, %v4274
        %v4291 = vsel %vm4279, 4487038.5, %v4275
        %v4292 = vsel %vm4280, 4487038.5, %v4276
        %vm4293 = vcmp.eq.s32.totalorder %v4145, 10
        %vm4294 = vcmp.eq.s32.totalorder %v4146, 10
        %vm4295 = vcmp.eq.s32.totalorder %v4147, 10
        %vm4296 = vcmp.eq.s32.totalorder %v4148, 10
        %v4297 = vsel %vm4293, 1.1235563e+08, %v4281
        %v4298 = vsel %vm4294, 1.1235563e+08, %v4282
        %v4299 = vsel %vm4295, 1.1235563e+08, %v4283
        %v4300 = vsel %vm4296, 1.1235563e+08, %v4284
        %v4301 = vsel %vm4293, 0.21, %v4285
        %v4302 = vsel %vm4294, 0.21, %v4286
        %v4303 = vsel %vm4295, 0.21, %v4287
        %v4304 = vsel %vm4296, 0.21, %v4288
        %v4305 = vsel %vm4293, 5974375.0, %v4289
        %v4306 = vsel %vm4294, 5974375.0, %v4290
        %v4307 = vsel %vm4295, 5974375.0, %v4291
        %v4308 = vsel %vm4296, 5974375.0, %v4292
        %vm4309 = vcmp.eq.s32.totalorder %v4145, 11
        %vm4310 = vcmp.eq.s32.totalorder %v4146, 11
        %vm4311 = vcmp.eq.s32.totalorder %v4147, 11
        %vm4312 = vcmp.eq.s32.totalorder %v4148, 11
        %v4313 = vsel %vm4309, 1.4489813e+08, %v4297
        %v4314 = vsel %vm4310, 1.4489813e+08, %v4298
        %v4315 = vsel %vm4311, 1.4489813e+08, %v4299
        %v4316 = vsel %vm4312, 1.4489813e+08, %v4300
        %v4317 = vsel %vm4309, 0.2275, %v4301
        %v4318 = vsel %vm4310, 0.2275, %v4302
        %v4319 = vsel %vm4311, 0.2275, %v4303
        %v4320 = vsel %vm4312, 0.2275, %v4304
        %v4321 = vsel %vm4309, 7940600.0, %v4305
        %v4322 = vsel %vm4310, 7940600.0, %v4306
        %v4323 = vsel %vm4311, 7940600.0, %v4307
        %v4324 = vsel %vm4312, 7940600.0, %v4308
        %vm4325 = vcmp.eq.s32.totalorder %v4145, 12
        %vm4326 = vcmp.eq.s32.totalorder %v4146, 12
        %vm4327 = vcmp.eq.s32.totalorder %v4147, 12
        %vm4328 = vcmp.eq.s32.totalorder %v4148, 12
        %v4329 = vsel %vm4325, 1.7893462e+08, %v4313
        %v4330 = vsel %vm4326, 1.7893462e+08, %v4314
        %v4331 = vsel %vm4327, 1.7893462e+08, %v4315
        %v4332 = vsel %vm4328, 1.7893462e+08, %v4316
        %v4333 = vsel %vm4325, 0.245, %v4317
        %v4334 = vsel %vm4326, 0.245, %v4318
        %v4335 = vsel %vm4327, 0.245, %v4319
        %v4336 = vsel %vm4328, 0.245, %v4320
        %v4337 = vsel %vm4325, 10476317.0, %v4321
        %v4338 = vsel %vm4326, 10476317.0, %v4322
        %v4339 = vsel %vm4327, 10476317.0, %v4323
        %v4340 = vsel %vm4328, 10476317.0, %v4324
        %vm4341 = vcmp.eq.s32.totalorder %v4145, 13
        %vm4342 = vcmp.eq.s32.totalorder %v4146, 13
        %vm4343 = vcmp.eq.s32.totalorder %v4147, 13
        %vm4344 = vcmp.eq.s32.totalorder %v4148, 13
        %v4345 = vsel %vm4341, 2.0577562e+08, %v4329
        %v4346 = vsel %vm4342, 2.0577562e+08, %v4330
        %v4347 = vsel %vm4343, 2.0577562e+08, %v4331
        %v4348 = vsel %vm4344, 2.0577562e+08, %v4332
        %v4349 = vsel %vm4341, 0.2625, %v4333
        %v4350 = vsel %vm4342, 0.2625, %v4334
        %v4351 = vsel %vm4343, 0.2625, %v4335
        %v4352 = vsel %vm4344, 0.2625, %v4336
        %v4353 = vsel %vm4341, 13607670.0, %v4337
        %v4354 = vsel %vm4342, 13607670.0, %v4338
        %v4355 = vsel %vm4343, 13607670.0, %v4339
        %v4356 = vsel %vm4344, 13607670.0, %v4340
        %vm4357 = vcmp.eq.s32.totalorder %v4145, 14
        %vm4358 = vcmp.eq.s32.totalorder %v4146, 14
        %vm4359 = vcmp.eq.s32.totalorder %v4147, 14
        %vm4360 = vcmp.eq.s32.totalorder %v4148, 14
        %v4361 = vsel %vm4357, 2.1354498e+08, %v4345
        %v4362 = vsel %vm4358, 2.1354498e+08, %v4346
        %v4363 = vsel %vm4359, 2.1354498e+08, %v4347
        %v4364 = vsel %vm4360, 2.1354498e+08, %v4348
        %v4365 = vsel %vm4357, 0.28, %v4349
        %v4366 = vsel %vm4358, 0.28, %v4350
        %v4367 = vsel %vm4359, 0.28, %v4351
        %v4368 = vsel %vm4360, 0.28, %v4352
        %v4369 = vsel %vm4357, 17208746.0, %v4353
        %v4370 = vsel %vm4358, 17208746.0, %v4354
        %v4371 = vsel %vm4359, 17208746.0, %v4355
        %v4372 = vsel %vm4360, 17208746.0, %v4356
        %vm4373 = vcmp.eq.s32.totalorder %v4145, 15
        %vm4374 = vcmp.eq.s32.totalorder %v4146, 15
        %vm4375 = vcmp.eq.s32.totalorder %v4147, 15
        %vm4376 = vcmp.eq.s32.totalorder %v4148, 15
        %v4377 = vsel %vm4373, 1.9567355e+08, %v4361
        %v4378 = vsel %vm4374, 1.9567355e+08, %v4362
        %v4379 = vsel %vm4375, 1.9567355e+08, %v4363
        %v4380 = vsel %vm4376, 1.9567355e+08, %v4364
        %v4381 = vsel %vm4373, 0.2975, %v4365
        %v4382 = vsel %vm4374, 0.2975, %v4366
        %v4383 = vsel %vm4375, 0.2975, %v4367
        %v4384 = vsel %vm4376, 0.2975, %v4368
        %v4385 = vsel %vm4373, 20945786.0, %v4369
        %v4386 = vsel %vm4374, 20945786.0, %v4370
        %v4387 = vsel %vm4375, 20945786.0, %v4371
        %v4388 = vsel %vm4376, 20945786.0, %v4372
        %vm4389 = vcmp.eq.s32.totalorder %v4145, 16
        %vm4390 = vcmp.eq.s32.totalorder %v4146, 16
        %vm4391 = vcmp.eq.s32.totalorder %v4147, 16
        %vm4392 = vcmp.eq.s32.totalorder %v4148, 16
        %v4393 = vsel %vm4389, 1.5927611e+08, %v4377
        %v4394 = vsel %vm4390, 1.5927611e+08, %v4378
        %v4395 = vsel %vm4391, 1.5927611e+08, %v4379
        %v4396 = vsel %vm4392, 1.5927611e+08, %v4380
        %v4397 = vsel %vm4389, 0.315, %v4381
        %v4398 = vsel %vm4390, 0.315, %v4382
        %v4399 = vsel %vm4391, 0.315, %v4383
        %v4400 = vsel %vm4392, 0.315, %v4384
        %v4401 = vsel %vm4389, 24370070.0, %v4385
        %v4402 = vsel %vm4390, 24370070.0, %v4386
        %v4403 = vsel %vm4391, 24370070.0, %v4387
        %v4404 = vsel %vm4392, 24370070.0, %v4388
        %vm4405 = vcmp.eq.s32.totalorder %v4145, 17
        %vm4406 = vcmp.eq.s32.totalorder %v4146, 17
        %vm4407 = vcmp.eq.s32.totalorder %v4147, 17
        %vm4408 = vcmp.eq.s32.totalorder %v4148, 17
        %v4409 = vsel %vm4405, 1.18705024e+08, %v4393
        %v4410 = vsel %vm4406, 1.18705024e+08, %v4394
        %v4411 = vsel %vm4407, 1.18705024e+08, %v4395
        %v4412 = vsel %vm4408, 1.18705024e+08, %v4396
        %v4413 = vsel %vm4405, 0.3325, %v4397
        %v4414 = vsel %vm4406, 0.3325, %v4398
        %v4415 = vsel %vm4407, 0.3325, %v4399
        %v4416 = vsel %vm4408, 0.3325, %v4400
        %v4417 = vsel %vm4405, 27157404.0, %v4401
        %v4418 = vsel %vm4406, 27157404.0, %v4402
        %v4419 = vsel %vm4407, 27157404.0, %v4403
        %v4420 = vsel %vm4408, 27157404.0, %v4404
        %v4421 = vsub.f32 %v4117, %v4413
        %v4422 = vsub.f32 %v4118, %v4414
        %v4423 = vsub.f32 %v4119, %v4415
        %v4424 = vsub.f32 %v4120, %v4416
        %v4425 = vmul.f32 %v4409, %v4421
        %v4426 = vmul.f32 %v4410, %v4422
        %v4427 = vmul.f32 %v4411, %v4423
        %v4428 = vmul.f32 %v4412, %v4424
        %v4429 = vadd.f32 %v4425, %v4417
        %v4430 = vadd.f32 %v4426, %v4418
        %v4431 = vadd.f32 %v4427, %v4419
        %v4432 = vadd.f32 %v4428, %v4420
        %v4433 = vrcp.pop %v4429
        %v4434 = vmul.f32 %v4429, %v4433
        %v4435 = vsub.f32 1.0, %v4434
        %v4436 = vmul.f32 %v4433, %v4435
        %v4437 = vadd.f32 %v4433, %v4436
        %vm4438 = vweird.f32 %v4429
        %vm4439 = vweird.f32 %v4433
        %vm4440 = vmor %vm4438, %vm4439
        %v4441 = vsel %vm4440, %v4433, %v4437
        %v4442 = vand.u32 2147483647, %v4429
        %vm4443 = vcmp.eq.f32.partialorder %v4442, 8.507059e+37
        %v4444 = vand.u32 %v4429, 2147483648
        %v4445 = vor.u32 1.1754944e-38, %v4444
        %v4446 = vsel %vm4443, %v4445, %v4441
        %v4447 = vmul.f32 1.0, %v4446
        %v4448 = vrcp.pop %v4430
        %v4449 = vmul.f32 %v4430, %v4448
        %v4450 = vsub.f32 1.0, %v4449
        %v4451 = vmul.f32 %v4448, %v4450
        %v4452 = vadd.f32 %v4448, %v4451
        %vm4453 = vweird.f32 %v4430
        %vm4454 = vweird.f32 %v4448
        %vm4455 = vmor %vm4453, %vm4454
        %v4456 = vsel %vm4455, %v4448, %v4452
        %v4457 = vand.u32 2147483647, %v4430
        %vm4458 = vcmp.eq.f32.partialorder %v4457, 8.507059e+37
        %v4459 = vand.u32 %v4430, 2147483648
        %v4460 = vor.u32 1.1754944e-38, %v4459
        %v4461 = vsel %vm4458, %v4460, %v4456
        %v4462 = vmul.f32 1.0, %v4461
        %v4463 = vrcp.pop %v4431
        %v4464 = vmul.f32 %v4431, %v4463
        %v4465 = vsub.f32 1.0, %v4464
        %v4466 = vmul.f32 %v4463, %v4465
        %v4467 = vadd.f32 %v4463, %v4466
        %vm4468 = vweird.f32 %v4431
        %vm4469 = vweird.f32 %v4463
        %vm4470 = vmor %vm4468, %vm4469
        %v4471 = vsel %vm4470, %v4463, %v4467
        %v4472 = vand.u32 2147483647, %v4431
        %vm4473 = vcmp.eq.f32.partialorder %v4472, 8.507059e+37
        %v4474 = vand.u32 %v4431, 2147483648
        %v4475 = vor.u32 1.1754944e-38, %v4474
        %v4476 = vsel %vm4473, %v4475, %v4471
        %v4477 = vmul.f32 1.0, %v4476
        %v4478 = vrcp.pop %v4432
        %v4479 = vmul.f32 %v4432, %v4478
        %v4480 = vsub.f32 1.0, %v4479
        %v4481 = vmul.f32 %v4478, %v4480
        %v4482 = vadd.f32 %v4478, %v4481
        %vm4483 = vweird.f32 %v4432
        %vm4484 = vweird.f32 %v4478
        %vm4485 = vmor %vm4483, %vm4484
        %v4486 = vsel %vm4485, %v4478, %v4482
        %v4487 = vand.u32 2147483647, %v4432
        %vm4488 = vcmp.eq.f32.partialorder %v4487, 8.507059e+37
        %v4489 = vand.u32 %v4432, 2147483648
        %v4490 = vor.u32 1.1754944e-38, %v4489
        %v4491 = vsel %vm4488, %v4490, %v4486
        %v4492 = vmul.f32 1.0, %v4491
        %v4493 = vsub.f32 %v4429, 2285464.5
        %v4494 = vsub.f32 %v4430, 2285464.5
        %v4495 = vsub.f32 %v4431, 2285464.5
        %v4496 = vsub.f32 %v4432, 2285464.5
        %v4497 = vmul.f32 %v4493, 2.0
        %v4498 = vmul.f32 %v4494, 2.0
        %v4499 = vmul.f32 %v4495, 2.0
        %v4500 = vmul.f32 %v4496, 2.0
        %v4501 = vmul.f32 %v4497, 3.1415927
        %v4502 = vmul.f32 %v4498, 3.1415927
        %v4503 = vmul.f32 %v4499, 3.1415927
        %v4504 = vmul.f32 %v4500, 3.1415927
        %v4505 = vadd.f32 %v4447, 4.375478e-07
        %v4506 = vadd.f32 %v4462, 4.375478e-07
        %v4507 = vadd.f32 %v4477, 4.375478e-07
        %v4508 = vadd.f32 %v4492, 4.375478e-07
        %v4509 = vmul.f32 %v4501, %v4505
        %v4510 = vmul.f32 %v4502, %v4506
        %v4511 = vmul.f32 %v4503, %v4507
        %v4512 = vmul.f32 %v4504, %v4508
        %vm4513 = vcmp.ge.f32.partialorder %v4509, 3.1415927
        %vm4514 = vcmp.ge.f32.partialorder %v4510, 3.1415927
        %vm4515 = vcmp.ge.f32.partialorder %v4511, 3.1415927
        %vm4516 = vcmp.ge.f32.partialorder %v4512, 3.1415927
        %v4517 = vsel %vm4513, 1.0, 0.0
        %v4518 = vsel %vm4514, 1.0, 0.0
        %v4519 = vsel %vm4515, 1.0, 0.0
        %v4520 = vsel %vm4516, 1.0, 0.0
        %4521 = vst [vmem:[%s202] sm:$0xff] %v4517
        %4522 = vst [vmem:[%s202 + $0x8] sm:$0xff] %v4518
        %4523 = vst [vmem:[%s202 + $0x10] sm:$0xff] %v4519
        %4524 = vst [vmem:[%s202 + $0x18] sm:$0xff] %v4520
        %s4525 = sand.u32 %s75, 1
        %s4526 = scalar_lea.sflag [#allocation4], %s4525
        %s4527 = sand.u32 %s75, 1
        %s4528 = smul.addr %s4527, 32
        %s4529 = scalar_lea.vmem [#allocation7], %s4528
        // Predicated region
        $region37: #{tpu_custom_call.1} parent=27 // pred_check
          %p4530 = pneg %p85
        $region38: #{tpu_custom_call.1} parent=27 // pred_check_branch
          %4532 = sbr.rel (%p4530) target = $region40
        $region39: #{tpu_custom_call.1} parent=27 // pred_region
          %s4533 = smul.u32 4, %s20
          %4535 = vsyncadd %s4526, 0
          %s4536 = smul.addr %s4533, 8
          %s4537 = scalar_lea.hbm %s2, %s4536
          %s4538 = sshll.u32 %s4529, 4
          %s4539 = int_to_ptr.vmem [resolvable:$true] %s4538
          %s4540 = sshll.u32 %s4537, 4
          %s4541 = int_to_ptr.hbm [resolvable:$true] %s4540
          %4546 = dma.vmem_to_hbm [thread:$0]  %s4539, 512, %s4541, %s4526, 128, 128, 8
        $region40: #{tpu_custom_call.1} parent=27 // pred_fallthru
          _
      $region28: #{tpu_custom_call.1} parent=5 // pred_fallthru
        _
      %p4547 = scmp.le.s32.totalorder 2, %s15
      // Predicated region
      $region41: #{tpu_custom_call.1} parent=5 // pred_check
        %p4548 = pneg %p4547
      $region42: #{tpu_custom_call.1} parent=5 // pred_check_branch
        %4550 = sbr.rel (%p4548) target = $region44
      $region43: #{tpu_custom_call.1} parent=5 // pred_region
        %s4551 = ssub.s32 %s15, 2
        // Predicated region
        $region45: #{tpu_custom_call.1} parent=43 // pred_check
          %p4552 = pneg %p91
        $region46: #{tpu_custom_call.1} parent=43 // pred_check_branch
          %4554 = sbr.rel (%p4552) target = $region48
        $region47: #{tpu_custom_call.1} parent=43 // pred_region
          %s4555 = sand.u32 %s76, 1
          %s4556 = scalar_lea.sflag [#allocation4], %s4555
          %s4557 = sand.u32 %s76, 1
          %s4558 = smul.addr %s4557, 32
          %s4559 = scalar_lea.vmem [#allocation7], %s4558
          %4561 = dma.done %s4556, 512
        $region48: #{tpu_custom_call.1} parent=43 // pred_fallthru
          _
      $region44: #{tpu_custom_call.1} parent=5 // pred_fallthru
        _
    $region6: #{tpu_custom_call.1} parent=1 // loop_footer
      %s19 = sadd.s32 1, %s15
    $region7: #{tpu_custom_call.1} parent=1 // loop_footer_branch
      %14 = sbr.rel target = $region3
    $region8: #{tpu_custom_call.1} parent=1 // loop_exit
      _
    %4562 = vsyncpa [#allocation3], 1
    %s4563 = scalar_lea.sflag [#allocation3], 1
    %4564 = vsyncpa %s4563, 1
    %4565 = vsyncpa [#allocation4], 1
    %s4566 = scalar_lea.sflag [#allocation4], 1
    %4567 = vsyncpa %s4566, 1
    %4568 = vsyncpa [#allocation5], 1
    %s4569 = scalar_lea.sflag [#allocation5], 1
    %4570 = vsyncpa %s4569, 1

</llo_original>
